<compile_context>
chip_gen: v6e
topology: v6e:2x2x1
jax: 0.10.0
libtpu: 0.0.40
codegen_flags: <defaults>
</compile_context>

<pallas_src>
import math

import jax
import jax.numpy as jnp
from jax.experimental import pallas as pl
from jax.experimental.pallas import tpu as pltpu


# ----------------------------- small helpers -----------------------------

def _rup(x, m):
    return ((x + m - 1) // m) * m


def pad_matrix(w, in_blocks, out_blocks):
    """Scatter logical weight blocks into a zero-padded (lane-aligned) matrix.

    w:          (sum logical in, sum logical out)
    *_blocks:   list of (logical_size, padded_size) per feature group.
    """
    in_p = sum(p for _, p in in_blocks)
    out_p = sum(p for _, p in out_blocks)
    out = jnp.zeros((in_p, out_p), jnp.float32)
    ro, rp = 0, 0
    for rl, rpad in in_blocks:
        co, cp = 0, 0
        for cl, cpad in out_blocks:
            out = out.at[rp:rp + rl, cp:cp + cl].set(w[ro:ro + rl, co:co + cl])
            co += cl
            cp += cpad
        ro += rl
        rp += rpad
    return out


# ----------------------------- batched matmul kernels -----------------------------

def _mm_kernel(x_ref, w_ref, o_ref):
    o_ref[...] = jnp.dot(x_ref[...], w_ref[...], preferred_element_type=jnp.float32)


def _mm_bias_kernel(x_ref, w_ref, b_ref, o_ref):
    o_ref[...] = (jnp.dot(x_ref[...], w_ref[...], preferred_element_type=jnp.float32)
                  + b_ref[...])


def _choose_tile(n, cap=512):
    if n <= cap:
        return n
    for t in (512, 384, 256, 128):
        if n % t == 0:
            return t
    return n


def matmul(x, w, b=None):
    """out = x @ w (+ b).  x:(M,K), w:(K,N), b:(1,N) or None.  N is tiled on a parallel grid."""
    M, K = x.shape
    N = w.shape[1]
    tn = _choose_tile(N)
    grid = (N // tn,)
    x_spec = pl.BlockSpec((M, K), lambda j: (0, 0))
    w_spec = pl.BlockSpec((K, tn), lambda j: (0, j))
    o_spec = pl.BlockSpec((M, tn), lambda j: (0, j))
    cp = pltpu.CompilerParams(dimension_semantics=("parallel",))
    out_shape = jax.ShapeDtypeStruct((M, N), jnp.float32)
    if b is None:
        return pl.pallas_call(
            _mm_kernel, out_shape=out_shape, grid=grid,
            in_specs=[x_spec, w_spec], out_specs=o_spec,
            compiler_params=cp)(x, w)
    b_spec = pl.BlockSpec((1, tn), lambda j: (0, j))
    return pl.pallas_call(
        _mm_bias_kernel, out_shape=out_shape, grid=grid,
        in_specs=[x_spec, w_spec, b_spec], out_specs=o_spec,
        compiler_params=cp)(x, w, b)


# ----------------------------- fused bidirectional encoder GRU layer -----------------------------

def _bigru_step_kernel(gi_ref, m_ref, whhf_ref, whhr_ref, bhhf_ref, bhhr_ref,
                       o_ref, h_ref):
    # grid = (S,).  Rows [0:B] are the forward direction at original time t;
    # rows [B:2B] are the reverse direction at original time S-1-t.
    t = pl.program_id(0)

    @pl.when(t == 0)
    def _():
        h_ref[...] = jnp.zeros_like(h_ref)       # h_0 = 0

    d = whhf_ref.shape[0]
    b2 = h_ref.shape[0]
    bh = b2 // 2

    h = h_ref[...]
    gh_f = jnp.dot(h[:bh, :], whhf_ref[...], preferred_element_type=jnp.float32) + bhhf_ref[...]
    gh_r = jnp.dot(h[bh:, :], whhr_ref[...], preferred_element_type=jnp.float32) + bhhr_ref[...]
    gh = jnp.concatenate([gh_f, gh_r], axis=0)
    gi = gi_ref[0]                               # input->gates precomputed outside the scan

    r = jax.nn.sigmoid(gi[:, 0:d] + gh[:, 0:d])
    z = jax.nn.sigmoid(gi[:, d:2 * d] + gh[:, d:2 * d])
    n = jnp.tanh(gi[:, 2 * d:] + r * gh[:, 2 * d:])
    h_new = (1.0 - z) * n + z * h

    m = m_ref[0]                                 # (2B, 1); 1.0 == inside the packed sequence
    h_next = m * h_new + (1.0 - m) * h           # hidden frozen past length
    h_ref[...] = h_next
    o_ref[0] = h_next * m                        # pad_packed_sequence zero-fills


def bigru_layer(x, lengths, layer):
    """One bidirectional GRU layer with packed-sequence semantics (fwd+rev fused)."""
    BPn, S, _ = x.shape
    dmP = layer['f']['whh'].shape[0]
    G = 3 * dmP

    # hoisted input->gates matmuls (one large MXU matmul per direction)
    x_flat = x.reshape(BPn * S, x.shape[2])
    gi_f = matmul(x_flat, layer['f']['wih'], layer['f']['bih']).reshape(BPn, S, G)
    gi_r = matmul(x_flat, layer['r']['wih'], layer['r']['bih']).reshape(BPn, S, G)
    gi_f = jnp.transpose(gi_f, (1, 0, 2))                  # (S, B, G)  time-major
    gi_r = jnp.transpose(gi_r, (1, 0, 2))[::-1]            # reverse direction: reversed time
    gi_all = jnp.concatenate([gi_f, gi_r], axis=1)         # (S, 2B, G)

    ts = jnp.arange(S)
    m_f = (ts[:, None] < lengths[None, :]).astype(jnp.float32)
    m_r = ((S - 1 - ts)[:, None] < lengths[None, :]).astype(jnp.float32)
    mask = jnp.concatenate([m_f, m_r], axis=1)[:, :, None]  # (S, 2B, 1)

    out = pl.pallas_call(
        _bigru_step_kernel,
        out_shape=jax.ShapeDtypeStruct((S, 2 * BPn, dmP), jnp.float32),
        grid=(S,),
        in_specs=[
            pl.BlockSpec((1, 2 * BPn, G), lambda t: (t, 0, 0)),   # gi
            pl.BlockSpec((1, 2 * BPn, 1), lambda t: (t, 0, 0)),   # valid mask
            pl.BlockSpec((dmP, G), lambda t: (0, 0)),             # whh fwd (resident)
            pl.BlockSpec((dmP, G), lambda t: (0, 0)),             # whh rev (resident)
            pl.BlockSpec((1, G), lambda t: (0, 0)),               # bhh fwd
            pl.BlockSpec((1, G), lambda t: (0, 0)),               # bhh rev
        ],
        out_specs=pl.BlockSpec((1, 2 * BPn, dmP), lambda t: (t, 0, 0)),
        scratch_shapes=[pltpu.VMEM((2 * BPn, dmP), jnp.float32)],
        compiler_params=pltpu.CompilerParams(dimension_semantics=("arbitrary",)),
    )(gi_all, mask, layer['f']['whh'], layer['r']['whh'],
      layer['f']['bhh'], layer['r']['bhh'])

    out_f = jnp.transpose(out[:, :BPn, :], (1, 0, 2))              # (B, S, dmP)
    out_r = jnp.transpose(out[:, BPn:, :][::-1], (1, 0, 2))        # un-reverse time
    return jnp.concatenate([out_f, out_r], axis=-1)                # (B, S, 2*dmP)


def encoder_forward(P, src_seq, lengths):
    x = P['enc_emb'][src_seq]                    # (B, S, dwP); eval-mode dropout == identity
    for layer in P['enc_gru']:
        x = bigru_layer(x, lengths, layer)       # inter-layer dropout == identity (eval)
    return x                                     # (B, S, 2*dmP), zeros at padded positions


# ----------------------------- fused decoder step kernel -----------------------------

def _decoder_step_kernel(ctxy_ref, finy_ref, gi0y_ref, s0_ref,
                         ctxh_ref, hin_ref, amask_ref,
                         ws_ref, bs_ref, wsc_ref,
                         wih0_ref, bih0_ref, whh0_ref, bhh0_ref,
                         wih1_ref, bih1_ref, whh1_ref, bhh1_ref,
                         wc_ref, bc_ref, wsf_ref, bsf_ref,
                         fin_ref, s_ref):
    t = pl.program_id(0)
    d = whh0_ref.shape[0]                        # padded d_model

    @pl.when(t == 0)
    def _():
        s_ref[...] = s0_ref[...]                 # s_0 from ctx_to_s0(mean-pooled encoder states)

    s_cat = s_ref[...]                           # (B, 2d)  layout [layer0 | layer1]
    s_l0 = s_cat[:, :d]
    s_l1 = s_cat[:, d:]

    # ---- attention over source positions (ctx_h / h_in resident in VMEM) ----
    ctx_s = jnp.dot(s_cat, ws_ref[...], preferred_element_type=jnp.float32) + bs_ref[...]
    ctx_ys = ctxy_ref[0] + ctx_s                                   # (B, dc)
    ctx = jnp.tanh(ctx_ys[:, None, :] + ctxh_ref[...])             # (B, S, dc)
    score = jnp.sum(ctx * wsc_ref[...][None, :, :], axis=-1)       # (B, S)
    # NOTE: ctx_to_score bias omitted — softmax over source positions is shift-invariant.
    score = jnp.where(amask_ref[...] > 0.5, score, -jnp.inf)
    m = jnp.max(score, axis=-1, keepdims=True)
    e = jnp.exp(score - m)
    p = e * pl.reciprocal(jnp.sum(e, axis=-1, keepdims=True), approx=True)
    c_t = jnp.einsum('bqs,bsd->bqd', p[:, None, :], hin_ref[...],
                     preferred_element_type=jnp.float32)[:, 0, :]  # (B, dc) via MXU

    # ---- decoder GRU layer 0 (input = [c_t ; y_t]; the y_t part of W_ih is precomputed) ----
    gi0 = (jnp.dot(c_t, wih0_ref[...], preferred_element_type=jnp.float32)
           + gi0y_ref[0] + bih0_ref[...])
    gh0 = jnp.dot(s_l0, whh0_ref[...], preferred_element_type=jnp.float32) + bhh0_ref[...]
    r0 = jax.nn.sigmoid(gi0[:, :d] + gh0[:, :d])
    z0 = jax.nn.sigmoid(gi0[:, d:2 * d] + gh0[:, d:2 * d])
    n0 = jnp.tanh(gi0[:, 2 * d:] + r0 * gh0[:, 2 * d:])
    h0 = (1.0 - z0) * n0 + z0 * s_l0

    # ---- decoder GRU layer 1 ----
    gi1 = jnp.dot(h0, wih1_ref[...], preferred_element_type=jnp.float32) + bih1_ref[...]
    gh1 = jnp.dot(s_l1, whh1_ref[...], preferred_element_type=jnp.float32) + bhh1_ref[...]
    r1 = jax.nn.sigmoid(gi1[:, :d] + gh1[:, :d])
    z1 = jax.nn.sigmoid(gi1[:, d:2 * d] + gh1[:, d:2 * d])
    n1 = jnp.tanh(gi1[:, 2 * d:] + r1 * gh1[:, 2 * d:])
    h1 = (1.0 - z1) * n1 + z1 * s_l1

    # ---- fin = tanh(y_to_fin(y_t) + c_to_fin(c_t) + s_to_fin(h1)) ----
    fin_c = jnp.dot(c_t, wc_ref[...], preferred_element_type=jnp.float32) + bc_ref[...]
    fin_s = jnp.dot(h1, wsf_ref[...], preferred_element_type=jnp.float32) + bsf_ref[...]
    fin_ref[0] = jnp.tanh(finy_ref[0] + fin_c + fin_s)

    s_ref[...] = jnp.concatenate([h0, h1], axis=1)


def decoder_forward(P, h_in, lengths, y_in):
    BPn, S, dcP = h_in.shape
    T = y_in.shape[1]
    dwP = P['dec_emb'].shape[1]
    dmP = P['dec_whh0'].shape[0]
    G = 3 * dmP
    SW = 2 * dmP                                  # n_layers == 2

    y_emb = P['dec_emb'][y_in]                    # (B, T, dwP); eval-mode dropout == identity
    y_flat = y_emb.reshape(BPn * T, dwP)

    # hoisted, time-invariant projections (single large MXU matmuls over all timesteps)
    ctx_h = matmul(h_in.reshape(BPn * S, dcP), *P['h_to_ctx']).reshape(BPn, S, dcP)
    ctx_y = matmul(y_flat, *P['y_to_ctx']).reshape(BPn, T, dcP)
    fin_y = matmul(y_flat, *P['y_to_fin']).reshape(BPn, T, dwP)
    gi0_y = matmul(y_flat, P['dec_wih0_y']).reshape(BPn, T, G)     # bias added in the step kernel

    # s_0 = ctx_to_s0(mean-pooled encoder states)
    s0 = jnp.sum(h_in, axis=1) / lengths.astype(jnp.float32)[:, None]
    s0 = matmul(s0, *P['ctx_to_s0'])              # (B, 2*dmP), layout [layer0 | layer1]

    # time-major streams for the per-step blocks
    ctx_y_t = jnp.transpose(ctx_y, (1, 0, 2))
    fin_y_t = jnp.transpose(fin_y, (1, 0, 2))
    gi0_y_t = jnp.transpose(gi0_y, (1, 0, 2))

    amask = (jnp.arange(S)[None, :] < lengths[:, None]).astype(jnp.float32)  # 1.0 == attendable

    const2 = lambda t: (0, 0)
    const3 = lambda t: (0, 0, 0)
    step3 = lambda t: (t, 0, 0)

    fin_all = pl.pallas_call(
        _decoder_step_kernel,
        out_shape=jax.ShapeDtypeStruct((T, BPn, dwP), jnp.float32),
        grid=(T,),
        in_specs=[
            pl.BlockSpec((1, BPn, dcP), step3),       # ctx_y_t
            pl.BlockSpec((1, BPn, dwP), step3),       # fin_y_t
            pl.BlockSpec((1, BPn, G), step3),         # gi0_y_t
            pl.BlockSpec((BPn, SW), const2),          # s0
            pl.BlockSpec((BPn, S, dcP), const3),      # ctx_h   (resident)
            pl.BlockSpec((BPn, S, dcP), const3),      # h_in    (resident)
            pl.BlockSpec((BPn, S), const2),           # attention mask
            pl.BlockSpec((SW, dcP), const2),          # s_to_ctx W
            pl.BlockSpec((1, dcP), const2),           # s_to_ctx b
            pl.BlockSpec((1, dcP), const2),           # ctx_to_score row
            pl.BlockSpec((dcP, G), const2),           # dec GRU0 W_ih (c_t part)
            pl.BlockSpec((1, G), const2),             # dec GRU0 b_ih
            pl.BlockSpec((dmP, G), const2),           # dec GRU0 W_hh
            pl.BlockSpec((1, G), const2),             # dec GRU0 b_hh
            pl.BlockSpec((dmP, G), const2),           # dec GRU1 W_ih
            pl.BlockSpec((1, G), const2),             # dec GRU1 b_ih
            pl.BlockSpec((dmP, G), const2),           # dec GRU1 W_hh
            pl.BlockSpec((1, G), const2),             # dec GRU1 b_hh
            pl.BlockSpec((dcP, dwP), const2),         # c_to_fin W
            pl.BlockSpec((1, dwP), const2),           # c_to_fin b
            pl.BlockSpec((dmP, dwP), const2),         # s_to_fin W
            pl.BlockSpec((1, dwP), const2),           # s_to_fin b
        ],
        out_specs=pl.BlockSpec((1, BPn, dwP), step3),
        scratch_shapes=[pltpu.VMEM((BPn, SW), jnp.float32)],
        compiler_params=pltpu.CompilerParams(dimension_semantics=("arbitrary",)),
    )(ctx_y_t, fin_y_t, gi0_y_t, s0, ctx_h, h_in, amask,
      P['s_to_ctx'][0], P['s_to_ctx'][1], P['ctx_to_score'],
      P['dec_wih0_c'], P['dec_bih0'], P['dec_whh0'], P['dec_bhh0'],
      P['dec_wih1'], P['dec_bih1'], P['dec_whh1'], P['dec_bhh1'],
      P['c_to_fin'][0], P['c_to_fin'][1], P['s_to_fin'][0], P['s_to_fin'][1])

    # final vocab projection: one large, bias-free, N-tiled matmul over all timesteps (tied weights)
    fin_flat = jnp.transpose(fin_all, (1, 0, 2)).reshape(BPn * T, dwP)
    logits = matmul(fin_flat, P['fin_to_voc'])     # (B*T, VP)
    return logits.reshape(BPn, T, -1)


# ----------------------------- parameters -----------------------------

def init_params(key, V, dw, dm, n_layers):
    assert n_layers == 2, "fused decoder kernel is written for the module default n_layers=2"
    dc = 2 * dm
    dwP, dmP = _rup(dw, 128), _rup(dm, 128)
    VP = _rup(V, 128)
    dcP = 2 * dmP

    dw_blk = [(dw, dwP)]
    dm_blk = [(dm, dmP)]
    dc_blk = [(dm, dmP), (dm, dmP)]
    gate_blk = [(dm, dmP)] * 3
    sall_blk = [(dm, dmP)] * n_layers
    voc_blk = [(V, VP)]

    keys = iter(jax.random.split(key, 64))

    def u(shape, bound):
        return jax.random.uniform(next(keys), shape, jnp.float32, -bound, bound)

    def lin(in_f, in_blk, out_f, out_blk):
        bnd = 1.0 / math.sqrt(in_f)
        W = pad_matrix(u((in_f, out_f), bnd), in_blk, out_blk)
        b = pad_matrix(u((1, out_f), bnd), [(1, 1)], out_blk)
        return W, b

    def gru_dir(in_f, in_blk, hid):
        bnd = 1.0 / math.sqrt(hid)
        return dict(
            wih=pad_matrix(u((in_f, 3 * hid), bnd), in_blk, gate_blk),
            whh=pad_matrix(u((hid, 3 * hid), bnd), dm_blk, gate_blk),
            bih=pad_matrix(u((1, 3 * hid), bnd), [(1, 1)], gate_blk),
            bhh=pad_matrix(u((1, 3 * hid), bnd), [(1, 1)], gate_blk),
        )

    P = {}
    # ---- encoder ----
    enc_emb = u((V, dw), 1.0).at[0].set(0.0)                 # padding_idx = 0
    P['enc_emb'] = jnp.zeros((V, dwP), jnp.float32).at[:, :dw].set(enc_emb)
    P['enc_gru'] = [
        {'f': gru_dir(dw if l == 0 else dc, dw_blk if l == 0 else dc_blk, dm),
         'r': gru_dir(dw if l == 0 else dc, dw_blk if l == 0 else dc_blk, dm)}
        for l in range(n_layers)
    ]
    # ---- decoder ----
    fin_w = u((V, dw), 1.0 / math.sqrt(dw))                  # fin_to_voc weight (V, dw), no bias
    P['dec_emb'] = jnp.zeros((V, dwP), jnp.float32).at[:, :dw].set(fin_w)   # tied
    P['fin_to_voc'] = pad_matrix(fin_w.T, dw_blk, voc_blk)   # (dwP, VP), same values (tied)
    P['ctx_to_s0'] = lin(dc, dc_blk, n_layers * dm, sall_blk)
    P['y_to_ctx'] = lin(dw, dw_blk, dc, dc_blk)
    P['s_to_ctx'] = lin(n_layers * dm, sall_blk, dc, dc_blk)
    P['h_to_ctx'] = lin(dc, dc_blk, dc, dc_blk)
    P['ctx_to_score'] = pad_matrix(u((1, dc), 1.0 / math.sqrt(dc)), [(1, 1)], dc_blk)
    # (ctx_to_score bias dropped: softmax over source positions is shift-invariant)
    P['y_to_fin'] = lin(dw, dw_blk, dw, dw_blk)
    P['c_to_fin'] = lin(dc, dc_blk, dw, dw_blk)
    P['s_to_fin'] = lin(dm, dm_blk, dw, dw_blk)
    g0 = gru_dir(dc + dw, dc_blk + dw_blk, dm)               # layer-0 input = [c_t ; y_t]
    g1 = gru_dir(dm, dm_blk, dm)
    P['dec_wih0_c'] = g0['wih'][:dcP, :]
    P['dec_wih0_y'] = g0['wih'][dcP:, :]
    P['dec_bih0'] = g0['bih']
    P['dec_whh0'] = g0['whh']
    P['dec_bhh0'] = g0['bhh']
    P['dec_wih1'] = g1['wih']
    P['dec_bih1'] = g1['bih']
    P['dec_whh1'] = g1['whh']
    P['dec_bhh1'] = g1['bhh']
    return P


# ----------------------------- full model -----------------------------

def nmt_forward(params, src_seq, src_pos, tgt_seq, tgt_pos):
    tgt_in = tgt_seq[:, :-1]                          # teacher-forcing shift
    B, _ = src_seq.shape
    T = tgt_in.shape[1]
    V = params['dec_emb'].shape[0]

    lengths = jnp.max(src_pos, axis=1)                # lengths_seq_src = src_pos.max(1)

    # pad the batch to a full sublane tile; pad rows use length 1 (keeps divide/softmax finite)
    BP = _rup(B, 8)
    pad_b = BP - B
    src_p = jnp.pad(src_seq, ((0, pad_b), (0, 0)))
    tgt_p = jnp.pad(tgt_in, ((0, pad_b), (0, 0)))
    len_p = jnp.concatenate([lengths, jnp.ones((pad_b,), lengths.dtype)], axis=0)

    enc_out = encoder_forward(params, src_p, len_p)            # (BP, S, 2*dmP)
    logits = decoder_forward(params, enc_out, len_p, tgt_p)    # (BP, T, VP)

    # torch: cat(logits, 0).view(T, B, V).transpose(0, 1).view(B*T, V)
    return logits[:B, :, :V].reshape(B * T, V)


# ----------------------------- main -----------------------------

if __name__ == "__main__":
    V = 32          # n_src_vocab == n_tgt_vocab
    dw = 32         # d_word_vec
    dm = 32         # d_model  (d_ctx = 64)
    n_layers = 2
    B, Sx, Ty1 = 2, 8, 6

    key = jax.random.PRNGKey(0)
    kp, k1, k2 = jax.random.split(key, 3)
    params = init_params(kp, V, dw, dm, n_layers)

    lengths = jnp.array([8, 6], dtype=jnp.int32)               # sorted descending (pack requirement)
    src_tok = jax.random.randint(k1, (B, Sx), 1, V).astype(jnp.int32)
    pos = jnp.arange(1, Sx + 1)[None, :]
    valid = pos <= lengths[:, None]
    src_seq = jnp.where(valid, src_tok, 0)
    src_pos = jnp.where(valid, pos, 0).astype(jnp.int32)

    tgt_seq = jax.random.randint(k2, (B, Ty1), 1, V).astype(jnp.int32)
    tgt_pos = jnp.tile(jnp.arange(1, Ty1 + 1)[None, :], (B, 1)).astype(jnp.int32)

    fwd = jax.jit(nmt_forward)
    out = fwd(params, src_seq, src_pos, tgt_seq, tgt_pos)
    jax.block_until_ready(out)

    assert out.shape == (B * (Ty1 - 1), V), out.shape
    assert bool(jnp.all(jnp.isfinite(out)))
    print("KERNEL_OK")
</pallas_src>

<mosaic_0001>
module attributes {stable_mosaic.version = 11 : i64} {
  func.func @_bigru_step_kernel(%arg0: i32, %arg1: memref<1x16x384xf32, #tpu.memory_space<vmem>>, %arg2: memref<1x16x1xf32, #tpu.memory_space<vmem>>, %arg3: memref<128x384xf32, #tpu.memory_space<vmem>>, %arg4: memref<128x384xf32, #tpu.memory_space<vmem>>, %arg5: memref<1x384xf32, #tpu.memory_space<vmem>>, %arg6: memref<1x384xf32, #tpu.memory_space<vmem>>, %arg7: memref<1x16x128xf32, #tpu.memory_space<vmem>>, %arg8: memref<16x128xf32, #tpu.memory_space<vmem>>) attributes {dimension_semantics = [#tpu.dimension_semantics<arbitrary>], iteration_bounds = array<i64: 8>, scalar_prefetch = 0 : i64, scratch_operands = 1 : i64, tpu.core_type = #tpu.core_type<tc>, window_params = [{transform_indices = @transform_0, window_bounds = array<i64: 1, 16, 384>}, {transform_indices = @transform_1, window_bounds = array<i64: 1, 16, 1>}, {pipeline_mode = #tpu.pipeline_mode<synchronous>, transform_indices = @transform_2, window_bounds = array<i64: 128, 384>}, {pipeline_mode = #tpu.pipeline_mode<synchronous>, transform_indices = @transform_3, window_bounds = array<i64: 128, 384>}, {pipeline_mode = #tpu.pipeline_mode<synchronous>, transform_indices = @transform_4, window_bounds = array<i64: 1, 384>}, {pipeline_mode = #tpu.pipeline_mode<synchronous>, transform_indices = @transform_5, window_bounds = array<i64: 1, 384>}, {transform_indices = @transform_6, window_bounds = array<i64: 1, 16, 128>}]} {
    %c0_i32 = arith.constant 0 : i32
    %0 = arith.cmpi eq, %arg0, %c0_i32 : i32
    %1 = arith.extui %0 : i1 to i32
    %c0_i32_0 = arith.constant 0 : i32
    %2 = arith.cmpi ne, %1, %c0_i32_0 : i32
    scf.if %2 {
      %cst_26 = arith.constant 0.000000e+00 : f32
      %60 = vector.broadcast %cst_26 : f32 to vector<16x128xf32>
      %c0_27 = arith.constant 0 : index
      %c0_28 = arith.constant 0 : index
      %61 = vector.load %arg8[%c0_27, %c0_28] : memref<16x128xf32, #tpu.memory_space<vmem>>, vector<16x128xf32>
      tpu.vector_store %arg8[%c0_27, %c0_28], %60 {strides = array<i32>} : memref<16x128xf32, #tpu.memory_space<vmem>>, vector<16x128xf32>,
    } else {
    }
    %c0 = arith.constant 0 : index
    %c0_1 = arith.constant 0 : index
    %3 = vector.load %arg8[%c0, %c0_1] : memref<16x128xf32, #tpu.memory_space<vmem>>, vector<16x128xf32>
    %4 = vector.extract_strided_slice %3 {offsets = [0, 0], sizes = [8, 128], strides = [1, 1]} : vector<16x128xf32> to vector<8x128xf32>
    %c0_2 = arith.constant 0 : index
    %c0_3 = arith.constant 0 : index
    %5 = vector.load %arg3[%c0_2, %c0_3] : memref<128x384xf32, #tpu.memory_space<vmem>>, vector<128x384xf32>
    %cst = arith.constant dense<0.000000e+00> : vector<8x384xf32>
    %6 = tpu.matmul %4, %5, %cst {dimension_numbers = #tpu.dot_dimension_numbers<[1], [0], [0], [1], [0, 0, 1, 1], [], []>} : vector<8x128xf32>, vector<128x384xf32>, vector<8x384xf32> -> vector<8x384xf32>
    %c0_4 = arith.constant 0 : index
    %c0_5 = arith.constant 0 : index
    %7 = vector.load %arg5[%c0_4, %c0_5] : memref<1x384xf32, #tpu.memory_space<vmem>>, vector<1x384xf32>
    %8 = vector.broadcast %7 : vector<1x384xf32> to vector<8x384xf32>
    %9 = arith.addf %6, %8 : vector<8x384xf32>
    %10 = vector.extract_strided_slice %3 {offsets = [8, 0], sizes = [8, 128], strides = [1, 1]} : vector<16x128xf32> to vector<8x128xf32>
    %c0_6 = arith.constant 0 : index
    %c0_7 = arith.constant 0 : index
    %11 = vector.load %arg4[%c0_6, %c0_7] : memref<128x384xf32, #tpu.memory_space<vmem>>, vector<128x384xf32>
    %cst_8 = arith.constant dense<0.000000e+00> : vector<8x384xf32>
    %12 = tpu.matmul %10, %11, %cst_8 {dimension_numbers = #tpu.dot_dimension_numbers<[1], [0], [0], [1], [0, 0, 1, 1], [], []>} : vector<8x128xf32>, vector<128x384xf32>, vector<8x384xf32> -> vector<8x384xf32>
    %c0_9 = arith.constant 0 : index
    %c0_10 = arith.constant 0 : index
    %13 = vector.load %arg6[%c0_9, %c0_10] : memref<1x384xf32, #tpu.memory_space<vmem>>, vector<1x384xf32>
    %14 = vector.broadcast %13 : vector<1x384xf32> to vector<8x384xf32>
    %15 = arith.addf %12, %14 : vector<8x384xf32>
    %16 = tpu.concatenate %9, %15 in 0 : vector<8x384xf32>, vector<8x384xf32> -> vector<16x384xf32>
    %c0_11 = arith.constant 0 : index
    %c0_12 = arith.constant 0 : index
    %c0_13 = arith.constant 0 : index
    %17 = vector.load %arg1[%c0_11, %c0_12, %c0_13] : memref<1x16x384xf32, #tpu.memory_space<vmem>>, vector<1x16x384xf32>
    %18 = vector.shape_cast %17 : vector<1x16x384xf32> to vector<16x384xf32>
    %19 = vector.extract_strided_slice %18 {offsets = [0, 0], sizes = [16, 128], strides = [1, 1]} : vector<16x384xf32> to vector<16x128xf32>
    %20 = vector.extract_strided_slice %16 {offsets = [0, 0], sizes = [16, 128], strides = [1, 1]} : vector<16x384xf32> to vector<16x128xf32>
    %21 = arith.addf %19, %20 : vector<16x128xf32>
    %22 = arith.negf %21 : vector<16x128xf32>
    %23 = math.exp %22 : vector<16x128xf32>
    %cst_14 = arith.constant 1.000000e+00 : f32
    %24 = vector.broadcast %cst_14 : f32 to vector<16x128xf32>
    %25 = arith.addf %24, %23 : vector<16x128xf32>
    %26 = arith.divf %24, %25 : vector<16x128xf32>
    %27 = vector.extract_strided_slice %18 {offsets = [0, 128], sizes = [16, 128], strides = [1, 1]} : vector<16x384xf32> to vector<16x128xf32>
    %28 = vector.extract_strided_slice %16 {offsets = [0, 128], sizes = [16, 128], strides = [1, 1]} : vector<16x384xf32> to vector<16x128xf32>
    %29 = arith.addf %27, %28 : vector<16x128xf32>
    %30 = arith.negf %29 : vector<16x128xf32>
    %31 = math.exp %30 : vector<16x128xf32>
    %cst_15 = arith.constant 1.000000e+00 : f32
    %32 = vector.broadcast %cst_15 : f32 to vector<16x128xf32>
    %33 = arith.addf %32, %31 : vector<16x128xf32>
    %34 = arith.divf %32, %33 : vector<16x128xf32>
    %35 = vector.extract_strided_slice %18 {offsets = [0, 256], sizes = [16, 128], strides = [1, 1]} : vector<16x384xf32> to vector<16x128xf32>
    %36 = vector.extract_strided_slice %16 {offsets = [0, 256], sizes = [16, 128], strides = [1, 1]} : vector<16x384xf32> to vector<16x128xf32>
    %37 = arith.mulf %26, %36 : vector<16x128xf32>
    %38 = arith.addf %35, %37 : vector<16x128xf32>
    %39 = math.tanh %38 : vector<16x128xf32>
    %cst_16 = arith.constant 1.000000e+00 : f32
    %40 = vector.broadcast %cst_16 : f32 to vector<16x128xf32>
    %41 = arith.subf %40, %34 : vector<16x128xf32>
    %42 = arith.mulf %41, %39 : vector<16x128xf32>
    %43 = arith.mulf %34, %3 : vector<16x128xf32>
    %44 = arith.addf %42, %43 : vector<16x128xf32>
    %c0_17 = arith.constant 0 : index
    %c0_18 = arith.constant 0 : index
    %c0_19 = arith.constant 0 : index
    %45 = vector.load %arg2[%c0_17, %c0_18, %c0_19] : memref<1x16x1xf32, #tpu.memory_space<vmem>>, vector<1x16x1xf32>
    %46 = vector.shape_cast %45 : vector<1x16x1xf32> to vector<16x1xf32>
    %47 = vector.broadcast %46 : vector<16x1xf32> to vector<16x128xf32>
    %48 = arith.mulf %47, %44 : vector<16x128xf32>
    %cst_20 = arith.constant 1.000000e+00 : f32
    %49 = vector.broadcast %cst_20 : f32 to vector<16x1xf32>
    %50 = arith.subf %49, %46 : vector<16x1xf32>
    %51 = vector.broadcast %50 : vector<16x1xf32> to vector<16x128xf32>
    %52 = arith.mulf %51, %3 : vector<16x128xf32>
    %53 = arith.addf %48, %52 : vector<16x128xf32>
    %c0_21 = arith.constant 0 : index
    %c0_22 = arith.constant 0 : index
    %54 = vector.load %arg8[%c0_21, %c0_22] : memref<16x128xf32, #tpu.memory_space<vmem>>, vector<16x128xf32>
    tpu.vector_store %arg8[%c0_21, %c0_22], %53 {strides = array<i32>} : memref<16x128xf32, #tpu.memory_space<vmem>>, vector<16x128xf32>,
    %55 = vector.broadcast %46 : vector<16x1xf32> to vector<16x128xf32>
    %56 = arith.mulf %53, %55 : vector<16x128xf32>
    %c0_23 = arith.constant 0 : index
    %c0_24 = arith.constant 0 : index
    %c0_25 = arith.constant 0 : index
    %57 = vector.load %arg7[%c0_23, %c0_24, %c0_25] : memref<1x16x128xf32, #tpu.memory_space<vmem>>, vector<1x16x128xf32>
    %58 = vector.shape_cast %57 : vector<1x16x128xf32> to vector<16x128xf32>
    %59 = vector.shape_cast %56 : vector<16x128xf32> to vector<1x16x128xf32>
    tpu.vector_store %arg7[%c0_23, %c0_24, %c0_25], %59 {strides = array<i32>} : memref<1x16x128xf32, #tpu.memory_space<vmem>>, vector<1x16x128xf32>,
    return
  }
  func.func @transform_0(%arg0: i32) -> (i32, i32, i32) {
    %c0_i32 = arith.constant 0 : i32
    %c0_i32_0 = arith.constant 0 : i32
    %c0_i32_1 = arith.constant 0 : i32
    return %arg0, %c0_i32, %c0_i32_0 : i32, i32, i32
  }
  func.func @transform_1(%arg0: i32) -> (i32, i32, i32) {
    %c0_i32 = arith.constant 0 : i32
    %c0_i32_0 = arith.constant 0 : i32
    %c0_i32_1 = arith.constant 0 : i32
    return %arg0, %c0_i32, %c0_i32_0 : i32, i32, i32
  }
  func.func @transform_2(%arg0: i32) -> (i32, i32) {
    %c0_i32 = arith.constant 0 : i32
    %c0_i32_0 = arith.constant 0 : i32
    %c0_i32_1 = arith.constant 0 : i32
    return %c0_i32, %c0_i32_0 : i32, i32
  }
  func.func @transform_3(%arg0: i32) -> (i32, i32) {
    %c0_i32 = arith.constant 0 : i32
    %c0_i32_0 = arith.constant 0 : i32
    %c0_i32_1 = arith.constant 0 : i32
    return %c0_i32, %c0_i32_0 : i32, i32
  }
  func.func @transform_4(%arg0: i32) -> (i32, i32) {
    %c0_i32 = arith.constant 0 : i32
    %c0_i32_0 = arith.constant 0 : i32
    %c0_i32_1 = arith.constant 0 : i32
    return %c0_i32, %c0_i32_0 : i32, i32
  }
  func.func @transform_5(%arg0: i32) -> (i32, i32) {
    %c0_i32 = arith.constant 0 : i32
    %c0_i32_0 = arith.constant 0 : i32
    %c0_i32_1 = arith.constant 0 : i32
    return %c0_i32, %c0_i32_0 : i32, i32
  }
  func.func @transform_6(%arg0: i32) -> (i32, i32, i32) {
    %c0_i32 = arith.constant 0 : i32
    %c0_i32_0 = arith.constant 0 : i32
    %c0_i32_1 = arith.constant 0 : i32
    return %arg0, %c0_i32, %c0_i32_0 : i32, i32, i32
  }
}

module attributes {stable_mosaic.version = 11 : i64} {
  func.func @_mm_bias_kernel(%arg0: i32, %arg1: memref<64x128xf32, #tpu.memory_space<vmem>>, %arg2: memref<128x384xf32, #tpu.memory_space<vmem>>, %arg3: memref<1x384xf32, #tpu.memory_space<vmem>>, %arg4: memref<64x384xf32, #tpu.memory_space<vmem>>) attributes {dimension_semantics = [#tpu.dimension_semantics<parallel>], iteration_bounds = array<i64: 1>, scalar_prefetch = 0 : i64, scratch_operands = 0 : i64, tpu.core_type = #tpu.core_type<tc>, window_params = [{pipeline_mode = #tpu.pipeline_mode<synchronous>, transform_indices = @transform_0, window_bounds = array<i64: 64, 128>}, {transform_indices = @transform_1, window_bounds = array<i64: 128, 384>}, {transform_indices = @transform_2, window_bounds = array<i64: 1, 384>}, {transform_indices = @transform_3, window_bounds = array<i64: 64, 384>}]} {
    %c0 = arith.constant 0 : index
    %c0_0 = arith.constant 0 : index
    %0 = vector.load %arg1[%c0, %c0_0] : memref<64x128xf32, #tpu.memory_space<vmem>>, vector<64x128xf32>
    %c0_1 = arith.constant 0 : index
    %c0_2 = arith.constant 0 : index
    %1 = vector.load %arg2[%c0_1, %c0_2] : memref<128x384xf32, #tpu.memory_space<vmem>>, vector<128x384xf32>
    %cst = arith.constant dense<0.000000e+00> : vector<64x384xf32>
    %2 = tpu.matmul %0, %1, %cst {dimension_numbers = #tpu.dot_dimension_numbers<[1], [0], [0], [1], [0, 0, 1, 1], [], []>} : vector<64x128xf32>, vector<128x384xf32>, vector<64x384xf32> -> vector<64x384xf32>
    %c0_3 = arith.constant 0 : index
    %c0_4 = arith.constant 0 : index
    %3 = vector.load %arg3[%c0_3, %c0_4] : memref<1x384xf32, #tpu.memory_space<vmem>>, vector<1x384xf32>
    %4 = vector.broadcast %3 : vector<1x384xf32> to vector<64x384xf32>
    %5 = arith.addf %2, %4 : vector<64x384xf32>
    %c0_5 = arith.constant 0 : index
    %c0_6 = arith.constant 0 : index
    %6 = vector.load %arg4[%c0_5, %c0_6] : memref<64x384xf32, #tpu.memory_space<vmem>>, vector<64x384xf32>
    tpu.vector_store %arg4[%c0_5, %c0_6], %5 {strides = array<i32>} : memref<64x384xf32, #tpu.memory_space<vmem>>, vector<64x384xf32>,
    return
  }
  func.func @transform_0(%arg0: i32) -> (i32, i32) {
    %c0_i32 = arith.constant 0 : i32
    %c0_i32_0 = arith.constant 0 : i32
    %c0_i32_1 = arith.constant 0 : i32
    return %c0_i32, %c0_i32_0 : i32, i32
  }
  func.func @transform_1(%arg0: i32) -> (i32, i32) {
    %c0_i32 = arith.constant 0 : i32
    %c0_i32_0 = arith.constant 0 : i32
    return %c0_i32, %arg0 : i32, i32
  }
  func.func @transform_2(%arg0: i32) -> (i32, i32) {
    %c0_i32 = arith.constant 0 : i32
    %c0_i32_0 = arith.constant 0 : i32
    return %c0_i32, %arg0 : i32, i32
  }
  func.func @transform_3(%arg0: i32) -> (i32, i32) {
    %c0_i32 = arith.constant 0 : i32
    %c0_i32_0 = arith.constant 0 : i32
    return %c0_i32, %arg0 : i32, i32
  }
}

module attributes {stable_mosaic.version = 11 : i64} {
  func.func @_mm_bias_kernel(%arg0: i32, %arg1: memref<64x256xf32, #tpu.memory_space<vmem>>, %arg2: memref<256x384xf32, #tpu.memory_space<vmem>>, %arg3: memref<1x384xf32, #tpu.memory_space<vmem>>, %arg4: memref<64x384xf32, #tpu.memory_space<vmem>>) attributes {dimension_semantics = [#tpu.dimension_semantics<parallel>], iteration_bounds = array<i64: 1>, scalar_prefetch = 0 : i64, scratch_operands = 0 : i64, tpu.core_type = #tpu.core_type<tc>, window_params = [{pipeline_mode = #tpu.pipeline_mode<synchronous>, transform_indices = @transform_0, window_bounds = array<i64: 64, 256>}, {transform_indices = @transform_1, window_bounds = array<i64: 256, 384>}, {transform_indices = @transform_2, window_bounds = array<i64: 1, 384>}, {transform_indices = @transform_3, window_bounds = array<i64: 64, 384>}]} {
    %c0 = arith.constant 0 : index
    %c0_0 = arith.constant 0 : index
    %0 = vector.load %arg1[%c0, %c0_0] : memref<64x256xf32, #tpu.memory_space<vmem>>, vector<64x256xf32>
    %c0_1 = arith.constant 0 : index
    %c0_2 = arith.constant 0 : index
    %1 = vector.load %arg2[%c0_1, %c0_2] : memref<256x384xf32, #tpu.memory_space<vmem>>, vector<256x384xf32>
    %cst = arith.constant dense<0.000000e+00> : vector<64x384xf32>
    %2 = tpu.matmul %0, %1, %cst {dimension_numbers = #tpu.dot_dimension_numbers<[1], [0], [0], [1], [0, 0, 1, 1], [], []>} : vector<64x256xf32>, vector<256x384xf32>, vector<64x384xf32> -> vector<64x384xf32>
    %c0_3 = arith.constant 0 : index
    %c0_4 = arith.constant 0 : index
    %3 = vector.load %arg3[%c0_3, %c0_4] : memref<1x384xf32, #tpu.memory_space<vmem>>, vector<1x384xf32>
    %4 = vector.broadcast %3 : vector<1x384xf32> to vector<64x384xf32>
    %5 = arith.addf %2, %4 : vector<64x384xf32>
    %c0_5 = arith.constant 0 : index
    %c0_6 = arith.constant 0 : index
    %6 = vector.load %arg4[%c0_5, %c0_6] : memref<64x384xf32, #tpu.memory_space<vmem>>, vector<64x384xf32>
    tpu.vector_store %arg4[%c0_5, %c0_6], %5 {strides = array<i32>} : memref<64x384xf32, #tpu.memory_space<vmem>>, vector<64x384xf32>,
    return
  }
  func.func @transform_0(%arg0: i32) -> (i32, i32) {
    %c0_i32 = arith.constant 0 : i32
    %c0_i32_0 = arith.constant 0 : i32
    %c0_i32_1 = arith.constant 0 : i32
    return %c0_i32, %c0_i32_0 : i32, i32
  }
  func.func @transform_1(%arg0: i32) -> (i32, i32) {
    %c0_i32 = arith.constant 0 : i32
    %c0_i32_0 = arith.constant 0 : i32
    return %c0_i32, %arg0 : i32, i32
  }
  func.func @transform_2(%arg0: i32) -> (i32, i32) {
    %c0_i32 = arith.constant 0 : i32
    %c0_i32_0 = arith.constant 0 : i32
    return %c0_i32, %arg0 : i32, i32
  }
  func.func @transform_3(%arg0: i32) -> (i32, i32) {
    %c0_i32 = arith.constant 0 : i32
    %c0_i32_0 = arith.constant 0 : i32
    return %c0_i32, %arg0 : i32, i32
  }
}

module attributes {stable_mosaic.version = 11 : i64} {
  func.func @_mm_bias_kernel(%arg0: i32, %arg1: memref<64x256xf32, #tpu.memory_space<vmem>>, %arg2: memref<256x256xf32, #tpu.memory_space<vmem>>, %arg3: memref<1x256xf32, #tpu.memory_space<vmem>>, %arg4: memref<64x256xf32, #tpu.memory_space<vmem>>) attributes {dimension_semantics = [#tpu.dimension_semantics<parallel>], iteration_bounds = array<i64: 1>, scalar_prefetch = 0 : i64, scratch_operands = 0 : i64, tpu.core_type = #tpu.core_type<tc>, window_params = [{pipeline_mode = #tpu.pipeline_mode<synchronous>, transform_indices = @transform_0, window_bounds = array<i64: 64, 256>}, {transform_indices = @transform_1, window_bounds = array<i64: 256, 256>}, {transform_indices = @transform_2, window_bounds = array<i64: 1, 256>}, {transform_indices = @transform_3, window_bounds = array<i64: 64, 256>}]} {
    %c0 = arith.constant 0 : index
    %c0_0 = arith.constant 0 : index
    %0 = vector.load %arg1[%c0, %c0_0] : memref<64x256xf32, #tpu.memory_space<vmem>>, vector<64x256xf32>
    %c0_1 = arith.constant 0 : index
    %c0_2 = arith.constant 0 : index
    %1 = vector.load %arg2[%c0_1, %c0_2] : memref<256x256xf32, #tpu.memory_space<vmem>>, vector<256x256xf32>
    %cst = arith.constant dense<0.000000e+00> : vector<64x256xf32>
    %2 = tpu.matmul %0, %1, %cst {dimension_numbers = #tpu.dot_dimension_numbers<[1], [0], [0], [1], [0, 0, 1, 1], [], []>} : vector<64x256xf32>, vector<256x256xf32>, vector<64x256xf32> -> vector<64x256xf32>
    %c0_3 = arith.constant 0 : index
    %c0_4 = arith.constant 0 : index
    %3 = vector.load %arg3[%c0_3, %c0_4] : memref<1x256xf32, #tpu.memory_space<vmem>>, vector<1x256xf32>
    %4 = vector.broadcast %3 : vector<1x256xf32> to vector<64x256xf32>
    %5 = arith.addf %2, %4 : vector<64x256xf32>
    %c0_5 = arith.constant 0 : index
    %c0_6 = arith.constant 0 : index
    %6 = vector.load %arg4[%c0_5, %c0_6] : memref<64x256xf32, #tpu.memory_space<vmem>>, vector<64x256xf32>
    tpu.vector_store %arg4[%c0_5, %c0_6], %5 {strides = array<i32>} : memref<64x256xf32, #tpu.memory_space<vmem>>, vector<64x256xf32>,
    return
  }
  func.func @transform_0(%arg0: i32) -> (i32, i32) {
    %c0_i32 = arith.constant 0 : i32
    %c0_i32_0 = arith.constant 0 : i32
    %c0_i32_1 = arith.constant 0 : i32
    return %c0_i32, %c0_i32_0 : i32, i32
  }
  func.func @transform_1(%arg0: i32) -> (i32, i32) {
    %c0_i32 = arith.constant 0 : i32
    %c0_i32_0 = arith.constant 0 : i32
    return %c0_i32, %arg0 : i32, i32
  }
  func.func @transform_2(%arg0: i32) -> (i32, i32) {
    %c0_i32 = arith.constant 0 : i32
    %c0_i32_0 = arith.constant 0 : i32
    return %c0_i32, %arg0 : i32, i32
  }
  func.func @transform_3(%arg0: i32) -> (i32, i32) {
    %c0_i32 = arith.constant 0 : i32
    %c0_i32_0 = arith.constant 0 : i32
    return %c0_i32, %arg0 : i32, i32
  }
}

module attributes {stable_mosaic.version = 11 : i64} {
  func.func @_mm_bias_kernel(%arg0: i32, %arg1: memref<8x256xf32, #tpu.memory_space<vmem>>, %arg2: memref<256x256xf32, #tpu.memory_space<vmem>>, %arg3: memref<1x256xf32, #tpu.memory_space<vmem>>, %arg4: memref<8x256xf32, #tpu.memory_space<vmem>>) attributes {dimension_semantics = [#tpu.dimension_semantics<parallel>], iteration_bounds = array<i64: 1>, scalar_prefetch = 0 : i64, scratch_operands = 0 : i64, tpu.core_type = #tpu.core_type<tc>, window_params = [{pipeline_mode = #tpu.pipeline_mode<synchronous>, transform_indices = @transform_0, window_bounds = array<i64: 8, 256>}, {transform_indices = @transform_1, window_bounds = array<i64: 256, 256>}, {transform_indices = @transform_2, window_bounds = array<i64: 1, 256>}, {transform_indices = @transform_3, window_bounds = array<i64: 8, 256>}]} {
    %c0 = arith.constant 0 : index
    %c0_0 = arith.constant 0 : index
    %0 = vector.load %arg1[%c0, %c0_0] : memref<8x256xf32, #tpu.memory_space<vmem>>, vector<8x256xf32>
    %c0_1 = arith.constant 0 : index
    %c0_2 = arith.constant 0 : index
    %1 = vector.load %arg2[%c0_1, %c0_2] : memref<256x256xf32, #tpu.memory_space<vmem>>, vector<256x256xf32>
    %cst = arith.constant dense<0.000000e+00> : vector<8x256xf32>
    %2 = tpu.matmul %0, %1, %cst {dimension_numbers = #tpu.dot_dimension_numbers<[1], [0], [0], [1], [0, 0, 1, 1], [], []>} : vector<8x256xf32>, vector<256x256xf32>, vector<8x256xf32> -> vector<8x256xf32>
    %c0_3 = arith.constant 0 : index
    %c0_4 = arith.constant 0 : index
    %3 = vector.load %arg3[%c0_3, %c0_4] : memref<1x256xf32, #tpu.memory_space<vmem>>, vector<1x256xf32>
    %4 = vector.broadcast %3 : vector<1x256xf32> to vector<8x256xf32>
    %5 = arith.addf %2, %4 : vector<8x256xf32>
    %c0_5 = arith.constant 0 : index
    %c0_6 = arith.constant 0 : index
    %6 = vector.load %arg4[%c0_5, %c0_6] : memref<8x256xf32, #tpu.memory_space<vmem>>, vector<8x256xf32>
    tpu.vector_store %arg4[%c0_5, %c0_6], %5 {strides = array<i32>} : memref<8x256xf32, #tpu.memory_space<vmem>>, vector<8x256xf32>,
    return
  }
  func.func @transform_0(%arg0: i32) -> (i32, i32) {
    %c0_i32 = arith.constant 0 : i32
    %c0_i32_0 = arith.constant 0 : i32
    %c0_i32_1 = arith.constant 0 : i32
    return %c0_i32, %c0_i32_0 : i32, i32
  }
  func.func @transform_1(%arg0: i32) -> (i32, i32) {
    %c0_i32 = arith.constant 0 : i32
    %c0_i32_0 = arith.constant 0 : i32
    return %c0_i32, %arg0 : i32, i32
  }
  func.func @transform_2(%arg0: i32) -> (i32, i32) {
    %c0_i32 = arith.constant 0 : i32
    %c0_i32_0 = arith.constant 0 : i32
    return %c0_i32, %arg0 : i32, i32
  }
  func.func @transform_3(%arg0: i32) -> (i32, i32) {
    %c0_i32 = arith.constant 0 : i32
    %c0_i32_0 = arith.constant 0 : i32
    return %c0_i32, %arg0 : i32, i32
  }
}

module attributes {stable_mosaic.version = 11 : i64} {
  func.func @_mm_kernel(%arg0: i32, %arg1: memref<40x128xf32, #tpu.memory_space<vmem>>, %arg2: memref<128x384xf32, #tpu.memory_space<vmem>>, %arg3: memref<40x384xf32, #tpu.memory_space<vmem>>) attributes {dimension_semantics = [#tpu.dimension_semantics<parallel>], iteration_bounds = array<i64: 1>, scalar_prefetch = 0 : i64, scratch_operands = 0 : i64, tpu.core_type = #tpu.core_type<tc>, window_params = [{pipeline_mode = #tpu.pipeline_mode<synchronous>, transform_indices = @transform_0, window_bounds = array<i64: 40, 128>}, {transform_indices = @transform_1, window_bounds = array<i64: 128, 384>}, {transform_indices = @transform_2, window_bounds = array<i64: 40, 384>}]} {
    %c0 = arith.constant 0 : index
    %c0_0 = arith.constant 0 : index
    %0 = vector.load %arg1[%c0, %c0_0] : memref<40x128xf32, #tpu.memory_space<vmem>>, vector<40x128xf32>
    %c0_1 = arith.constant 0 : index
    %c0_2 = arith.constant 0 : index
    %1 = vector.load %arg2[%c0_1, %c0_2] : memref<128x384xf32, #tpu.memory_space<vmem>>, vector<128x384xf32>
    %cst = arith.constant dense<0.000000e+00> : vector<40x384xf32>
    %2 = tpu.matmul %0, %1, %cst {dimension_numbers = #tpu.dot_dimension_numbers<[1], [0], [0], [1], [0, 0, 1, 1], [], []>} : vector<40x128xf32>, vector<128x384xf32>, vector<40x384xf32> -> vector<40x384xf32>
    %c0_3 = arith.constant 0 : index
    %c0_4 = arith.constant 0 : index
    %3 = vector.load %arg3[%c0_3, %c0_4] : memref<40x384xf32, #tpu.memory_space<vmem>>, vector<40x384xf32>
    tpu.vector_store %arg3[%c0_3, %c0_4], %2 {strides = array<i32>} : memref<40x384xf32, #tpu.memory_space<vmem>>, vector<40x384xf32>,
    return
  }
  func.func @transform_0(%arg0: i32) -> (i32, i32) {
    %c0_i32 = arith.constant 0 : i32
    %c0_i32_0 = arith.constant 0 : i32
    %c0_i32_1 = arith.constant 0 : i32
    return %c0_i32, %c0_i32_0 : i32, i32
  }
  func.func @transform_1(%arg0: i32) -> (i32, i32) {
    %c0_i32 = arith.constant 0 : i32
    %c0_i32_0 = arith.constant 0 : i32
    return %c0_i32, %arg0 : i32, i32
  }
  func.func @transform_2(%arg0: i32) -> (i32, i32) {
    %c0_i32 = arith.constant 0 : i32
    %c0_i32_0 = arith.constant 0 : i32
    return %c0_i32, %arg0 : i32, i32
  }
}

module attributes {stable_mosaic.version = 11 : i64} {
  func.func @_mm_bias_kernel(%arg0: i32, %arg1: memref<40x128xf32, #tpu.memory_space<vmem>>, %arg2: memref<128x256xf32, #tpu.memory_space<vmem>>, %arg3: memref<1x256xf32, #tpu.memory_space<vmem>>, %arg4: memref<40x256xf32, #tpu.memory_space<vmem>>) attributes {dimension_semantics = [#tpu.dimension_semantics<parallel>], iteration_bounds = array<i64: 1>, scalar_prefetch = 0 : i64, scratch_operands = 0 : i64, tpu.core_type = #tpu.core_type<tc>, window_params = [{pipeline_mode = #tpu.pipeline_mode<synchronous>, transform_indices = @transform_0, window_bounds = array<i64: 40, 128>}, {transform_indices = @transform_1, window_bounds = array<i64: 128, 256>}, {transform_indices = @transform_2, window_bounds = array<i64: 1, 256>}, {transform_indices = @transform_3, window_bounds = array<i64: 40, 256>}]} {
    %c0 = arith.constant 0 : index
    %c0_0 = arith.constant 0 : index
    %0 = vector.load %arg1[%c0, %c0_0] : memref<40x128xf32, #tpu.memory_space<vmem>>, vector<40x128xf32>
    %c0_1 = arith.constant 0 : index
    %c0_2 = arith.constant 0 : index
    %1 = vector.load %arg2[%c0_1, %c0_2] : memref<128x256xf32, #tpu.memory_space<vmem>>, vector<128x256xf32>
    %cst = arith.constant dense<0.000000e+00> : vector<40x256xf32>
    %2 = tpu.matmul %0, %1, %cst {dimension_numbers = #tpu.dot_dimension_numbers<[1], [0], [0], [1], [0, 0, 1, 1], [], []>} : vector<40x128xf32>, vector<128x256xf32>, vector<40x256xf32> -> vector<40x256xf32>
    %c0_3 = arith.constant 0 : index
    %c0_4 = arith.constant 0 : index
    %3 = vector.load %arg3[%c0_3, %c0_4] : memref<1x256xf32, #tpu.memory_space<vmem>>, vector<1x256xf32>
    %4 = vector.broadcast %3 : vector<1x256xf32> to vector<40x256xf32>
    %5 = arith.addf %2, %4 : vector<40x256xf32>
    %c0_5 = arith.constant 0 : index
    %c0_6 = arith.constant 0 : index
    %6 = vector.load %arg4[%c0_5, %c0_6] : memref<40x256xf32, #tpu.memory_space<vmem>>, vector<40x256xf32>
    tpu.vector_store %arg4[%c0_5, %c0_6], %5 {strides = array<i32>} : memref<40x256xf32, #tpu.memory_space<vmem>>, vector<40x256xf32>,
    return
  }
  func.func @transform_0(%arg0: i32) -> (i32, i32) {
    %c0_i32 = arith.constant 0 : i32
    %c0_i32_0 = arith.constant 0 : i32
    %c0_i32_1 = arith.constant 0 : i32
    return %c0_i32, %c0_i32_0 : i32, i32
  }
  func.func @transform_1(%arg0: i32) -> (i32, i32) {
    %c0_i32 = arith.constant 0 : i32
    %c0_i32_0 = arith.constant 0 : i32
    return %c0_i32, %arg0 : i32, i32
  }
  func.func @transform_2(%arg0: i32) -> (i32, i32) {
    %c0_i32 = arith.constant 0 : i32
    %c0_i32_0 = arith.constant 0 : i32
    return %c0_i32, %arg0 : i32, i32
  }
  func.func @transform_3(%arg0: i32) -> (i32, i32) {
    %c0_i32 = arith.constant 0 : i32
    %c0_i32_0 = arith.constant 0 : i32
    return %c0_i32, %arg0 : i32, i32
  }
}

module attributes {stable_mosaic.version = 11 : i64} {
  func.func @_mm_bias_kernel(%arg0: i32, %arg1: memref<40x128xf32, #tpu.memory_space<vmem>>, %arg2: memref<128x128xf32, #tpu.memory_space<vmem>>, %arg3: memref<1x128xf32, #tpu.memory_space<vmem>>, %arg4: memref<40x128xf32, #tpu.memory_space<vmem>>) attributes {dimension_semantics = [#tpu.dimension_semantics<parallel>], iteration_bounds = array<i64: 1>, scalar_prefetch = 0 : i64, scratch_operands = 0 : i64, tpu.core_type = #tpu.core_type<tc>, window_params = [{pipeline_mode = #tpu.pipeline_mode<synchronous>, transform_indices = @transform_0, window_bounds = array<i64: 40, 128>}, {transform_indices = @transform_1, window_bounds = array<i64: 128, 128>}, {transform_indices = @transform_2, window_bounds = array<i64: 1, 128>}, {transform_indices = @transform_3, window_bounds = array<i64: 40, 128>}]} {
    %c0 = arith.constant 0 : index
    %c0_0 = arith.constant 0 : index
    %0 = vector.load %arg1[%c0, %c0_0] : memref<40x128xf32, #tpu.memory_space<vmem>>, vector<40x128xf32>
    %c0_1 = arith.constant 0 : index
    %c0_2 = arith.constant 0 : index
    %1 = vector.load %arg2[%c0_1, %c0_2] : memref<128x128xf32, #tpu.memory_space<vmem>>, vector<128x128xf32>
    %cst = arith.constant dense<0.000000e+00> : vector<40x128xf32>
    %2 = tpu.matmul %0, %1, %cst {dimension_numbers = #tpu.dot_dimension_numbers<[1], [0], [0], [1], [0, 0, 1, 1], [], []>} : vector<40x128xf32>, vector<128x128xf32>, vector<40x128xf32> -> vector<40x128xf32>
    %c0_3 = arith.constant 0 : index
    %c0_4 = arith.constant 0 : index
    %3 = vector.load %arg3[%c0_3, %c0_4] : memref<1x128xf32, #tpu.memory_space<vmem>>, vector<1x128xf32>
    %4 = vector.broadcast %3 : vector<1x128xf32> to vector<40x128xf32>
    %5 = arith.addf %2, %4 : vector<40x128xf32>
    %c0_5 = arith.constant 0 : index
    %c0_6 = arith.constant 0 : index
    %6 = vector.load %arg4[%c0_5, %c0_6] : memref<40x128xf32, #tpu.memory_space<vmem>>, vector<40x128xf32>
    tpu.vector_store %arg4[%c0_5, %c0_6], %5 {strides = array<i32>} : memref<40x128xf32, #tpu.memory_space<vmem>>, vector<40x128xf32>,
    return
  }
  func.func @transform_0(%arg0: i32) -> (i32, i32) {
    %c0_i32 = arith.constant 0 : i32
    %c0_i32_0 = arith.constant 0 : i32
    %c0_i32_1 = arith.constant 0 : i32
    return %c0_i32, %c0_i32_0 : i32, i32
  }
  func.func @transform_1(%arg0: i32) -> (i32, i32) {
    %c0_i32 = arith.constant 0 : i32
    %c0_i32_0 = arith.constant 0 : i32
    return %c0_i32, %arg0 : i32, i32
  }
  func.func @transform_2(%arg0: i32) -> (i32, i32) {
    %c0_i32 = arith.constant 0 : i32
    %c0_i32_0 = arith.constant 0 : i32
    return %c0_i32, %arg0 : i32, i32
  }
  func.func @transform_3(%arg0: i32) -> (i32, i32) {
    %c0_i32 = arith.constant 0 : i32
    %c0_i32_0 = arith.constant 0 : i32
    return %c0_i32, %arg0 : i32, i32
  }
}

module attributes {stable_mosaic.version = 11 : i64} {
  func.func @_decoder_step_kernel(%arg0: i32, %arg1: memref<1x8x256xf32, #tpu.memory_space<vmem>>, %arg2: memref<1x8x128xf32, #tpu.memory_space<vmem>>, %arg3: memref<1x8x384xf32, #tpu.memory_space<vmem>>, %arg4: memref<8x256xf32, #tpu.memory_space<vmem>>, %arg5: memref<8x8x256xf32, #tpu.memory_space<vmem>>, %arg6: memref<8x8x256xf32, #tpu.memory_space<vmem>>, %arg7: memref<8x8xf32, #tpu.memory_space<vmem>>, %arg8: memref<256x256xf32, #tpu.memory_space<vmem>>, %arg9: memref<1x256xf32, #tpu.memory_space<vmem>>, %arg10: memref<1x256xf32, #tpu.memory_space<vmem>>, %arg11: memref<256x384xf32, #tpu.memory_space<vmem>>, %arg12: memref<1x384xf32, #tpu.memory_space<vmem>>, %arg13: memref<128x384xf32, #tpu.memory_space<vmem>>, %arg14: memref<1x384xf32, #tpu.memory_space<vmem>>, %arg15: memref<128x384xf32, #tpu.memory_space<vmem>>, %arg16: memref<1x384xf32, #tpu.memory_space<vmem>>, %arg17: memref<128x384xf32, #tpu.memory_space<vmem>>, %arg18: memref<1x384xf32, #tpu.memory_space<vmem>>, %arg19: memref<256x128xf32, #tpu.memory_space<vmem>>, %arg20: memref<1x128xf32, #tpu.memory_space<vmem>>, %arg21: memref<128x128xf32, #tpu.memory_space<vmem>>, %arg22: memref<1x128xf32, #tpu.memory_space<vmem>>, %arg23: memref<1x8x128xf32, #tpu.memory_space<vmem>>, %arg24: memref<8x256xf32, #tpu.memory_space<vmem>>) attributes {dimension_semantics = [#tpu.dimension_semantics<arbitrary>], iteration_bounds = array<i64: 5>, scalar_prefetch = 0 : i64, scratch_operands = 1 : i64, tpu.core_type = #tpu.core_type<tc>, window_params = [{transform_indices = @transform_0, window_bounds = array<i64: 1, 8, 256>}, {transform_indices = @transform_1, window_bounds = array<i64: 1, 8, 128>}, {transform_indices = @transform_2, window_bounds = array<i64: 1, 8, 384>}, {pipeline_mode = #tpu.pipeline_mode<synchronous>, transform_indices = @transform_3, window_bounds = array<i64: 8, 256>}, {pipeline_mode = #tpu.pipeline_mode<synchronous>, transform_indices = @transform_4, window_bounds = array<i64: 8, 8, 256>}, {pipeline_mode = #tpu.pipeline_mode<synchronous>, transform_indices = @transform_5, window_bounds = array<i64: 8, 8, 256>}, {pipeline_mode = #tpu.pipeline_mode<synchronous>, transform_indices = @transform_6, window_bounds = array<i64: 8, 8>}, {pipeline_mode = #tpu.pipeline_mode<synchronous>, transform_indices = @transform_7, window_bounds = array<i64: 256, 256>}, {pipeline_mode = #tpu.pipeline_mode<synchronous>, transform_indices = @transform_8, window_bounds = array<i64: 1, 256>}, {pipeline_mode = #tpu.pipeline_mode<synchronous>, transform_indices = @transform_9, window_bounds = array<i64: 1, 256>}, {pipeline_mode = #tpu.pipeline_mode<synchronous>, transform_indices = @transform_10, window_bounds = array<i64: 256, 384>}, {pipeline_mode = #tpu.pipeline_mode<synchronous>, transform_indices = @transform_11, window_bounds = array<i64: 1, 384>}, {pipeline_mode = #tpu.pipeline_mode<synchronous>, transform_indices = @transform_12, window_bounds = array<i64: 128, 384>}, {pipeline_mode = #tpu.pipeline_mode<synchronous>, transform_indices = @transform_13, window_bounds = array<i64: 1, 384>}, {pipeline_mode = #tpu.pipeline_mode<synchronous>, transform_indices = @transform_14, window_bounds = array<i64: 128, 384>}, {pipeline_mode = #tpu.pipeline_mode<synchronous>, transform_indices = @transform_15, window_bounds = array<i64: 1, 384>}, {pipeline_mode = #tpu.pipeline_mode<synchronous>, transform_indices = @transform_16, window_bounds = array<i64: 128, 384>}, {pipeline_mode = #tpu.pipeline_mode<synchronous>, transform_indices = @transform_17, window_bounds = array<i64: 1, 384>}, {pipeline_mode = #tpu.pipeline_mode<synchronous>, transform_indices = @transform_18, window_bounds = array<i64: 256, 128>}, {pipeline_mode = #tpu.pipeline_mode<synchronous>, transform_indices = @transform_19, window_bounds = array<i64: 1, 128>}, {pipeline_mode = #tpu.pipeline_mode<synchronous>, transform_indices = @transform_20, window_bounds = array<i64: 128, 128>}, {pipeline_mode = #tpu.pipeline_mode<synchronous>, transform_indices = @transform_21, window_bounds = array<i64: 1, 128>}, {transform_indices = @transform_22, window_bounds = array<i64: 1, 8, 128>}]} {
    %c0_i32 = arith.constant 0 : i32
    %0 = arith.cmpi eq, %arg0, %c0_i32 : i32
    %1 = arith.extui %0 : i1 to i32
    %c0_i32_0 = arith.constant 0 : i32
    %2 = arith.cmpi ne, %1, %c0_i32_0 : i32
    scf.if %2 {
      %c0_72 = arith.constant 0 : index
      %c0_73 = arith.constant 0 : index
      %138 = vector.load %arg4[%c0_72, %c0_73] : memref<8x256xf32, #tpu.memory_space<vmem>>, vector<8x256xf32>
      %c0_74 = arith.constant 0 : index
      %c0_75 = arith.constant 0 : index
      %139 = vector.load %arg24[%c0_74, %c0_75] : memref<8x256xf32, #tpu.memory_space<vmem>>, vector<8x256xf32>
      tpu.vector_store %arg24[%c0_74, %c0_75], %138 {strides = array<i32>} : memref<8x256xf32, #tpu.memory_space<vmem>>, vector<8x256xf32>,
    } else {
    }
    %c0 = arith.constant 0 : index
    %c0_1 = arith.constant 0 : index
    %3 = vector.load %arg24[%c0, %c0_1] : memref<8x256xf32, #tpu.memory_space<vmem>>, vector<8x256xf32>
    %4 = vector.extract_strided_slice %3 {offsets = [0, 0], sizes = [8, 128], strides = [1, 1]} : vector<8x256xf32> to vector<8x128xf32>
    %5 = vector.extract_strided_slice %3 {offsets = [0, 128], sizes = [8, 128], strides = [1, 1]} : vector<8x256xf32> to vector<8x128xf32>
    %c0_2 = arith.constant 0 : index
    %c0_3 = arith.constant 0 : index
    %6 = vector.load %arg8[%c0_2, %c0_3] : memref<256x256xf32, #tpu.memory_space<vmem>>, vector<256x256xf32>
    %cst = arith.constant dense<0.000000e+00> : vector<8x256xf32>
    %7 = tpu.matmul %3, %6, %cst {dimension_numbers = #tpu.dot_dimension_numbers<[1], [0], [0], [1], [0, 0, 1, 1], [], []>} : vector<8x256xf32>, vector<256x256xf32>, vector<8x256xf32> -> vector<8x256xf32>
    %c0_4 = arith.constant 0 : index
    %c0_5 = arith.constant 0 : index
    %8 = vector.load %arg9[%c0_4, %c0_5] : memref<1x256xf32, #tpu.memory_space<vmem>>, vector<1x256xf32>
    %9 = vector.broadcast %8 : vector<1x256xf32> to vector<8x256xf32>
    %10 = arith.addf %7, %9 : vector<8x256xf32>
    %c0_6 = arith.constant 0 : index
    %c0_7 = arith.constant 0 : index
    %c0_8 = arith.constant 0 : index
    %11 = vector.load %arg1[%c0_6, %c0_7, %c0_8] : memref<1x8x256xf32, #tpu.memory_space<vmem>>, vector<1x8x256xf32>
    %12 = vector.shape_cast %11 : vector<1x8x256xf32> to vector<8x256xf32>
    %13 = arith.addf %12, %10 : vector<8x256xf32>
    %14 = vector.shape_cast %13 : vector<8x256xf32> to vector<8x1x256xf32>
    %c0_9 = arith.constant 0 : index
    %c0_10 = arith.constant 0 : index
    %c0_11 = arith.constant 0 : index
    %15 = vector.load %arg5[%c0_9, %c0_10, %c0_11] : memref<8x8x256xf32, #tpu.memory_space<vmem>>, vector<8x8x256xf32>
    %16 = vector.broadcast %14 : vector<8x1x256xf32> to vector<8x8x256xf32>
    %17 = arith.addf %16, %15 : vector<8x8x256xf32>
    %18 = math.tanh %17 : vector<8x8x256xf32>
    %c0_12 = arith.constant 0 : index
    %c0_13 = arith.constant 0 : index
    %19 = vector.load %arg10[%c0_12, %c0_13] : memref<1x256xf32, #tpu.memory_space<vmem>>, vector<1x256xf32>
    %20 = vector.shape_cast %19 : vector<1x256xf32> to vector<1x1x256xf32>
    %21 = vector.broadcast %20 : vector<1x1x256xf32> to vector<8x8x256xf32>
    %22 = arith.mulf %18, %21 : vector<8x8x256xf32>
    %cst_14 = arith.constant dense<0.000000e+00> : vector<8x8xf32>
    %23 = vector.multi_reduction <add>, %22, %cst_14 [2] : vector<8x8x256xf32> to vector<8x8xf32>
    %c0_15 = arith.constant 0 : index
    %c0_16 = arith.constant 0 : index
    %24 = vector.load %arg7[%c0_15, %c0_16] : memref<8x8xf32, #tpu.memory_space<vmem>>, vector<8x8xf32>
    %cst_17 = arith.constant 5.000000e-01 : f32
    %25 = vector.broadcast %cst_17 : f32 to vector<8x8xf32>
    %26 = arith.cmpf ogt, %24, %25 : vector<8x8xf32>
    %cst_18 = arith.constant 0xFF800000 : f32
    %27 = vector.broadcast %cst_18 : f32 to vector<8x8xf32>
    %28 = arith.select %26, %23, %27 : vector<8x8xi1>, vector<8x8xf32>
    %cst_19 = arith.constant dense<0xFF800000> : vector<8xf32>
    %29 = vector.multi_reduction <maximumf>, %28, %cst_19 [1] : vector<8x8xf32> to vector<8xf32>
    %30 = vector.shape_cast %29 : vector<8xf32> to vector<8x1xf32>
    %31 = vector.broadcast %30 : vector<8x1xf32> to vector<8x8xf32>
    %32 = arith.subf %28, %31 : vector<8x8xf32>
    %33 = math.exp %32 : vector<8x8xf32>
    %cst_20 = arith.constant dense<0.000000e+00> : vector<8xf32>
    %34 = vector.multi_reduction <add>, %33, %cst_20 [1] : vector<8x8xf32> to vector<8xf32>
    %35 = vector.shape_cast %34 : vector<8xf32> to vector<8x1xf32>
    %36 = tpu.reciprocal %35 {approx = true} : vector<8x1xf32> -> vector<8x1xf32>
    %37 = vector.broadcast %36 : vector<8x1xf32> to vector<8x8xf32>
    %38 = arith.mulf %33, %37 : vector<8x8xf32>
    %39 = vector.shape_cast %38 : vector<8x8xf32> to vector<8x1x8xf32>
    %c0_21 = arith.constant 0 : index
    %c0_22 = arith.constant 0 : index
    %c0_23 = arith.constant 0 : index
    %40 = vector.load %arg6[%c0_21, %c0_22, %c0_23] : memref<8x8x256xf32, #tpu.memory_space<vmem>>, vector<8x8x256xf32>
    "tpu.trace_start"() <{level = 10 : i32, message = "bqs,bsd->bqd"}> : () -> ()
    %cst_24 = arith.constant dense<0.000000e+00> : vector<8x1x256xf32>
    %41 = tpu.matmul %39, %40, %cst_24 {dimension_numbers = #tpu.dot_dimension_numbers<[2], [1], [1], [2], [0, 0, 0, 1, 1, 2], [0], [0]>} : vector<8x1x8xf32>, vector<8x8x256xf32>, vector<8x1x256xf32> -> vector<8x1x256xf32>
    "tpu.trace_stop"() : () -> ()
    %42 = vector.shape_cast %41 : vector<8x1x256xf32> to vector<8x256xf32>
    %c0_25 = arith.constant 0 : index
    %c0_26 = arith.constant 0 : index
    %43 = vector.load %arg11[%c0_25, %c0_26] : memref<256x384xf32, #tpu.memory_space<vmem>>, vector<256x384xf32>
    %cst_27 = arith.constant dense<0.000000e+00> : vector<8x384xf32>
    %44 = tpu.matmul %42, %43, %cst_27 {dimension_numbers = #tpu.dot_dimension_numbers<[1], [0], [0], [1], [0, 0, 1, 1], [], []>} : vector<8x256xf32>, vector<256x384xf32>, vector<8x384xf32> -> vector<8x384xf32>
    %c0_28 = arith.constant 0 : index
    %c0_29 = arith.constant 0 : index
    %c0_30 = arith.constant 0 : index
    %45 = vector.load %arg3[%c0_28, %c0_29, %c0_30] : memref<1x8x384xf32, #tpu.memory_space<vmem>>, vector<1x8x384xf32>
    %46 = vector.shape_cast %45 : vector<1x8x384xf32> to vector<8x384xf32>
    %47 = arith.addf %44, %46 : vector<8x384xf32>
    %c0_31 = arith.constant 0 : index
    %c0_32 = arith.constant 0 : index
    %48 = vector.load %arg12[%c0_31, %c0_32] : memref<1x384xf32, #tpu.memory_space<vmem>>, vector<1x384xf32>
    %49 = vector.broadcast %48 : vector<1x384xf32> to vector<8x384xf32>
    %50 = arith.addf %47, %49 : vector<8x384xf32>
    %c0_33 = arith.constant 0 : index
    %c0_34 = arith.constant 0 : index
    %51 = vector.load %arg13[%c0_33, %c0_34] : memref<128x384xf32, #tpu.memory_space<vmem>>, vector<128x384xf32>
    %cst_35 = arith.constant dense<0.000000e+00> : vector<8x384xf32>
    %52 = tpu.matmul %4, %51, %cst_35 {dimension_numbers = #tpu.dot_dimension_numbers<[1], [0], [0], [1], [0, 0, 1, 1], [], []>} : vector<8x128xf32>, vector<128x384xf32>, vector<8x384xf32> -> vector<8x384xf32>
    %c0_36 = arith.constant 0 : index
    %c0_37 = arith.constant 0 : index
    %53 = vector.load %arg14[%c0_36, %c0_37] : memref<1x384xf32, #tpu.memory_space<vmem>>, vector<1x384xf32>
    %54 = vector.broadcast %53 : vector<1x384xf32> to vector<8x384xf32>
    %55 = arith.addf %52, %54 : vector<8x384xf32>
    %56 = vector.extract_strided_slice %50 {offsets = [0, 0], sizes = [8, 128], strides = [1, 1]} : vector<8x384xf32> to vector<8x128xf32>
    %57 = vector.extract_strided_slice %55 {offsets = [0, 0], sizes = [8, 128], strides = [1, 1]} : vector<8x384xf32> to vector<8x128xf32>
    %58 = arith.addf %56, %57 : vector<8x128xf32>
    %59 = arith.negf %58 : vector<8x128xf32>
    %60 = math.exp %59 : vector<8x128xf32>
    %cst_38 = arith.constant 1.000000e+00 : f32
    %61 = vector.broadcast %cst_38 : f32 to vector<8x128xf32>
    %62 = arith.addf %61, %60 : vector<8x128xf32>
    %63 = arith.divf %61, %62 : vector<8x128xf32>
    %64 = vector.extract_strided_slice %50 {offsets = [0, 128], sizes = [8, 128], strides = [1, 1]} : vector<8x384xf32> to vector<8x128xf32>
    %65 = vector.extract_strided_slice %55 {offsets = [0, 128], sizes = [8, 128], strides = [1, 1]} : vector<8x384xf32> to vector<8x128xf32>
    %66 = arith.addf %64, %65 : vector<8x128xf32>
    %67 = arith.negf %66 : vector<8x128xf32>
    %68 = math.exp %67 : vector<8x128xf32>
    %cst_39 = arith.constant 1.000000e+00 : f32
    %69 = vector.broadcast %cst_39 : f32 to vector<8x128xf32>
    %70 = arith.addf %69, %68 : vector<8x128xf32>
    %71 = arith.divf %69, %70 : vector<8x128xf32>
    %72 = vector.extract_strided_slice %50 {offsets = [0, 256], sizes = [8, 128], strides = [1, 1]} : vector<8x384xf32> to vector<8x128xf32>
    %73 = vector.extract_strided_slice %55 {offsets = [0, 256], sizes = [8, 128], strides = [1, 1]} : vector<8x384xf32> to vector<8x128xf32>
    %74 = arith.mulf %63, %73 : vector<8x128xf32>
    %75 = arith.addf %72, %74 : vector<8x128xf32>
    %76 = math.tanh %75 : vector<8x128xf32>
    %cst_40 = arith.constant 1.000000e+00 : f32
    %77 = vector.broadcast %cst_40 : f32 to vector<8x128xf32>
    %78 = arith.subf %77, %71 : vector<8x128xf32>
    %79 = arith.mulf %78, %76 : vector<8x128xf32>
    %80 = arith.mulf %71, %4 : vector<8x128xf32>
    %81 = arith.addf %79, %80 : vector<8x128xf32>
    %c0_41 = arith.constant 0 : index
    %c0_42 = arith.constant 0 : index
    %82 = vector.load %arg15[%c0_41, %c0_42] : memref<128x384xf32, #tpu.memory_space<vmem>>, vector<128x384xf32>
    %cst_43 = arith.constant dense<0.000000e+00> : vector<8x384xf32>
    %83 = tpu.matmul %81, %82, %cst_43 {dimension_numbers = #tpu.dot_dimension_numbers<[1], [0], [0], [1], [0, 0, 1, 1], [], []>} : vector<8x128xf32>, vector<128x384xf32>, vector<8x384xf32> -> vector<8x384xf32>
    %c0_44 = arith.constant 0 : index
    %c0_45 = arith.constant 0 : index
    %84 = vector.load %arg16[%c0_44, %c0_45] : memref<1x384xf32, #tpu.memory_space<vmem>>, vector<1x384xf32>
    %85 = vector.broadcast %84 : vector<1x384xf32> to vector<8x384xf32>
    %86 = arith.addf %83, %85 : vector<8x384xf32>
    %c0_46 = arith.constant 0 : index
    %c0_47 = arith.constant 0 : index
    %87 = vector.load %arg17[%c0_46, %c0_47] : memref<128x384xf32, #tpu.memory_space<vmem>>, vector<128x384xf32>
    %cst_48 = arith.constant dense<0.000000e+00> : vector<8x384xf32>
    %88 = tpu.matmul %5, %87, %cst_48 {dimension_numbers = #tpu.dot_dimension_numbers<[1], [0], [0], [1], [0, 0, 1, 1], [], []>} : vector<8x128xf32>, vector<128x384xf32>, vector<8x384xf32> -> vector<8x384xf32>
    %c0_49 = arith.constant 0 : index
    %c0_50 = arith.constant 0 : index
    %89 = vector.load %arg18[%c0_49, %c0_50] : memref<1x384xf32, #tpu.memory_space<vmem>>, vector<1x384xf32>
    %90 = vector.broadcast %89 : vector<1x384xf32> to vector<8x384xf32>
    %91 = arith.addf %88, %90 : vector<8x384xf32>
    %92 = vector.extract_strided_slice %86 {offsets = [0, 0], sizes = [8, 128], strides = [1, 1]} : vector<8x384xf32> to vector<8x128xf32>
    %93 = vector.extract_strided_slice %91 {offsets = [0, 0], sizes = [8, 128], strides = [1, 1]} : vector<8x384xf32> to vector<8x128xf32>
    %94 = arith.addf %92, %93 : vector<8x128xf32>
    %95 = arith.negf %94 : vector<8x128xf32>
    %96 = math.exp %95 : vector<8x128xf32>
    %cst_51 = arith.constant 1.000000e+00 : f32
    %97 = vector.broadcast %cst_51 : f32 to vector<8x128xf32>
    %98 = arith.addf %97, %96 : vector<8x128xf32>
    %99 = arith.divf %97, %98 : vector<8x128xf32>
    %100 = vector.extract_strided_slice %86 {offsets = [0, 128], sizes = [8, 128], strides = [1, 1]} : vector<8x384xf32> to vector<8x128xf32>
    %101 = vector.extract_strided_slice %91 {offsets = [0, 128], sizes = [8, 128], strides = [1, 1]} : vector<8x384xf32> to vector<8x128xf32>
    %102 = arith.addf %100, %101 : vector<8x128xf32>
    %103 = arith.negf %102 : vector<8x128xf32>
    %104 = math.exp %103 : vector<8x128xf32>
    %cst_52 = arith.constant 1.000000e+00 : f32
    %105 = vector.broadcast %cst_52 : f32 to vector<8x128xf32>
    %106 = arith.addf %105, %104 : vector<8x128xf32>
    %107 = arith.divf %105, %106 : vector<8x128xf32>
    %108 = vector.extract_strided_slice %86 {offsets = [0, 256], sizes = [8, 128], strides = [1, 1]} : vector<8x384xf32> to vector<8x128xf32>
    %109 = vector.extract_strided_slice %91 {offsets = [0, 256], sizes = [8, 128], strides = [1, 1]} : vector<8x384xf32> to vector<8x128xf32>
    %110 = arith.mulf %99, %109 : vector<8x128xf32>
    %111 = arith.addf %108, %110 : vector<8x128xf32>
    %112 = math.tanh %111 : vector<8x128xf32>
    %cst_53 = arith.constant 1.000000e+00 : f32
    %113 = vector.broadcast %cst_53 : f32 to vector<8x128xf32>
    %114 = arith.subf %113, %107 : vector<8x128xf32>
    %115 = arith.mulf %114, %112 : vector<8x128xf32>
    %116 = arith.mulf %107, %5 : vector<8x128xf32>
    %117 = arith.addf %115, %116 : vector<8x128xf32>
    %c0_54 = arith.constant 0 : index
    %c0_55 = arith.constant 0 : index
    %118 = vector.load %arg19[%c0_54, %c0_55] : memref<256x128xf32, #tpu.memory_space<vmem>>, vector<256x128xf32>
    %cst_56 = arith.constant dense<0.000000e+00> : vector<8x128xf32>
    %119 = tpu.matmul %42, %118, %cst_56 {dimension_numbers = #tpu.dot_dimension_numbers<[1], [0], [0], [1], [0, 0, 1, 1], [], []>} : vector<8x256xf32>, vector<256x128xf32>, vector<8x128xf32> -> vector<8x128xf32>
    %c0_57 = arith.constant 0 : index
    %c0_58 = arith.constant 0 : index
    %120 = vector.load %arg20[%c0_57, %c0_58] : memref<1x128xf32, #tpu.memory_space<vmem>>, vector<1x128xf32>
    %121 = vector.broadcast %120 : vector<1x128xf32> to vector<8x128xf32>
    %122 = arith.addf %119, %121 : vector<8x128xf32>
    %c0_59 = arith.constant 0 : index
    %c0_60 = arith.constant 0 : index
    %123 = vector.load %arg21[%c0_59, %c0_60] : memref<128x128xf32, #tpu.memory_space<vmem>>, vector<128x128xf32>
    %cst_61 = arith.constant dense<0.000000e+00> : vector<8x128xf32>
    %124 = tpu.matmul %117, %123, %cst_61 {dimension_numbers = #tpu.dot_dimension_numbers<[1], [0], [0], [1], [0, 0, 1, 1], [], []>} : vector<8x128xf32>, vector<128x128xf32>, vector<8x128xf32> -> vector<8x128xf32>
    %c0_62 = arith.constant 0 : index
    %c0_63 = arith.constant 0 : index
    %125 = vector.load %arg22[%c0_62, %c0_63] : memref<1x128xf32, #tpu.memory_space<vmem>>, vector<1x128xf32>
    %126 = vector.broadcast %125 : vector<1x128xf32> to vector<8x128xf32>
    %127 = arith.addf %124, %126 : vector<8x128xf32>
    %c0_64 = arith.constant 0 : index
    %c0_65 = arith.constant 0 : index
    %c0_66 = arith.constant 0 : index
    %128 = vector.load %arg2[%c0_64, %c0_65, %c0_66] : memref<1x8x128xf32, #tpu.memory_space<vmem>>, vector<1x8x128xf32>
    %129 = vector.shape_cast %128 : vector<1x8x128xf32> to vector<8x128xf32>
    %130 = arith.addf %129, %122 : vector<8x128xf32>
    %131 = arith.addf %130, %127 : vector<8x128xf32>
    %132 = math.tanh %131 : vector<8x128xf32>
    %c0_67 = arith.constant 0 : index
    %c0_68 = arith.constant 0 : index
    %c0_69 = arith.constant 0 : index
    %133 = vector.load %arg23[%c0_67, %c0_68, %c0_69] : memref<1x8x128xf32, #tpu.memory_space<vmem>>, vector<1x8x128xf32>
    %134 = vector.shape_cast %133 : vector<1x8x128xf32> to vector<8x128xf32>
    %135 = vector.shape_cast %132 : vector<8x128xf32> to vector<1x8x128xf32>
    tpu.vector_store %arg23[%c0_67, %c0_68, %c0_69], %135 {strides = array<i32>} : memref<1x8x128xf32, #tpu.memory_space<vmem>>, vector<1x8x128xf32>,
    %136 = tpu.concatenate %81, %117 in 1 : vector<8x128xf32>, vector<8x128xf32> -> vector<8x256xf32>
    %c0_70 = arith.constant 0 : index
    %c0_71 = arith.constant 0 : index
    %137 = vector.load %arg24[%c0_70, %c0_71] : memref<8x256xf32, #tpu.memory_space<vmem>>, vector<8x256xf32>
    tpu.vector_store %arg24[%c0_70, %c0_71], %136 {strides = array<i32>} : memref<8x256xf32, #tpu.memory_space<vmem>>, vector<8x256xf32>,
    return
  }
  func.func @transform_0(%arg0: i32) -> (i32, i32, i32) {
    %c0_i32 = arith.constant 0 : i32
    %c0_i32_0 = arith.constant 0 : i32
    %c0_i32_1 = arith.constant 0 : i32
    return %arg0, %c0_i32, %c0_i32_0 : i32, i32, i32
  }
  func.func @transform_1(%arg0: i32) -> (i32, i32, i32) {
    %c0_i32 = arith.constant 0 : i32
    %c0_i32_0 = arith.constant 0 : i32
    %c0_i32_1 = arith.constant 0 : i32
    return %arg0, %c0_i32, %c0_i32_0 : i32, i32, i32
  }
  func.func @transform_2(%arg0: i32) -> (i32, i32, i32) {
    %c0_i32 = arith.constant 0 : i32
    %c0_i32_0 = arith.constant 0 : i32
    %c0_i32_1 = arith.constant 0 : i32
    return %arg0, %c0_i32, %c0_i32_0 : i32, i32, i32
  }
  func.func @transform_3(%arg0: i32) -> (i32, i32) {
    %c0_i32 = arith.constant 0 : i32
    %c0_i32_0 = arith.constant 0 : i32
    %c0_i32_1 = arith.constant 0 : i32
    return %c0_i32, %c0_i32_0 : i32, i32
  }
  func.func @transform_4(%arg0: i32) -> (i32, i32, i32) {
    %c0_i32 = arith.constant 0 : i32
    %c0_i32_0 = arith.constant 0 : i32
    %c0_i32_1 = arith.constant 0 : i32
    %c0_i32_2 = arith.constant 0 : i32
    return %c0_i32, %c0_i32_0, %c0_i32_1 : i32, i32, i32
  }
  func.func @transform_5(%arg0: i32) -> (i32, i32, i32) {
    %c0_i32 = arith.constant 0 : i32
    %c0_i32_0 = arith.constant 0 : i32
    %c0_i32_1 = arith.constant 0 : i32
    %c0_i32_2 = arith.constant 0 : i32
    return %c0_i32, %c0_i32_0, %c0_i32_1 : i32, i32, i32
  }
  func.func @transform_6(%arg0: i32) -> (i32, i32) {
    %c0_i32 = arith.constant 0 : i32
    %c0_i32_0 = arith.constant 0 : i32
    %c0_i32_1 = arith.constant 0 : i32
    return %c0_i32, %c0_i32_0 : i32, i32
  }
  func.func @transform_7(%arg0: i32) -> (i32, i32) {
    %c0_i32 = arith.constant 0 : i32
    %c0_i32_0 = arith.constant 0 : i32
    %c0_i32_1 = arith.constant 0 : i32
    return %c0_i32, %c0_i32_0 : i32, i32
  }
  func.func @transform_8(%arg0: i32) -> (i32, i32) {
    %c0_i32 = arith.constant 0 : i32
    %c0_i32_0 = arith.constant 0 : i32
    %c0_i32_1 = arith.constant 0 : i32
    return %c0_i32, %c0_i32_0 : i32, i32
  }
  func.func @transform_9(%arg0: i32) -> (i32, i32) {
    %c0_i32 = arith.constant 0 : i32
    %c0_i32_0 = arith.constant 0 : i32
    %c0_i32_1 = arith.constant 0 : i32
    return %c0_i32, %c0_i32_0 : i32, i32
  }
  func.func @transform_10(%arg0: i32) -> (i32, i32) {
    %c0_i32 = arith.constant 0 : i32
    %c0_i32_0 = arith.constant 0 : i32
    %c0_i32_1 = arith.constant 0 : i32
    return %c0_i32, %c0_i32_0 : i32, i32
  }
  func.func @transform_11(%arg0: i32) -> (i32, i32) {
    %c0_i32 = arith.constant 0 : i32
    %c0_i32_0 = arith.constant 0 : i32
    %c0_i32_1 = arith.constant 0 : i32
    return %c0_i32, %c0_i32_0 : i32, i32
  }
  func.func @transform_12(%arg0: i32) -> (i32, i32) {
    %c0_i32 = arith.constant 0 : i32
    %c0_i32_0 = arith.constant 0 : i32
    %c0_i32_1 = arith.constant 0 : i32
    return %c0_i32, %c0_i32_0 : i32, i32
  }
  func.func @transform_13(%arg0: i32) -> (i32, i32) {
    %c0_i32 = arith.constant 0 : i32
    %c0_i32_0 = arith.constant 0 : i32
    %c0_i32_1 = arith.constant 0 : i32
    return %c0_i32, %c0_i32_0 : i32, i32
  }
  func.func @transform_14(%arg0: i32) -> (i32, i32) {
    %c0_i32 = arith.constant 0 : i32
    %c0_i32_0 = arith.constant 0 : i32
    %c0_i32_1 = arith.constant 0 : i32
    return %c0_i32, %c0_i32_0 : i32, i32
  }
  func.func @transform_15(%arg0: i32) -> (i32, i32) {
    %c0_i32 = arith.constant 0 : i32
    %c0_i32_0 = arith.constant 0 : i32
    %c0_i32_1 = arith.constant 0 : i32
    return %c0_i32, %c0_i32_0 : i32, i32
  }
  func.func @transform_16(%arg0: i32) -> (i32, i32) {
    %c0_i32 = arith.constant 0 : i32
    %c0_i32_0 = arith.constant 0 : i32
    %c0_i32_1 = arith.constant 0 : i32
    return %c0_i32, %c0_i32_0 : i32, i32
  }
  func.func @transform_17(%arg0: i32) -> (i32, i32) {
    %c0_i32 = arith.constant 0 : i32
    %c0_i32_0 = arith.constant 0 : i32
    %c0_i32_1 = arith.constant 0 : i32
    return %c0_i32, %c0_i32_0 : i32, i32
  }
  func.func @transform_18(%arg0: i32) -> (i32, i32) {
    %c0_i32 = arith.constant 0 : i32
    %c0_i32_0 = arith.constant 0 : i32
    %c0_i32_1 = arith.constant 0 : i32
    return %c0_i32, %c0_i32_0 : i32, i32
  }
  func.func @transform_19(%arg0: i32) -> (i32, i32) {
    %c0_i32 = arith.constant 0 : i32
    %c0_i32_0 = arith.constant 0 : i32
    %c0_i32_1 = arith.constant 0 : i32
    return %c0_i32, %c0_i32_0 : i32, i32
  }
  func.func @transform_20(%arg0: i32) -> (i32, i32) {
    %c0_i32 = arith.constant 0 : i32
    %c0_i32_0 = arith.constant 0 : i32
    %c0_i32_1 = arith.constant 0 : i32
    return %c0_i32, %c0_i32_0 : i32, i32
  }
  func.func @transform_21(%arg0: i32) -> (i32, i32) {
    %c0_i32 = arith.constant 0 : i32
    %c0_i32_0 = arith.constant 0 : i32
    %c0_i32_1 = arith.constant 0 : i32
    return %c0_i32, %c0_i32_0 : i32, i32
  }
  func.func @transform_22(%arg0: i32) -> (i32, i32, i32) {
    %c0_i32 = arith.constant 0 : i32
    %c0_i32_0 = arith.constant 0 : i32
    %c0_i32_1 = arith.constant 0 : i32
    return %arg0, %c0_i32, %c0_i32_0 : i32, i32, i32
  }
}

module attributes {stable_mosaic.version = 11 : i64} {
  func.func @_mm_kernel(%arg0: i32, %arg1: memref<40x128xf32, #tpu.memory_space<vmem>>, %arg2: memref<128x128xf32, #tpu.memory_space<vmem>>, %arg3: memref<40x128xf32, #tpu.memory_space<vmem>>) attributes {dimension_semantics = [#tpu.dimension_semantics<parallel>], iteration_bounds = array<i64: 1>, scalar_prefetch = 0 : i64, scratch_operands = 0 : i64, tpu.core_type = #tpu.core_type<tc>, window_params = [{pipeline_mode = #tpu.pipeline_mode<synchronous>, transform_indices = @transform_0, window_bounds = array<i64: 40, 128>}, {transform_indices = @transform_1, window_bounds = array<i64: 128, 128>}, {transform_indices = @transform_2, window_bounds = array<i64: 40, 128>}]} {
    %c0 = arith.constant 0 : index
    %c0_0 = arith.constant 0 : index
    %0 = vector.load %arg1[%c0, %c0_0] : memref<40x128xf32, #tpu.memory_space<vmem>>, vector<40x128xf32>
    %c0_1 = arith.constant 0 : index
    %c0_2 = arith.constant 0 : index
    %1 = vector.load %arg2[%c0_1, %c0_2] : memref<128x128xf32, #tpu.memory_space<vmem>>, vector<128x128xf32>
    %cst = arith.constant dense<0.000000e+00> : vector<40x128xf32>
    %2 = tpu.matmul %0, %1, %cst {dimension_numbers = #tpu.dot_dimension_numbers<[1], [0], [0], [1], [0, 0, 1, 1], [], []>} : vector<40x128xf32>, vector<128x128xf32>, vector<40x128xf32> -> vector<40x128xf32>
    %c0_3 = arith.constant 0 : index
    %c0_4 = arith.constant 0 : index
    %3 = vector.load %arg3[%c0_3, %c0_4] : memref<40x128xf32, #tpu.memory_space<vmem>>, vector<40x128xf32>
    tpu.vector_store %arg3[%c0_3, %c0_4], %2 {strides = array<i32>} : memref<40x128xf32, #tpu.memory_space<vmem>>, vector<40x128xf32>,
    return
  }
  func.func @transform_0(%arg0: i32) -> (i32, i32) {
    %c0_i32 = arith.constant 0 : i32
    %c0_i32_0 = arith.constant 0 : i32
    %c0_i32_1 = arith.constant 0 : i32
    return %c0_i32, %c0_i32_0 : i32, i32
  }
  func.func @transform_1(%arg0: i32) -> (i32, i32) {
    %c0_i32 = arith.constant 0 : i32
    %c0_i32_0 = arith.constant 0 : i32
    return %c0_i32, %arg0 : i32, i32
  }
  func.func @transform_2(%arg0: i32) -> (i32, i32) {
    %c0_i32 = arith.constant 0 : i32
    %c0_i32_0 = arith.constant 0 : i32
    return %c0_i32, %arg0 : i32, i32
  }
}

</mosaic_0001>

<llo_original>
// kernel: nmt_forward.14
$region0: #{nmt_forward.14}
  #allocation0 [shape = 'u32[]', space=smem, size = 0x4, offset = 0x4, fixed_abs, tag = 'smem constant byte address 0x4 - core index']
  #allocation1 [shape = 'u32[144,128]{1,0:T(1,128)}', space=vmem, size = 0x12000, scoped, tag = 'internal scratch']
  %s0 = inlined_call_operand.vmem [shape: f32[64,128], index: 0, kind: input, shape index: {}]
  %s1 = inlined_call_operand.vmem [shape: f32[128,384], index: 1, kind: input, shape index: {}]
  %s2 = inlined_call_operand.vmem [shape: f32[1,384], index: 2, kind: input, shape index: {}]
  %s3 = inlined_call_operand.vmem [shape: f32[64,384], index: 3, kind: output, shape index: {}]
  %s4 = sld [smem:[#allocation0]]
  $region22: #{nmt_forward.14} parent=0
    _
  %s6 = ssub.s32 1, %s4
  %s7 = scalar_select 0, %s6, %s4
  // Predicated region
  $region2: #{nmt_forward.14} parent=0 // pred_check
    _
  $region3: #{nmt_forward.14} parent=0 // pred_check_branch
    %9 = sbr.rel (0) target = $region5
  $region4: #{nmt_forward.14} parent=0 // pred_region
    _
  $region5: #{nmt_forward.14} parent=0 // pred_fallthru
    _
  // Predicated region
  $region6: #{nmt_forward.14} parent=0 // pred_check
    _
  $region7: #{nmt_forward.14} parent=0 // pred_check_branch
    %11 = sbr.rel (0) target = $region9
  $region8: #{nmt_forward.14} parent=0 // pred_region
    _
  $region9: #{nmt_forward.14} parent=0 // pred_fallthru
    _
  // Predicated region
  $region10: #{nmt_forward.14} parent=0 // pred_check
    _
  $region11: #{nmt_forward.14} parent=0 // pred_check_branch
    %13 = sbr.rel (0) target = $region13
  $region12: #{nmt_forward.14} parent=0 // pred_region
    _
  $region13: #{nmt_forward.14} parent=0 // pred_fallthru
    _
  %v14 = vld [vmem:[%s0] sm:$0xff]
  %v15 = vld [vmem:[%s0 + $0x8] sm:$0xff]
  %v16 = vld [vmem:[%s0 + $0x10] sm:$0xff]
  %v17 = vld [vmem:[%s0 + $0x18] sm:$0xff]
  %v18 = vld [vmem:[%s0 + $0x20] sm:$0xff]
  %v19 = vld [vmem:[%s0 + $0x28] sm:$0xff]
  %v20 = vld [vmem:[%s0 + $0x30] sm:$0xff]
  %v21 = vld [vmem:[%s0 + $0x38] sm:$0xff]
  %v22 = vld [vmem:[%s1] sm:$0xff]
  %v23 = vld [vmem:[%s1 + $0x8] sm:$0xff]
  %v24 = vld [vmem:[%s1 + $0x10] sm:$0xff]
  %v25 = vld [vmem:[%s1 + $0x18] sm:$0xff]
  %v26 = vld [vmem:[%s1 + $0x20] sm:$0xff]
  %v27 = vld [vmem:[%s1 + $0x28] sm:$0xff]
  %v28 = vld [vmem:[%s1 + $0x30] sm:$0xff]
  %v29 = vld [vmem:[%s1 + $0x38] sm:$0xff]
  %v30 = vld [vmem:[%s1 + $0x40] sm:$0xff]
  %v31 = vld [vmem:[%s1 + $0x48] sm:$0xff]
  %v32 = vld [vmem:[%s1 + $0x50] sm:$0xff]
  %v33 = vld [vmem:[%s1 + $0x58] sm:$0xff]
  %v34 = vld [vmem:[%s1 + $0x60] sm:$0xff]
  %v35 = vld [vmem:[%s1 + $0x68] sm:$0xff]
  %v36 = vld [vmem:[%s1 + $0x70] sm:$0xff]
  %v37 = vld [vmem:[%s1 + $0x78] sm:$0xff]
  %v38 = vld [vmem:[%s1 + $0x80] sm:$0xff]
  %v39 = vld [vmem:[%s1 + $0x88] sm:$0xff]
  %v40 = vld [vmem:[%s1 + $0x90] sm:$0xff]
  %v41 = vld [vmem:[%s1 + $0x98] sm:$0xff]
  %v42 = vld [vmem:[%s1 + $0xa0] sm:$0xff]
  %v43 = vld [vmem:[%s1 + $0xa8] sm:$0xff]
  %v44 = vld [vmem:[%s1 + $0xb0] sm:$0xff]
  %v45 = vld [vmem:[%s1 + $0xb8] sm:$0xff]
  %v46 = vld [vmem:[%s1 + $0xc0] sm:$0xff]
  %v47 = vld [vmem:[%s1 + $0xc8] sm:$0xff]
  %v48 = vld [vmem:[%s1 + $0xd0] sm:$0xff]
  %v49 = vld [vmem:[%s1 + $0xd8] sm:$0xff]
  %v50 = vld [vmem:[%s1 + $0xe0] sm:$0xff]
  %v51 = vld [vmem:[%s1 + $0xe8] sm:$0xff]
  %v52 = vld [vmem:[%s1 + $0xf0] sm:$0xff]
  %v53 = vld [vmem:[%s1 + $0xf8] sm:$0xff]
  %v54 = vld [vmem:[%s1 + $0x100] sm:$0xff]
  %v55 = vld [vmem:[%s1 + $0x108] sm:$0xff]
  %v56 = vld [vmem:[%s1 + $0x110] sm:$0xff]
  %v57 = vld [vmem:[%s1 + $0x118] sm:$0xff]
  %v58 = vld [vmem:[%s1 + $0x120] sm:$0xff]
  %v59 = vld [vmem:[%s1 + $0x128] sm:$0xff]
  %v60 = vld [vmem:[%s1 + $0x130] sm:$0xff]
  %v61 = vld [vmem:[%s1 + $0x138] sm:$0xff]
  %v62 = vld [vmem:[%s1 + $0x140] sm:$0xff]
  %v63 = vld [vmem:[%s1 + $0x148] sm:$0xff]
  %v64 = vld [vmem:[%s1 + $0x150] sm:$0xff]
  %v65 = vld [vmem:[%s1 + $0x158] sm:$0xff]
  %v66 = vld [vmem:[%s1 + $0x160] sm:$0xff]
  %v67 = vld [vmem:[%s1 + $0x168] sm:$0xff]
  %v68 = vld [vmem:[%s1 + $0x170] sm:$0xff]
  %v69 = vld [vmem:[%s1 + $0x178] sm:$0xff]
  %v70 = vld [vmem:[%s2] sm:$0x7]
  %v72 = vlaneseq
  %v73 = vshrl.u32 %v72, 7
  %v74 = vsub.s32 0, %v73
  %v75 = vrot.slane %v70, %v74
  %v76 = vlaneseq
  %v77 = vshrl.u32 %v76, 7
  %v78 = vsub.s32 1, %v77
  %v79 = vrot.slane %v70, %v78
  %v80 = vlaneseq
  %v81 = vshrl.u32 %v80, 7
  %v82 = vsub.s32 2, %v81
  %v83 = vrot.slane %v70, %v82
  %87 = vmatprep.subr.mxu0 %v68
  %88 = vmatpush1.msra.mxu0 %v67
  %89 = vmatprep.subr.mxu0 %v65
  %90 = vmatpush1.msra.mxu0 %v64
  %91 = vmatprep.subr.mxu0 %v62
  %92 = vmatpush1.msra.mxu0 %v61
  %93 = vmatprep.subr.mxu0 %v59
  %94 = vmatpush1.msra.mxu0 %v58
  %95 = vmatprep.subr.mxu0 %v56
  %96 = vmatpush1.msra.mxu0 %v55
  %97 = vmatprep.subr.mxu0 %v53
  %98 = vmatpush1.msra.mxu0 %v52
  %99 = vmatprep.subr.mxu0 %v50
  %100 = vmatpush1.msra.mxu0 %v49
  %101 = vmatprep.subr.mxu0 %v47
  %102 = vmatpush1.msra.mxu0 %v46
  %103 = vmatprep.subr.mxu0 %v44
  %104 = vmatpush1.msra.mxu0 %v43
  %105 = vmatprep.subr.mxu0 %v41
  %106 = vmatpush1.msra.mxu0 %v40
  %107 = vmatprep.subr.mxu0 %v38
  %108 = vmatpush1.msra.mxu0 %v37
  %109 = vmatprep.subr.mxu0 %v35
  %110 = vmatpush1.msra.mxu0 %v34
  %111 = vmatprep.subr.mxu0 %v32
  %112 = vmatpush1.msra.mxu0 %v31
  %113 = vmatprep.subr.mxu0 %v29
  %114 = vmatpush1.msra.mxu0 %v28
  %115 = vmatprep.subr.mxu0 %v26
  %116 = vmatpush1.msra.mxu0 %v25
  %117 = vmatprep.subr.mxu0 %v23
  %118 = vmatpush1.msra.mxu0 %v22
  %119 = vmatprep.subr.mxu0 0.0
  %120 = vmatpush2.msra.mxu0 0.0
  %121 = vmatprep.subr.mxu0 0.0
  %122 = vmatpush2.msra.mxu0 0.0
  %123 = vmatprep.subr.mxu0 0.0
  %124 = vmatpush2.msra.mxu0 0.0
  %125 = vmatprep.subr.mxu0 0.0
  %126 = vmatpush2.msra.mxu0 0.0
  %127 = vmatprep.subr.mxu0 0.0
  %128 = vmatpush2.msra.mxu0 0.0
  %129 = vmatprep.subr.mxu0 0.0
  %130 = vmatpush2.msra.mxu0 0.0
  %131 = vmatprep.subr.mxu0 0.0
  %132 = vmatpush2.msra.mxu0 0.0
  %133 = vmatprep.subr.mxu0 0.0
  %134 = vmatpush2.msra.mxu0 0.0
  %135 = vmatprep.subr.mxu0 0.0
  %136 = vmatpush2.msra.mxu0 0.0
  %137 = vmatprep.subr.mxu0 0.0
  %138 = vmatpush2.msra.mxu0 0.0
  %139 = vmatprep.subr.mxu0 0.0
  %140 = vmatpush2.msra.mxu0 0.0
  %141 = vmatprep.subr.mxu0 0.0
  %142 = vmatpush2.msra.mxu0 0.0
  %143 = vmatprep.subr.mxu0 0.0
  %144 = vmatpush2.msra.mxu0 0.0
  %145 = vmatprep.subr.mxu0 0.0
  %146 = vmatpush2.msra.mxu0 0.0
  %147 = vmatprep.subr.mxu0 0.0
  %148 = vmatpush2.msra.mxu0 0.0
  %149 = vmatprep.subr.mxu0 0.0
  %150 = vmatpush2.msra.mxu0 0.0
  %151 = vmatprep.mubr.f32.mxu0 0.0
  %152 = vmatmul.mubr.f32.gmra.mxu0 %v14
  %v153 = vpop.f32.mrf.mxu0
  %v154 = vadd.f32 %v75, %v153
  %v155 = vpop.f32.mrf.mxu0
  %v156 = vadd.f32 %v79, %v155
  %157 = vmatprep.mubr.f32.mxu0 0.0
  %158 = vmatmul.mubr.f32.gmra.mxu0 %v15
  %v159 = vpop.f32.mrf.mxu0
  %v160 = vadd.f32 %v75, %v159
  %v161 = vpop.f32.mrf.mxu0
  %v162 = vadd.f32 %v79, %v161
  %163 = vmatprep.mubr.f32.mxu0 0.0
  %164 = vmatmul.mubr.f32.gmra.mxu0 %v16
  %v165 = vpop.f32.mrf.mxu0
  %v166 = vadd.f32 %v75, %v165
  %v167 = vpop.f32.mrf.mxu0
  %v168 = vadd.f32 %v79, %v167
  %169 = vmatprep.mubr.f32.mxu0 0.0
  %170 = vmatmul.mubr.f32.gmra.mxu0 %v17
  %v171 = vpop.f32.mrf.mxu0
  %v172 = vadd.f32 %v75, %v171
  %v173 = vpop.f32.mrf.mxu0
  %v174 = vadd.f32 %v79, %v173
  %175 = vmatprep.mubr.f32.mxu0 0.0
  %176 = vmatmul.mubr.f32.gmra.mxu0 %v18
  %v177 = vpop.f32.mrf.mxu0
  %v178 = vadd.f32 %v75, %v177
  %v179 = vpop.f32.mrf.mxu0
  %v180 = vadd.f32 %v79, %v179
  %181 = vmatprep.mubr.f32.mxu0 0.0
  %182 = vmatmul.mubr.f32.gmra.mxu0 %v19
  %v183 = vpop.f32.mrf.mxu0
  %v184 = vadd.f32 %v75, %v183
  %v185 = vpop.f32.mrf.mxu0
  %v186 = vadd.f32 %v79, %v185
  %187 = vmatprep.mubr.f32.mxu0 0.0
  %188 = vmatmul.mubr.f32.gmra.mxu0 %v20
  %v189 = vpop.f32.mrf.mxu0
  %v190 = vadd.f32 %v75, %v189
  %v191 = vpop.f32.mrf.mxu0
  %v192 = vadd.f32 %v79, %v191
  %193 = vmatprep.mubr.f32.mxu0 0.0
  %194 = vmatmul.mubr.f32.gmra.mxu0 %v21
  %v195 = vpop.f32.mrf.mxu0
  %v196 = vadd.f32 %v75, %v195
  %v197 = vpop.f32.mrf.mxu0
  %v198 = vadd.f32 %v79, %v197
  %199 = vdwg.mxu0
  %200 = vmatprep.subr.mxu0 0.0
  %201 = vmatpush1.msra.mxu0 %v69
  %202 = vmatprep.subr.mxu0 0.0
  %203 = vmatpush1.msra.mxu0 %v66
  %204 = vmatprep.subr.mxu0 0.0
  %205 = vmatpush1.msra.mxu0 %v63
  %206 = vmatprep.subr.mxu0 0.0
  %207 = vmatpush1.msra.mxu0 %v60
  %208 = vmatprep.subr.mxu0 0.0
  %209 = vmatpush1.msra.mxu0 %v57
  %210 = vmatprep.subr.mxu0 0.0
  %211 = vmatpush1.msra.mxu0 %v54
  %212 = vmatprep.subr.mxu0 0.0
  %213 = vmatpush1.msra.mxu0 %v51
  %214 = vmatprep.subr.mxu0 0.0
  %215 = vmatpush1.msra.mxu0 %v48
  %216 = vmatprep.subr.mxu0 0.0
  %217 = vmatpush1.msra.mxu0 %v45
  %218 = vmatprep.subr.mxu0 0.0
  %219 = vmatpush1.msra.mxu0 %v42
  %220 = vmatprep.subr.mxu0 0.0
  %221 = vmatpush1.msra.mxu0 %v39
  %222 = vmatprep.subr.mxu0 0.0
  %223 = vmatpush1.msra.mxu0 %v36
  %224 = vmatprep.subr.mxu0 0.0
  %225 = vmatpush1.msra.mxu0 %v33
  %226 = vmatprep.subr.mxu0 0.0
  %227 = vmatpush1.msra.mxu0 %v30
  %228 = vmatprep.subr.mxu0 0.0
  %229 = vmatpush1.msra.mxu0 %v27
  %230 = vmatprep.subr.mxu0 0.0
  %231 = vmatpush1.msra.mxu0 %v24
  %232 = vmatprep.subr.mxu0 0.0
  %233 = vmatpush2.msra.mxu0 0.0
  %234 = vmatprep.subr.mxu0 0.0
  %235 = vmatpush2.msra.mxu0 0.0
  %236 = vmatprep.subr.mxu0 0.0
  %237 = vmatpush2.msra.mxu0 0.0
  %238 = vmatprep.subr.mxu0 0.0
  %239 = vmatpush2.msra.mxu0 0.0
  %240 = vmatprep.subr.mxu0 0.0
  %241 = vmatpush2.msra.mxu0 0.0
  %242 = vmatprep.subr.mxu0 0.0
  %243 = vmatpush2.msra.mxu0 0.0
  %244 = vmatprep.subr.mxu0 0.0
  %245 = vmatpush2.msra.mxu0 0.0
  %246 = vmatprep.subr.mxu0 0.0
  %247 = vmatpush2.msra.mxu0 0.0
  %248 = vmatprep.subr.mxu0 0.0
  %249 = vmatpush2.msra.mxu0 0.0
  %250 = vmatprep.subr.mxu0 0.0
  %251 = vmatpush2.msra.mxu0 0.0
  %252 = vmatprep.subr.mxu0 0.0
  %253 = vmatpush2.msra.mxu0 0.0
  %254 = vmatprep.subr.mxu0 0.0
  %255 = vmatpush2.msra.mxu0 0.0
  %256 = vmatprep.subr.mxu0 0.0
  %257 = vmatpush2.msra.mxu0 0.0
  %258 = vmatprep.subr.mxu0 0.0
  %259 = vmatpush2.msra.mxu0 0.0
  %260 = vmatprep.subr.mxu0 0.0
  %261 = vmatpush2.msra.mxu0 0.0
  %262 = vmatprep.subr.mxu0 0.0
  %263 = vmatpush2.msra.mxu0 0.0
  %264 = vmatprep.mubr.f32.mxu0 0.0
  %265 = vmatmul.mubr.f32.gmra.mxu0 %v14
  %v266 = vpop.f32.mrf.mxu0
  %v267 = vadd.f32 %v83, %v266
  %v268 = vpop.f32.mrf.mxu0
  %269 = vmatprep.mubr.f32.mxu0 0.0
  %270 = vmatmul.mubr.f32.gmra.mxu0 %v15
  %v271 = vpop.f32.mrf.mxu0
  %v272 = vadd.f32 %v83, %v271
  %v273 = vpop.f32.mrf.mxu0
  %274 = vmatprep.mubr.f32.mxu0 0.0
  %275 = vmatmul.mubr.f32.gmra.mxu0 %v16
  %v276 = vpop.f32.mrf.mxu0
  %v277 = vadd.f32 %v83, %v276
  %v278 = vpop.f32.mrf.mxu0
  %279 = vmatprep.mubr.f32.mxu0 0.0
  %280 = vmatmul.mubr.f32.gmra.mxu0 %v17
  %v281 = vpop.f32.mrf.mxu0
  %v282 = vadd.f32 %v83, %v281
  %v283 = vpop.f32.mrf.mxu0
  %284 = vmatprep.mubr.f32.mxu0 0.0
  %285 = vmatmul.mubr.f32.gmra.mxu0 %v18
  %v286 = vpop.f32.mrf.mxu0
  %v287 = vadd.f32 %v83, %v286
  %v288 = vpop.f32.mrf.mxu0
  %289 = vmatprep.mubr.f32.mxu0 0.0
  %290 = vmatmul.mubr.f32.gmra.mxu0 %v19
  %v291 = vpop.f32.mrf.mxu0
  %v292 = vadd.f32 %v83, %v291
  %v293 = vpop.f32.mrf.mxu0
  %294 = vmatprep.mubr.f32.mxu0 0.0
  %295 = vmatmul.mubr.f32.gmra.mxu0 %v20
  %v296 = vpop.f32.mrf.mxu0
  %v297 = vadd.f32 %v83, %v296
  %v298 = vpop.f32.mrf.mxu0
  %299 = vmatprep.mubr.f32.mxu0 0.0
  %300 = vmatmul.mubr.f32.gmra.mxu0 %v21
  %v301 = vpop.f32.mrf.mxu0
  %v302 = vadd.f32 %v83, %v301
  %v303 = vpop.f32.mrf.mxu0
  %304 = vdwg.mxu0
  %305 = vst [vmem:[%s3] sm:$0xff] %v154
  %306 = vst [vmem:[%s3 + $0x8] sm:$0xff] %v156
  %307 = vst [vmem:[%s3 + $0x10] sm:$0xff] %v267
  %308 = vst [vmem:[%s3 + $0x18] sm:$0xff] %v160
  %309 = vst [vmem:[%s3 + $0x20] sm:$0xff] %v162
  %310 = vst [vmem:[%s3 + $0x28] sm:$0xff] %v272
  %311 = vst [vmem:[%s3 + $0x30] sm:$0xff] %v166
  %312 = vst [vmem:[%s3 + $0x38] sm:$0xff] %v168
  %313 = vst [vmem:[%s3 + $0x40] sm:$0xff] %v277
  %314 = vst [vmem:[%s3 + $0x48] sm:$0xff] %v172
  %315 = vst [vmem:[%s3 + $0x50] sm:$0xff] %v174
  %316 = vst [vmem:[%s3 + $0x58] sm:$0xff] %v282
  %317 = vst [vmem:[%s3 + $0x60] sm:$0xff] %v178
  %318 = vst [vmem:[%s3 + $0x68] sm:$0xff] %v180
  %319 = vst [vmem:[%s3 + $0x70] sm:$0xff] %v287
  %320 = vst [vmem:[%s3 + $0x78] sm:$0xff] %v184
  %321 = vst [vmem:[%s3 + $0x80] sm:$0xff] %v186
  %322 = vst [vmem:[%s3 + $0x88] sm:$0xff] %v292
  %323 = vst [vmem:[%s3 + $0x90] sm:$0xff] %v190
  %324 = vst [vmem:[%s3 + $0x98] sm:$0xff] %v192
  %325 = vst [vmem:[%s3 + $0xa0] sm:$0xff] %v297
  %326 = vst [vmem:[%s3 + $0xa8] sm:$0xff] %v196
  %327 = vst [vmem:[%s3 + $0xb0] sm:$0xff] %v198
  %328 = vst [vmem:[%s3 + $0xb8] sm:$0xff] %v302
  // Predicated region
  $region14: #{nmt_forward.14} parent=0 // pred_check
    _
  $region15: #{nmt_forward.14} parent=0 // pred_check_branch
    %330 = sbr.rel (0) target = $region17
  $region16: #{nmt_forward.14} parent=0 // pred_region
    _
  $region17: #{nmt_forward.14} parent=0 // pred_fallthru
    _
  // Predicated region
  $region18: #{nmt_forward.14} parent=0 // pred_check
    _
  $region19: #{nmt_forward.14} parent=0 // pred_check_branch
    %332 = sbr.rel (0) target = $region21
  $region20: #{nmt_forward.14} parent=0 // pred_region
    _
  $region21: #{nmt_forward.14} parent=0 // pred_fallthru
    _

// kernel: nmt_forward.17
$region0: #{nmt_forward.17}
  #allocation0 [shape = 'u32[]', space=smem, size = 0x4, offset = 0x4, fixed_abs, tag = 'smem constant byte address 0x4 - core index']
  #allocation1 [shape = 'u32[144,128]{1,0:T(1,128)}', space=vmem, size = 0x12000, scoped, tag = 'internal scratch']
  %s0 = inlined_call_operand.vmem [shape: f32[64,256], index: 0, kind: input, shape index: {}]
  %s1 = inlined_call_operand.vmem [shape: f32[256,384], index: 1, kind: input, shape index: {}]
  %s2 = inlined_call_operand.vmem [shape: f32[1,384], index: 2, kind: input, shape index: {}]
  %s3 = inlined_call_operand.vmem [shape: f32[64,384], index: 3, kind: output, shape index: {}]
  %s4 = sld [smem:[#allocation0]]
  $region22: #{nmt_forward.17} parent=0
    _
  %s6 = ssub.s32 1, %s4
  %s7 = scalar_select 0, %s6, %s4
  // Predicated region
  $region2: #{nmt_forward.17} parent=0 // pred_check
    _
  $region3: #{nmt_forward.17} parent=0 // pred_check_branch
    %9 = sbr.rel (0) target = $region5
  $region4: #{nmt_forward.17} parent=0 // pred_region
    _
  $region5: #{nmt_forward.17} parent=0 // pred_fallthru
    _
  // Predicated region
  $region6: #{nmt_forward.17} parent=0 // pred_check
    _
  $region7: #{nmt_forward.17} parent=0 // pred_check_branch
    %11 = sbr.rel (0) target = $region9
  $region8: #{nmt_forward.17} parent=0 // pred_region
    _
  $region9: #{nmt_forward.17} parent=0 // pred_fallthru
    _
  // Predicated region
  $region10: #{nmt_forward.17} parent=0 // pred_check
    _
  $region11: #{nmt_forward.17} parent=0 // pred_check_branch
    %13 = sbr.rel (0) target = $region13
  $region12: #{nmt_forward.17} parent=0 // pred_region
    _
  $region13: #{nmt_forward.17} parent=0 // pred_fallthru
    _
  %v14 = vld [vmem:[%s0] sm:$0xff]
  %v15 = vld [vmem:[%s0 + $0x8] sm:$0xff]
  %v16 = vld [vmem:[%s0 + $0x10] sm:$0xff]
  %v17 = vld [vmem:[%s0 + $0x18] sm:$0xff]
  %v18 = vld [vmem:[%s0 + $0x20] sm:$0xff]
  %v19 = vld [vmem:[%s0 + $0x28] sm:$0xff]
  %v20 = vld [vmem:[%s0 + $0x30] sm:$0xff]
  %v21 = vld [vmem:[%s0 + $0x38] sm:$0xff]
  %v22 = vld [vmem:[%s0 + $0x40] sm:$0xff]
  %v23 = vld [vmem:[%s0 + $0x48] sm:$0xff]
  %v24 = vld [vmem:[%s0 + $0x50] sm:$0xff]
  %v25 = vld [vmem:[%s0 + $0x58] sm:$0xff]
  %v26 = vld [vmem:[%s0 + $0x60] sm:$0xff]
  %v27 = vld [vmem:[%s0 + $0x68] sm:$0xff]
  %v28 = vld [vmem:[%s0 + $0x70] sm:$0xff]
  %v29 = vld [vmem:[%s0 + $0x78] sm:$0xff]
  %v30 = vld [vmem:[%s1] sm:$0xff]
  %v31 = vld [vmem:[%s1 + $0x8] sm:$0xff]
  %v32 = vld [vmem:[%s1 + $0x10] sm:$0xff]
  %v33 = vld [vmem:[%s1 + $0x18] sm:$0xff]
  %v34 = vld [vmem:[%s1 + $0x20] sm:$0xff]
  %v35 = vld [vmem:[%s1 + $0x28] sm:$0xff]
  %v36 = vld [vmem:[%s1 + $0x30] sm:$0xff]
  %v37 = vld [vmem:[%s1 + $0x38] sm:$0xff]
  %v38 = vld [vmem:[%s1 + $0x40] sm:$0xff]
  %v39 = vld [vmem:[%s1 + $0x48] sm:$0xff]
  %v40 = vld [vmem:[%s1 + $0x50] sm:$0xff]
  %v41 = vld [vmem:[%s1 + $0x58] sm:$0xff]
  %v42 = vld [vmem:[%s1 + $0x60] sm:$0xff]
  %v43 = vld [vmem:[%s1 + $0x68] sm:$0xff]
  %v44 = vld [vmem:[%s1 + $0x70] sm:$0xff]
  %v45 = vld [vmem:[%s1 + $0x78] sm:$0xff]
  %v46 = vld [vmem:[%s1 + $0x80] sm:$0xff]
  %v47 = vld [vmem:[%s1 + $0x88] sm:$0xff]
  %v48 = vld [vmem:[%s1 + $0x90] sm:$0xff]
  %v49 = vld [vmem:[%s1 + $0x98] sm:$0xff]
  %v50 = vld [vmem:[%s1 + $0xa0] sm:$0xff]
  %v51 = vld [vmem:[%s1 + $0xa8] sm:$0xff]
  %v52 = vld [vmem:[%s1 + $0xb0] sm:$0xff]
  %v53 = vld [vmem:[%s1 + $0xb8] sm:$0xff]
  %v54 = vld [vmem:[%s1 + $0xc0] sm:$0xff]
  %v55 = vld [vmem:[%s1 + $0xc8] sm:$0xff]
  %v56 = vld [vmem:[%s1 + $0xd0] sm:$0xff]
  %v57 = vld [vmem:[%s1 + $0xd8] sm:$0xff]
  %v58 = vld [vmem:[%s1 + $0xe0] sm:$0xff]
  %v59 = vld [vmem:[%s1 + $0xe8] sm:$0xff]
  %v60 = vld [vmem:[%s1 + $0xf0] sm:$0xff]
  %v61 = vld [vmem:[%s1 + $0xf8] sm:$0xff]
  %v62 = vld [vmem:[%s1 + $0x100] sm:$0xff]
  %v63 = vld [vmem:[%s1 + $0x108] sm:$0xff]
  %v64 = vld [vmem:[%s1 + $0x110] sm:$0xff]
  %v65 = vld [vmem:[%s1 + $0x118] sm:$0xff]
  %v66 = vld [vmem:[%s1 + $0x120] sm:$0xff]
  %v67 = vld [vmem:[%s1 + $0x128] sm:$0xff]
  %v68 = vld [vmem:[%s1 + $0x130] sm:$0xff]
  %v69 = vld [vmem:[%s1 + $0x138] sm:$0xff]
  %v70 = vld [vmem:[%s1 + $0x140] sm:$0xff]
  %v71 = vld [vmem:[%s1 + $0x148] sm:$0xff]
  %v72 = vld [vmem:[%s1 + $0x150] sm:$0xff]
  %v73 = vld [vmem:[%s1 + $0x158] sm:$0xff]
  %v74 = vld [vmem:[%s1 + $0x160] sm:$0xff]
  %v75 = vld [vmem:[%s1 + $0x168] sm:$0xff]
  %v76 = vld [vmem:[%s1 + $0x170] sm:$0xff]
  %v77 = vld [vmem:[%s1 + $0x178] sm:$0xff]
  %v78 = vld [vmem:[%s1 + $0x180] sm:$0xff]
  %v79 = vld [vmem:[%s1 + $0x188] sm:$0xff]
  %v80 = vld [vmem:[%s1 + $0x190] sm:$0xff]
  %v81 = vld [vmem:[%s1 + $0x198] sm:$0xff]
  %v82 = vld [vmem:[%s1 + $0x1a0] sm:$0xff]
  %v83 = vld [vmem:[%s1 + $0x1a8] sm:$0xff]
  %v84 = vld [vmem:[%s1 + $0x1b0] sm:$0xff]
  %v85 = vld [vmem:[%s1 + $0x1b8] sm:$0xff]
  %v86 = vld [vmem:[%s1 + $0x1c0] sm:$0xff]
  %v87 = vld [vmem:[%s1 + $0x1c8] sm:$0xff]
  %v88 = vld [vmem:[%s1 + $0x1d0] sm:$0xff]
  %v89 = vld [vmem:[%s1 + $0x1d8] sm:$0xff]
  %v90 = vld [vmem:[%s1 + $0x1e0] sm:$0xff]
  %v91 = vld [vmem:[%s1 + $0x1e8] sm:$0xff]
  %v92 = vld [vmem:[%s1 + $0x1f0] sm:$0xff]
  %v93 = vld [vmem:[%s1 + $0x1f8] sm:$0xff]
  %v94 = vld [vmem:[%s1 + $0x200] sm:$0xff]
  %v95 = vld [vmem:[%s1 + $0x208] sm:$0xff]
  %v96 = vld [vmem:[%s1 + $0x210] sm:$0xff]
  %v97 = vld [vmem:[%s1 + $0x218] sm:$0xff]
  %v98 = vld [vmem:[%s1 + $0x220] sm:$0xff]
  %v99 = vld [vmem:[%s1 + $0x228] sm:$0xff]
  %v100 = vld [vmem:[%s1 + $0x230] sm:$0xff]
  %v101 = vld [vmem:[%s1 + $0x238] sm:$0xff]
  %v102 = vld [vmem:[%s1 + $0x240] sm:$0xff]
  %v103 = vld [vmem:[%s1 + $0x248] sm:$0xff]
  %v104 = vld [vmem:[%s1 + $0x250] sm:$0xff]
  %v105 = vld [vmem:[%s1 + $0x258] sm:$0xff]
  %v106 = vld [vmem:[%s1 + $0x260] sm:$0xff]
  %v107 = vld [vmem:[%s1 + $0x268] sm:$0xff]
  %v108 = vld [vmem:[%s1 + $0x270] sm:$0xff]
  %v109 = vld [vmem:[%s1 + $0x278] sm:$0xff]
  %v110 = vld [vmem:[%s1 + $0x280] sm:$0xff]
  %v111 = vld [vmem:[%s1 + $0x288] sm:$0xff]
  %v112 = vld [vmem:[%s1 + $0x290] sm:$0xff]
  %v113 = vld [vmem:[%s1 + $0x298] sm:$0xff]
  %v114 = vld [vmem:[%s1 + $0x2a0] sm:$0xff]
  %v115 = vld [vmem:[%s1 + $0x2a8] sm:$0xff]
  %v116 = vld [vmem:[%s1 + $0x2b0] sm:$0xff]
  %v117 = vld [vmem:[%s1 + $0x2b8] sm:$0xff]
  %v118 = vld [vmem:[%s1 + $0x2c0] sm:$0xff]
  %v119 = vld [vmem:[%s1 + $0x2c8] sm:$0xff]
  %v120 = vld [vmem:[%s1 + $0x2d0] sm:$0xff]
  %v121 = vld [vmem:[%s1 + $0x2d8] sm:$0xff]
  %v122 = vld [vmem:[%s1 + $0x2e0] sm:$0xff]
  %v123 = vld [vmem:[%s1 + $0x2e8] sm:$0xff]
  %v124 = vld [vmem:[%s1 + $0x2f0] sm:$0xff]
  %v125 = vld [vmem:[%s1 + $0x2f8] sm:$0xff]
  %v126 = vld [vmem:[%s2] sm:$0x7]
  %v128 = vlaneseq
  %v129 = vshrl.u32 %v128, 7
  %v130 = vsub.s32 0, %v129
  %v131 = vrot.slane %v126, %v130
  %v132 = vlaneseq
  %v133 = vshrl.u32 %v132, 7
  %v134 = vsub.s32 1, %v133
  %v135 = vrot.slane %v126, %v134
  %v136 = vlaneseq
  %v137 = vshrl.u32 %v136, 7
  %v138 = vsub.s32 2, %v137
  %v139 = vrot.slane %v126, %v138
  %143 = vmatprep.subr.mxu0 %v76
  %144 = vmatpush1.msra.mxu0 %v75
  %145 = vmatprep.subr.mxu0 %v73
  %146 = vmatpush1.msra.mxu0 %v72
  %147 = vmatprep.subr.mxu0 %v70
  %148 = vmatpush1.msra.mxu0 %v69
  %149 = vmatprep.subr.mxu0 %v67
  %150 = vmatpush1.msra.mxu0 %v66
  %151 = vmatprep.subr.mxu0 %v64
  %152 = vmatpush1.msra.mxu0 %v63
  %153 = vmatprep.subr.mxu0 %v61
  %154 = vmatpush1.msra.mxu0 %v60
  %155 = vmatprep.subr.mxu0 %v58
  %156 = vmatpush1.msra.mxu0 %v57
  %157 = vmatprep.subr.mxu0 %v55
  %158 = vmatpush1.msra.mxu0 %v54
  %159 = vmatprep.subr.mxu0 %v52
  %160 = vmatpush1.msra.mxu0 %v51
  %161 = vmatprep.subr.mxu0 %v49
  %162 = vmatpush1.msra.mxu0 %v48
  %163 = vmatprep.subr.mxu0 %v46
  %164 = vmatpush1.msra.mxu0 %v45
  %165 = vmatprep.subr.mxu0 %v43
  %166 = vmatpush1.msra.mxu0 %v42
  %167 = vmatprep.subr.mxu0 %v40
  %168 = vmatpush1.msra.mxu0 %v39
  %169 = vmatprep.subr.mxu0 %v37
  %170 = vmatpush1.msra.mxu0 %v36
  %171 = vmatprep.subr.mxu0 %v34
  %172 = vmatpush1.msra.mxu0 %v33
  %173 = vmatprep.subr.mxu0 %v31
  %174 = vmatpush1.msra.mxu0 %v30
  %175 = vmatprep.subr.mxu0 %v124
  %176 = vmatpush2.msra.mxu0 %v123
  %177 = vmatprep.subr.mxu0 %v121
  %178 = vmatpush2.msra.mxu0 %v120
  %179 = vmatprep.subr.mxu0 %v118
  %180 = vmatpush2.msra.mxu0 %v117
  %181 = vmatprep.subr.mxu0 %v115
  %182 = vmatpush2.msra.mxu0 %v114
  %183 = vmatprep.subr.mxu0 %v112
  %184 = vmatpush2.msra.mxu0 %v111
  %185 = vmatprep.subr.mxu0 %v109
  %186 = vmatpush2.msra.mxu0 %v108
  %187 = vmatprep.subr.mxu0 %v106
  %188 = vmatpush2.msra.mxu0 %v105
  %189 = vmatprep.subr.mxu0 %v103
  %190 = vmatpush2.msra.mxu0 %v102
  %191 = vmatprep.subr.mxu0 %v100
  %192 = vmatpush2.msra.mxu0 %v99
  %193 = vmatprep.subr.mxu0 %v97
  %194 = vmatpush2.msra.mxu0 %v96
  %195 = vmatprep.subr.mxu0 %v94
  %196 = vmatpush2.msra.mxu0 %v93
  %197 = vmatprep.subr.mxu0 %v91
  %198 = vmatpush2.msra.mxu0 %v90
  %199 = vmatprep.subr.mxu0 %v88
  %200 = vmatpush2.msra.mxu0 %v87
  %201 = vmatprep.subr.mxu0 %v85
  %202 = vmatpush2.msra.mxu0 %v84
  %203 = vmatprep.subr.mxu0 %v82
  %204 = vmatpush2.msra.mxu0 %v81
  %205 = vmatprep.subr.mxu0 %v79
  %206 = vmatpush2.msra.mxu0 %v78
  %207 = vmatprep.mubr.f32.mxu0 %v15
  %208 = vmatmul.mubr.f32.gmra.mxu0 %v14
  %v209 = vpop.f32.mrf.mxu0
  %v210 = vadd.f32 %v131, %v209
  %v211 = vpop.f32.mrf.mxu0
  %v212 = vadd.f32 %v135, %v211
  %213 = vmatprep.mubr.f32.mxu0 %v17
  %214 = vmatmul.mubr.f32.gmra.mxu0 %v16
  %v215 = vpop.f32.mrf.mxu0
  %v216 = vadd.f32 %v131, %v215
  %v217 = vpop.f32.mrf.mxu0
  %v218 = vadd.f32 %v135, %v217
  %219 = vmatprep.mubr.f32.mxu0 %v19
  %220 = vmatmul.mubr.f32.gmra.mxu0 %v18
  %v221 = vpop.f32.mrf.mxu0
  %v222 = vadd.f32 %v131, %v221
  %v223 = vpop.f32.mrf.mxu0
  %v224 = vadd.f32 %v135, %v223
  %225 = vmatprep.mubr.f32.mxu0 %v21
  %226 = vmatmul.mubr.f32.gmra.mxu0 %v20
  %v227 = vpop.f32.mrf.mxu0
  %v228 = vadd.f32 %v131, %v227
  %v229 = vpop.f32.mrf.mxu0
  %v230 = vadd.f32 %v135, %v229
  %231 = vmatprep.mubr.f32.mxu0 %v23
  %232 = vmatmul.mubr.f32.gmra.mxu0 %v22
  %v233 = vpop.f32.mrf.mxu0
  %v234 = vadd.f32 %v131, %v233
  %v235 = vpop.f32.mrf.mxu0
  %v236 = vadd.f32 %v135, %v235
  %237 = vmatprep.mubr.f32.mxu0 %v25
  %238 = vmatmul.mubr.f32.gmra.mxu0 %v24
  %v239 = vpop.f32.mrf.mxu0
  %v240 = vadd.f32 %v131, %v239
  %v241 = vpop.f32.mrf.mxu0
  %v242 = vadd.f32 %v135, %v241
  %243 = vmatprep.mubr.f32.mxu0 %v27
  %244 = vmatmul.mubr.f32.gmra.mxu0 %v26
  %v245 = vpop.f32.mrf.mxu0
  %v246 = vadd.f32 %v131, %v245
  %v247 = vpop.f32.mrf.mxu0
  %v248 = vadd.f32 %v135, %v247
  %249 = vmatprep.mubr.f32.mxu0 %v29
  %250 = vmatmul.mubr.f32.gmra.mxu0 %v28
  %v251 = vpop.f32.mrf.mxu0
  %v252 = vadd.f32 %v131, %v251
  %v253 = vpop.f32.mrf.mxu0
  %v254 = vadd.f32 %v135, %v253
  %255 = vdwg.mxu0
  %256 = vmatprep.subr.mxu0 0.0
  %257 = vmatpush1.msra.mxu0 %v77
  %258 = vmatprep.subr.mxu0 0.0
  %259 = vmatpush1.msra.mxu0 %v74
  %260 = vmatprep.subr.mxu0 0.0
  %261 = vmatpush1.msra.mxu0 %v71
  %262 = vmatprep.subr.mxu0 0.0
  %263 = vmatpush1.msra.mxu0 %v68
  %264 = vmatprep.subr.mxu0 0.0
  %265 = vmatpush1.msra.mxu0 %v65
  %266 = vmatprep.subr.mxu0 0.0
  %267 = vmatpush1.msra.mxu0 %v62
  %268 = vmatprep.subr.mxu0 0.0
  %269 = vmatpush1.msra.mxu0 %v59
  %270 = vmatprep.subr.mxu0 0.0
  %271 = vmatpush1.msra.mxu0 %v56
  %272 = vmatprep.subr.mxu0 0.0
  %273 = vmatpush1.msra.mxu0 %v53
  %274 = vmatprep.subr.mxu0 0.0
  %275 = vmatpush1.msra.mxu0 %v50
  %276 = vmatprep.subr.mxu0 0.0
  %277 = vmatpush1.msra.mxu0 %v47
  %278 = vmatprep.subr.mxu0 0.0
  %279 = vmatpush1.msra.mxu0 %v44
  %280 = vmatprep.subr.mxu0 0.0
  %281 = vmatpush1.msra.mxu0 %v41
  %282 = vmatprep.subr.mxu0 0.0
  %283 = vmatpush1.msra.mxu0 %v38
  %284 = vmatprep.subr.mxu0 0.0
  %285 = vmatpush1.msra.mxu0 %v35
  %286 = vmatprep.subr.mxu0 0.0
  %287 = vmatpush1.msra.mxu0 %v32
  %288 = vmatprep.subr.mxu0 0.0
  %289 = vmatpush2.msra.mxu0 %v125
  %290 = vmatprep.subr.mxu0 0.0
  %291 = vmatpush2.msra.mxu0 %v122
  %292 = vmatprep.subr.mxu0 0.0
  %293 = vmatpush2.msra.mxu0 %v119
  %294 = vmatprep.subr.mxu0 0.0
  %295 = vmatpush2.msra.mxu0 %v116
  %296 = vmatprep.subr.mxu0 0.0
  %297 = vmatpush2.msra.mxu0 %v113
  %298 = vmatprep.subr.mxu0 0.0
  %299 = vmatpush2.msra.mxu0 %v110
  %300 = vmatprep.subr.mxu0 0.0
  %301 = vmatpush2.msra.mxu0 %v107
  %302 = vmatprep.subr.mxu0 0.0
  %303 = vmatpush2.msra.mxu0 %v104
  %304 = vmatprep.subr.mxu0 0.0
  %305 = vmatpush2.msra.mxu0 %v101
  %306 = vmatprep.subr.mxu0 0.0
  %307 = vmatpush2.msra.mxu0 %v98
  %308 = vmatprep.subr.mxu0 0.0
  %309 = vmatpush2.msra.mxu0 %v95
  %310 = vmatprep.subr.mxu0 0.0
  %311 = vmatpush2.msra.mxu0 %v92
  %312 = vmatprep.subr.mxu0 0.0
  %313 = vmatpush2.msra.mxu0 %v89
  %314 = vmatprep.subr.mxu0 0.0
  %315 = vmatpush2.msra.mxu0 %v86
  %316 = vmatprep.subr.mxu0 0.0
  %317 = vmatpush2.msra.mxu0 %v83
  %318 = vmatprep.subr.mxu0 0.0
  %319 = vmatpush2.msra.mxu0 %v80
  %320 = vmatprep.mubr.f32.mxu0 %v15
  %321 = vmatmul.mubr.f32.gmra.mxu0 %v14
  %v322 = vpop.f32.mrf.mxu0
  %v323 = vadd.f32 %v139, %v322
  %v324 = vpop.f32.mrf.mxu0
  %325 = vmatprep.mubr.f32.mxu0 %v17
  %326 = vmatmul.mubr.f32.gmra.mxu0 %v16
  %v327 = vpop.f32.mrf.mxu0
  %v328 = vadd.f32 %v139, %v327
  %v329 = vpop.f32.mrf.mxu0
  %330 = vmatprep.mubr.f32.mxu0 %v19
  %331 = vmatmul.mubr.f32.gmra.mxu0 %v18
  %v332 = vpop.f32.mrf.mxu0
  %v333 = vadd.f32 %v139, %v332
  %v334 = vpop.f32.mrf.mxu0
  %335 = vmatprep.mubr.f32.mxu0 %v21
  %336 = vmatmul.mubr.f32.gmra.mxu0 %v20
  %v337 = vpop.f32.mrf.mxu0
  %v338 = vadd.f32 %v139, %v337
  %v339 = vpop.f32.mrf.mxu0
  %340 = vmatprep.mubr.f32.mxu0 %v23
  %341 = vmatmul.mubr.f32.gmra.mxu0 %v22
  %v342 = vpop.f32.mrf.mxu0
  %v343 = vadd.f32 %v139, %v342
  %v344 = vpop.f32.mrf.mxu0
  %345 = vmatprep.mubr.f32.mxu0 %v25
  %346 = vmatmul.mubr.f32.gmra.mxu0 %v24
  %v347 = vpop.f32.mrf.mxu0
  %v348 = vadd.f32 %v139, %v347
  %v349 = vpop.f32.mrf.mxu0
  %350 = vmatprep.mubr.f32.mxu0 %v27
  %351 = vmatmul.mubr.f32.gmra.mxu0 %v26
  %v352 = vpop.f32.mrf.mxu0
  %v353 = vadd.f32 %v139, %v352
  %v354 = vpop.f32.mrf.mxu0
  %355 = vmatprep.mubr.f32.mxu0 %v29
  %356 = vmatmul.mubr.f32.gmra.mxu0 %v28
  %v357 = vpop.f32.mrf.mxu0
  %v358 = vadd.f32 %v139, %v357
  %v359 = vpop.f32.mrf.mxu0
  %360 = vdwg.mxu0
  %361 = vst [vmem:[%s3] sm:$0xff] %v210
  %362 = vst [vmem:[%s3 + $0x8] sm:$0xff] %v212
  %363 = vst [vmem:[%s3 + $0x10] sm:$0xff] %v323
  %364 = vst [vmem:[%s3 + $0x18] sm:$0xff] %v216
  %365 = vst [vmem:[%s3 + $0x20] sm:$0xff] %v218
  %366 = vst [vmem:[%s3 + $0x28] sm:$0xff] %v328
  %367 = vst [vmem:[%s3 + $0x30] sm:$0xff] %v222
  %368 = vst [vmem:[%s3 + $0x38] sm:$0xff] %v224
  %369 = vst [vmem:[%s3 + $0x40] sm:$0xff] %v333
  %370 = vst [vmem:[%s3 + $0x48] sm:$0xff] %v228
  %371 = vst [vmem:[%s3 + $0x50] sm:$0xff] %v230
  %372 = vst [vmem:[%s3 + $0x58] sm:$0xff] %v338
  %373 = vst [vmem:[%s3 + $0x60] sm:$0xff] %v234
  %374 = vst [vmem:[%s3 + $0x68] sm:$0xff] %v236
  %375 = vst [vmem:[%s3 + $0x70] sm:$0xff] %v343
  %376 = vst [vmem:[%s3 + $0x78] sm:$0xff] %v240
  %377 = vst [vmem:[%s3 + $0x80] sm:$0xff] %v242
  %378 = vst [vmem:[%s3 + $0x88] sm:$0xff] %v348
  %379 = vst [vmem:[%s3 + $0x90] sm:$0xff] %v246
  %380 = vst [vmem:[%s3 + $0x98] sm:$0xff] %v248
  %381 = vst [vmem:[%s3 + $0xa0] sm:$0xff] %v353
  %382 = vst [vmem:[%s3 + $0xa8] sm:$0xff] %v252
  %383 = vst [vmem:[%s3 + $0xb0] sm:$0xff] %v254
  %384 = vst [vmem:[%s3 + $0xb8] sm:$0xff] %v358
  // Predicated region
  $region14: #{nmt_forward.17} parent=0 // pred_check
    _
  $region15: #{nmt_forward.17} parent=0 // pred_check_branch
    %386 = sbr.rel (0) target = $region17
  $region16: #{nmt_forward.17} parent=0 // pred_region
    _
  $region17: #{nmt_forward.17} parent=0 // pred_fallthru
    _
  // Predicated region
  $region18: #{nmt_forward.17} parent=0 // pred_check
    _
  $region19: #{nmt_forward.17} parent=0 // pred_check_branch
    %388 = sbr.rel (0) target = $region21
  $region20: #{nmt_forward.17} parent=0 // pred_region
    _
  $region21: #{nmt_forward.17} parent=0 // pred_fallthru
    _

// kernel: nmt_forward.15
$region0: #{nmt_forward.15}
  #allocation0 [shape = 'u32[]', space=smem, size = 0x4, offset = 0x4, fixed_abs, tag = 'smem constant byte address 0x4 - core index']
  #allocation1 [shape = 'u32[144,128]{1,0:T(1,128)}', space=vmem, size = 0x12000, scoped, tag = 'internal scratch']
  #allocation2 [shape = 'f32[16,128]{1,0:T(8,128)}', space=vmem, size = 0x2000, scoped, tag = 'scratch operand']
  %s0 = inlined_call_operand.vmem [shape: f32[8,16,384], index: 0, kind: input, shape index: {}]
  %s1 = inlined_call_operand.vmem [shape: f32[8,16,1], index: 1, kind: input, shape index: {}]
  %s2 = inlined_call_operand.vmem [shape: f32[128,384], index: 2, kind: input, shape index: {}]
  %s3 = inlined_call_operand.vmem [shape: f32[128,384], index: 3, kind: input, shape index: {}]
  %s4 = inlined_call_operand.vmem [shape: f32[1,384], index: 4, kind: input, shape index: {}]
  %s5 = inlined_call_operand.vmem [shape: f32[1,384], index: 5, kind: input, shape index: {}]
  %s6 = inlined_call_operand.vmem [shape: f32[8,16,128], index: 6, kind: output, shape index: {}]
  %s7 = sld [smem:[#allocation0]]
  $region61: #{nmt_forward.15} parent=0
    _
  %s9 = ssub.s32 1, %s7
  %s10 = scalar_select 0, %s9, %s7
  loop: start=0, step=1, limit=10
  $region2: #{nmt_forward.15} parent=0 // loop_pre_header
    _
  $region3: #{nmt_forward.15} parent=0 // loop_header
    %s12 = sphi 0, %s16
    %p13 = scmp.ge.s32.totalorder %s12, 10
    %s22 = sphi 0, %s24
    %s25 = sphi 0, %s22
    %s26 = sphi 0, %s25
    %s42 = sphi 0, %s26
    %s48 = sphi 0, %s50
    %s51 = sphi 0, %s48
    %s52 = sphi 0, %s51
    %s68 = sphi 0, %s52
    %s72 = sphi 0, %s72
    %s74 = sphi 0, %s72
    %s75 = sphi 0, %s74
    %s89 = sphi 0, %s75
    %s93 = sphi 0, %s93
    %s95 = sphi 0, %s93
    %s96 = sphi 0, %s95
    %s110 = sphi 0, %s96
    %s114 = sphi 0, %s114
    %s116 = sphi 0, %s114
    %s117 = sphi 0, %s116
    %s131 = sphi 0, %s117
    %s135 = sphi 0, %s135
    %s137 = sphi 0, %s135
    %s138 = sphi 0, %s137
    %s152 = sphi 0, %s138
    %s158 = sphi 0, %s160
    %s161 = sphi 0, %s158
    %s162 = sphi 0, %s161
    %s178 = sphi 0, %s162
  $region4: #{nmt_forward.15} parent=0 // loop_header_branch
    %15 = sbr.rel (%p13) target = $region8
  $region5: #{nmt_forward.15} parent=0 // loop_body
    %s17 = ssub.s32 %s12, 1
    %s18 = ssub.s32 %s12, 2
    %s19 = sadd.s32 %s12, 1
    %s20 = ssub.s32 %s12, %s19
    %p21 = scmp.eq.s32.totalorder %s20, 0
    %s23 = sadd.s32 %s22, 1
    %s24 = scalar_select %p21, %s22, %s23
    %p27 = pneg %p21
    %p28 = scmp.eq.s32.totalorder %s12, 7
    %p29 = por %p27, %p28
    %p30 = scmp.ne.s32.totalorder %s22, %s25
    %p31 = scmp.eq.s32.totalorder %s12, 0
    %p32 = por %p30, %p31
    %p33 = scmp.ne.s32.totalorder %s22, %s25
    %p34 = scmp.eq.s32.totalorder %s17, 7
    %p35 = por %p33, %p34
    %p36 = scmp.ne.s32.totalorder %s25, %s26
    %p37 = scmp.eq.s32.totalorder %s17, 0
    %p38 = por %p36, %p37
    %p39 = scmp.ne.s32.totalorder %s25, %s26
    %p40 = scmp.eq.s32.totalorder %s18, 7
    %p41 = por %p39, %p40
    %p43 = scmp.ne.s32.totalorder %s26, %s42
    %p44 = scmp.eq.s32.totalorder %s18, 0
    %p45 = por %p43, %p44
    %s46 = ssub.s32 %s12, %s19
    %p47 = scmp.eq.s32.totalorder %s46, 0
    %s49 = sadd.s32 %s48, 1
    %s50 = scalar_select %p47, %s48, %s49
    %p53 = pneg %p47
    %p54 = scmp.eq.s32.totalorder %s12, 7
    %p55 = por %p53, %p54
    %p56 = scmp.ne.s32.totalorder %s48, %s51
    %p57 = scmp.eq.s32.totalorder %s12, 0
    %p58 = por %p56, %p57
    %p59 = scmp.ne.s32.totalorder %s48, %s51
    %p60 = scmp.eq.s32.totalorder %s17, 7
    %p61 = por %p59, %p60
    %p62 = scmp.ne.s32.totalorder %s51, %s52
    %p63 = scmp.eq.s32.totalorder %s17, 0
    %p64 = por %p62, %p63
    %p65 = scmp.ne.s32.totalorder %s51, %s52
    %p66 = scmp.eq.s32.totalorder %s18, 7
    %p67 = por %p65, %p66
    %p69 = scmp.ne.s32.totalorder %s52, %s68
    %p70 = scmp.eq.s32.totalorder %s18, 0
    %p71 = por %p69, %p70
    %s73 = sadd.s32 %s72, 1
    %p76 = scmp.eq.s32.totalorder %s12, 7
    %p77 = scmp.ne.s32.totalorder %s72, %s74
    %p78 = scmp.eq.s32.totalorder %s12, 0
    %p79 = por %p77, %p78
    %p80 = scmp.ne.s32.totalorder %s72, %s74
    %p81 = scmp.eq.s32.totalorder %s17, 7
    %p82 = por %p80, %p81
    %p83 = scmp.ne.s32.totalorder %s74, %s75
    %p84 = scmp.eq.s32.totalorder %s17, 0
    %p85 = por %p83, %p84
    %p86 = scmp.ne.s32.totalorder %s74, %s75
    %p87 = scmp.eq.s32.totalorder %s18, 7
    %p88 = por %p86, %p87
    %p90 = scmp.ne.s32.totalorder %s75, %s89
    %p91 = scmp.eq.s32.totalorder %s18, 0
    %p92 = por %p90, %p91
    %s94 = sadd.s32 %s93, 1
    %p97 = scmp.eq.s32.totalorder %s12, 7
    %p98 = scmp.ne.s32.totalorder %s93, %s95
    %p99 = scmp.eq.s32.totalorder %s12, 0
    %p100 = por %p98, %p99
    %p101 = scmp.ne.s32.totalorder %s93, %s95
    %p102 = scmp.eq.s32.totalorder %s17, 7
    %p103 = por %p101, %p102
    %p104 = scmp.ne.s32.totalorder %s95, %s96
    %p105 = scmp.eq.s32.totalorder %s17, 0
    %p106 = por %p104, %p105
    %p107 = scmp.ne.s32.totalorder %s95, %s96
    %p108 = scmp.eq.s32.totalorder %s18, 7
    %p109 = por %p107, %p108
    %p111 = scmp.ne.s32.totalorder %s96, %s110
    %p112 = scmp.eq.s32.totalorder %s18, 0
    %p113 = por %p111, %p112
    %s115 = sadd.s32 %s114, 1
    %p118 = scmp.eq.s32.totalorder %s12, 7
    %p119 = scmp.ne.s32.totalorder %s114, %s116
    %p120 = scmp.eq.s32.totalorder %s12, 0
    %p121 = por %p119, %p120
    %p122 = scmp.ne.s32.totalorder %s114, %s116
    %p123 = scmp.eq.s32.totalorder %s17, 7
    %p124 = por %p122, %p123
    %p125 = scmp.ne.s32.totalorder %s116, %s117
    %p126 = scmp.eq.s32.totalorder %s17, 0
    %p127 = por %p125, %p126
    %p128 = scmp.ne.s32.totalorder %s116, %s117
    %p129 = scmp.eq.s32.totalorder %s18, 7
    %p130 = por %p128, %p129
    %p132 = scmp.ne.s32.totalorder %s117, %s131
    %p133 = scmp.eq.s32.totalorder %s18, 0
    %p134 = por %p132, %p133
    %s136 = sadd.s32 %s135, 1
    %p139 = scmp.eq.s32.totalorder %s12, 7
    %p140 = scmp.ne.s32.totalorder %s135, %s137
    %p141 = scmp.eq.s32.totalorder %s12, 0
    %p142 = por %p140, %p141
    %p143 = scmp.ne.s32.totalorder %s135, %s137
    %p144 = scmp.eq.s32.totalorder %s17, 7
    %p145 = por %p143, %p144
    %p146 = scmp.ne.s32.totalorder %s137, %s138
    %p147 = scmp.eq.s32.totalorder %s17, 0
    %p148 = por %p146, %p147
    %p149 = scmp.ne.s32.totalorder %s137, %s138
    %p150 = scmp.eq.s32.totalorder %s18, 7
    %p151 = por %p149, %p150
    %p153 = scmp.ne.s32.totalorder %s138, %s152
    %p154 = scmp.eq.s32.totalorder %s18, 0
    %p155 = por %p153, %p154
    %s156 = ssub.s32 %s12, %s19
    %p157 = scmp.eq.s32.totalorder %s156, 0
    %s159 = sadd.s32 %s158, 1
    %s160 = scalar_select %p157, %s158, %s159
    %p163 = pneg %p157
    %p164 = scmp.eq.s32.totalorder %s12, 7
    %p165 = por %p163, %p164
    %p166 = scmp.ne.s32.totalorder %s158, %s161
    %p167 = scmp.eq.s32.totalorder %s12, 0
    %p168 = por %p166, %p167
    %p169 = scmp.ne.s32.totalorder %s158, %s161
    %p170 = scmp.eq.s32.totalorder %s17, 7
    %p171 = por %p169, %p170
    %p172 = scmp.ne.s32.totalorder %s161, %s162
    %p173 = scmp.eq.s32.totalorder %s17, 0
    %p174 = por %p172, %p173
    %p175 = scmp.ne.s32.totalorder %s161, %s162
    %p176 = scmp.eq.s32.totalorder %s18, 7
    %p177 = por %p175, %p176
    %p179 = scmp.ne.s32.totalorder %s162, %s178
    %p180 = scmp.eq.s32.totalorder %s18, 0
    %p181 = por %p179, %p180
    %p182 = scmp.le.s32.totalorder 1, %s12
    %p183 = scmp.lt.s32.totalorder %s12, 9
    %p184 = pnand %p182, %p183
    %p185 = pneg %p184
    // Predicated region
    $region9: #{nmt_forward.15} parent=5 // pred_check
      _
    $region10: #{nmt_forward.15} parent=5 // pred_check_branch
      %187 = sbr.rel (%p184) target = $region12
    $region11: #{nmt_forward.15} parent=5 // pred_region
      %s188 = ssub.s32 %s12, 1
      // Predicated region
      $region13: #{nmt_forward.15} parent=11 // pred_check
        %p189 = pneg %p85
      $region14: #{nmt_forward.15} parent=11 // pred_check_branch
        %191 = sbr.rel (%p189) target = $region16
      $region15: #{nmt_forward.15} parent=11 // pred_region
        _
      $region16: #{nmt_forward.15} parent=11 // pred_fallthru
        _
      // Predicated region
      $region17: #{nmt_forward.15} parent=11 // pred_check
        %p192 = pneg %p106
      $region18: #{nmt_forward.15} parent=11 // pred_check_branch
        %194 = sbr.rel (%p192) target = $region20
      $region19: #{nmt_forward.15} parent=11 // pred_region
        _
      $region20: #{nmt_forward.15} parent=11 // pred_fallthru
        _
      // Predicated region
      $region21: #{nmt_forward.15} parent=11 // pred_check
        %p195 = pneg %p127
      $region22: #{nmt_forward.15} parent=11 // pred_check_branch
        %197 = sbr.rel (%p195) target = $region24
      $region23: #{nmt_forward.15} parent=11 // pred_region
        _
      $region24: #{nmt_forward.15} parent=11 // pred_fallthru
        _
      // Predicated region
      $region25: #{nmt_forward.15} parent=11 // pred_check
        %p198 = pneg %p148
      $region26: #{nmt_forward.15} parent=11 // pred_check_branch
        %200 = sbr.rel (%p198) target = $region28
      $region27: #{nmt_forward.15} parent=11 // pred_region
        _
      $region28: #{nmt_forward.15} parent=11 // pred_fallthru
        _
    $region12: #{nmt_forward.15} parent=5 // pred_fallthru
      _
    %p201 = scmp.lt.s32.totalorder %s12, 8
    // Predicated region
    $region29: #{nmt_forward.15} parent=5 // pred_check
      %p202 = pneg %p201
    $region30: #{nmt_forward.15} parent=5 // pred_check_branch
      %204 = sbr.rel (%p202) target = $region32
    $region31: #{nmt_forward.15} parent=5 // pred_region
      // Predicated region
      $region33: #{nmt_forward.15} parent=31 // pred_check
        %p205 = pneg %p32
      $region34: #{nmt_forward.15} parent=31 // pred_check_branch
        %207 = sbr.rel (%p205) target = $region36
      $region35: #{nmt_forward.15} parent=31 // pred_region
        %p208 = scmp.lt.s32.totalorder %s12, 7
        %s209 = scalar_select %p208, %s12, 7
        %s210 = smul.addr %s209, 6
        %s211 = smul.addr %s210, 8
        %s212 = scalar_lea.vmem %s0, %s211
      $region36: #{nmt_forward.15} parent=31 // pred_fallthru
        _
      // Predicated region
      $region37: #{nmt_forward.15} parent=31 // pred_check
        %p213 = pneg %p58
      $region38: #{nmt_forward.15} parent=31 // pred_check_branch
        %215 = sbr.rel (%p213) target = $region40
      $region39: #{nmt_forward.15} parent=31 // pred_region
        %p216 = scmp.lt.s32.totalorder %s12, 7
        %s217 = scalar_select %p216, %s12, 7
        %s218 = smul.addr %s217, 2
        %s219 = smul.addr %s218, 8
        %s220 = scalar_lea.vmem %s1, %s219
      $region40: #{nmt_forward.15} parent=31 // pred_fallthru
        _
    $region32: #{nmt_forward.15} parent=5 // pred_fallthru
      _
    %p221 = scmp.le.s32.totalorder 1, %s12
    %p222 = scmp.lt.s32.totalorder %s12, 9
    %p223 = pnand %p221, %p222
    %p224 = pneg %p223
    // Predicated region
    $region41: #{nmt_forward.15} parent=5 // pred_check
      _
    $region42: #{nmt_forward.15} parent=5 // pred_check_branch
      %226 = sbr.rel (%p223) target = $region44
    $region43: #{nmt_forward.15} parent=5 // pred_region
      %s227 = ssub.s32 %s12, 1
      %p228 = scmp.lt.s32.totalorder %s17, 7
      %s229 = scalar_select %p228, %s17, 7
      %s230 = smul.addr %s229, 6
      %s231 = smul.addr %s230, 8
      %s232 = scalar_lea.vmem %s0, %s231
      %p233 = pneg %p38
      %p234 = pneg %p35
      %p235 = scmp.lt.s32.totalorder %s17, 7
      %s236 = scalar_select %p235, %s17, 7
      %s237 = smul.addr %s236, 2
      %s238 = smul.addr %s237, 8
      %s239 = scalar_lea.vmem %s1, %s238
      %p240 = pneg %p64
      %p241 = pneg %p61
      %p242 = pneg %p85
      %p243 = pneg %p82
      %p244 = pneg %p106
      %p245 = pneg %p103
      %p246 = pneg %p127
      %p247 = pneg %p124
      %p248 = pneg %p148
      %p249 = pneg %p145
      %p250 = pneg %p174
      %p251 = pneg %p171
      %p252 = scmp.lt.s32.totalorder %s17, 7
      %s253 = scalar_select %p252, %s17, 7
      %s254 = smul.addr %s253, 2
      %s255 = smul.addr %s254, 8
      %s256 = scalar_lea.vmem %s6, %s255
      %p257 = scmp.lt.s32.totalorder %s17, 7
      %s258 = scalar_select %p257, %s17, 7
      %s259 = smul.addr %s258, 6
      %s260 = smul.addr %s259, 8
      %s261 = scalar_lea.vmem %s0, %s260
      %p262 = scmp.lt.s32.totalorder %s17, 7
      %s263 = scalar_select %p262, %s17, 7
      %s264 = smul.addr %s263, 2
      %s265 = smul.addr %s264, 8
      %s266 = scalar_lea.vmem %s1, %s265
      %p267 = scmp.lt.s32.totalorder %s17, 7
      %s268 = scalar_select %p267, %s17, 7
      %s269 = smul.addr %s268, 2
      %s270 = smul.addr %s269, 8
      %s271 = scalar_lea.vmem %s6, %s270
      %p272 = scmp.eq.s32.totalorder %s17, 0
      // Predicated region
      $region45: #{nmt_forward.15} parent=43 // pred_check
        %p273 = pneg %p272
      $region46: #{nmt_forward.15} parent=43 // pred_check_branch
        %275 = sbr.rel (%p273) target = $region48
      $region47: #{nmt_forward.15} parent=43 // pred_region
        %276 = vst [vmem:[#allocation2] sm:$0xff] 0.0
        %277 = vst [vmem:[#allocation2 + $0x8] sm:$0xff] 0.0
      $region48: #{nmt_forward.15} parent=43 // pred_fallthru
        _
      %v278 = vld [vmem:[#allocation2] sm:$0xff]
      %v279 = vld [vmem:[#allocation2 + $0x8] sm:$0xff]
      %v280 = vld [vmem:[%s2] sm:$0xff]
      %v281 = vld [vmem:[%s2 + $0x8] sm:$0xff]
      %v282 = vld [vmem:[%s2 + $0x10] sm:$0xff]
      %v283 = vld [vmem:[%s2 + $0x18] sm:$0xff]
      %v284 = vld [vmem:[%s2 + $0x20] sm:$0xff]
      %v285 = vld [vmem:[%s2 + $0x28] sm:$0xff]
      %v286 = vld [vmem:[%s2 + $0x30] sm:$0xff]
      %v287 = vld [vmem:[%s2 + $0x38] sm:$0xff]
      %v288 = vld [vmem:[%s2 + $0x40] sm:$0xff]
      %v289 = vld [vmem:[%s2 + $0x48] sm:$0xff]
      %v290 = vld [vmem:[%s2 + $0x50] sm:$0xff]
      %v291 = vld [vmem:[%s2 + $0x58] sm:$0xff]
      %v292 = vld [vmem:[%s2 + $0x60] sm:$0xff]
      %v293 = vld [vmem:[%s2 + $0x68] sm:$0xff]
      %v294 = vld [vmem:[%s2 + $0x70] sm:$0xff]
      %v295 = vld [vmem:[%s2 + $0x78] sm:$0xff]
      %v296 = vld [vmem:[%s2 + $0x80] sm:$0xff]
      %v297 = vld [vmem:[%s2 + $0x88] sm:$0xff]
      %v298 = vld [vmem:[%s2 + $0x90] sm:$0xff]
      %v299 = vld [vmem:[%s2 + $0x98] sm:$0xff]
      %v300 = vld [vmem:[%s2 + $0xa0] sm:$0xff]
      %v301 = vld [vmem:[%s2 + $0xa8] sm:$0xff]
      %v302 = vld [vmem:[%s2 + $0xb0] sm:$0xff]
      %v303 = vld [vmem:[%s2 + $0xb8] sm:$0xff]
      %v304 = vld [vmem:[%s2 + $0xc0] sm:$0xff]
      %v305 = vld [vmem:[%s2 + $0xc8] sm:$0xff]
      %v306 = vld [vmem:[%s2 + $0xd0] sm:$0xff]
      %v307 = vld [vmem:[%s2 + $0xd8] sm:$0xff]
      %v308 = vld [vmem:[%s2 + $0xe0] sm:$0xff]
      %v309 = vld [vmem:[%s2 + $0xe8] sm:$0xff]
      %v310 = vld [vmem:[%s2 + $0xf0] sm:$0xff]
      %v311 = vld [vmem:[%s2 + $0xf8] sm:$0xff]
      %v312 = vld [vmem:[%s2 + $0x100] sm:$0xff]
      %v313 = vld [vmem:[%s2 + $0x108] sm:$0xff]
      %v314 = vld [vmem:[%s2 + $0x110] sm:$0xff]
      %v315 = vld [vmem:[%s2 + $0x118] sm:$0xff]
      %v316 = vld [vmem:[%s2 + $0x120] sm:$0xff]
      %v317 = vld [vmem:[%s2 + $0x128] sm:$0xff]
      %v318 = vld [vmem:[%s2 + $0x130] sm:$0xff]
      %v319 = vld [vmem:[%s2 + $0x138] sm:$0xff]
      %v320 = vld [vmem:[%s2 + $0x140] sm:$0xff]
      %v321 = vld [vmem:[%s2 + $0x148] sm:$0xff]
      %v322 = vld [vmem:[%s2 + $0x150] sm:$0xff]
      %v323 = vld [vmem:[%s2 + $0x158] sm:$0xff]
      %v324 = vld [vmem:[%s2 + $0x160] sm:$0xff]
      %v325 = vld [vmem:[%s2 + $0x168] sm:$0xff]
      %v326 = vld [vmem:[%s2 + $0x170] sm:$0xff]
      %v327 = vld [vmem:[%s2 + $0x178] sm:$0xff]
      %v328 = vld [vmem:[%s4] sm:$0x7]
      %v330 = vlaneseq
      %v331 = vshrl.u32 %v330, 7
      %v332 = vsub.s32 0, %v331
      %v333 = vrot.slane %v328, %v332
      %v334 = vlaneseq
      %v335 = vshrl.u32 %v334, 7
      %v336 = vsub.s32 1, %v335
      %v337 = vrot.slane %v328, %v336
      %v338 = vlaneseq
      %v339 = vshrl.u32 %v338, 7
      %v340 = vsub.s32 2, %v339
      %v341 = vrot.slane %v328, %v340
      %345 = vmatprep.subr.mxu0 %v326
      %346 = vmatpush1.msra.mxu0 %v325
      %347 = vmatprep.subr.mxu0 %v323
      %348 = vmatpush1.msra.mxu0 %v322
      %349 = vmatprep.subr.mxu0 %v320
      %350 = vmatpush1.msra.mxu0 %v319
      %351 = vmatprep.subr.mxu0 %v317
      %352 = vmatpush1.msra.mxu0 %v316
      %353 = vmatprep.subr.mxu0 %v314
      %354 = vmatpush1.msra.mxu0 %v313
      %355 = vmatprep.subr.mxu0 %v311
      %356 = vmatpush1.msra.mxu0 %v310
      %357 = vmatprep.subr.mxu0 %v308
      %358 = vmatpush1.msra.mxu0 %v307
      %359 = vmatprep.subr.mxu0 %v305
      %360 = vmatpush1.msra.mxu0 %v304
      %361 = vmatprep.subr.mxu0 %v302
      %362 = vmatpush1.msra.mxu0 %v301
      %363 = vmatprep.subr.mxu0 %v299
      %364 = vmatpush1.msra.mxu0 %v298
      %365 = vmatprep.subr.mxu0 %v296
      %366 = vmatpush1.msra.mxu0 %v295
      %367 = vmatprep.subr.mxu0 %v293
      %368 = vmatpush1.msra.mxu0 %v292
      %369 = vmatprep.subr.mxu0 %v290
      %370 = vmatpush1.msra.mxu0 %v289
      %371 = vmatprep.subr.mxu0 %v287
      %372 = vmatpush1.msra.mxu0 %v286
      %373 = vmatprep.subr.mxu0 %v284
      %374 = vmatpush1.msra.mxu0 %v283
      %375 = vmatprep.subr.mxu0 %v281
      %376 = vmatpush1.msra.mxu0 %v280
      %377 = vmatprep.subr.mxu0 0.0
      %378 = vmatpush2.msra.mxu0 0.0
      %379 = vmatprep.subr.mxu0 0.0
      %380 = vmatpush2.msra.mxu0 0.0
      %381 = vmatprep.subr.mxu0 0.0
      %382 = vmatpush2.msra.mxu0 0.0
      %383 = vmatprep.subr.mxu0 0.0
      %384 = vmatpush2.msra.mxu0 0.0
      %385 = vmatprep.subr.mxu0 0.0
      %386 = vmatpush2.msra.mxu0 0.0
      %387 = vmatprep.subr.mxu0 0.0
      %388 = vmatpush2.msra.mxu0 0.0
      %389 = vmatprep.subr.mxu0 0.0
      %390 = vmatpush2.msra.mxu0 0.0
      %391 = vmatprep.subr.mxu0 0.0
      %392 = vmatpush2.msra.mxu0 0.0
      %393 = vmatprep.subr.mxu0 0.0
      %394 = vmatpush2.msra.mxu0 0.0
      %395 = vmatprep.subr.mxu0 0.0
      %396 = vmatpush2.msra.mxu0 0.0
      %397 = vmatprep.subr.mxu0 0.0
      %398 = vmatpush2.msra.mxu0 0.0
      %399 = vmatprep.subr.mxu0 0.0
      %400 = vmatpush2.msra.mxu0 0.0
      %401 = vmatprep.subr.mxu0 0.0
      %402 = vmatpush2.msra.mxu0 0.0
      %403 = vmatprep.subr.mxu0 0.0
      %404 = vmatpush2.msra.mxu0 0.0
      %405 = vmatprep.subr.mxu0 0.0
      %406 = vmatpush2.msra.mxu0 0.0
      %407 = vmatprep.subr.mxu0 0.0
      %408 = vmatpush2.msra.mxu0 0.0
      %409 = vmatprep.mubr.f32.mxu0 0.0
      %410 = vmatmul.mubr.f32.gmra.mxu0 %v278
      %v411 = vpop.f32.mrf.mxu0
      %v412 = vadd.f32 %v333, %v411
      %v413 = vpop.f32.mrf.mxu0
      %v414 = vadd.f32 %v337, %v413
      %415 = vdwg.mxu0
      %416 = vmatprep.subr.mxu0 0.0
      %417 = vmatpush1.msra.mxu0 %v327
      %418 = vmatprep.subr.mxu0 0.0
      %419 = vmatpush1.msra.mxu0 %v324
      %420 = vmatprep.subr.mxu0 0.0
      %421 = vmatpush1.msra.mxu0 %v321
      %422 = vmatprep.subr.mxu0 0.0
      %423 = vmatpush1.msra.mxu0 %v318
      %424 = vmatprep.subr.mxu0 0.0
      %425 = vmatpush1.msra.mxu0 %v315
      %426 = vmatprep.subr.mxu0 0.0
      %427 = vmatpush1.msra.mxu0 %v312
      %428 = vmatprep.subr.mxu0 0.0
      %429 = vmatpush1.msra.mxu0 %v309
      %430 = vmatprep.subr.mxu0 0.0
      %431 = vmatpush1.msra.mxu0 %v306
      %432 = vmatprep.subr.mxu0 0.0
      %433 = vmatpush1.msra.mxu0 %v303
      %434 = vmatprep.subr.mxu0 0.0
      %435 = vmatpush1.msra.mxu0 %v300
      %436 = vmatprep.subr.mxu0 0.0
      %437 = vmatpush1.msra.mxu0 %v297
      %438 = vmatprep.subr.mxu0 0.0
      %439 = vmatpush1.msra.mxu0 %v294
      %440 = vmatprep.subr.mxu0 0.0
      %441 = vmatpush1.msra.mxu0 %v291
      %442 = vmatprep.subr.mxu0 0.0
      %443 = vmatpush1.msra.mxu0 %v288
      %444 = vmatprep.subr.mxu0 0.0
      %445 = vmatpush1.msra.mxu0 %v285
      %446 = vmatprep.subr.mxu0 0.0
      %447 = vmatpush1.msra.mxu0 %v282
      %448 = vmatprep.subr.mxu0 0.0
      %449 = vmatpush2.msra.mxu0 0.0
      %450 = vmatprep.subr.mxu0 0.0
      %451 = vmatpush2.msra.mxu0 0.0
      %452 = vmatprep.subr.mxu0 0.0
      %453 = vmatpush2.msra.mxu0 0.0
      %454 = vmatprep.subr.mxu0 0.0
      %455 = vmatpush2.msra.mxu0 0.0
      %456 = vmatprep.subr.mxu0 0.0
      %457 = vmatpush2.msra.mxu0 0.0
      %458 = vmatprep.subr.mxu0 0.0
      %459 = vmatpush2.msra.mxu0 0.0
      %460 = vmatprep.subr.mxu0 0.0
      %461 = vmatpush2.msra.mxu0 0.0
      %462 = vmatprep.subr.mxu0 0.0
      %463 = vmatpush2.msra.mxu0 0.0
      %464 = vmatprep.subr.mxu0 0.0
      %465 = vmatpush2.msra.mxu0 0.0
      %466 = vmatprep.subr.mxu0 0.0
      %467 = vmatpush2.msra.mxu0 0.0
      %468 = vmatprep.subr.mxu0 0.0
      %469 = vmatpush2.msra.mxu0 0.0
      %470 = vmatprep.subr.mxu0 0.0
      %471 = vmatpush2.msra.mxu0 0.0
      %472 = vmatprep.subr.mxu0 0.0
      %473 = vmatpush2.msra.mxu0 0.0
      %474 = vmatprep.subr.mxu0 0.0
      %475 = vmatpush2.msra.mxu0 0.0
      %476 = vmatprep.subr.mxu0 0.0
      %477 = vmatpush2.msra.mxu0 0.0
      %478 = vmatprep.subr.mxu0 0.0
      %479 = vmatpush2.msra.mxu0 0.0
      %480 = vmatprep.mubr.f32.mxu0 0.0
      %481 = vmatmul.mubr.f32.gmra.mxu0 %v278
      %v482 = vpop.f32.mrf.mxu0
      %v483 = vadd.f32 %v341, %v482
      %v484 = vpop.f32.mrf.mxu0
      %485 = vdwg.mxu0
      %v486 = vld [vmem:[%s3] sm:$0xff]
      %v487 = vld [vmem:[%s3 + $0x8] sm:$0xff]
      %v488 = vld [vmem:[%s3 + $0x10] sm:$0xff]
      %v489 = vld [vmem:[%s3 + $0x18] sm:$0xff]
      %v490 = vld [vmem:[%s3 + $0x20] sm:$0xff]
      %v491 = vld [vmem:[%s3 + $0x28] sm:$0xff]
      %v492 = vld [vmem:[%s3 + $0x30] sm:$0xff]
      %v493 = vld [vmem:[%s3 + $0x38] sm:$0xff]
      %v494 = vld [vmem:[%s3 + $0x40] sm:$0xff]
      %v495 = vld [vmem:[%s3 + $0x48] sm:$0xff]
      %v496 = vld [vmem:[%s3 + $0x50] sm:$0xff]
      %v497 = vld [vmem:[%s3 + $0x58] sm:$0xff]
      %v498 = vld [vmem:[%s3 + $0x60] sm:$0xff]
      %v499 = vld [vmem:[%s3 + $0x68] sm:$0xff]
      %v500 = vld [vmem:[%s3 + $0x70] sm:$0xff]
      %v501 = vld [vmem:[%s3 + $0x78] sm:$0xff]
      %v502 = vld [vmem:[%s3 + $0x80] sm:$0xff]
      %v503 = vld [vmem:[%s3 + $0x88] sm:$0xff]
      %v504 = vld [vmem:[%s3 + $0x90] sm:$0xff]
      %v505 = vld [vmem:[%s3 + $0x98] sm:$0xff]
      %v506 = vld [vmem:[%s3 + $0xa0] sm:$0xff]
      %v507 = vld [vmem:[%s3 + $0xa8] sm:$0xff]
      %v508 = vld [vmem:[%s3 + $0xb0] sm:$0xff]
      %v509 = vld [vmem:[%s3 + $0xb8] sm:$0xff]
      %v510 = vld [vmem:[%s3 + $0xc0] sm:$0xff]
      %v511 = vld [vmem:[%s3 + $0xc8] sm:$0xff]
      %v512 = vld [vmem:[%s3 + $0xd0] sm:$0xff]
      %v513 = vld [vmem:[%s3 + $0xd8] sm:$0xff]
      %v514 = vld [vmem:[%s3 + $0xe0] sm:$0xff]
      %v515 = vld [vmem:[%s3 + $0xe8] sm:$0xff]
      %v516 = vld [vmem:[%s3 + $0xf0] sm:$0xff]
      %v517 = vld [vmem:[%s3 + $0xf8] sm:$0xff]
      %v518 = vld [vmem:[%s3 + $0x100] sm:$0xff]
      %v519 = vld [vmem:[%s3 + $0x108] sm:$0xff]
      %v520 = vld [vmem:[%s3 + $0x110] sm:$0xff]
      %v521 = vld [vmem:[%s3 + $0x118] sm:$0xff]
      %v522 = vld [vmem:[%s3 + $0x120] sm:$0xff]
      %v523 = vld [vmem:[%s3 + $0x128] sm:$0xff]
      %v524 = vld [vmem:[%s3 + $0x130] sm:$0xff]
      %v525 = vld [vmem:[%s3 + $0x138] sm:$0xff]
      %v526 = vld [vmem:[%s3 + $0x140] sm:$0xff]
      %v527 = vld [vmem:[%s3 + $0x148] sm:$0xff]
      %v528 = vld [vmem:[%s3 + $0x150] sm:$0xff]
      %v529 = vld [vmem:[%s3 + $0x158] sm:$0xff]
      %v530 = vld [vmem:[%s3 + $0x160] sm:$0xff]
      %v531 = vld [vmem:[%s3 + $0x168] sm:$0xff]
      %v532 = vld [vmem:[%s3 + $0x170] sm:$0xff]
      %v533 = vld [vmem:[%s3 + $0x178] sm:$0xff]
      %v534 = vld [vmem:[%s5] sm:$0x7]
      %v536 = vlaneseq
      %v537 = vshrl.u32 %v536, 7
      %v538 = vsub.s32 0, %v537
      %v539 = vrot.slane %v534, %v538
      %v540 = vlaneseq
      %v541 = vshrl.u32 %v540, 7
      %v542 = vsub.s32 1, %v541
      %v543 = vrot.slane %v534, %v542
      %v544 = vlaneseq
      %v545 = vshrl.u32 %v544, 7
      %v546 = vsub.s32 2, %v545
      %v547 = vrot.slane %v534, %v546
      %551 = vmatprep.subr.mxu0 %v532
      %552 = vmatpush1.msra.mxu0 %v531
      %553 = vmatprep.subr.mxu0 %v529
      %554 = vmatpush1.msra.mxu0 %v528
      %555 = vmatprep.subr.mxu0 %v526
      %556 = vmatpush1.msra.mxu0 %v525
      %557 = vmatprep.subr.mxu0 %v523
      %558 = vmatpush1.msra.mxu0 %v522
      %559 = vmatprep.subr.mxu0 %v520
      %560 = vmatpush1.msra.mxu0 %v519
      %561 = vmatprep.subr.mxu0 %v517
      %562 = vmatpush1.msra.mxu0 %v516
      %563 = vmatprep.subr.mxu0 %v514
      %564 = vmatpush1.msra.mxu0 %v513
      %565 = vmatprep.subr.mxu0 %v511
      %566 = vmatpush1.msra.mxu0 %v510
      %567 = vmatprep.subr.mxu0 %v508
      %568 = vmatpush1.msra.mxu0 %v507
      %569 = vmatprep.subr.mxu0 %v505
      %570 = vmatpush1.msra.mxu0 %v504
      %571 = vmatprep.subr.mxu0 %v502
      %572 = vmatpush1.msra.mxu0 %v501
      %573 = vmatprep.subr.mxu0 %v499
      %574 = vmatpush1.msra.mxu0 %v498
      %575 = vmatprep.subr.mxu0 %v496
      %576 = vmatpush1.msra.mxu0 %v495
      %577 = vmatprep.subr.mxu0 %v493
      %578 = vmatpush1.msra.mxu0 %v492
      %579 = vmatprep.subr.mxu0 %v490
      %580 = vmatpush1.msra.mxu0 %v489
      %581 = vmatprep.subr.mxu0 %v487
      %582 = vmatpush1.msra.mxu0 %v486
      %583 = vmatprep.subr.mxu0 0.0
      %584 = vmatpush2.msra.mxu0 0.0
      %585 = vmatprep.subr.mxu0 0.0
      %586 = vmatpush2.msra.mxu0 0.0
      %587 = vmatprep.subr.mxu0 0.0
      %588 = vmatpush2.msra.mxu0 0.0
      %589 = vmatprep.subr.mxu0 0.0
      %590 = vmatpush2.msra.mxu0 0.0
      %591 = vmatprep.subr.mxu0 0.0
      %592 = vmatpush2.msra.mxu0 0.0
      %593 = vmatprep.subr.mxu0 0.0
      %594 = vmatpush2.msra.mxu0 0.0
      %595 = vmatprep.subr.mxu0 0.0
      %596 = vmatpush2.msra.mxu0 0.0
      %597 = vmatprep.subr.mxu0 0.0
      %598 = vmatpush2.msra.mxu0 0.0
      %599 = vmatprep.subr.mxu0 0.0
      %600 = vmatpush2.msra.mxu0 0.0
      %601 = vmatprep.subr.mxu0 0.0
      %602 = vmatpush2.msra.mxu0 0.0
      %603 = vmatprep.subr.mxu0 0.0
      %604 = vmatpush2.msra.mxu0 0.0
      %605 = vmatprep.subr.mxu0 0.0
      %606 = vmatpush2.msra.mxu0 0.0
      %607 = vmatprep.subr.mxu0 0.0
      %608 = vmatpush2.msra.mxu0 0.0
      %609 = vmatprep.subr.mxu0 0.0
      %610 = vmatpush2.msra.mxu0 0.0
      %611 = vmatprep.subr.mxu0 0.0
      %612 = vmatpush2.msra.mxu0 0.0
      %613 = vmatprep.subr.mxu0 0.0
      %614 = vmatpush2.msra.mxu0 0.0
      %615 = vmatprep.mubr.f32.mxu0 0.0
      %616 = vmatmul.mubr.f32.gmra.mxu0 %v279
      %v617 = vpop.f32.mrf.mxu0
      %v618 = vadd.f32 %v539, %v617
      %v619 = vpop.f32.mrf.mxu0
      %v620 = vadd.f32 %v543, %v619
      %621 = vdwg.mxu0
      %622 = vmatprep.subr.mxu0 0.0
      %623 = vmatpush1.msra.mxu0 %v533
      %624 = vmatprep.subr.mxu0 0.0
      %625 = vmatpush1.msra.mxu0 %v530
      %626 = vmatprep.subr.mxu0 0.0
      %627 = vmatpush1.msra.mxu0 %v527
      %628 = vmatprep.subr.mxu0 0.0
      %629 = vmatpush1.msra.mxu0 %v524
      %630 = vmatprep.subr.mxu0 0.0
      %631 = vmatpush1.msra.mxu0 %v521
      %632 = vmatprep.subr.mxu0 0.0
      %633 = vmatpush1.msra.mxu0 %v518
      %634 = vmatprep.subr.mxu0 0.0
      %635 = vmatpush1.msra.mxu0 %v515
      %636 = vmatprep.subr.mxu0 0.0
      %637 = vmatpush1.msra.mxu0 %v512
      %638 = vmatprep.subr.mxu0 0.0
      %639 = vmatpush1.msra.mxu0 %v509
      %640 = vmatprep.subr.mxu0 0.0
      %641 = vmatpush1.msra.mxu0 %v506
      %642 = vmatprep.subr.mxu0 0.0
      %643 = vmatpush1.msra.mxu0 %v503
      %644 = vmatprep.subr.mxu0 0.0
      %645 = vmatpush1.msra.mxu0 %v500
      %646 = vmatprep.subr.mxu0 0.0
      %647 = vmatpush1.msra.mxu0 %v497
      %648 = vmatprep.subr.mxu0 0.0
      %649 = vmatpush1.msra.mxu0 %v494
      %650 = vmatprep.subr.mxu0 0.0
      %651 = vmatpush1.msra.mxu0 %v491
      %652 = vmatprep.subr.mxu0 0.0
      %653 = vmatpush1.msra.mxu0 %v488
      %654 = vmatprep.subr.mxu0 0.0
      %655 = vmatpush2.msra.mxu0 0.0
      %656 = vmatprep.subr.mxu0 0.0
      %657 = vmatpush2.msra.mxu0 0.0
      %658 = vmatprep.subr.mxu0 0.0
      %659 = vmatpush2.msra.mxu0 0.0
      %660 = vmatprep.subr.mxu0 0.0
      %661 = vmatpush2.msra.mxu0 0.0
      %662 = vmatprep.subr.mxu0 0.0
      %663 = vmatpush2.msra.mxu0 0.0
      %664 = vmatprep.subr.mxu0 0.0
      %665 = vmatpush2.msra.mxu0 0.0
      %666 = vmatprep.subr.mxu0 0.0
      %667 = vmatpush2.msra.mxu0 0.0
      %668 = vmatprep.subr.mxu0 0.0
      %669 = vmatpush2.msra.mxu0 0.0
      %670 = vmatprep.subr.mxu0 0.0
      %671 = vmatpush2.msra.mxu0 0.0
      %672 = vmatprep.subr.mxu0 0.0
      %673 = vmatpush2.msra.mxu0 0.0
      %674 = vmatprep.subr.mxu0 0.0
      %675 = vmatpush2.msra.mxu0 0.0
      %676 = vmatprep.subr.mxu0 0.0
      %677 = vmatpush2.msra.mxu0 0.0
      %678 = vmatprep.subr.mxu0 0.0
      %679 = vmatpush2.msra.mxu0 0.0
      %680 = vmatprep.subr.mxu0 0.0
      %681 = vmatpush2.msra.mxu0 0.0
      %682 = vmatprep.subr.mxu0 0.0
      %683 = vmatpush2.msra.mxu0 0.0
      %684 = vmatprep.subr.mxu0 0.0
      %685 = vmatpush2.msra.mxu0 0.0
      %686 = vmatprep.mubr.f32.mxu0 0.0
      %687 = vmatmul.mubr.f32.gmra.mxu0 %v279
      %v688 = vpop.f32.mrf.mxu0
      %v689 = vadd.f32 %v547, %v688
      %v690 = vpop.f32.mrf.mxu0
      %691 = vdwg.mxu0
      %v692 = vld [vmem:[%s261] sm:$0xff]
      %v693 = vld [vmem:[%s261 + $0x8] sm:$0xff]
      %v694 = vld [vmem:[%s261 + $0x10] sm:$0xff]
      %v695 = vld [vmem:[%s261 + $0x18] sm:$0xff]
      %v696 = vld [vmem:[%s261 + $0x20] sm:$0xff]
      %v697 = vld [vmem:[%s261 + $0x28] sm:$0xff]
      %v698 = vadd.f32 %v692, %v412
      %v699 = vadd.f32 %v695, %v618
      %v700 = vxor.u32 %v698, 2147483648
      %v701 = vxor.u32 %v699, 2147483648
      %v702 = vmul.f32 %v700, 1.442695
      %v703 = vpow.pop %v702
      %v704 = vmul.f32 %v701, 1.442695
      %v705 = vpow.pop %v704
      %v706 = vadd.f32 %v703, 1.0
      %v707 = vadd.f32 %v705, 1.0
      %v708 = vrcp.pop %v706
      %v709 = vmul.f32 1.0, %v708
      %v710 = vrcp.pop %v707
      %v711 = vmul.f32 1.0, %v710
      %v712 = vadd.f32 %v693, %v414
      %v713 = vadd.f32 %v696, %v620
      %v714 = vxor.u32 %v712, 2147483648
      %v715 = vxor.u32 %v713, 2147483648
      %v716 = vmul.f32 %v714, 1.442695
      %v717 = vpow.pop %v716
      %v718 = vmul.f32 %v715, 1.442695
      %v719 = vpow.pop %v718
      %v720 = vadd.f32 %v717, 1.0
      %v721 = vadd.f32 %v719, 1.0
      %v722 = vrcp.pop %v720
      %v723 = vmul.f32 1.0, %v722
      %v724 = vrcp.pop %v721
      %v725 = vmul.f32 1.0, %v724
      %v726 = vmul.f32 %v709, %v483
      %v727 = vmul.f32 %v711, %v689
      %v728 = vadd.f32 %v694, %v726
      %v729 = vadd.f32 %v697, %v727
      %v730 = vtanh.pop %v728
      %v731 = vtanh.pop %v729
      %v732 = vsub.f32 1.0, %v723
      %v733 = vsub.f32 1.0, %v725
      %v734 = vmul.f32 %v732, %v730
      %v735 = vmul.f32 %v733, %v731
      %v736 = vmul.f32 %v723, %v278
      %v737 = vmul.f32 %v725, %v279
      %v738 = vadd.f32 %v734, %v736
      %v739 = vadd.f32 %v735, %v737
      %v740 = vld [vmem:[%s266] sm:$0xff]
      %v741 = vld [vmem:[%s266 + $0x8] sm:$0xff]
      %743 = vset.pattern.permute.xlu0 0
      %744 = vperm.xlu0 %743, %v740
      %v745 = vpop.permute.xlu0 %744
      %748 = vset.pattern.permute.xlu0 0
      %749 = vperm.xlu0 %748, %v741
      %v750 = vpop.permute.xlu0 %749
      %v752 = vmul.f32 %v745, %v738
      %v753 = vmul.f32 %v750, %v739
      %v754 = vsub.f32 1.0, %v740
      %v755 = vsub.f32 1.0, %v741
      %757 = vset.pattern.permute.xlu0 0
      %758 = vperm.xlu0 %757, %v754
      %v759 = vpop.permute.xlu0 %758
      %762 = vset.pattern.permute.xlu0 0
      %763 = vperm.xlu0 %762, %v755
      %v764 = vpop.permute.xlu0 %763
      %v766 = vmul.f32 %v759, %v278
      %v767 = vmul.f32 %v764, %v279
      %v768 = vadd.f32 %v752, %v766
      %v769 = vadd.f32 %v753, %v767
      %770 = vst [vmem:[#allocation2] sm:$0xff] %v768
      %771 = vst [vmem:[#allocation2 + $0x8] sm:$0xff] %v769
      %v772 = vmul.f32 %v768, %v745
      %v773 = vmul.f32 %v769, %v750
      %774 = vst [vmem:[%s271] sm:$0xff] %v772
      %775 = vst [vmem:[%s271 + $0x8] sm:$0xff] %v773
      %p776 = scmp.lt.s32.totalorder %s17, 7
      %s777 = scalar_select %p776, %s17, 7
      %s778 = smul.addr %s777, 2
      %s779 = smul.addr %s778, 8
      %s780 = scalar_lea.vmem %s6, %s779
      // Predicated region
      $region49: #{nmt_forward.15} parent=43 // pred_check
        %p781 = pneg %p171
      $region50: #{nmt_forward.15} parent=43 // pred_check_branch
        %783 = sbr.rel (%p781) target = $region52
      $region51: #{nmt_forward.15} parent=43 // pred_region
        _
      $region52: #{nmt_forward.15} parent=43 // pred_fallthru
        _
    $region44: #{nmt_forward.15} parent=5 // pred_fallthru
      _
    %p784 = scmp.le.s32.totalorder 2, %s12
    // Predicated region
    $region53: #{nmt_forward.15} parent=5 // pred_check
      %p785 = pneg %p784
    $region54: #{nmt_forward.15} parent=5 // pred_check_branch
      %787 = sbr.rel (%p785) target = $region56
    $region55: #{nmt_forward.15} parent=5 // pred_region
      %s788 = ssub.s32 %s12, 2
      // Predicated region
      $region57: #{nmt_forward.15} parent=55 // pred_check
        %p789 = pneg %p177
      $region58: #{nmt_forward.15} parent=55 // pred_check_branch
        %791 = sbr.rel (%p789) target = $region60
      $region59: #{nmt_forward.15} parent=55 // pred_region
        %p792 = scmp.lt.s32.totalorder %s18, 7
        %s793 = scalar_select %p792, %s18, 7
        %s794 = smul.addr %s793, 2
        %s795 = smul.addr %s794, 8
        %s796 = scalar_lea.vmem %s6, %s795
      $region60: #{nmt_forward.15} parent=55 // pred_fallthru
        _
    $region56: #{nmt_forward.15} parent=5 // pred_fallthru
      _
  $region6: #{nmt_forward.15} parent=0 // loop_footer
    %s16 = sadd.s32 1, %s12
  $region7: #{nmt_forward.15} parent=0 // loop_footer_branch
    %11 = sbr.rel target = $region3
  $region8: #{nmt_forward.15} parent=0 // loop_exit
    _

// kernel: nmt_forward.19
$region0: #{nmt_forward.19}
  #allocation0 [shape = 'u32[]', space=smem, size = 0x4, offset = 0x4, fixed_abs, tag = 'smem constant byte address 0x4 - core index']
  #allocation1 [shape = 'u32[144,128]{1,0:T(1,128)}', space=vmem, size = 0x12000, scoped, tag = 'internal scratch']
  %s0 = inlined_call_operand.vmem [shape: f32[64,256], index: 0, kind: input, shape index: {}]
  %s1 = inlined_call_operand.vmem [shape: f32[256,256], index: 1, kind: input, shape index: {}]
  %s2 = inlined_call_operand.vmem [shape: f32[1,256], index: 2, kind: input, shape index: {}]
  %s3 = inlined_call_operand.vmem [shape: f32[64,256], index: 3, kind: output, shape index: {}]
  %s4 = sld [smem:[#allocation0]]
  $region22: #{nmt_forward.19} parent=0
    _
  %s6 = ssub.s32 1, %s4
  %s7 = scalar_select 0, %s6, %s4
  // Predicated region
  $region2: #{nmt_forward.19} parent=0 // pred_check
    _
  $region3: #{nmt_forward.19} parent=0 // pred_check_branch
    %9 = sbr.rel (0) target = $region5
  $region4: #{nmt_forward.19} parent=0 // pred_region
    _
  $region5: #{nmt_forward.19} parent=0 // pred_fallthru
    _
  // Predicated region
  $region6: #{nmt_forward.19} parent=0 // pred_check
    _
  $region7: #{nmt_forward.19} parent=0 // pred_check_branch
    %11 = sbr.rel (0) target = $region9
  $region8: #{nmt_forward.19} parent=0 // pred_region
    _
  $region9: #{nmt_forward.19} parent=0 // pred_fallthru
    _
  // Predicated region
  $region10: #{nmt_forward.19} parent=0 // pred_check
    _
  $region11: #{nmt_forward.19} parent=0 // pred_check_branch
    %13 = sbr.rel (0) target = $region13
  $region12: #{nmt_forward.19} parent=0 // pred_region
    _
  $region13: #{nmt_forward.19} parent=0 // pred_fallthru
    _
  %v14 = vld [vmem:[%s0] sm:$0xff]
  %v15 = vld [vmem:[%s0 + $0x8] sm:$0xff]
  %v16 = vld [vmem:[%s0 + $0x10] sm:$0xff]
  %v17 = vld [vmem:[%s0 + $0x18] sm:$0xff]
  %v18 = vld [vmem:[%s0 + $0x20] sm:$0xff]
  %v19 = vld [vmem:[%s0 + $0x28] sm:$0xff]
  %v20 = vld [vmem:[%s0 + $0x30] sm:$0xff]
  %v21 = vld [vmem:[%s0 + $0x38] sm:$0xff]
  %v22 = vld [vmem:[%s0 + $0x40] sm:$0xff]
  %v23 = vld [vmem:[%s0 + $0x48] sm:$0xff]
  %v24 = vld [vmem:[%s0 + $0x50] sm:$0xff]
  %v25 = vld [vmem:[%s0 + $0x58] sm:$0xff]
  %v26 = vld [vmem:[%s0 + $0x60] sm:$0xff]
  %v27 = vld [vmem:[%s0 + $0x68] sm:$0xff]
  %v28 = vld [vmem:[%s0 + $0x70] sm:$0xff]
  %v29 = vld [vmem:[%s0 + $0x78] sm:$0xff]
  %v30 = vld [vmem:[%s1] sm:$0xff]
  %v31 = vld [vmem:[%s1 + $0x8] sm:$0xff]
  %v32 = vld [vmem:[%s1 + $0x10] sm:$0xff]
  %v33 = vld [vmem:[%s1 + $0x18] sm:$0xff]
  %v34 = vld [vmem:[%s1 + $0x20] sm:$0xff]
  %v35 = vld [vmem:[%s1 + $0x28] sm:$0xff]
  %v36 = vld [vmem:[%s1 + $0x30] sm:$0xff]
  %v37 = vld [vmem:[%s1 + $0x38] sm:$0xff]
  %v38 = vld [vmem:[%s1 + $0x40] sm:$0xff]
  %v39 = vld [vmem:[%s1 + $0x48] sm:$0xff]
  %v40 = vld [vmem:[%s1 + $0x50] sm:$0xff]
  %v41 = vld [vmem:[%s1 + $0x58] sm:$0xff]
  %v42 = vld [vmem:[%s1 + $0x60] sm:$0xff]
  %v43 = vld [vmem:[%s1 + $0x68] sm:$0xff]
  %v44 = vld [vmem:[%s1 + $0x70] sm:$0xff]
  %v45 = vld [vmem:[%s1 + $0x78] sm:$0xff]
  %v46 = vld [vmem:[%s1 + $0x80] sm:$0xff]
  %v47 = vld [vmem:[%s1 + $0x88] sm:$0xff]
  %v48 = vld [vmem:[%s1 + $0x90] sm:$0xff]
  %v49 = vld [vmem:[%s1 + $0x98] sm:$0xff]
  %v50 = vld [vmem:[%s1 + $0xa0] sm:$0xff]
  %v51 = vld [vmem:[%s1 + $0xa8] sm:$0xff]
  %v52 = vld [vmem:[%s1 + $0xb0] sm:$0xff]
  %v53 = vld [vmem:[%s1 + $0xb8] sm:$0xff]
  %v54 = vld [vmem:[%s1 + $0xc0] sm:$0xff]
  %v55 = vld [vmem:[%s1 + $0xc8] sm:$0xff]
  %v56 = vld [vmem:[%s1 + $0xd0] sm:$0xff]
  %v57 = vld [vmem:[%s1 + $0xd8] sm:$0xff]
  %v58 = vld [vmem:[%s1 + $0xe0] sm:$0xff]
  %v59 = vld [vmem:[%s1 + $0xe8] sm:$0xff]
  %v60 = vld [vmem:[%s1 + $0xf0] sm:$0xff]
  %v61 = vld [vmem:[%s1 + $0xf8] sm:$0xff]
  %v62 = vld [vmem:[%s1 + $0x100] sm:$0xff]
  %v63 = vld [vmem:[%s1 + $0x108] sm:$0xff]
  %v64 = vld [vmem:[%s1 + $0x110] sm:$0xff]
  %v65 = vld [vmem:[%s1 + $0x118] sm:$0xff]
  %v66 = vld [vmem:[%s1 + $0x120] sm:$0xff]
  %v67 = vld [vmem:[%s1 + $0x128] sm:$0xff]
  %v68 = vld [vmem:[%s1 + $0x130] sm:$0xff]
  %v69 = vld [vmem:[%s1 + $0x138] sm:$0xff]
  %v70 = vld [vmem:[%s1 + $0x140] sm:$0xff]
  %v71 = vld [vmem:[%s1 + $0x148] sm:$0xff]
  %v72 = vld [vmem:[%s1 + $0x150] sm:$0xff]
  %v73 = vld [vmem:[%s1 + $0x158] sm:$0xff]
  %v74 = vld [vmem:[%s1 + $0x160] sm:$0xff]
  %v75 = vld [vmem:[%s1 + $0x168] sm:$0xff]
  %v76 = vld [vmem:[%s1 + $0x170] sm:$0xff]
  %v77 = vld [vmem:[%s1 + $0x178] sm:$0xff]
  %v78 = vld [vmem:[%s1 + $0x180] sm:$0xff]
  %v79 = vld [vmem:[%s1 + $0x188] sm:$0xff]
  %v80 = vld [vmem:[%s1 + $0x190] sm:$0xff]
  %v81 = vld [vmem:[%s1 + $0x198] sm:$0xff]
  %v82 = vld [vmem:[%s1 + $0x1a0] sm:$0xff]
  %v83 = vld [vmem:[%s1 + $0x1a8] sm:$0xff]
  %v84 = vld [vmem:[%s1 + $0x1b0] sm:$0xff]
  %v85 = vld [vmem:[%s1 + $0x1b8] sm:$0xff]
  %v86 = vld [vmem:[%s1 + $0x1c0] sm:$0xff]
  %v87 = vld [vmem:[%s1 + $0x1c8] sm:$0xff]
  %v88 = vld [vmem:[%s1 + $0x1d0] sm:$0xff]
  %v89 = vld [vmem:[%s1 + $0x1d8] sm:$0xff]
  %v90 = vld [vmem:[%s1 + $0x1e0] sm:$0xff]
  %v91 = vld [vmem:[%s1 + $0x1e8] sm:$0xff]
  %v92 = vld [vmem:[%s1 + $0x1f0] sm:$0xff]
  %v93 = vld [vmem:[%s1 + $0x1f8] sm:$0xff]
  %v94 = vld [vmem:[%s2] sm:$0x3]
  %v96 = vlaneseq
  %v97 = vshrl.u32 %v96, 7
  %v98 = vsub.s32 0, %v97
  %v99 = vrot.slane %v94, %v98
  %v100 = vlaneseq
  %v101 = vshrl.u32 %v100, 7
  %v102 = vsub.s32 1, %v101
  %v103 = vrot.slane %v94, %v102
  %106 = vmatprep.subr.mxu0 %v61
  %107 = vmatpush1.msra.mxu0 %v60
  %108 = vmatprep.subr.mxu0 %v59
  %109 = vmatpush1.msra.mxu0 %v58
  %110 = vmatprep.subr.mxu0 %v57
  %111 = vmatpush1.msra.mxu0 %v56
  %112 = vmatprep.subr.mxu0 %v55
  %113 = vmatpush1.msra.mxu0 %v54
  %114 = vmatprep.subr.mxu0 %v53
  %115 = vmatpush1.msra.mxu0 %v52
  %116 = vmatprep.subr.mxu0 %v51
  %117 = vmatpush1.msra.mxu0 %v50
  %118 = vmatprep.subr.mxu0 %v49
  %119 = vmatpush1.msra.mxu0 %v48
  %120 = vmatprep.subr.mxu0 %v47
  %121 = vmatpush1.msra.mxu0 %v46
  %122 = vmatprep.subr.mxu0 %v45
  %123 = vmatpush1.msra.mxu0 %v44
  %124 = vmatprep.subr.mxu0 %v43
  %125 = vmatpush1.msra.mxu0 %v42
  %126 = vmatprep.subr.mxu0 %v41
  %127 = vmatpush1.msra.mxu0 %v40
  %128 = vmatprep.subr.mxu0 %v39
  %129 = vmatpush1.msra.mxu0 %v38
  %130 = vmatprep.subr.mxu0 %v37
  %131 = vmatpush1.msra.mxu0 %v36
  %132 = vmatprep.subr.mxu0 %v35
  %133 = vmatpush1.msra.mxu0 %v34
  %134 = vmatprep.subr.mxu0 %v33
  %135 = vmatpush1.msra.mxu0 %v32
  %136 = vmatprep.subr.mxu0 %v31
  %137 = vmatpush1.msra.mxu0 %v30
  %138 = vmatprep.subr.mxu0 %v93
  %139 = vmatpush2.msra.mxu0 %v92
  %140 = vmatprep.subr.mxu0 %v91
  %141 = vmatpush2.msra.mxu0 %v90
  %142 = vmatprep.subr.mxu0 %v89
  %143 = vmatpush2.msra.mxu0 %v88
  %144 = vmatprep.subr.mxu0 %v87
  %145 = vmatpush2.msra.mxu0 %v86
  %146 = vmatprep.subr.mxu0 %v85
  %147 = vmatpush2.msra.mxu0 %v84
  %148 = vmatprep.subr.mxu0 %v83
  %149 = vmatpush2.msra.mxu0 %v82
  %150 = vmatprep.subr.mxu0 %v81
  %151 = vmatpush2.msra.mxu0 %v80
  %152 = vmatprep.subr.mxu0 %v79
  %153 = vmatpush2.msra.mxu0 %v78
  %154 = vmatprep.subr.mxu0 %v77
  %155 = vmatpush2.msra.mxu0 %v76
  %156 = vmatprep.subr.mxu0 %v75
  %157 = vmatpush2.msra.mxu0 %v74
  %158 = vmatprep.subr.mxu0 %v73
  %159 = vmatpush2.msra.mxu0 %v72
  %160 = vmatprep.subr.mxu0 %v71
  %161 = vmatpush2.msra.mxu0 %v70
  %162 = vmatprep.subr.mxu0 %v69
  %163 = vmatpush2.msra.mxu0 %v68
  %164 = vmatprep.subr.mxu0 %v67
  %165 = vmatpush2.msra.mxu0 %v66
  %166 = vmatprep.subr.mxu0 %v65
  %167 = vmatpush2.msra.mxu0 %v64
  %168 = vmatprep.subr.mxu0 %v63
  %169 = vmatpush2.msra.mxu0 %v62
  %170 = vmatprep.mubr.f32.mxu0 %v15
  %171 = vmatmul.mubr.f32.gmra.mxu0 %v14
  %v172 = vpop.f32.mrf.mxu0
  %v173 = vadd.f32 %v99, %v172
  %v174 = vpop.f32.mrf.mxu0
  %v175 = vadd.f32 %v103, %v174
  %176 = vmatprep.mubr.f32.mxu0 %v17
  %177 = vmatmul.mubr.f32.gmra.mxu0 %v16
  %v178 = vpop.f32.mrf.mxu0
  %v179 = vadd.f32 %v99, %v178
  %v180 = vpop.f32.mrf.mxu0
  %v181 = vadd.f32 %v103, %v180
  %182 = vmatprep.mubr.f32.mxu0 %v19
  %183 = vmatmul.mubr.f32.gmra.mxu0 %v18
  %v184 = vpop.f32.mrf.mxu0
  %v185 = vadd.f32 %v99, %v184
  %v186 = vpop.f32.mrf.mxu0
  %v187 = vadd.f32 %v103, %v186
  %188 = vmatprep.mubr.f32.mxu0 %v21
  %189 = vmatmul.mubr.f32.gmra.mxu0 %v20
  %v190 = vpop.f32.mrf.mxu0
  %v191 = vadd.f32 %v99, %v190
  %v192 = vpop.f32.mrf.mxu0
  %v193 = vadd.f32 %v103, %v192
  %194 = vmatprep.mubr.f32.mxu0 %v23
  %195 = vmatmul.mubr.f32.gmra.mxu0 %v22
  %v196 = vpop.f32.mrf.mxu0
  %v197 = vadd.f32 %v99, %v196
  %v198 = vpop.f32.mrf.mxu0
  %v199 = vadd.f32 %v103, %v198
  %200 = vmatprep.mubr.f32.mxu0 %v25
  %201 = vmatmul.mubr.f32.gmra.mxu0 %v24
  %v202 = vpop.f32.mrf.mxu0
  %v203 = vadd.f32 %v99, %v202
  %v204 = vpop.f32.mrf.mxu0
  %v205 = vadd.f32 %v103, %v204
  %206 = vmatprep.mubr.f32.mxu0 %v27
  %207 = vmatmul.mubr.f32.gmra.mxu0 %v26
  %v208 = vpop.f32.mrf.mxu0
  %v209 = vadd.f32 %v99, %v208
  %v210 = vpop.f32.mrf.mxu0
  %v211 = vadd.f32 %v103, %v210
  %212 = vmatprep.mubr.f32.mxu0 %v29
  %213 = vmatmul.mubr.f32.gmra.mxu0 %v28
  %v214 = vpop.f32.mrf.mxu0
  %v215 = vadd.f32 %v99, %v214
  %v216 = vpop.f32.mrf.mxu0
  %v217 = vadd.f32 %v103, %v216
  %218 = vdwg.mxu0
  %219 = vst [vmem:[%s3] sm:$0xff] %v173
  %220 = vst [vmem:[%s3 + $0x8] sm:$0xff] %v175
  %221 = vst [vmem:[%s3 + $0x10] sm:$0xff] %v179
  %222 = vst [vmem:[%s3 + $0x18] sm:$0xff] %v181
  %223 = vst [vmem:[%s3 + $0x20] sm:$0xff] %v185
  %224 = vst [vmem:[%s3 + $0x28] sm:$0xff] %v187
  %225 = vst [vmem:[%s3 + $0x30] sm:$0xff] %v191
  %226 = vst [vmem:[%s3 + $0x38] sm:$0xff] %v193
  %227 = vst [vmem:[%s3 + $0x40] sm:$0xff] %v197
  %228 = vst [vmem:[%s3 + $0x48] sm:$0xff] %v199
  %229 = vst [vmem:[%s3 + $0x50] sm:$0xff] %v203
  %230 = vst [vmem:[%s3 + $0x58] sm:$0xff] %v205
  %231 = vst [vmem:[%s3 + $0x60] sm:$0xff] %v209
  %232 = vst [vmem:[%s3 + $0x68] sm:$0xff] %v211
  %233 = vst [vmem:[%s3 + $0x70] sm:$0xff] %v215
  %234 = vst [vmem:[%s3 + $0x78] sm:$0xff] %v217
  // Predicated region
  $region14: #{nmt_forward.19} parent=0 // pred_check
    _
  $region15: #{nmt_forward.19} parent=0 // pred_check_branch
    %236 = sbr.rel (0) target = $region17
  $region16: #{nmt_forward.19} parent=0 // pred_region
    _
  $region17: #{nmt_forward.19} parent=0 // pred_fallthru
    _
  // Predicated region
  $region18: #{nmt_forward.19} parent=0 // pred_check
    _
  $region19: #{nmt_forward.19} parent=0 // pred_check_branch
    %238 = sbr.rel (0) target = $region21
  $region20: #{nmt_forward.19} parent=0 // pred_region
    _
  $region21: #{nmt_forward.19} parent=0 // pred_fallthru
    _

// kernel: nmt_forward.23
$region0: #{nmt_forward.23}
  #allocation0 [shape = 'u32[]', space=smem, size = 0x4, offset = 0x4, fixed_abs, tag = 'smem constant byte address 0x4 - core index']
  #allocation1 [shape = 'u32[144,128]{1,0:T(1,128)}', space=vmem, size = 0x12000, scoped, tag = 'internal scratch']
  %s0 = inlined_call_operand.vmem [shape: f32[8,256], index: 0, kind: input, shape index: {}]
  %s1 = inlined_call_operand.vmem [shape: f32[256,256], index: 1, kind: input, shape index: {}]
  %s2 = inlined_call_operand.vmem [shape: f32[1,256], index: 2, kind: input, shape index: {}]
  %s3 = inlined_call_operand.vmem [shape: f32[8,256], index: 3, kind: output, shape index: {}]
  %s4 = sld [smem:[#allocation0]]
  $region22: #{nmt_forward.23} parent=0
    _
  %s6 = ssub.s32 1, %s4
  %s7 = scalar_select 0, %s6, %s4
  // Predicated region
  $region2: #{nmt_forward.23} parent=0 // pred_check
    _
  $region3: #{nmt_forward.23} parent=0 // pred_check_branch
    %9 = sbr.rel (0) target = $region5
  $region4: #{nmt_forward.23} parent=0 // pred_region
    _
  $region5: #{nmt_forward.23} parent=0 // pred_fallthru
    _
  // Predicated region
  $region6: #{nmt_forward.23} parent=0 // pred_check
    _
  $region7: #{nmt_forward.23} parent=0 // pred_check_branch
    %11 = sbr.rel (0) target = $region9
  $region8: #{nmt_forward.23} parent=0 // pred_region
    _
  $region9: #{nmt_forward.23} parent=0 // pred_fallthru
    _
  // Predicated region
  $region10: #{nmt_forward.23} parent=0 // pred_check
    _
  $region11: #{nmt_forward.23} parent=0 // pred_check_branch
    %13 = sbr.rel (0) target = $region13
  $region12: #{nmt_forward.23} parent=0 // pred_region
    _
  $region13: #{nmt_forward.23} parent=0 // pred_fallthru
    _
  %v14 = vld [vmem:[%s0] sm:$0xff]
  %v15 = vld [vmem:[%s0 + $0x8] sm:$0xff]
  %v16 = vld [vmem:[%s1] sm:$0xff]
  %v17 = vld [vmem:[%s1 + $0x8] sm:$0xff]
  %v18 = vld [vmem:[%s1 + $0x10] sm:$0xff]
  %v19 = vld [vmem:[%s1 + $0x18] sm:$0xff]
  %v20 = vld [vmem:[%s1 + $0x20] sm:$0xff]
  %v21 = vld [vmem:[%s1 + $0x28] sm:$0xff]
  %v22 = vld [vmem:[%s1 + $0x30] sm:$0xff]
  %v23 = vld [vmem:[%s1 + $0x38] sm:$0xff]
  %v24 = vld [vmem:[%s1 + $0x40] sm:$0xff]
  %v25 = vld [vmem:[%s1 + $0x48] sm:$0xff]
  %v26 = vld [vmem:[%s1 + $0x50] sm:$0xff]
  %v27 = vld [vmem:[%s1 + $0x58] sm:$0xff]
  %v28 = vld [vmem:[%s1 + $0x60] sm:$0xff]
  %v29 = vld [vmem:[%s1 + $0x68] sm:$0xff]
  %v30 = vld [vmem:[%s1 + $0x70] sm:$0xff]
  %v31 = vld [vmem:[%s1 + $0x78] sm:$0xff]
  %v32 = vld [vmem:[%s1 + $0x80] sm:$0xff]
  %v33 = vld [vmem:[%s1 + $0x88] sm:$0xff]
  %v34 = vld [vmem:[%s1 + $0x90] sm:$0xff]
  %v35 = vld [vmem:[%s1 + $0x98] sm:$0xff]
  %v36 = vld [vmem:[%s1 + $0xa0] sm:$0xff]
  %v37 = vld [vmem:[%s1 + $0xa8] sm:$0xff]
  %v38 = vld [vmem:[%s1 + $0xb0] sm:$0xff]
  %v39 = vld [vmem:[%s1 + $0xb8] sm:$0xff]
  %v40 = vld [vmem:[%s1 + $0xc0] sm:$0xff]
  %v41 = vld [vmem:[%s1 + $0xc8] sm:$0xff]
  %v42 = vld [vmem:[%s1 + $0xd0] sm:$0xff]
  %v43 = vld [vmem:[%s1 + $0xd8] sm:$0xff]
  %v44 = vld [vmem:[%s1 + $0xe0] sm:$0xff]
  %v45 = vld [vmem:[%s1 + $0xe8] sm:$0xff]
  %v46 = vld [vmem:[%s1 + $0xf0] sm:$0xff]
  %v47 = vld [vmem:[%s1 + $0xf8] sm:$0xff]
  %v48 = vld [vmem:[%s1 + $0x100] sm:$0xff]
  %v49 = vld [vmem:[%s1 + $0x108] sm:$0xff]
  %v50 = vld [vmem:[%s1 + $0x110] sm:$0xff]
  %v51 = vld [vmem:[%s1 + $0x118] sm:$0xff]
  %v52 = vld [vmem:[%s1 + $0x120] sm:$0xff]
  %v53 = vld [vmem:[%s1 + $0x128] sm:$0xff]
  %v54 = vld [vmem:[%s1 + $0x130] sm:$0xff]
  %v55 = vld [vmem:[%s1 + $0x138] sm:$0xff]
  %v56 = vld [vmem:[%s1 + $0x140] sm:$0xff]
  %v57 = vld [vmem:[%s1 + $0x148] sm:$0xff]
  %v58 = vld [vmem:[%s1 + $0x150] sm:$0xff]
  %v59 = vld [vmem:[%s1 + $0x158] sm:$0xff]
  %v60 = vld [vmem:[%s1 + $0x160] sm:$0xff]
  %v61 = vld [vmem:[%s1 + $0x168] sm:$0xff]
  %v62 = vld [vmem:[%s1 + $0x170] sm:$0xff]
  %v63 = vld [vmem:[%s1 + $0x178] sm:$0xff]
  %v64 = vld [vmem:[%s1 + $0x180] sm:$0xff]
  %v65 = vld [vmem:[%s1 + $0x188] sm:$0xff]
  %v66 = vld [vmem:[%s1 + $0x190] sm:$0xff]
  %v67 = vld [vmem:[%s1 + $0x198] sm:$0xff]
  %v68 = vld [vmem:[%s1 + $0x1a0] sm:$0xff]
  %v69 = vld [vmem:[%s1 + $0x1a8] sm:$0xff]
  %v70 = vld [vmem:[%s1 + $0x1b0] sm:$0xff]
  %v71 = vld [vmem:[%s1 + $0x1b8] sm:$0xff]
  %v72 = vld [vmem:[%s1 + $0x1c0] sm:$0xff]
  %v73 = vld [vmem:[%s1 + $0x1c8] sm:$0xff]
  %v74 = vld [vmem:[%s1 + $0x1d0] sm:$0xff]
  %v75 = vld [vmem:[%s1 + $0x1d8] sm:$0xff]
  %v76 = vld [vmem:[%s1 + $0x1e0] sm:$0xff]
  %v77 = vld [vmem:[%s1 + $0x1e8] sm:$0xff]
  %v78 = vld [vmem:[%s1 + $0x1f0] sm:$0xff]
  %v79 = vld [vmem:[%s1 + $0x1f8] sm:$0xff]
  %v80 = vld [vmem:[%s2] sm:$0x3]
  %v82 = vlaneseq
  %v83 = vshrl.u32 %v82, 7
  %v84 = vsub.s32 0, %v83
  %v85 = vrot.slane %v80, %v84
  %v86 = vlaneseq
  %v87 = vshrl.u32 %v86, 7
  %v88 = vsub.s32 1, %v87
  %v89 = vrot.slane %v80, %v88
  %92 = vmatprep.subr.mxu0 %v47
  %93 = vmatpush1.msra.mxu0 %v46
  %94 = vmatprep.subr.mxu0 %v45
  %95 = vmatpush1.msra.mxu0 %v44
  %96 = vmatprep.subr.mxu0 %v43
  %97 = vmatpush1.msra.mxu0 %v42
  %98 = vmatprep.subr.mxu0 %v41
  %99 = vmatpush1.msra.mxu0 %v40
  %100 = vmatprep.subr.mxu0 %v39
  %101 = vmatpush1.msra.mxu0 %v38
  %102 = vmatprep.subr.mxu0 %v37
  %103 = vmatpush1.msra.mxu0 %v36
  %104 = vmatprep.subr.mxu0 %v35
  %105 = vmatpush1.msra.mxu0 %v34
  %106 = vmatprep.subr.mxu0 %v33
  %107 = vmatpush1.msra.mxu0 %v32
  %108 = vmatprep.subr.mxu0 %v31
  %109 = vmatpush1.msra.mxu0 %v30
  %110 = vmatprep.subr.mxu0 %v29
  %111 = vmatpush1.msra.mxu0 %v28
  %112 = vmatprep.subr.mxu0 %v27
  %113 = vmatpush1.msra.mxu0 %v26
  %114 = vmatprep.subr.mxu0 %v25
  %115 = vmatpush1.msra.mxu0 %v24
  %116 = vmatprep.subr.mxu0 %v23
  %117 = vmatpush1.msra.mxu0 %v22
  %118 = vmatprep.subr.mxu0 %v21
  %119 = vmatpush1.msra.mxu0 %v20
  %120 = vmatprep.subr.mxu0 %v19
  %121 = vmatpush1.msra.mxu0 %v18
  %122 = vmatprep.subr.mxu0 %v17
  %123 = vmatpush1.msra.mxu0 %v16
  %124 = vmatprep.subr.mxu0 %v79
  %125 = vmatpush2.msra.mxu0 %v78
  %126 = vmatprep.subr.mxu0 %v77
  %127 = vmatpush2.msra.mxu0 %v76
  %128 = vmatprep.subr.mxu0 %v75
  %129 = vmatpush2.msra.mxu0 %v74
  %130 = vmatprep.subr.mxu0 %v73
  %131 = vmatpush2.msra.mxu0 %v72
  %132 = vmatprep.subr.mxu0 %v71
  %133 = vmatpush2.msra.mxu0 %v70
  %134 = vmatprep.subr.mxu0 %v69
  %135 = vmatpush2.msra.mxu0 %v68
  %136 = vmatprep.subr.mxu0 %v67
  %137 = vmatpush2.msra.mxu0 %v66
  %138 = vmatprep.subr.mxu0 %v65
  %139 = vmatpush2.msra.mxu0 %v64
  %140 = vmatprep.subr.mxu0 %v63
  %141 = vmatpush2.msra.mxu0 %v62
  %142 = vmatprep.subr.mxu0 %v61
  %143 = vmatpush2.msra.mxu0 %v60
  %144 = vmatprep.subr.mxu0 %v59
  %145 = vmatpush2.msra.mxu0 %v58
  %146 = vmatprep.subr.mxu0 %v57
  %147 = vmatpush2.msra.mxu0 %v56
  %148 = vmatprep.subr.mxu0 %v55
  %149 = vmatpush2.msra.mxu0 %v54
  %150 = vmatprep.subr.mxu0 %v53
  %151 = vmatpush2.msra.mxu0 %v52
  %152 = vmatprep.subr.mxu0 %v51
  %153 = vmatpush2.msra.mxu0 %v50
  %154 = vmatprep.subr.mxu0 %v49
  %155 = vmatpush2.msra.mxu0 %v48
  %156 = vmatprep.mubr.f32.mxu0 %v15
  %157 = vmatmul.mubr.f32.gmra.mxu0 %v14
  %v158 = vpop.f32.mrf.mxu0
  %v159 = vadd.f32 %v85, %v158
  %v160 = vpop.f32.mrf.mxu0
  %v161 = vadd.f32 %v89, %v160
  %162 = vdwg.mxu0
  %163 = vst [vmem:[%s3] sm:$0xff] %v159
  %164 = vst [vmem:[%s3 + $0x8] sm:$0xff] %v161
  // Predicated region
  $region14: #{nmt_forward.23} parent=0 // pred_check
    _
  $region15: #{nmt_forward.23} parent=0 // pred_check_branch
    %166 = sbr.rel (0) target = $region17
  $region16: #{nmt_forward.23} parent=0 // pred_region
    _
  $region17: #{nmt_forward.23} parent=0 // pred_fallthru
    _
  // Predicated region
  $region18: #{nmt_forward.23} parent=0 // pred_check
    _
  $region19: #{nmt_forward.23} parent=0 // pred_check_branch
    %168 = sbr.rel (0) target = $region21
  $region20: #{nmt_forward.23} parent=0 // pred_region
    _
  $region21: #{nmt_forward.23} parent=0 // pred_fallthru
    _

// kernel: nmt_forward.22
$region0: #{nmt_forward.22}
  #allocation0 [shape = 'u32[]', space=smem, size = 0x4, offset = 0x4, fixed_abs, tag = 'smem constant byte address 0x4 - core index']
  #allocation1 [shape = 'u32[144,128]{1,0:T(1,128)}', space=vmem, size = 0x12000, scoped, tag = 'internal scratch']
  %s0 = inlined_call_operand.vmem [shape: f32[40,128], index: 0, kind: input, shape index: {}]
  %s1 = inlined_call_operand.vmem [shape: f32[128,384], index: 1, kind: input, shape index: {}]
  %s2 = inlined_call_operand.vmem [shape: f32[40,384], index: 2, kind: output, shape index: {}]
  %s3 = sld [smem:[#allocation0]]
  $region18: #{nmt_forward.22} parent=0
    _
  %s5 = ssub.s32 1, %s3
  %s6 = scalar_select 0, %s5, %s3
  // Predicated region
  $region2: #{nmt_forward.22} parent=0 // pred_check
    _
  $region3: #{nmt_forward.22} parent=0 // pred_check_branch
    %8 = sbr.rel (0) target = $region5
  $region4: #{nmt_forward.22} parent=0 // pred_region
    _
  $region5: #{nmt_forward.22} parent=0 // pred_fallthru
    _
  // Predicated region
  $region6: #{nmt_forward.22} parent=0 // pred_check
    _
  $region7: #{nmt_forward.22} parent=0 // pred_check_branch
    %10 = sbr.rel (0) target = $region9
  $region8: #{nmt_forward.22} parent=0 // pred_region
    _
  $region9: #{nmt_forward.22} parent=0 // pred_fallthru
    _
  %v11 = vld [vmem:[%s0] sm:$0xff]
  %v12 = vld [vmem:[%s0 + $0x8] sm:$0xff]
  %v13 = vld [vmem:[%s0 + $0x10] sm:$0xff]
  %v14 = vld [vmem:[%s0 + $0x18] sm:$0xff]
  %v15 = vld [vmem:[%s0 + $0x20] sm:$0xff]
  %v16 = vld [vmem:[%s1] sm:$0xff]
  %v17 = vld [vmem:[%s1 + $0x8] sm:$0xff]
  %v18 = vld [vmem:[%s1 + $0x10] sm:$0xff]
  %v19 = vld [vmem:[%s1 + $0x18] sm:$0xff]
  %v20 = vld [vmem:[%s1 + $0x20] sm:$0xff]
  %v21 = vld [vmem:[%s1 + $0x28] sm:$0xff]
  %v22 = vld [vmem:[%s1 + $0x30] sm:$0xff]
  %v23 = vld [vmem:[%s1 + $0x38] sm:$0xff]
  %v24 = vld [vmem:[%s1 + $0x40] sm:$0xff]
  %v25 = vld [vmem:[%s1 + $0x48] sm:$0xff]
  %v26 = vld [vmem:[%s1 + $0x50] sm:$0xff]
  %v27 = vld [vmem:[%s1 + $0x58] sm:$0xff]
  %v28 = vld [vmem:[%s1 + $0x60] sm:$0xff]
  %v29 = vld [vmem:[%s1 + $0x68] sm:$0xff]
  %v30 = vld [vmem:[%s1 + $0x70] sm:$0xff]
  %v31 = vld [vmem:[%s1 + $0x78] sm:$0xff]
  %v32 = vld [vmem:[%s1 + $0x80] sm:$0xff]
  %v33 = vld [vmem:[%s1 + $0x88] sm:$0xff]
  %v34 = vld [vmem:[%s1 + $0x90] sm:$0xff]
  %v35 = vld [vmem:[%s1 + $0x98] sm:$0xff]
  %v36 = vld [vmem:[%s1 + $0xa0] sm:$0xff]
  %v37 = vld [vmem:[%s1 + $0xa8] sm:$0xff]
  %v38 = vld [vmem:[%s1 + $0xb0] sm:$0xff]
  %v39 = vld [vmem:[%s1 + $0xb8] sm:$0xff]
  %v40 = vld [vmem:[%s1 + $0xc0] sm:$0xff]
  %v41 = vld [vmem:[%s1 + $0xc8] sm:$0xff]
  %v42 = vld [vmem:[%s1 + $0xd0] sm:$0xff]
  %v43 = vld [vmem:[%s1 + $0xd8] sm:$0xff]
  %v44 = vld [vmem:[%s1 + $0xe0] sm:$0xff]
  %v45 = vld [vmem:[%s1 + $0xe8] sm:$0xff]
  %v46 = vld [vmem:[%s1 + $0xf0] sm:$0xff]
  %v47 = vld [vmem:[%s1 + $0xf8] sm:$0xff]
  %v48 = vld [vmem:[%s1 + $0x100] sm:$0xff]
  %v49 = vld [vmem:[%s1 + $0x108] sm:$0xff]
  %v50 = vld [vmem:[%s1 + $0x110] sm:$0xff]
  %v51 = vld [vmem:[%s1 + $0x118] sm:$0xff]
  %v52 = vld [vmem:[%s1 + $0x120] sm:$0xff]
  %v53 = vld [vmem:[%s1 + $0x128] sm:$0xff]
  %v54 = vld [vmem:[%s1 + $0x130] sm:$0xff]
  %v55 = vld [vmem:[%s1 + $0x138] sm:$0xff]
  %v56 = vld [vmem:[%s1 + $0x140] sm:$0xff]
  %v57 = vld [vmem:[%s1 + $0x148] sm:$0xff]
  %v58 = vld [vmem:[%s1 + $0x150] sm:$0xff]
  %v59 = vld [vmem:[%s1 + $0x158] sm:$0xff]
  %v60 = vld [vmem:[%s1 + $0x160] sm:$0xff]
  %v61 = vld [vmem:[%s1 + $0x168] sm:$0xff]
  %v62 = vld [vmem:[%s1 + $0x170] sm:$0xff]
  %v63 = vld [vmem:[%s1 + $0x178] sm:$0xff]
  %64 = vmatprep.subr.mxu0 %v62
  %65 = vmatpush1.msra.mxu0 %v61
  %66 = vmatprep.subr.mxu0 %v59
  %67 = vmatpush1.msra.mxu0 %v58
  %68 = vmatprep.subr.mxu0 %v56
  %69 = vmatpush1.msra.mxu0 %v55
  %70 = vmatprep.subr.mxu0 %v53
  %71 = vmatpush1.msra.mxu0 %v52
  %72 = vmatprep.subr.mxu0 %v50
  %73 = vmatpush1.msra.mxu0 %v49
  %74 = vmatprep.subr.mxu0 %v47
  %75 = vmatpush1.msra.mxu0 %v46
  %76 = vmatprep.subr.mxu0 %v44
  %77 = vmatpush1.msra.mxu0 %v43
  %78 = vmatprep.subr.mxu0 %v41
  %79 = vmatpush1.msra.mxu0 %v40
  %80 = vmatprep.subr.mxu0 %v38
  %81 = vmatpush1.msra.mxu0 %v37
  %82 = vmatprep.subr.mxu0 %v35
  %83 = vmatpush1.msra.mxu0 %v34
  %84 = vmatprep.subr.mxu0 %v32
  %85 = vmatpush1.msra.mxu0 %v31
  %86 = vmatprep.subr.mxu0 %v29
  %87 = vmatpush1.msra.mxu0 %v28
  %88 = vmatprep.subr.mxu0 %v26
  %89 = vmatpush1.msra.mxu0 %v25
  %90 = vmatprep.subr.mxu0 %v23
  %91 = vmatpush1.msra.mxu0 %v22
  %92 = vmatprep.subr.mxu0 %v20
  %93 = vmatpush1.msra.mxu0 %v19
  %94 = vmatprep.subr.mxu0 %v17
  %95 = vmatpush1.msra.mxu0 %v16
  %96 = vmatprep.subr.mxu0 0.0
  %97 = vmatpush2.msra.mxu0 0.0
  %98 = vmatprep.subr.mxu0 0.0
  %99 = vmatpush2.msra.mxu0 0.0
  %100 = vmatprep.subr.mxu0 0.0
  %101 = vmatpush2.msra.mxu0 0.0
  %102 = vmatprep.subr.mxu0 0.0
  %103 = vmatpush2.msra.mxu0 0.0
  %104 = vmatprep.subr.mxu0 0.0
  %105 = vmatpush2.msra.mxu0 0.0
  %106 = vmatprep.subr.mxu0 0.0
  %107 = vmatpush2.msra.mxu0 0.0
  %108 = vmatprep.subr.mxu0 0.0
  %109 = vmatpush2.msra.mxu0 0.0
  %110 = vmatprep.subr.mxu0 0.0
  %111 = vmatpush2.msra.mxu0 0.0
  %112 = vmatprep.subr.mxu0 0.0
  %113 = vmatpush2.msra.mxu0 0.0
  %114 = vmatprep.subr.mxu0 0.0
  %115 = vmatpush2.msra.mxu0 0.0
  %116 = vmatprep.subr.mxu0 0.0
  %117 = vmatpush2.msra.mxu0 0.0
  %118 = vmatprep.subr.mxu0 0.0
  %119 = vmatpush2.msra.mxu0 0.0
  %120 = vmatprep.subr.mxu0 0.0
  %121 = vmatpush2.msra.mxu0 0.0
  %122 = vmatprep.subr.mxu0 0.0
  %123 = vmatpush2.msra.mxu0 0.0
  %124 = vmatprep.subr.mxu0 0.0
  %125 = vmatpush2.msra.mxu0 0.0
  %126 = vmatprep.subr.mxu0 0.0
  %127 = vmatpush2.msra.mxu0 0.0
  %128 = vmatprep.mubr.f32.mxu0 0.0
  %129 = vmatmul.mubr.f32.gmra.mxu0 %v11
  %v130 = vpop.f32.mrf.mxu0
  %v131 = vadd.f32 0.0, %v130
  %v132 = vpop.f32.mrf.mxu0
  %v133 = vadd.f32 0.0, %v132
  %134 = vmatprep.mubr.f32.mxu0 0.0
  %135 = vmatmul.mubr.f32.gmra.mxu0 %v12
  %v136 = vpop.f32.mrf.mxu0
  %v137 = vadd.f32 0.0, %v136
  %v138 = vpop.f32.mrf.mxu0
  %v139 = vadd.f32 0.0, %v138
  %140 = vmatprep.mubr.f32.mxu0 0.0
  %141 = vmatmul.mubr.f32.gmra.mxu0 %v13
  %v142 = vpop.f32.mrf.mxu0
  %v143 = vadd.f32 0.0, %v142
  %v144 = vpop.f32.mrf.mxu0
  %v145 = vadd.f32 0.0, %v144
  %146 = vmatprep.mubr.f32.mxu0 0.0
  %147 = vmatmul.mubr.f32.gmra.mxu0 %v14
  %v148 = vpop.f32.mrf.mxu0
  %v149 = vadd.f32 0.0, %v148
  %v150 = vpop.f32.mrf.mxu0
  %v151 = vadd.f32 0.0, %v150
  %152 = vmatprep.mubr.f32.mxu0 0.0
  %153 = vmatmul.mubr.f32.gmra.mxu0 %v15
  %v154 = vpop.f32.mrf.mxu0
  %v155 = vadd.f32 0.0, %v154
  %v156 = vpop.f32.mrf.mxu0
  %v157 = vadd.f32 0.0, %v156
  %158 = vdwg.mxu0
  %159 = vmatprep.subr.mxu0 0.0
  %160 = vmatpush1.msra.mxu0 %v63
  %161 = vmatprep.subr.mxu0 0.0
  %162 = vmatpush1.msra.mxu0 %v60
  %163 = vmatprep.subr.mxu0 0.0
  %164 = vmatpush1.msra.mxu0 %v57
  %165 = vmatprep.subr.mxu0 0.0
  %166 = vmatpush1.msra.mxu0 %v54
  %167 = vmatprep.subr.mxu0 0.0
  %168 = vmatpush1.msra.mxu0 %v51
  %169 = vmatprep.subr.mxu0 0.0
  %170 = vmatpush1.msra.mxu0 %v48
  %171 = vmatprep.subr.mxu0 0.0
  %172 = vmatpush1.msra.mxu0 %v45
  %173 = vmatprep.subr.mxu0 0.0
  %174 = vmatpush1.msra.mxu0 %v42
  %175 = vmatprep.subr.mxu0 0.0
  %176 = vmatpush1.msra.mxu0 %v39
  %177 = vmatprep.subr.mxu0 0.0
  %178 = vmatpush1.msra.mxu0 %v36
  %179 = vmatprep.subr.mxu0 0.0
  %180 = vmatpush1.msra.mxu0 %v33
  %181 = vmatprep.subr.mxu0 0.0
  %182 = vmatpush1.msra.mxu0 %v30
  %183 = vmatprep.subr.mxu0 0.0
  %184 = vmatpush1.msra.mxu0 %v27
  %185 = vmatprep.subr.mxu0 0.0
  %186 = vmatpush1.msra.mxu0 %v24
  %187 = vmatprep.subr.mxu0 0.0
  %188 = vmatpush1.msra.mxu0 %v21
  %189 = vmatprep.subr.mxu0 0.0
  %190 = vmatpush1.msra.mxu0 %v18
  %191 = vmatprep.subr.mxu0 0.0
  %192 = vmatpush2.msra.mxu0 0.0
  %193 = vmatprep.subr.mxu0 0.0
  %194 = vmatpush2.msra.mxu0 0.0
  %195 = vmatprep.subr.mxu0 0.0
  %196 = vmatpush2.msra.mxu0 0.0
  %197 = vmatprep.subr.mxu0 0.0
  %198 = vmatpush2.msra.mxu0 0.0
  %199 = vmatprep.subr.mxu0 0.0
  %200 = vmatpush2.msra.mxu0 0.0
  %201 = vmatprep.subr.mxu0 0.0
  %202 = vmatpush2.msra.mxu0 0.0
  %203 = vmatprep.subr.mxu0 0.0
  %204 = vmatpush2.msra.mxu0 0.0
  %205 = vmatprep.subr.mxu0 0.0
  %206 = vmatpush2.msra.mxu0 0.0
  %207 = vmatprep.subr.mxu0 0.0
  %208 = vmatpush2.msra.mxu0 0.0
  %209 = vmatprep.subr.mxu0 0.0
  %210 = vmatpush2.msra.mxu0 0.0
  %211 = vmatprep.subr.mxu0 0.0
  %212 = vmatpush2.msra.mxu0 0.0
  %213 = vmatprep.subr.mxu0 0.0
  %214 = vmatpush2.msra.mxu0 0.0
  %215 = vmatprep.subr.mxu0 0.0
  %216 = vmatpush2.msra.mxu0 0.0
  %217 = vmatprep.subr.mxu0 0.0
  %218 = vmatpush2.msra.mxu0 0.0
  %219 = vmatprep.subr.mxu0 0.0
  %220 = vmatpush2.msra.mxu0 0.0
  %221 = vmatprep.subr.mxu0 0.0
  %222 = vmatpush2.msra.mxu0 0.0
  %223 = vmatprep.mubr.f32.mxu0 0.0
  %224 = vmatmul.mubr.f32.gmra.mxu0 %v11
  %v225 = vpop.f32.mrf.mxu0
  %v226 = vadd.f32 0.0, %v225
  %v227 = vpop.f32.mrf.mxu0
  %228 = vmatprep.mubr.f32.mxu0 0.0
  %229 = vmatmul.mubr.f32.gmra.mxu0 %v12
  %v230 = vpop.f32.mrf.mxu0
  %v231 = vadd.f32 0.0, %v230
  %v232 = vpop.f32.mrf.mxu0
  %233 = vmatprep.mubr.f32.mxu0 0.0
  %234 = vmatmul.mubr.f32.gmra.mxu0 %v13
  %v235 = vpop.f32.mrf.mxu0
  %v236 = vadd.f32 0.0, %v235
  %v237 = vpop.f32.mrf.mxu0
  %238 = vmatprep.mubr.f32.mxu0 0.0
  %239 = vmatmul.mubr.f32.gmra.mxu0 %v14
  %v240 = vpop.f32.mrf.mxu0
  %v241 = vadd.f32 0.0, %v240
  %v242 = vpop.f32.mrf.mxu0
  %243 = vmatprep.mubr.f32.mxu0 0.0
  %244 = vmatmul.mubr.f32.gmra.mxu0 %v15
  %v245 = vpop.f32.mrf.mxu0
  %v246 = vadd.f32 0.0, %v245
  %v247 = vpop.f32.mrf.mxu0
  %248 = vdwg.mxu0
  %249 = vst [vmem:[%s2] sm:$0xff] %v131
  %250 = vst [vmem:[%s2 + $0x8] sm:$0xff] %v133
  %251 = vst [vmem:[%s2 + $0x10] sm:$0xff] %v226
  %252 = vst [vmem:[%s2 + $0x18] sm:$0xff] %v137
  %253 = vst [vmem:[%s2 + $0x20] sm:$0xff] %v139
  %254 = vst [vmem:[%s2 + $0x28] sm:$0xff] %v231
  %255 = vst [vmem:[%s2 + $0x30] sm:$0xff] %v143
  %256 = vst [vmem:[%s2 + $0x38] sm:$0xff] %v145
  %257 = vst [vmem:[%s2 + $0x40] sm:$0xff] %v236
  %258 = vst [vmem:[%s2 + $0x48] sm:$0xff] %v149
  %259 = vst [vmem:[%s2 + $0x50] sm:$0xff] %v151
  %260 = vst [vmem:[%s2 + $0x58] sm:$0xff] %v241
  %261 = vst [vmem:[%s2 + $0x60] sm:$0xff] %v155
  %262 = vst [vmem:[%s2 + $0x68] sm:$0xff] %v157
  %263 = vst [vmem:[%s2 + $0x70] sm:$0xff] %v246
  // Predicated region
  $region10: #{nmt_forward.22} parent=0 // pred_check
    _
  $region11: #{nmt_forward.22} parent=0 // pred_check_branch
    %265 = sbr.rel (0) target = $region13
  $region12: #{nmt_forward.22} parent=0 // pred_region
    _
  $region13: #{nmt_forward.22} parent=0 // pred_fallthru
    _
  // Predicated region
  $region14: #{nmt_forward.22} parent=0 // pred_check
    _
  $region15: #{nmt_forward.22} parent=0 // pred_check_branch
    %267 = sbr.rel (0) target = $region17
  $region16: #{nmt_forward.22} parent=0 // pred_region
    _
  $region17: #{nmt_forward.22} parent=0 // pred_fallthru
    _

// kernel: nmt_forward.20
$region0: #{nmt_forward.20}
  #allocation0 [shape = 'u32[]', space=smem, size = 0x4, offset = 0x4, fixed_abs, tag = 'smem constant byte address 0x4 - core index']
  #allocation1 [shape = 'u32[144,128]{1,0:T(1,128)}', space=vmem, size = 0x12000, scoped, tag = 'internal scratch']
  %s0 = inlined_call_operand.vmem [shape: f32[40,128], index: 0, kind: input, shape index: {}]
  %s1 = inlined_call_operand.vmem [shape: f32[128,256], index: 1, kind: input, shape index: {}]
  %s2 = inlined_call_operand.vmem [shape: f32[1,256], index: 2, kind: input, shape index: {}]
  %s3 = inlined_call_operand.vmem [shape: f32[40,256], index: 3, kind: output, shape index: {}]
  %s4 = sld [smem:[#allocation0]]
  $region22: #{nmt_forward.20} parent=0
    _
  %s6 = ssub.s32 1, %s4
  %s7 = scalar_select 0, %s6, %s4
  // Predicated region
  $region2: #{nmt_forward.20} parent=0 // pred_check
    _
  $region3: #{nmt_forward.20} parent=0 // pred_check_branch
    %9 = sbr.rel (0) target = $region5
  $region4: #{nmt_forward.20} parent=0 // pred_region
    _
  $region5: #{nmt_forward.20} parent=0 // pred_fallthru
    _
  // Predicated region
  $region6: #{nmt_forward.20} parent=0 // pred_check
    _
  $region7: #{nmt_forward.20} parent=0 // pred_check_branch
    %11 = sbr.rel (0) target = $region9
  $region8: #{nmt_forward.20} parent=0 // pred_region
    _
  $region9: #{nmt_forward.20} parent=0 // pred_fallthru
    _
  // Predicated region
  $region10: #{nmt_forward.20} parent=0 // pred_check
    _
  $region11: #{nmt_forward.20} parent=0 // pred_check_branch
    %13 = sbr.rel (0) target = $region13
  $region12: #{nmt_forward.20} parent=0 // pred_region
    _
  $region13: #{nmt_forward.20} parent=0 // pred_fallthru
    _
  %v14 = vld [vmem:[%s0] sm:$0xff]
  %v15 = vld [vmem:[%s0 + $0x8] sm:$0xff]
  %v16 = vld [vmem:[%s0 + $0x10] sm:$0xff]
  %v17 = vld [vmem:[%s0 + $0x18] sm:$0xff]
  %v18 = vld [vmem:[%s0 + $0x20] sm:$0xff]
  %v19 = vld [vmem:[%s1] sm:$0xff]
  %v20 = vld [vmem:[%s1 + $0x8] sm:$0xff]
  %v21 = vld [vmem:[%s1 + $0x10] sm:$0xff]
  %v22 = vld [vmem:[%s1 + $0x18] sm:$0xff]
  %v23 = vld [vmem:[%s1 + $0x20] sm:$0xff]
  %v24 = vld [vmem:[%s1 + $0x28] sm:$0xff]
  %v25 = vld [vmem:[%s1 + $0x30] sm:$0xff]
  %v26 = vld [vmem:[%s1 + $0x38] sm:$0xff]
  %v27 = vld [vmem:[%s1 + $0x40] sm:$0xff]
  %v28 = vld [vmem:[%s1 + $0x48] sm:$0xff]
  %v29 = vld [vmem:[%s1 + $0x50] sm:$0xff]
  %v30 = vld [vmem:[%s1 + $0x58] sm:$0xff]
  %v31 = vld [vmem:[%s1 + $0x60] sm:$0xff]
  %v32 = vld [vmem:[%s1 + $0x68] sm:$0xff]
  %v33 = vld [vmem:[%s1 + $0x70] sm:$0xff]
  %v34 = vld [vmem:[%s1 + $0x78] sm:$0xff]
  %v35 = vld [vmem:[%s1 + $0x80] sm:$0xff]
  %v36 = vld [vmem:[%s1 + $0x88] sm:$0xff]
  %v37 = vld [vmem:[%s1 + $0x90] sm:$0xff]
  %v38 = vld [vmem:[%s1 + $0x98] sm:$0xff]
  %v39 = vld [vmem:[%s1 + $0xa0] sm:$0xff]
  %v40 = vld [vmem:[%s1 + $0xa8] sm:$0xff]
  %v41 = vld [vmem:[%s1 + $0xb0] sm:$0xff]
  %v42 = vld [vmem:[%s1 + $0xb8] sm:$0xff]
  %v43 = vld [vmem:[%s1 + $0xc0] sm:$0xff]
  %v44 = vld [vmem:[%s1 + $0xc8] sm:$0xff]
  %v45 = vld [vmem:[%s1 + $0xd0] sm:$0xff]
  %v46 = vld [vmem:[%s1 + $0xd8] sm:$0xff]
  %v47 = vld [vmem:[%s1 + $0xe0] sm:$0xff]
  %v48 = vld [vmem:[%s1 + $0xe8] sm:$0xff]
  %v49 = vld [vmem:[%s1 + $0xf0] sm:$0xff]
  %v50 = vld [vmem:[%s1 + $0xf8] sm:$0xff]
  %v51 = vld [vmem:[%s2] sm:$0x3]
  %v53 = vlaneseq
  %v54 = vshrl.u32 %v53, 7
  %v55 = vsub.s32 0, %v54
  %v56 = vrot.slane %v51, %v55
  %v57 = vlaneseq
  %v58 = vshrl.u32 %v57, 7
  %v59 = vsub.s32 1, %v58
  %v60 = vrot.slane %v51, %v59
  %63 = vmatprep.subr.mxu0 %v50
  %64 = vmatpush1.msra.mxu0 %v49
  %65 = vmatprep.subr.mxu0 %v48
  %66 = vmatpush1.msra.mxu0 %v47
  %67 = vmatprep.subr.mxu0 %v46
  %68 = vmatpush1.msra.mxu0 %v45
  %69 = vmatprep.subr.mxu0 %v44
  %70 = vmatpush1.msra.mxu0 %v43
  %71 = vmatprep.subr.mxu0 %v42
  %72 = vmatpush1.msra.mxu0 %v41
  %73 = vmatprep.subr.mxu0 %v40
  %74 = vmatpush1.msra.mxu0 %v39
  %75 = vmatprep.subr.mxu0 %v38
  %76 = vmatpush1.msra.mxu0 %v37
  %77 = vmatprep.subr.mxu0 %v36
  %78 = vmatpush1.msra.mxu0 %v35
  %79 = vmatprep.subr.mxu0 %v34
  %80 = vmatpush1.msra.mxu0 %v33
  %81 = vmatprep.subr.mxu0 %v32
  %82 = vmatpush1.msra.mxu0 %v31
  %83 = vmatprep.subr.mxu0 %v30
  %84 = vmatpush1.msra.mxu0 %v29
  %85 = vmatprep.subr.mxu0 %v28
  %86 = vmatpush1.msra.mxu0 %v27
  %87 = vmatprep.subr.mxu0 %v26
  %88 = vmatpush1.msra.mxu0 %v25
  %89 = vmatprep.subr.mxu0 %v24
  %90 = vmatpush1.msra.mxu0 %v23
  %91 = vmatprep.subr.mxu0 %v22
  %92 = vmatpush1.msra.mxu0 %v21
  %93 = vmatprep.subr.mxu0 %v20
  %94 = vmatpush1.msra.mxu0 %v19
  %95 = vmatprep.subr.mxu0 0.0
  %96 = vmatpush2.msra.mxu0 0.0
  %97 = vmatprep.subr.mxu0 0.0
  %98 = vmatpush2.msra.mxu0 0.0
  %99 = vmatprep.subr.mxu0 0.0
  %100 = vmatpush2.msra.mxu0 0.0
  %101 = vmatprep.subr.mxu0 0.0
  %102 = vmatpush2.msra.mxu0 0.0
  %103 = vmatprep.subr.mxu0 0.0
  %104 = vmatpush2.msra.mxu0 0.0
  %105 = vmatprep.subr.mxu0 0.0
  %106 = vmatpush2.msra.mxu0 0.0
  %107 = vmatprep.subr.mxu0 0.0
  %108 = vmatpush2.msra.mxu0 0.0
  %109 = vmatprep.subr.mxu0 0.0
  %110 = vmatpush2.msra.mxu0 0.0
  %111 = vmatprep.subr.mxu0 0.0
  %112 = vmatpush2.msra.mxu0 0.0
  %113 = vmatprep.subr.mxu0 0.0
  %114 = vmatpush2.msra.mxu0 0.0
  %115 = vmatprep.subr.mxu0 0.0
  %116 = vmatpush2.msra.mxu0 0.0
  %117 = vmatprep.subr.mxu0 0.0
  %118 = vmatpush2.msra.mxu0 0.0
  %119 = vmatprep.subr.mxu0 0.0
  %120 = vmatpush2.msra.mxu0 0.0
  %121 = vmatprep.subr.mxu0 0.0
  %122 = vmatpush2.msra.mxu0 0.0
  %123 = vmatprep.subr.mxu0 0.0
  %124 = vmatpush2.msra.mxu0 0.0
  %125 = vmatprep.subr.mxu0 0.0
  %126 = vmatpush2.msra.mxu0 0.0
  %127 = vmatprep.mubr.f32.mxu0 0.0
  %128 = vmatmul.mubr.f32.gmra.mxu0 %v14
  %v129 = vpop.f32.mrf.mxu0
  %v130 = vadd.f32 %v56, %v129
  %v131 = vpop.f32.mrf.mxu0
  %v132 = vadd.f32 %v60, %v131
  %133 = vmatprep.mubr.f32.mxu0 0.0
  %134 = vmatmul.mubr.f32.gmra.mxu0 %v15
  %v135 = vpop.f32.mrf.mxu0
  %v136 = vadd.f32 %v56, %v135
  %v137 = vpop.f32.mrf.mxu0
  %v138 = vadd.f32 %v60, %v137
  %139 = vmatprep.mubr.f32.mxu0 0.0
  %140 = vmatmul.mubr.f32.gmra.mxu0 %v16
  %v141 = vpop.f32.mrf.mxu0
  %v142 = vadd.f32 %v56, %v141
  %v143 = vpop.f32.mrf.mxu0
  %v144 = vadd.f32 %v60, %v143
  %145 = vmatprep.mubr.f32.mxu0 0.0
  %146 = vmatmul.mubr.f32.gmra.mxu0 %v17
  %v147 = vpop.f32.mrf.mxu0
  %v148 = vadd.f32 %v56, %v147
  %v149 = vpop.f32.mrf.mxu0
  %v150 = vadd.f32 %v60, %v149
  %151 = vmatprep.mubr.f32.mxu0 0.0
  %152 = vmatmul.mubr.f32.gmra.mxu0 %v18
  %v153 = vpop.f32.mrf.mxu0
  %v154 = vadd.f32 %v56, %v153
  %v155 = vpop.f32.mrf.mxu0
  %v156 = vadd.f32 %v60, %v155
  %157 = vdwg.mxu0
  %158 = vst [vmem:[%s3] sm:$0xff] %v130
  %159 = vst [vmem:[%s3 + $0x8] sm:$0xff] %v132
  %160 = vst [vmem:[%s3 + $0x10] sm:$0xff] %v136
  %161 = vst [vmem:[%s3 + $0x18] sm:$0xff] %v138
  %162 = vst [vmem:[%s3 + $0x20] sm:$0xff] %v142
  %163 = vst [vmem:[%s3 + $0x28] sm:$0xff] %v144
  %164 = vst [vmem:[%s3 + $0x30] sm:$0xff] %v148
  %165 = vst [vmem:[%s3 + $0x38] sm:$0xff] %v150
  %166 = vst [vmem:[%s3 + $0x40] sm:$0xff] %v154
  %167 = vst [vmem:[%s3 + $0x48] sm:$0xff] %v156
  // Predicated region
  $region14: #{nmt_forward.20} parent=0 // pred_check
    _
  $region15: #{nmt_forward.20} parent=0 // pred_check_branch
    %169 = sbr.rel (0) target = $region17
  $region16: #{nmt_forward.20} parent=0 // pred_region
    _
  $region17: #{nmt_forward.20} parent=0 // pred_fallthru
    _
  // Predicated region
  $region18: #{nmt_forward.20} parent=0 // pred_check
    _
  $region19: #{nmt_forward.20} parent=0 // pred_check_branch
    %171 = sbr.rel (0) target = $region21
  $region20: #{nmt_forward.20} parent=0 // pred_region
    _
  $region21: #{nmt_forward.20} parent=0 // pred_fallthru
    _

// kernel: nmt_forward.21
$region0: #{nmt_forward.21}
  #allocation0 [shape = 'u32[]', space=smem, size = 0x4, offset = 0x4, fixed_abs, tag = 'smem constant byte address 0x4 - core index']
  #allocation1 [shape = 'u32[144,128]{1,0:T(1,128)}', space=vmem, size = 0x12000, scoped, tag = 'internal scratch']
  %s0 = inlined_call_operand.vmem [shape: f32[40,128], index: 0, kind: input, shape index: {}]
  %s1 = inlined_call_operand.vmem [shape: f32[128,128], index: 1, kind: input, shape index: {}]
  %s2 = inlined_call_operand.vmem [shape: f32[1,128], index: 2, kind: input, shape index: {}]
  %s3 = inlined_call_operand.vmem [shape: f32[40,128], index: 3, kind: output, shape index: {}]
  %s4 = sld [smem:[#allocation0]]
  $region22: #{nmt_forward.21} parent=0
    _
  %s6 = ssub.s32 1, %s4
  %s7 = scalar_select 0, %s6, %s4
  // Predicated region
  $region2: #{nmt_forward.21} parent=0 // pred_check
    _
  $region3: #{nmt_forward.21} parent=0 // pred_check_branch
    %9 = sbr.rel (0) target = $region5
  $region4: #{nmt_forward.21} parent=0 // pred_region
    _
  $region5: #{nmt_forward.21} parent=0 // pred_fallthru
    _
  // Predicated region
  $region6: #{nmt_forward.21} parent=0 // pred_check
    _
  $region7: #{nmt_forward.21} parent=0 // pred_check_branch
    %11 = sbr.rel (0) target = $region9
  $region8: #{nmt_forward.21} parent=0 // pred_region
    _
  $region9: #{nmt_forward.21} parent=0 // pred_fallthru
    _
  // Predicated region
  $region10: #{nmt_forward.21} parent=0 // pred_check
    _
  $region11: #{nmt_forward.21} parent=0 // pred_check_branch
    %13 = sbr.rel (0) target = $region13
  $region12: #{nmt_forward.21} parent=0 // pred_region
    _
  $region13: #{nmt_forward.21} parent=0 // pred_fallthru
    _
  %v14 = vld [vmem:[%s0] sm:$0xff]
  %v15 = vld [vmem:[%s0 + $0x8] sm:$0xff]
  %v16 = vld [vmem:[%s0 + $0x10] sm:$0xff]
  %v17 = vld [vmem:[%s0 + $0x18] sm:$0xff]
  %v18 = vld [vmem:[%s0 + $0x20] sm:$0xff]
  %v19 = vld [vmem:[%s1] sm:$0xff]
  %v20 = vld [vmem:[%s1 + $0x8] sm:$0xff]
  %v21 = vld [vmem:[%s1 + $0x10] sm:$0xff]
  %v22 = vld [vmem:[%s1 + $0x18] sm:$0xff]
  %v23 = vld [vmem:[%s1 + $0x20] sm:$0xff]
  %v24 = vld [vmem:[%s1 + $0x28] sm:$0xff]
  %v25 = vld [vmem:[%s1 + $0x30] sm:$0xff]
  %v26 = vld [vmem:[%s1 + $0x38] sm:$0xff]
  %v27 = vld [vmem:[%s1 + $0x40] sm:$0xff]
  %v28 = vld [vmem:[%s1 + $0x48] sm:$0xff]
  %v29 = vld [vmem:[%s1 + $0x50] sm:$0xff]
  %v30 = vld [vmem:[%s1 + $0x58] sm:$0xff]
  %v31 = vld [vmem:[%s1 + $0x60] sm:$0xff]
  %v32 = vld [vmem:[%s1 + $0x68] sm:$0xff]
  %v33 = vld [vmem:[%s1 + $0x70] sm:$0xff]
  %v34 = vld [vmem:[%s1 + $0x78] sm:$0xff]
  %v35 = vld [vmem:[%s2] sm:$0x1]
  %v37 = vlaneseq
  %v38 = vshrl.u32 %v37, 7
  %v39 = vsub.s32 0, %v38
  %v40 = vrot.slane %v35, %v39
  %42 = vmatprep.subr.mxu0 0.0
  %43 = vmatpush1.msra.mxu0 %v34
  %44 = vmatprep.subr.mxu0 0.0
  %45 = vmatpush1.msra.mxu0 %v33
  %46 = vmatprep.subr.mxu0 0.0
  %47 = vmatpush1.msra.mxu0 %v32
  %48 = vmatprep.subr.mxu0 0.0
  %49 = vmatpush1.msra.mxu0 %v31
  %50 = vmatprep.subr.mxu0 0.0
  %51 = vmatpush1.msra.mxu0 %v30
  %52 = vmatprep.subr.mxu0 0.0
  %53 = vmatpush1.msra.mxu0 %v29
  %54 = vmatprep.subr.mxu0 0.0
  %55 = vmatpush1.msra.mxu0 %v28
  %56 = vmatprep.subr.mxu0 0.0
  %57 = vmatpush1.msra.mxu0 %v27
  %58 = vmatprep.subr.mxu0 0.0
  %59 = vmatpush1.msra.mxu0 %v26
  %60 = vmatprep.subr.mxu0 0.0
  %61 = vmatpush1.msra.mxu0 %v25
  %62 = vmatprep.subr.mxu0 0.0
  %63 = vmatpush1.msra.mxu0 %v24
  %64 = vmatprep.subr.mxu0 0.0
  %65 = vmatpush1.msra.mxu0 %v23
  %66 = vmatprep.subr.mxu0 0.0
  %67 = vmatpush1.msra.mxu0 %v22
  %68 = vmatprep.subr.mxu0 0.0
  %69 = vmatpush1.msra.mxu0 %v21
  %70 = vmatprep.subr.mxu0 0.0
  %71 = vmatpush1.msra.mxu0 %v20
  %72 = vmatprep.subr.mxu0 0.0
  %73 = vmatpush1.msra.mxu0 %v19
  %74 = vmatprep.subr.mxu0 0.0
  %75 = vmatpush2.msra.mxu0 0.0
  %76 = vmatprep.subr.mxu0 0.0
  %77 = vmatpush2.msra.mxu0 0.0
  %78 = vmatprep.subr.mxu0 0.0
  %79 = vmatpush2.msra.mxu0 0.0
  %80 = vmatprep.subr.mxu0 0.0
  %81 = vmatpush2.msra.mxu0 0.0
  %82 = vmatprep.subr.mxu0 0.0
  %83 = vmatpush2.msra.mxu0 0.0
  %84 = vmatprep.subr.mxu0 0.0
  %85 = vmatpush2.msra.mxu0 0.0
  %86 = vmatprep.subr.mxu0 0.0
  %87 = vmatpush2.msra.mxu0 0.0
  %88 = vmatprep.subr.mxu0 0.0
  %89 = vmatpush2.msra.mxu0 0.0
  %90 = vmatprep.subr.mxu0 0.0
  %91 = vmatpush2.msra.mxu0 0.0
  %92 = vmatprep.subr.mxu0 0.0
  %93 = vmatpush2.msra.mxu0 0.0
  %94 = vmatprep.subr.mxu0 0.0
  %95 = vmatpush2.msra.mxu0 0.0
  %96 = vmatprep.subr.mxu0 0.0
  %97 = vmatpush2.msra.mxu0 0.0
  %98 = vmatprep.subr.mxu0 0.0
  %99 = vmatpush2.msra.mxu0 0.0
  %100 = vmatprep.subr.mxu0 0.0
  %101 = vmatpush2.msra.mxu0 0.0
  %102 = vmatprep.subr.mxu0 0.0
  %103 = vmatpush2.msra.mxu0 0.0
  %104 = vmatprep.subr.mxu0 0.0
  %105 = vmatpush2.msra.mxu0 0.0
  %106 = vmatprep.mubr.f32.mxu0 0.0
  %107 = vmatmul.mubr.f32.gmra.mxu0 %v14
  %v108 = vpop.f32.mrf.mxu0
  %v109 = vadd.f32 %v40, %v108
  %v110 = vpop.f32.mrf.mxu0
  %111 = vmatprep.mubr.f32.mxu0 0.0
  %112 = vmatmul.mubr.f32.gmra.mxu0 %v15
  %v113 = vpop.f32.mrf.mxu0
  %v114 = vadd.f32 %v40, %v113
  %v115 = vpop.f32.mrf.mxu0
  %116 = vmatprep.mubr.f32.mxu0 0.0
  %117 = vmatmul.mubr.f32.gmra.mxu0 %v16
  %v118 = vpop.f32.mrf.mxu0
  %v119 = vadd.f32 %v40, %v118
  %v120 = vpop.f32.mrf.mxu0
  %121 = vmatprep.mubr.f32.mxu0 0.0
  %122 = vmatmul.mubr.f32.gmra.mxu0 %v17
  %v123 = vpop.f32.mrf.mxu0
  %v124 = vadd.f32 %v40, %v123
  %v125 = vpop.f32.mrf.mxu0
  %126 = vmatprep.mubr.f32.mxu0 0.0
  %127 = vmatmul.mubr.f32.gmra.mxu0 %v18
  %v128 = vpop.f32.mrf.mxu0
  %v129 = vadd.f32 %v40, %v128
  %v130 = vpop.f32.mrf.mxu0
  %131 = vdwg.mxu0
  %132 = vst [vmem:[%s3] sm:$0xff] %v109
  %133 = vst [vmem:[%s3 + $0x8] sm:$0xff] %v114
  %134 = vst [vmem:[%s3 + $0x10] sm:$0xff] %v119
  %135 = vst [vmem:[%s3 + $0x18] sm:$0xff] %v124
  %136 = vst [vmem:[%s3 + $0x20] sm:$0xff] %v129
  // Predicated region
  $region14: #{nmt_forward.21} parent=0 // pred_check
    _
  $region15: #{nmt_forward.21} parent=0 // pred_check_branch
    %138 = sbr.rel (0) target = $region17
  $region16: #{nmt_forward.21} parent=0 // pred_region
    _
  $region17: #{nmt_forward.21} parent=0 // pred_fallthru
    _
  // Predicated region
  $region18: #{nmt_forward.21} parent=0 // pred_check
    _
  $region19: #{nmt_forward.21} parent=0 // pred_check_branch
    %140 = sbr.rel (0) target = $region21
  $region20: #{nmt_forward.21} parent=0 // pred_region
    _
  $region21: #{nmt_forward.21} parent=0 // pred_fallthru
    _

// kernel: nmt_forward.25
$region0: #{nmt_forward.25}
  #allocation0 [shape = 'u32[]', space=smem, size = 0x4, offset = 0x4, fixed_abs, tag = 'smem constant byte address 0x4 - core index']
  #allocation1 [shape = 'u32[144,128]{1,0:T(1,128)}', space=vmem, size = 0x12000, scoped, tag = 'internal scratch']
  %s0 = inlined_call_operand.vmem [shape: f32[40,128], index: 0, kind: input, shape index: {}]
  %s1 = inlined_call_operand.vmem [shape: f32[128,128], index: 1, kind: input, shape index: {}]
  %s2 = inlined_call_operand.vmem [shape: f32[40,128], index: 2, kind: output, shape index: {}]
  %s3 = sld [smem:[#allocation0]]
  $region18: #{nmt_forward.25} parent=0
    _
  %s5 = ssub.s32 1, %s3
  %s6 = scalar_select 0, %s5, %s3
  // Predicated region
  $region2: #{nmt_forward.25} parent=0 // pred_check
    _
  $region3: #{nmt_forward.25} parent=0 // pred_check_branch
    %8 = sbr.rel (0) target = $region5
  $region4: #{nmt_forward.25} parent=0 // pred_region
    _
  $region5: #{nmt_forward.25} parent=0 // pred_fallthru
    _
  // Predicated region
  $region6: #{nmt_forward.25} parent=0 // pred_check
    _
  $region7: #{nmt_forward.25} parent=0 // pred_check_branch
    %10 = sbr.rel (0) target = $region9
  $region8: #{nmt_forward.25} parent=0 // pred_region
    _
  $region9: #{nmt_forward.25} parent=0 // pred_fallthru
    _
  %v11 = vld [vmem:[%s0] sm:$0xff]
  %v12 = vld [vmem:[%s0 + $0x8] sm:$0xff]
  %v13 = vld [vmem:[%s0 + $0x10] sm:$0xff]
  %v14 = vld [vmem:[%s0 + $0x18] sm:$0xff]
  %v15 = vld [vmem:[%s0 + $0x20] sm:$0xff]
  %v16 = vld [vmem:[%s1] sm:$0xff]
  %v17 = vld [vmem:[%s1 + $0x8] sm:$0xff]
  %v18 = vld [vmem:[%s1 + $0x10] sm:$0xff]
  %v19 = vld [vmem:[%s1 + $0x18] sm:$0xff]
  %v20 = vld [vmem:[%s1 + $0x20] sm:$0xff]
  %v21 = vld [vmem:[%s1 + $0x28] sm:$0xff]
  %v22 = vld [vmem:[%s1 + $0x30] sm:$0xff]
  %v23 = vld [vmem:[%s1 + $0x38] sm:$0xff]
  %v24 = vld [vmem:[%s1 + $0x40] sm:$0xff]
  %v25 = vld [vmem:[%s1 + $0x48] sm:$0xff]
  %v26 = vld [vmem:[%s1 + $0x50] sm:$0xff]
  %v27 = vld [vmem:[%s1 + $0x58] sm:$0xff]
  %v28 = vld [vmem:[%s1 + $0x60] sm:$0xff]
  %v29 = vld [vmem:[%s1 + $0x68] sm:$0xff]
  %v30 = vld [vmem:[%s1 + $0x70] sm:$0xff]
  %v31 = vld [vmem:[%s1 + $0x78] sm:$0xff]
  %32 = vmatprep.subr.mxu0 0.0
  %33 = vmatpush1.msra.mxu0 %v31
  %34 = vmatprep.subr.mxu0 0.0
  %35 = vmatpush1.msra.mxu0 %v30
  %36 = vmatprep.subr.mxu0 0.0
  %37 = vmatpush1.msra.mxu0 %v29
  %38 = vmatprep.subr.mxu0 0.0
  %39 = vmatpush1.msra.mxu0 %v28
  %40 = vmatprep.subr.mxu0 0.0
  %41 = vmatpush1.msra.mxu0 %v27
  %42 = vmatprep.subr.mxu0 0.0
  %43 = vmatpush1.msra.mxu0 %v26
  %44 = vmatprep.subr.mxu0 0.0
  %45 = vmatpush1.msra.mxu0 %v25
  %46 = vmatprep.subr.mxu0 0.0
  %47 = vmatpush1.msra.mxu0 %v24
  %48 = vmatprep.subr.mxu0 0.0
  %49 = vmatpush1.msra.mxu0 %v23
  %50 = vmatprep.subr.mxu0 0.0
  %51 = vmatpush1.msra.mxu0 %v22
  %52 = vmatprep.subr.mxu0 0.0
  %53 = vmatpush1.msra.mxu0 %v21
  %54 = vmatprep.subr.mxu0 0.0
  %55 = vmatpush1.msra.mxu0 %v20
  %56 = vmatprep.subr.mxu0 0.0
  %57 = vmatpush1.msra.mxu0 %v19
  %58 = vmatprep.subr.mxu0 0.0
  %59 = vmatpush1.msra.mxu0 %v18
  %60 = vmatprep.subr.mxu0 0.0
  %61 = vmatpush1.msra.mxu0 %v17
  %62 = vmatprep.subr.mxu0 0.0
  %63 = vmatpush1.msra.mxu0 %v16
  %64 = vmatprep.subr.mxu0 0.0
  %65 = vmatpush2.msra.mxu0 0.0
  %66 = vmatprep.subr.mxu0 0.0
  %67 = vmatpush2.msra.mxu0 0.0
  %68 = vmatprep.subr.mxu0 0.0
  %69 = vmatpush2.msra.mxu0 0.0
  %70 = vmatprep.subr.mxu0 0.0
  %71 = vmatpush2.msra.mxu0 0.0
  %72 = vmatprep.subr.mxu0 0.0
  %73 = vmatpush2.msra.mxu0 0.0
  %74 = vmatprep.subr.mxu0 0.0
  %75 = vmatpush2.msra.mxu0 0.0
  %76 = vmatprep.subr.mxu0 0.0
  %77 = vmatpush2.msra.mxu0 0.0
  %78 = vmatprep.subr.mxu0 0.0
  %79 = vmatpush2.msra.mxu0 0.0
  %80 = vmatprep.subr.mxu0 0.0
  %81 = vmatpush2.msra.mxu0 0.0
  %82 = vmatprep.subr.mxu0 0.0
  %83 = vmatpush2.msra.mxu0 0.0
  %84 = vmatprep.subr.mxu0 0.0
  %85 = vmatpush2.msra.mxu0 0.0
  %86 = vmatprep.subr.mxu0 0.0
  %87 = vmatpush2.msra.mxu0 0.0
  %88 = vmatprep.subr.mxu0 0.0
  %89 = vmatpush2.msra.mxu0 0.0
  %90 = vmatprep.subr.mxu0 0.0
  %91 = vmatpush2.msra.mxu0 0.0
  %92 = vmatprep.subr.mxu0 0.0
  %93 = vmatpush2.msra.mxu0 0.0
  %94 = vmatprep.subr.mxu0 0.0
  %95 = vmatpush2.msra.mxu0 0.0
  %96 = vmatprep.mubr.f32.mxu0 0.0
  %97 = vmatmul.mubr.f32.gmra.mxu0 %v11
  %v98 = vpop.f32.mrf.mxu0
  %v99 = vadd.f32 0.0, %v98
  %v100 = vpop.f32.mrf.mxu0
  %101 = vmatprep.mubr.f32.mxu0 0.0
  %102 = vmatmul.mubr.f32.gmra.mxu0 %v12
  %v103 = vpop.f32.mrf.mxu0
  %v104 = vadd.f32 0.0, %v103
  %v105 = vpop.f32.mrf.mxu0
  %106 = vmatprep.mubr.f32.mxu0 0.0
  %107 = vmatmul.mubr.f32.gmra.mxu0 %v13
  %v108 = vpop.f32.mrf.mxu0
  %v109 = vadd.f32 0.0, %v108
  %v110 = vpop.f32.mrf.mxu0
  %111 = vmatprep.mubr.f32.mxu0 0.0
  %112 = vmatmul.mubr.f32.gmra.mxu0 %v14
  %v113 = vpop.f32.mrf.mxu0
  %v114 = vadd.f32 0.0, %v113
  %v115 = vpop.f32.mrf.mxu0
  %116 = vmatprep.mubr.f32.mxu0 0.0
  %117 = vmatmul.mubr.f32.gmra.mxu0 %v15
  %v118 = vpop.f32.mrf.mxu0
  %v119 = vadd.f32 0.0, %v118
  %v120 = vpop.f32.mrf.mxu0
  %121 = vdwg.mxu0
  %122 = vst [vmem:[%s2] sm:$0xff] %v99
  %123 = vst [vmem:[%s2 + $0x8] sm:$0xff] %v104
  %124 = vst [vmem:[%s2 + $0x10] sm:$0xff] %v109
  %125 = vst [vmem:[%s2 + $0x18] sm:$0xff] %v114
  %126 = vst [vmem:[%s2 + $0x20] sm:$0xff] %v119
  // Predicated region
  $region10: #{nmt_forward.25} parent=0 // pred_check
    _
  $region11: #{nmt_forward.25} parent=0 // pred_check_branch
    %128 = sbr.rel (0) target = $region13
  $region12: #{nmt_forward.25} parent=0 // pred_region
    _
  $region13: #{nmt_forward.25} parent=0 // pred_fallthru
    _
  // Predicated region
  $region14: #{nmt_forward.25} parent=0 // pred_check
    _
  $region15: #{nmt_forward.25} parent=0 // pred_check_branch
    %130 = sbr.rel (0) target = $region17
  $region16: #{nmt_forward.25} parent=0 // pred_region
    _
  $region17: #{nmt_forward.25} parent=0 // pred_fallthru
    _

// kernel: nmt_forward.24
$region0: #{nmt_forward.24}
  #allocation0 [shape = 'u32[]', space=smem, size = 0x4, offset = 0x4, fixed_abs, tag = 'smem constant byte address 0x4 - core index']
  #allocation1 [shape = 'u32[144,128]{1,0:T(1,128)}', space=vmem, size = 0x12000, scoped, tag = 'internal scratch']
  #allocation2 [shape = 'f32[8,256]{1,0:T(8,128)}', space=vmem, size = 0x2000, scoped, tag = 'scratch operand']
  %s0 = inlined_call_operand.vmem [shape: f32[5,8,256], index: 0, kind: input, shape index: {}]
  %s1 = inlined_call_operand.vmem [shape: f32[5,8,128], index: 1, kind: input, shape index: {}]
  %s2 = inlined_call_operand.vmem [shape: f32[5,8,384], index: 2, kind: input, shape index: {}]
  %s3 = inlined_call_operand.vmem [shape: f32[8,256], index: 3, kind: input, shape index: {}]
  %s4 = inlined_call_operand.vmem [shape: f32[8,8,256], index: 4, kind: input, shape index: {}]
  %s5 = inlined_call_operand.vmem [shape: f32[8,8,256], index: 5, kind: input, shape index: {}]
  %s6 = inlined_call_operand.vmem [shape: f32[8,8], index: 6, kind: input, shape index: {}]
  %s7 = inlined_call_operand.vmem [shape: f32[256,256], index: 7, kind: input, shape index: {}]
  %s8 = inlined_call_operand.vmem [shape: f32[1,256], index: 8, kind: input, shape index: {}]
  %s9 = inlined_call_operand.vmem [shape: f32[1,256], index: 9, kind: input, shape index: {}]
  %s10 = inlined_call_operand.vmem [shape: f32[256,384], index: 10, kind: input, shape index: {}]
  %s11 = inlined_call_operand.vmem [shape: f32[1,384], index: 11, kind: input, shape index: {}]
  %s12 = inlined_call_operand.vmem [shape: f32[128,384], index: 12, kind: input, shape index: {}]
  %s13 = inlined_call_operand.vmem [shape: f32[1,384], index: 13, kind: input, shape index: {}]
  %s14 = inlined_call_operand.vmem [shape: f32[128,384], index: 14, kind: input, shape index: {}]
  %s15 = inlined_call_operand.vmem [shape: f32[1,384], index: 15, kind: input, shape index: {}]
  %s16 = inlined_call_operand.vmem [shape: f32[128,384], index: 16, kind: input, shape index: {}]
  %s17 = inlined_call_operand.vmem [shape: f32[1,384], index: 17, kind: input, shape index: {}]
  %s18 = inlined_call_operand.vmem [shape: f32[256,128], index: 18, kind: input, shape index: {}]
  %s19 = inlined_call_operand.vmem [shape: f32[1,128], index: 19, kind: input, shape index: {}]
  %s20 = inlined_call_operand.vmem [shape: f32[128,128], index: 20, kind: input, shape index: {}]
  %s21 = inlined_call_operand.vmem [shape: f32[1,128], index: 21, kind: input, shape index: {}]
  %s22 = inlined_call_operand.vmem [shape: f32[5,8,128], index: 22, kind: output, shape index: {}]
  %s23 = sld [smem:[#allocation0]]
  $region125: #{nmt_forward.24} parent=0
    _
  %s25 = ssub.s32 1, %s23
  %s26 = scalar_select 0, %s25, %s23
  loop: start=0, step=1, limit=7
  $region2: #{nmt_forward.24} parent=0 // loop_pre_header
    _
  $region3: #{nmt_forward.24} parent=0 // loop_header
    %s28 = sphi 0, %s32
    %p29 = scmp.ge.s32.totalorder %s28, 7
    %s38 = sphi 0, %s40
    %s41 = sphi 0, %s38
    %s42 = sphi 0, %s41
    %s58 = sphi 0, %s42
    %s64 = sphi 0, %s66
    %s67 = sphi 0, %s64
    %s68 = sphi 0, %s67
    %s84 = sphi 0, %s68
    %s90 = sphi 0, %s92
    %s93 = sphi 0, %s90
    %s94 = sphi 0, %s93
    %s110 = sphi 0, %s94
    %s114 = sphi 0, %s114
    %s116 = sphi 0, %s114
    %s117 = sphi 0, %s116
    %s131 = sphi 0, %s117
    %s135 = sphi 0, %s135
    %s137 = sphi 0, %s135
    %s138 = sphi 0, %s137
    %s152 = sphi 0, %s138
    %s156 = sphi 0, %s156
    %s158 = sphi 0, %s156
    %s159 = sphi 0, %s158
    %s173 = sphi 0, %s159
    %s177 = sphi 0, %s177
    %s179 = sphi 0, %s177
    %s180 = sphi 0, %s179
    %s194 = sphi 0, %s180
    %s198 = sphi 0, %s198
    %s200 = sphi 0, %s198
    %s201 = sphi 0, %s200
    %s215 = sphi 0, %s201
    %s219 = sphi 0, %s219
    %s221 = sphi 0, %s219
    %s222 = sphi 0, %s221
    %s236 = sphi 0, %s222
    %s240 = sphi 0, %s240
    %s242 = sphi 0, %s240
    %s243 = sphi 0, %s242
    %s257 = sphi 0, %s243
    %s261 = sphi 0, %s261
    %s263 = sphi 0, %s261
    %s264 = sphi 0, %s263
    %s278 = sphi 0, %s264
    %s282 = sphi 0, %s282
    %s284 = sphi 0, %s282
    %s285 = sphi 0, %s284
    %s299 = sphi 0, %s285
    %s303 = sphi 0, %s303
    %s305 = sphi 0, %s303
    %s306 = sphi 0, %s305
    %s320 = sphi 0, %s306
    %s324 = sphi 0, %s324
    %s326 = sphi 0, %s324
    %s327 = sphi 0, %s326
    %s341 = sphi 0, %s327
    %s345 = sphi 0, %s345
    %s347 = sphi 0, %s345
    %s348 = sphi 0, %s347
    %s362 = sphi 0, %s348
    %s366 = sphi 0, %s366
    %s368 = sphi 0, %s366
    %s369 = sphi 0, %s368
    %s383 = sphi 0, %s369
    %s387 = sphi 0, %s387
    %s389 = sphi 0, %s387
    %s390 = sphi 0, %s389
    %s404 = sphi 0, %s390
    %s408 = sphi 0, %s408
    %s410 = sphi 0, %s408
    %s411 = sphi 0, %s410
    %s425 = sphi 0, %s411
    %s429 = sphi 0, %s429
    %s431 = sphi 0, %s429
    %s432 = sphi 0, %s431
    %s446 = sphi 0, %s432
    %s450 = sphi 0, %s450
    %s452 = sphi 0, %s450
    %s453 = sphi 0, %s452
    %s467 = sphi 0, %s453
    %s471 = sphi 0, %s471
    %s473 = sphi 0, %s471
    %s474 = sphi 0, %s473
    %s488 = sphi 0, %s474
    %s492 = sphi 0, %s492
    %s494 = sphi 0, %s492
    %s495 = sphi 0, %s494
    %s509 = sphi 0, %s495
    %s515 = sphi 0, %s517
    %s518 = sphi 0, %s515
    %s519 = sphi 0, %s518
    %s535 = sphi 0, %s519
  $region4: #{nmt_forward.24} parent=0 // loop_header_branch
    %31 = sbr.rel (%p29) target = $region8
  $region5: #{nmt_forward.24} parent=0 // loop_body
    %s33 = ssub.s32 %s28, 1
    %s34 = ssub.s32 %s28, 2
    %s35 = sadd.s32 %s28, 1
    %s36 = ssub.s32 %s28, %s35
    %p37 = scmp.eq.s32.totalorder %s36, 0
    %s39 = sadd.s32 %s38, 1
    %s40 = scalar_select %p37, %s38, %s39
    %p43 = pneg %p37
    %p44 = scmp.eq.s32.totalorder %s28, 4
    %p45 = por %p43, %p44
    %p46 = scmp.ne.s32.totalorder %s38, %s41
    %p47 = scmp.eq.s32.totalorder %s28, 0
    %p48 = por %p46, %p47
    %p49 = scmp.ne.s32.totalorder %s38, %s41
    %p50 = scmp.eq.s32.totalorder %s33, 4
    %p51 = por %p49, %p50
    %p52 = scmp.ne.s32.totalorder %s41, %s42
    %p53 = scmp.eq.s32.totalorder %s33, 0
    %p54 = por %p52, %p53
    %p55 = scmp.ne.s32.totalorder %s41, %s42
    %p56 = scmp.eq.s32.totalorder %s34, 4
    %p57 = por %p55, %p56
    %p59 = scmp.ne.s32.totalorder %s42, %s58
    %p60 = scmp.eq.s32.totalorder %s34, 0
    %p61 = por %p59, %p60
    %s62 = ssub.s32 %s28, %s35
    %p63 = scmp.eq.s32.totalorder %s62, 0
    %s65 = sadd.s32 %s64, 1
    %s66 = scalar_select %p63, %s64, %s65
    %p69 = pneg %p63
    %p70 = scmp.eq.s32.totalorder %s28, 4
    %p71 = por %p69, %p70
    %p72 = scmp.ne.s32.totalorder %s64, %s67
    %p73 = scmp.eq.s32.totalorder %s28, 0
    %p74 = por %p72, %p73
    %p75 = scmp.ne.s32.totalorder %s64, %s67
    %p76 = scmp.eq.s32.totalorder %s33, 4
    %p77 = por %p75, %p76
    %p78 = scmp.ne.s32.totalorder %s67, %s68
    %p79 = scmp.eq.s32.totalorder %s33, 0
    %p80 = por %p78, %p79
    %p81 = scmp.ne.s32.totalorder %s67, %s68
    %p82 = scmp.eq.s32.totalorder %s34, 4
    %p83 = por %p81, %p82
    %p85 = scmp.ne.s32.totalorder %s68, %s84
    %p86 = scmp.eq.s32.totalorder %s34, 0
    %p87 = por %p85, %p86
    %s88 = ssub.s32 %s28, %s35
    %p89 = scmp.eq.s32.totalorder %s88, 0
    %s91 = sadd.s32 %s90, 1
    %s92 = scalar_select %p89, %s90, %s91
    %p95 = pneg %p89
    %p96 = scmp.eq.s32.totalorder %s28, 4
    %p97 = por %p95, %p96
    %p98 = scmp.ne.s32.totalorder %s90, %s93
    %p99 = scmp.eq.s32.totalorder %s28, 0
    %p100 = por %p98, %p99
    %p101 = scmp.ne.s32.totalorder %s90, %s93
    %p102 = scmp.eq.s32.totalorder %s33, 4
    %p103 = por %p101, %p102
    %p104 = scmp.ne.s32.totalorder %s93, %s94
    %p105 = scmp.eq.s32.totalorder %s33, 0
    %p106 = por %p104, %p105
    %p107 = scmp.ne.s32.totalorder %s93, %s94
    %p108 = scmp.eq.s32.totalorder %s34, 4
    %p109 = por %p107, %p108
    %p111 = scmp.ne.s32.totalorder %s94, %s110
    %p112 = scmp.eq.s32.totalorder %s34, 0
    %p113 = por %p111, %p112
    %s115 = sadd.s32 %s114, 1
    %p118 = scmp.eq.s32.totalorder %s28, 4
    %p119 = scmp.ne.s32.totalorder %s114, %s116
    %p120 = scmp.eq.s32.totalorder %s28, 0
    %p121 = por %p119, %p120
    %p122 = scmp.ne.s32.totalorder %s114, %s116
    %p123 = scmp.eq.s32.totalorder %s33, 4
    %p124 = por %p122, %p123
    %p125 = scmp.ne.s32.totalorder %s116, %s117
    %p126 = scmp.eq.s32.totalorder %s33, 0
    %p127 = por %p125, %p126
    %p128 = scmp.ne.s32.totalorder %s116, %s117
    %p129 = scmp.eq.s32.totalorder %s34, 4
    %p130 = por %p128, %p129
    %p132 = scmp.ne.s32.totalorder %s117, %s131
    %p133 = scmp.eq.s32.totalorder %s34, 0
    %p134 = por %p132, %p133
    %s136 = sadd.s32 %s135, 1
    %p139 = scmp.eq.s32.totalorder %s28, 4
    %p140 = scmp.ne.s32.totalorder %s135, %s137
    %p141 = scmp.eq.s32.totalorder %s28, 0
    %p142 = por %p140, %p141
    %p143 = scmp.ne.s32.totalorder %s135, %s137
    %p144 = scmp.eq.s32.totalorder %s33, 4
    %p145 = por %p143, %p144
    %p146 = scmp.ne.s32.totalorder %s137, %s138
    %p147 = scmp.eq.s32.totalorder %s33, 0
    %p148 = por %p146, %p147
    %p149 = scmp.ne.s32.totalorder %s137, %s138
    %p150 = scmp.eq.s32.totalorder %s34, 4
    %p151 = por %p149, %p150
    %p153 = scmp.ne.s32.totalorder %s138, %s152
    %p154 = scmp.eq.s32.totalorder %s34, 0
    %p155 = por %p153, %p154
    %s157 = sadd.s32 %s156, 1
    %p160 = scmp.eq.s32.totalorder %s28, 4
    %p161 = scmp.ne.s32.totalorder %s156, %s158
    %p162 = scmp.eq.s32.totalorder %s28, 0
    %p163 = por %p161, %p162
    %p164 = scmp.ne.s32.totalorder %s156, %s158
    %p165 = scmp.eq.s32.totalorder %s33, 4
    %p166 = por %p164, %p165
    %p167 = scmp.ne.s32.totalorder %s158, %s159
    %p168 = scmp.eq.s32.totalorder %s33, 0
    %p169 = por %p167, %p168
    %p170 = scmp.ne.s32.totalorder %s158, %s159
    %p171 = scmp.eq.s32.totalorder %s34, 4
    %p172 = por %p170, %p171
    %p174 = scmp.ne.s32.totalorder %s159, %s173
    %p175 = scmp.eq.s32.totalorder %s34, 0
    %p176 = por %p174, %p175
    %s178 = sadd.s32 %s177, 1
    %p181 = scmp.eq.s32.totalorder %s28, 4
    %p182 = scmp.ne.s32.totalorder %s177, %s179
    %p183 = scmp.eq.s32.totalorder %s28, 0
    %p184 = por %p182, %p183
    %p185 = scmp.ne.s32.totalorder %s177, %s179
    %p186 = scmp.eq.s32.totalorder %s33, 4
    %p187 = por %p185, %p186
    %p188 = scmp.ne.s32.totalorder %s179, %s180
    %p189 = scmp.eq.s32.totalorder %s33, 0
    %p190 = por %p188, %p189
    %p191 = scmp.ne.s32.totalorder %s179, %s180
    %p192 = scmp.eq.s32.totalorder %s34, 4
    %p193 = por %p191, %p192
    %p195 = scmp.ne.s32.totalorder %s180, %s194
    %p196 = scmp.eq.s32.totalorder %s34, 0
    %p197 = por %p195, %p196
    %s199 = sadd.s32 %s198, 1
    %p202 = scmp.eq.s32.totalorder %s28, 4
    %p203 = scmp.ne.s32.totalorder %s198, %s200
    %p204 = scmp.eq.s32.totalorder %s28, 0
    %p205 = por %p203, %p204
    %p206 = scmp.ne.s32.totalorder %s198, %s200
    %p207 = scmp.eq.s32.totalorder %s33, 4
    %p208 = por %p206, %p207
    %p209 = scmp.ne.s32.totalorder %s200, %s201
    %p210 = scmp.eq.s32.totalorder %s33, 0
    %p211 = por %p209, %p210
    %p212 = scmp.ne.s32.totalorder %s200, %s201
    %p213 = scmp.eq.s32.totalorder %s34, 4
    %p214 = por %p212, %p213
    %p216 = scmp.ne.s32.totalorder %s201, %s215
    %p217 = scmp.eq.s32.totalorder %s34, 0
    %p218 = por %p216, %p217
    %s220 = sadd.s32 %s219, 1
    %p223 = scmp.eq.s32.totalorder %s28, 4
    %p224 = scmp.ne.s32.totalorder %s219, %s221
    %p225 = scmp.eq.s32.totalorder %s28, 0
    %p226 = por %p224, %p225
    %p227 = scmp.ne.s32.totalorder %s219, %s221
    %p228 = scmp.eq.s32.totalorder %s33, 4
    %p229 = por %p227, %p228
    %p230 = scmp.ne.s32.totalorder %s221, %s222
    %p231 = scmp.eq.s32.totalorder %s33, 0
    %p232 = por %p230, %p231
    %p233 = scmp.ne.s32.totalorder %s221, %s222
    %p234 = scmp.eq.s32.totalorder %s34, 4
    %p235 = por %p233, %p234
    %p237 = scmp.ne.s32.totalorder %s222, %s236
    %p238 = scmp.eq.s32.totalorder %s34, 0
    %p239 = por %p237, %p238
    %s241 = sadd.s32 %s240, 1
    %p244 = scmp.eq.s32.totalorder %s28, 4
    %p245 = scmp.ne.s32.totalorder %s240, %s242
    %p246 = scmp.eq.s32.totalorder %s28, 0
    %p247 = por %p245, %p246
    %p248 = scmp.ne.s32.totalorder %s240, %s242
    %p249 = scmp.eq.s32.totalorder %s33, 4
    %p250 = por %p248, %p249
    %p251 = scmp.ne.s32.totalorder %s242, %s243
    %p252 = scmp.eq.s32.totalorder %s33, 0
    %p253 = por %p251, %p252
    %p254 = scmp.ne.s32.totalorder %s242, %s243
    %p255 = scmp.eq.s32.totalorder %s34, 4
    %p256 = por %p254, %p255
    %p258 = scmp.ne.s32.totalorder %s243, %s257
    %p259 = scmp.eq.s32.totalorder %s34, 0
    %p260 = por %p258, %p259
    %s262 = sadd.s32 %s261, 1
    %p265 = scmp.eq.s32.totalorder %s28, 4
    %p266 = scmp.ne.s32.totalorder %s261, %s263
    %p267 = scmp.eq.s32.totalorder %s28, 0
    %p268 = por %p266, %p267
    %p269 = scmp.ne.s32.totalorder %s261, %s263
    %p270 = scmp.eq.s32.totalorder %s33, 4
    %p271 = por %p269, %p270
    %p272 = scmp.ne.s32.totalorder %s263, %s264
    %p273 = scmp.eq.s32.totalorder %s33, 0
    %p274 = por %p272, %p273
    %p275 = scmp.ne.s32.totalorder %s263, %s264
    %p276 = scmp.eq.s32.totalorder %s34, 4
    %p277 = por %p275, %p276
    %p279 = scmp.ne.s32.totalorder %s264, %s278
    %p280 = scmp.eq.s32.totalorder %s34, 0
    %p281 = por %p279, %p280
    %s283 = sadd.s32 %s282, 1
    %p286 = scmp.eq.s32.totalorder %s28, 4
    %p287 = scmp.ne.s32.totalorder %s282, %s284
    %p288 = scmp.eq.s32.totalorder %s28, 0
    %p289 = por %p287, %p288
    %p290 = scmp.ne.s32.totalorder %s282, %s284
    %p291 = scmp.eq.s32.totalorder %s33, 4
    %p292 = por %p290, %p291
    %p293 = scmp.ne.s32.totalorder %s284, %s285
    %p294 = scmp.eq.s32.totalorder %s33, 0
    %p295 = por %p293, %p294
    %p296 = scmp.ne.s32.totalorder %s284, %s285
    %p297 = scmp.eq.s32.totalorder %s34, 4
    %p298 = por %p296, %p297
    %p300 = scmp.ne.s32.totalorder %s285, %s299
    %p301 = scmp.eq.s32.totalorder %s34, 0
    %p302 = por %p300, %p301
    %s304 = sadd.s32 %s303, 1
    %p307 = scmp.eq.s32.totalorder %s28, 4
    %p308 = scmp.ne.s32.totalorder %s303, %s305
    %p309 = scmp.eq.s32.totalorder %s28, 0
    %p310 = por %p308, %p309
    %p311 = scmp.ne.s32.totalorder %s303, %s305
    %p312 = scmp.eq.s32.totalorder %s33, 4
    %p313 = por %p311, %p312
    %p314 = scmp.ne.s32.totalorder %s305, %s306
    %p315 = scmp.eq.s32.totalorder %s33, 0
    %p316 = por %p314, %p315
    %p317 = scmp.ne.s32.totalorder %s305, %s306
    %p318 = scmp.eq.s32.totalorder %s34, 4
    %p319 = por %p317, %p318
    %p321 = scmp.ne.s32.totalorder %s306, %s320
    %p322 = scmp.eq.s32.totalorder %s34, 0
    %p323 = por %p321, %p322
    %s325 = sadd.s32 %s324, 1
    %p328 = scmp.eq.s32.totalorder %s28, 4
    %p329 = scmp.ne.s32.totalorder %s324, %s326
    %p330 = scmp.eq.s32.totalorder %s28, 0
    %p331 = por %p329, %p330
    %p332 = scmp.ne.s32.totalorder %s324, %s326
    %p333 = scmp.eq.s32.totalorder %s33, 4
    %p334 = por %p332, %p333
    %p335 = scmp.ne.s32.totalorder %s326, %s327
    %p336 = scmp.eq.s32.totalorder %s33, 0
    %p337 = por %p335, %p336
    %p338 = scmp.ne.s32.totalorder %s326, %s327
    %p339 = scmp.eq.s32.totalorder %s34, 4
    %p340 = por %p338, %p339
    %p342 = scmp.ne.s32.totalorder %s327, %s341
    %p343 = scmp.eq.s32.totalorder %s34, 0
    %p344 = por %p342, %p343
    %s346 = sadd.s32 %s345, 1
    %p349 = scmp.eq.s32.totalorder %s28, 4
    %p350 = scmp.ne.s32.totalorder %s345, %s347
    %p351 = scmp.eq.s32.totalorder %s28, 0
    %p352 = por %p350, %p351
    %p353 = scmp.ne.s32.totalorder %s345, %s347
    %p354 = scmp.eq.s32.totalorder %s33, 4
    %p355 = por %p353, %p354
    %p356 = scmp.ne.s32.totalorder %s347, %s348
    %p357 = scmp.eq.s32.totalorder %s33, 0
    %p358 = por %p356, %p357
    %p359 = scmp.ne.s32.totalorder %s347, %s348
    %p360 = scmp.eq.s32.totalorder %s34, 4
    %p361 = por %p359, %p360
    %p363 = scmp.ne.s32.totalorder %s348, %s362
    %p364 = scmp.eq.s32.totalorder %s34, 0
    %p365 = por %p363, %p364
    %s367 = sadd.s32 %s366, 1
    %p370 = scmp.eq.s32.totalorder %s28, 4
    %p371 = scmp.ne.s32.totalorder %s366, %s368
    %p372 = scmp.eq.s32.totalorder %s28, 0
    %p373 = por %p371, %p372
    %p374 = scmp.ne.s32.totalorder %s366, %s368
    %p375 = scmp.eq.s32.totalorder %s33, 4
    %p376 = por %p374, %p375
    %p377 = scmp.ne.s32.totalorder %s368, %s369
    %p378 = scmp.eq.s32.totalorder %s33, 0
    %p379 = por %p377, %p378
    %p380 = scmp.ne.s32.totalorder %s368, %s369
    %p381 = scmp.eq.s32.totalorder %s34, 4
    %p382 = por %p380, %p381
    %p384 = scmp.ne.s32.totalorder %s369, %s383
    %p385 = scmp.eq.s32.totalorder %s34, 0
    %p386 = por %p384, %p385
    %s388 = sadd.s32 %s387, 1
    %p391 = scmp.eq.s32.totalorder %s28, 4
    %p392 = scmp.ne.s32.totalorder %s387, %s389
    %p393 = scmp.eq.s32.totalorder %s28, 0
    %p394 = por %p392, %p393
    %p395 = scmp.ne.s32.totalorder %s387, %s389
    %p396 = scmp.eq.s32.totalorder %s33, 4
    %p397 = por %p395, %p396
    %p398 = scmp.ne.s32.totalorder %s389, %s390
    %p399 = scmp.eq.s32.totalorder %s33, 0
    %p400 = por %p398, %p399
    %p401 = scmp.ne.s32.totalorder %s389, %s390
    %p402 = scmp.eq.s32.totalorder %s34, 4
    %p403 = por %p401, %p402
    %p405 = scmp.ne.s32.totalorder %s390, %s404
    %p406 = scmp.eq.s32.totalorder %s34, 0
    %p407 = por %p405, %p406
    %s409 = sadd.s32 %s408, 1
    %p412 = scmp.eq.s32.totalorder %s28, 4
    %p413 = scmp.ne.s32.totalorder %s408, %s410
    %p414 = scmp.eq.s32.totalorder %s28, 0
    %p415 = por %p413, %p414
    %p416 = scmp.ne.s32.totalorder %s408, %s410
    %p417 = scmp.eq.s32.totalorder %s33, 4
    %p418 = por %p416, %p417
    %p419 = scmp.ne.s32.totalorder %s410, %s411
    %p420 = scmp.eq.s32.totalorder %s33, 0
    %p421 = por %p419, %p420
    %p422 = scmp.ne.s32.totalorder %s410, %s411
    %p423 = scmp.eq.s32.totalorder %s34, 4
    %p424 = por %p422, %p423
    %p426 = scmp.ne.s32.totalorder %s411, %s425
    %p427 = scmp.eq.s32.totalorder %s34, 0
    %p428 = por %p426, %p427
    %s430 = sadd.s32 %s429, 1
    %p433 = scmp.eq.s32.totalorder %s28, 4
    %p434 = scmp.ne.s32.totalorder %s429, %s431
    %p435 = scmp.eq.s32.totalorder %s28, 0
    %p436 = por %p434, %p435
    %p437 = scmp.ne.s32.totalorder %s429, %s431
    %p438 = scmp.eq.s32.totalorder %s33, 4
    %p439 = por %p437, %p438
    %p440 = scmp.ne.s32.totalorder %s431, %s432
    %p441 = scmp.eq.s32.totalorder %s33, 0
    %p442 = por %p440, %p441
    %p443 = scmp.ne.s32.totalorder %s431, %s432
    %p444 = scmp.eq.s32.totalorder %s34, 4
    %p445 = por %p443, %p444
    %p447 = scmp.ne.s32.totalorder %s432, %s446
    %p448 = scmp.eq.s32.totalorder %s34, 0
    %p449 = por %p447, %p448
    %s451 = sadd.s32 %s450, 1
    %p454 = scmp.eq.s32.totalorder %s28, 4
    %p455 = scmp.ne.s32.totalorder %s450, %s452
    %p456 = scmp.eq.s32.totalorder %s28, 0
    %p457 = por %p455, %p456
    %p458 = scmp.ne.s32.totalorder %s450, %s452
    %p459 = scmp.eq.s32.totalorder %s33, 4
    %p460 = por %p458, %p459
    %p461 = scmp.ne.s32.totalorder %s452, %s453
    %p462 = scmp.eq.s32.totalorder %s33, 0
    %p463 = por %p461, %p462
    %p464 = scmp.ne.s32.totalorder %s452, %s453
    %p465 = scmp.eq.s32.totalorder %s34, 4
    %p466 = por %p464, %p465
    %p468 = scmp.ne.s32.totalorder %s453, %s467
    %p469 = scmp.eq.s32.totalorder %s34, 0
    %p470 = por %p468, %p469
    %s472 = sadd.s32 %s471, 1
    %p475 = scmp.eq.s32.totalorder %s28, 4
    %p476 = scmp.ne.s32.totalorder %s471, %s473
    %p477 = scmp.eq.s32.totalorder %s28, 0
    %p478 = por %p476, %p477
    %p479 = scmp.ne.s32.totalorder %s471, %s473
    %p480 = scmp.eq.s32.totalorder %s33, 4
    %p481 = por %p479, %p480
    %p482 = scmp.ne.s32.totalorder %s473, %s474
    %p483 = scmp.eq.s32.totalorder %s33, 0
    %p484 = por %p482, %p483
    %p485 = scmp.ne.s32.totalorder %s473, %s474
    %p486 = scmp.eq.s32.totalorder %s34, 4
    %p487 = por %p485, %p486
    %p489 = scmp.ne.s32.totalorder %s474, %s488
    %p490 = scmp.eq.s32.totalorder %s34, 0
    %p491 = por %p489, %p490
    %s493 = sadd.s32 %s492, 1
    %p496 = scmp.eq.s32.totalorder %s28, 4
    %p497 = scmp.ne.s32.totalorder %s492, %s494
    %p498 = scmp.eq.s32.totalorder %s28, 0
    %p499 = por %p497, %p498
    %p500 = scmp.ne.s32.totalorder %s492, %s494
    %p501 = scmp.eq.s32.totalorder %s33, 4
    %p502 = por %p500, %p501
    %p503 = scmp.ne.s32.totalorder %s494, %s495
    %p504 = scmp.eq.s32.totalorder %s33, 0
    %p505 = por %p503, %p504
    %p506 = scmp.ne.s32.totalorder %s494, %s495
    %p507 = scmp.eq.s32.totalorder %s34, 4
    %p508 = por %p506, %p507
    %p510 = scmp.ne.s32.totalorder %s495, %s509
    %p511 = scmp.eq.s32.totalorder %s34, 0
    %p512 = por %p510, %p511
    %s513 = ssub.s32 %s28, %s35
    %p514 = scmp.eq.s32.totalorder %s513, 0
    %s516 = sadd.s32 %s515, 1
    %s517 = scalar_select %p514, %s515, %s516
    %p520 = pneg %p514
    %p521 = scmp.eq.s32.totalorder %s28, 4
    %p522 = por %p520, %p521
    %p523 = scmp.ne.s32.totalorder %s515, %s518
    %p524 = scmp.eq.s32.totalorder %s28, 0
    %p525 = por %p523, %p524
    %p526 = scmp.ne.s32.totalorder %s515, %s518
    %p527 = scmp.eq.s32.totalorder %s33, 4
    %p528 = por %p526, %p527
    %p529 = scmp.ne.s32.totalorder %s518, %s519
    %p530 = scmp.eq.s32.totalorder %s33, 0
    %p531 = por %p529, %p530
    %p532 = scmp.ne.s32.totalorder %s518, %s519
    %p533 = scmp.eq.s32.totalorder %s34, 4
    %p534 = por %p532, %p533
    %p536 = scmp.ne.s32.totalorder %s519, %s535
    %p537 = scmp.eq.s32.totalorder %s34, 0
    %p538 = por %p536, %p537
    %p539 = scmp.le.s32.totalorder 1, %s28
    %p540 = scmp.lt.s32.totalorder %s28, 6
    %p541 = pnand %p539, %p540
    %p542 = pneg %p541
    // Predicated region
    $region9: #{nmt_forward.24} parent=5 // pred_check
      _
    $region10: #{nmt_forward.24} parent=5 // pred_check_branch
      %544 = sbr.rel (%p541) target = $region12
    $region11: #{nmt_forward.24} parent=5 // pred_region
      %s545 = ssub.s32 %s28, 1
      // Predicated region
      $region13: #{nmt_forward.24} parent=11 // pred_check
        %p546 = pneg %p127
      $region14: #{nmt_forward.24} parent=11 // pred_check_branch
        %548 = sbr.rel (%p546) target = $region16
      $region15: #{nmt_forward.24} parent=11 // pred_region
        _
      $region16: #{nmt_forward.24} parent=11 // pred_fallthru
        _
      // Predicated region
      $region17: #{nmt_forward.24} parent=11 // pred_check
        %p549 = pneg %p148
      $region18: #{nmt_forward.24} parent=11 // pred_check_branch
        %551 = sbr.rel (%p549) target = $region20
      $region19: #{nmt_forward.24} parent=11 // pred_region
        _
      $region20: #{nmt_forward.24} parent=11 // pred_fallthru
        _
      // Predicated region
      $region21: #{nmt_forward.24} parent=11 // pred_check
        %p552 = pneg %p169
      $region22: #{nmt_forward.24} parent=11 // pred_check_branch
        %554 = sbr.rel (%p552) target = $region24
      $region23: #{nmt_forward.24} parent=11 // pred_region
        _
      $region24: #{nmt_forward.24} parent=11 // pred_fallthru
        _
      // Predicated region
      $region25: #{nmt_forward.24} parent=11 // pred_check
        %p555 = pneg %p190
      $region26: #{nmt_forward.24} parent=11 // pred_check_branch
        %557 = sbr.rel (%p555) target = $region28
      $region27: #{nmt_forward.24} parent=11 // pred_region
        _
      $region28: #{nmt_forward.24} parent=11 // pred_fallthru
        _
      // Predicated region
      $region29: #{nmt_forward.24} parent=11 // pred_check
        %p558 = pneg %p211
      $region30: #{nmt_forward.24} parent=11 // pred_check_branch
        %560 = sbr.rel (%p558) target = $region32
      $region31: #{nmt_forward.24} parent=11 // pred_region
        _
      $region32: #{nmt_forward.24} parent=11 // pred_fallthru
        _
      // Predicated region
      $region33: #{nmt_forward.24} parent=11 // pred_check
        %p561 = pneg %p232
      $region34: #{nmt_forward.24} parent=11 // pred_check_branch
        %563 = sbr.rel (%p561) target = $region36
      $region35: #{nmt_forward.24} parent=11 // pred_region
        _
      $region36: #{nmt_forward.24} parent=11 // pred_fallthru
        _
      // Predicated region
      $region37: #{nmt_forward.24} parent=11 // pred_check
        %p564 = pneg %p253
      $region38: #{nmt_forward.24} parent=11 // pred_check_branch
        %566 = sbr.rel (%p564) target = $region40
      $region39: #{nmt_forward.24} parent=11 // pred_region
        _
      $region40: #{nmt_forward.24} parent=11 // pred_fallthru
        _
      // Predicated region
      $region41: #{nmt_forward.24} parent=11 // pred_check
        %p567 = pneg %p274
      $region42: #{nmt_forward.24} parent=11 // pred_check_branch
        %569 = sbr.rel (%p567) target = $region44
      $region43: #{nmt_forward.24} parent=11 // pred_region
        _
      $region44: #{nmt_forward.24} parent=11 // pred_fallthru
        _
      // Predicated region
      $region45: #{nmt_forward.24} parent=11 // pred_check
        %p570 = pneg %p295
      $region46: #{nmt_forward.24} parent=11 // pred_check_branch
        %572 = sbr.rel (%p570) target = $region48
      $region47: #{nmt_forward.24} parent=11 // pred_region
        _
      $region48: #{nmt_forward.24} parent=11 // pred_fallthru
        _
      // Predicated region
      $region49: #{nmt_forward.24} parent=11 // pred_check
        %p573 = pneg %p316
      $region50: #{nmt_forward.24} parent=11 // pred_check_branch
        %575 = sbr.rel (%p573) target = $region52
      $region51: #{nmt_forward.24} parent=11 // pred_region
        _
      $region52: #{nmt_forward.24} parent=11 // pred_fallthru
        _
      // Predicated region
      $region53: #{nmt_forward.24} parent=11 // pred_check
        %p576 = pneg %p337
      $region54: #{nmt_forward.24} parent=11 // pred_check_branch
        %578 = sbr.rel (%p576) target = $region56
      $region55: #{nmt_forward.24} parent=11 // pred_region
        _
      $region56: #{nmt_forward.24} parent=11 // pred_fallthru
        _
      // Predicated region
      $region57: #{nmt_forward.24} parent=11 // pred_check
        %p579 = pneg %p358
      $region58: #{nmt_forward.24} parent=11 // pred_check_branch
        %581 = sbr.rel (%p579) target = $region60
      $region59: #{nmt_forward.24} parent=11 // pred_region
        _
      $region60: #{nmt_forward.24} parent=11 // pred_fallthru
        _
      // Predicated region
      $region61: #{nmt_forward.24} parent=11 // pred_check
        %p582 = pneg %p379
      $region62: #{nmt_forward.24} parent=11 // pred_check_branch
        %584 = sbr.rel (%p582) target = $region64
      $region63: #{nmt_forward.24} parent=11 // pred_region
        _
      $region64: #{nmt_forward.24} parent=11 // pred_fallthru
        _
      // Predicated region
      $region65: #{nmt_forward.24} parent=11 // pred_check
        %p585 = pneg %p400
      $region66: #{nmt_forward.24} parent=11 // pred_check_branch
        %587 = sbr.rel (%p585) target = $region68
      $region67: #{nmt_forward.24} parent=11 // pred_region
        _
      $region68: #{nmt_forward.24} parent=11 // pred_fallthru
        _
      // Predicated region
      $region69: #{nmt_forward.24} parent=11 // pred_check
        %p588 = pneg %p421
      $region70: #{nmt_forward.24} parent=11 // pred_check_branch
        %590 = sbr.rel (%p588) target = $region72
      $region71: #{nmt_forward.24} parent=11 // pred_region
        _
      $region72: #{nmt_forward.24} parent=11 // pred_fallthru
        _
      // Predicated region
      $region73: #{nmt_forward.24} parent=11 // pred_check
        %p591 = pneg %p442
      $region74: #{nmt_forward.24} parent=11 // pred_check_branch
        %593 = sbr.rel (%p591) target = $region76
      $region75: #{nmt_forward.24} parent=11 // pred_region
        _
      $region76: #{nmt_forward.24} parent=11 // pred_fallthru
        _
      // Predicated region
      $region77: #{nmt_forward.24} parent=11 // pred_check
        %p594 = pneg %p463
      $region78: #{nmt_forward.24} parent=11 // pred_check_branch
        %596 = sbr.rel (%p594) target = $region80
      $region79: #{nmt_forward.24} parent=11 // pred_region
        _
      $region80: #{nmt_forward.24} parent=11 // pred_fallthru
        _
      // Predicated region
      $region81: #{nmt_forward.24} parent=11 // pred_check
        %p597 = pneg %p484
      $region82: #{nmt_forward.24} parent=11 // pred_check_branch
        %599 = sbr.rel (%p597) target = $region84
      $region83: #{nmt_forward.24} parent=11 // pred_region
        _
      $region84: #{nmt_forward.24} parent=11 // pred_fallthru
        _
      // Predicated region
      $region85: #{nmt_forward.24} parent=11 // pred_check
        %p600 = pneg %p505
      $region86: #{nmt_forward.24} parent=11 // pred_check_branch
        %602 = sbr.rel (%p600) target = $region88
      $region87: #{nmt_forward.24} parent=11 // pred_region
        _
      $region88: #{nmt_forward.24} parent=11 // pred_fallthru
        _
    $region12: #{nmt_forward.24} parent=5 // pred_fallthru
      _
    %p603 = scmp.lt.s32.totalorder %s28, 5
    // Predicated region
    $region89: #{nmt_forward.24} parent=5 // pred_check
      %p604 = pneg %p603
    $region90: #{nmt_forward.24} parent=5 // pred_check_branch
      %606 = sbr.rel (%p604) target = $region92
    $region91: #{nmt_forward.24} parent=5 // pred_region
      // Predicated region
      $region93: #{nmt_forward.24} parent=91 // pred_check
        %p607 = pneg %p48
      $region94: #{nmt_forward.24} parent=91 // pred_check_branch
        %609 = sbr.rel (%p607) target = $region96
      $region95: #{nmt_forward.24} parent=91 // pred_region
        %p610 = scmp.lt.s32.totalorder %s28, 4
        %s611 = scalar_select %p610, %s28, 4
        %s612 = smul.addr %s611, 2
        %s613 = smul.addr %s612, 8
        %s614 = scalar_lea.vmem %s0, %s613
      $region96: #{nmt_forward.24} parent=91 // pred_fallthru
        _
      // Predicated region
      $region97: #{nmt_forward.24} parent=91 // pred_check
        %p615 = pneg %p74
      $region98: #{nmt_forward.24} parent=91 // pred_check_branch
        %617 = sbr.rel (%p615) target = $region100
      $region99: #{nmt_forward.24} parent=91 // pred_region
        %p618 = scmp.lt.s32.totalorder %s28, 4
        %s619 = scalar_select %p618, %s28, 4
        %s620 = smul.addr %s619, 8
        %s621 = scalar_lea.vmem %s1, %s620
      $region100: #{nmt_forward.24} parent=91 // pred_fallthru
        _
      // Predicated region
      $region101: #{nmt_forward.24} parent=91 // pred_check
        %p622 = pneg %p100
      $region102: #{nmt_forward.24} parent=91 // pred_check_branch
        %624 = sbr.rel (%p622) target = $region104
      $region103: #{nmt_forward.24} parent=91 // pred_region
        %p625 = scmp.lt.s32.totalorder %s28, 4
        %s626 = scalar_select %p625, %s28, 4
        %s627 = smul.addr %s626, 3
        %s628 = smul.addr %s627, 8
        %s629 = scalar_lea.vmem %s2, %s628
      $region104: #{nmt_forward.24} parent=91 // pred_fallthru
        _
    $region92: #{nmt_forward.24} parent=5 // pred_fallthru
      _
    %p630 = scmp.le.s32.totalorder 1, %s28
    %p631 = scmp.lt.s32.totalorder %s28, 6
    %p632 = pnand %p630, %p631
    %p633 = pneg %p632
    // Predicated region
    $region105: #{nmt_forward.24} parent=5 // pred_check
      _
    $region106: #{nmt_forward.24} parent=5 // pred_check_branch
      %635 = sbr.rel (%p632) target = $region108
    $region107: #{nmt_forward.24} parent=5 // pred_region
      %s636 = ssub.s32 %s28, 1
      %p637 = scmp.lt.s32.totalorder %s33, 4
      %s638 = scalar_select %p637, %s33, 4
      %s639 = smul.addr %s638, 2
      %s640 = smul.addr %s639, 8
      %s641 = scalar_lea.vmem %s0, %s640
      %p642 = pneg %p54
      %p643 = pneg %p51
      %p644 = scmp.lt.s32.totalorder %s33, 4
      %s645 = scalar_select %p644, %s33, 4
      %s646 = smul.addr %s645, 8
      %s647 = scalar_lea.vmem %s1, %s646
      %p648 = pneg %p80
      %p649 = pneg %p77
      %p650 = scmp.lt.s32.totalorder %s33, 4
      %s651 = scalar_select %p650, %s33, 4
      %s652 = smul.addr %s651, 3
      %s653 = smul.addr %s652, 8
      %s654 = scalar_lea.vmem %s2, %s653
      %p655 = pneg %p106
      %p656 = pneg %p103
      %p657 = pneg %p127
      %p658 = pneg %p124
      %p659 = pneg %p148
      %p660 = pneg %p145
      %p661 = pneg %p169
      %p662 = pneg %p166
      %p663 = pneg %p190
      %p664 = pneg %p187
      %p665 = pneg %p211
      %p666 = pneg %p208
      %p667 = pneg %p232
      %p668 = pneg %p229
      %p669 = pneg %p253
      %p670 = pneg %p250
      %p671 = pneg %p274
      %p672 = pneg %p271
      %p673 = pneg %p295
      %p674 = pneg %p292
      %p675 = pneg %p316
      %p676 = pneg %p313
      %p677 = pneg %p337
      %p678 = pneg %p334
      %p679 = pneg %p358
      %p680 = pneg %p355
      %p681 = pneg %p379
      %p682 = pneg %p376
      %p683 = pneg %p400
      %p684 = pneg %p397
      %p685 = pneg %p421
      %p686 = pneg %p418
      %p687 = pneg %p442
      %p688 = pneg %p439
      %p689 = pneg %p463
      %p690 = pneg %p460
      %p691 = pneg %p484
      %p692 = pneg %p481
      %p693 = pneg %p505
      %p694 = pneg %p502
      %p695 = pneg %p531
      %p696 = pneg %p528
      %p697 = scmp.lt.s32.totalorder %s33, 4
      %s698 = scalar_select %p697, %s33, 4
      %s699 = smul.addr %s698, 8
      %s700 = scalar_lea.vmem %s22, %s699
      %p701 = scmp.lt.s32.totalorder %s33, 4
      %s702 = scalar_select %p701, %s33, 4
      %s703 = smul.addr %s702, 2
      %s704 = smul.addr %s703, 8
      %s705 = scalar_lea.vmem %s0, %s704
      %p706 = scmp.lt.s32.totalorder %s33, 4
      %s707 = scalar_select %p706, %s33, 4
      %s708 = smul.addr %s707, 8
      %s709 = scalar_lea.vmem %s1, %s708
      %p710 = scmp.lt.s32.totalorder %s33, 4
      %s711 = scalar_select %p710, %s33, 4
      %s712 = smul.addr %s711, 3
      %s713 = smul.addr %s712, 8
      %s714 = scalar_lea.vmem %s2, %s713
      %p715 = scmp.lt.s32.totalorder %s33, 4
      %s716 = scalar_select %p715, %s33, 4
      %s717 = smul.addr %s716, 8
      %s718 = scalar_lea.vmem %s22, %s717
      %p719 = scmp.eq.s32.totalorder %s33, 0
      // Predicated region
      $region109: #{nmt_forward.24} parent=107 // pred_check
        %p720 = pneg %p719
      $region110: #{nmt_forward.24} parent=107 // pred_check_branch
        %722 = sbr.rel (%p720) target = $region112
      $region111: #{nmt_forward.24} parent=107 // pred_region
        %v723 = vld [vmem:[%s3] sm:$0xff]
        %v724 = vld [vmem:[%s3 + $0x8] sm:$0xff]
        %725 = vst [vmem:[#allocation2] sm:$0xff] %v723
        %726 = vst [vmem:[#allocation2 + $0x8] sm:$0xff] %v724
      $region112: #{nmt_forward.24} parent=107 // pred_fallthru
        _
      %v727 = vld [vmem:[#allocation2] sm:$0xff]
      %v728 = vld [vmem:[#allocation2 + $0x8] sm:$0xff]
      %v729 = vld [vmem:[%s7] sm:$0xff]
      %v730 = vld [vmem:[%s7 + $0x8] sm:$0xff]
      %v731 = vld [vmem:[%s7 + $0x10] sm:$0xff]
      %v732 = vld [vmem:[%s7 + $0x18] sm:$0xff]
      %v733 = vld [vmem:[%s7 + $0x20] sm:$0xff]
      %v734 = vld [vmem:[%s7 + $0x28] sm:$0xff]
      %v735 = vld [vmem:[%s7 + $0x30] sm:$0xff]
      %v736 = vld [vmem:[%s7 + $0x38] sm:$0xff]
      %v737 = vld [vmem:[%s7 + $0x40] sm:$0xff]
      %v738 = vld [vmem:[%s7 + $0x48] sm:$0xff]
      %v739 = vld [vmem:[%s7 + $0x50] sm:$0xff]
      %v740 = vld [vmem:[%s7 + $0x58] sm:$0xff]
      %v741 = vld [vmem:[%s7 + $0x60] sm:$0xff]
      %v742 = vld [vmem:[%s7 + $0x68] sm:$0xff]
      %v743 = vld [vmem:[%s7 + $0x70] sm:$0xff]
      %v744 = vld [vmem:[%s7 + $0x78] sm:$0xff]
      %v745 = vld [vmem:[%s7 + $0x80] sm:$0xff]
      %v746 = vld [vmem:[%s7 + $0x88] sm:$0xff]
      %v747 = vld [vmem:[%s7 + $0x90] sm:$0xff]
      %v748 = vld [vmem:[%s7 + $0x98] sm:$0xff]
      %v749 = vld [vmem:[%s7 + $0xa0] sm:$0xff]
      %v750 = vld [vmem:[%s7 + $0xa8] sm:$0xff]
      %v751 = vld [vmem:[%s7 + $0xb0] sm:$0xff]
      %v752 = vld [vmem:[%s7 + $0xb8] sm:$0xff]
      %v753 = vld [vmem:[%s7 + $0xc0] sm:$0xff]
      %v754 = vld [vmem:[%s7 + $0xc8] sm:$0xff]
      %v755 = vld [vmem:[%s7 + $0xd0] sm:$0xff]
      %v756 = vld [vmem:[%s7 + $0xd8] sm:$0xff]
      %v757 = vld [vmem:[%s7 + $0xe0] sm:$0xff]
      %v758 = vld [vmem:[%s7 + $0xe8] sm:$0xff]
      %v759 = vld [vmem:[%s7 + $0xf0] sm:$0xff]
      %v760 = vld [vmem:[%s7 + $0xf8] sm:$0xff]
      %v761 = vld [vmem:[%s7 + $0x100] sm:$0xff]
      %v762 = vld [vmem:[%s7 + $0x108] sm:$0xff]
      %v763 = vld [vmem:[%s7 + $0x110] sm:$0xff]
      %v764 = vld [vmem:[%s7 + $0x118] sm:$0xff]
      %v765 = vld [vmem:[%s7 + $0x120] sm:$0xff]
      %v766 = vld [vmem:[%s7 + $0x128] sm:$0xff]
      %v767 = vld [vmem:[%s7 + $0x130] sm:$0xff]
      %v768 = vld [vmem:[%s7 + $0x138] sm:$0xff]
      %v769 = vld [vmem:[%s7 + $0x140] sm:$0xff]
      %v770 = vld [vmem:[%s7 + $0x148] sm:$0xff]
      %v771 = vld [vmem:[%s7 + $0x150] sm:$0xff]
      %v772 = vld [vmem:[%s7 + $0x158] sm:$0xff]
      %v773 = vld [vmem:[%s7 + $0x160] sm:$0xff]
      %v774 = vld [vmem:[%s7 + $0x168] sm:$0xff]
      %v775 = vld [vmem:[%s7 + $0x170] sm:$0xff]
      %v776 = vld [vmem:[%s7 + $0x178] sm:$0xff]
      %v777 = vld [vmem:[%s7 + $0x180] sm:$0xff]
      %v778 = vld [vmem:[%s7 + $0x188] sm:$0xff]
      %v779 = vld [vmem:[%s7 + $0x190] sm:$0xff]
      %v780 = vld [vmem:[%s7 + $0x198] sm:$0xff]
      %v781 = vld [vmem:[%s7 + $0x1a0] sm:$0xff]
      %v782 = vld [vmem:[%s7 + $0x1a8] sm:$0xff]
      %v783 = vld [vmem:[%s7 + $0x1b0] sm:$0xff]
      %v784 = vld [vmem:[%s7 + $0x1b8] sm:$0xff]
      %v785 = vld [vmem:[%s7 + $0x1c0] sm:$0xff]
      %v786 = vld [vmem:[%s7 + $0x1c8] sm:$0xff]
      %v787 = vld [vmem:[%s7 + $0x1d0] sm:$0xff]
      %v788 = vld [vmem:[%s7 + $0x1d8] sm:$0xff]
      %v789 = vld [vmem:[%s7 + $0x1e0] sm:$0xff]
      %v790 = vld [vmem:[%s7 + $0x1e8] sm:$0xff]
      %v791 = vld [vmem:[%s7 + $0x1f0] sm:$0xff]
      %v792 = vld [vmem:[%s7 + $0x1f8] sm:$0xff]
      %v793 = vld [vmem:[%s8] sm:$0x3]
      %v795 = vlaneseq
      %v796 = vshrl.u32 %v795, 7
      %v797 = vsub.s32 0, %v796
      %v798 = vrot.slane %v793, %v797
      %v799 = vlaneseq
      %v800 = vshrl.u32 %v799, 7
      %v801 = vsub.s32 1, %v800
      %v802 = vrot.slane %v793, %v801
      %805 = vmatprep.subr.mxu0 %v760
      %806 = vmatpush1.msra.mxu0 %v759
      %807 = vmatprep.subr.mxu0 %v758
      %808 = vmatpush1.msra.mxu0 %v757
      %809 = vmatprep.subr.mxu0 %v756
      %810 = vmatpush1.msra.mxu0 %v755
      %811 = vmatprep.subr.mxu0 %v754
      %812 = vmatpush1.msra.mxu0 %v753
      %813 = vmatprep.subr.mxu0 %v752
      %814 = vmatpush1.msra.mxu0 %v751
      %815 = vmatprep.subr.mxu0 %v750
      %816 = vmatpush1.msra.mxu0 %v749
      %817 = vmatprep.subr.mxu0 %v748
      %818 = vmatpush1.msra.mxu0 %v747
      %819 = vmatprep.subr.mxu0 %v746
      %820 = vmatpush1.msra.mxu0 %v745
      %821 = vmatprep.subr.mxu0 %v744
      %822 = vmatpush1.msra.mxu0 %v743
      %823 = vmatprep.subr.mxu0 %v742
      %824 = vmatpush1.msra.mxu0 %v741
      %825 = vmatprep.subr.mxu0 %v740
      %826 = vmatpush1.msra.mxu0 %v739
      %827 = vmatprep.subr.mxu0 %v738
      %828 = vmatpush1.msra.mxu0 %v737
      %829 = vmatprep.subr.mxu0 %v736
      %830 = vmatpush1.msra.mxu0 %v735
      %831 = vmatprep.subr.mxu0 %v734
      %832 = vmatpush1.msra.mxu0 %v733
      %833 = vmatprep.subr.mxu0 %v732
      %834 = vmatpush1.msra.mxu0 %v731
      %835 = vmatprep.subr.mxu0 %v730
      %836 = vmatpush1.msra.mxu0 %v729
      %837 = vmatprep.subr.mxu0 %v792
      %838 = vmatpush2.msra.mxu0 %v791
      %839 = vmatprep.subr.mxu0 %v790
      %840 = vmatpush2.msra.mxu0 %v789
      %841 = vmatprep.subr.mxu0 %v788
      %842 = vmatpush2.msra.mxu0 %v787
      %843 = vmatprep.subr.mxu0 %v786
      %844 = vmatpush2.msra.mxu0 %v785
      %845 = vmatprep.subr.mxu0 %v784
      %846 = vmatpush2.msra.mxu0 %v783
      %847 = vmatprep.subr.mxu0 %v782
      %848 = vmatpush2.msra.mxu0 %v781
      %849 = vmatprep.subr.mxu0 %v780
      %850 = vmatpush2.msra.mxu0 %v779
      %851 = vmatprep.subr.mxu0 %v778
      %852 = vmatpush2.msra.mxu0 %v777
      %853 = vmatprep.subr.mxu0 %v776
      %854 = vmatpush2.msra.mxu0 %v775
      %855 = vmatprep.subr.mxu0 %v774
      %856 = vmatpush2.msra.mxu0 %v773
      %857 = vmatprep.subr.mxu0 %v772
      %858 = vmatpush2.msra.mxu0 %v771
      %859 = vmatprep.subr.mxu0 %v770
      %860 = vmatpush2.msra.mxu0 %v769
      %861 = vmatprep.subr.mxu0 %v768
      %862 = vmatpush2.msra.mxu0 %v767
      %863 = vmatprep.subr.mxu0 %v766
      %864 = vmatpush2.msra.mxu0 %v765
      %865 = vmatprep.subr.mxu0 %v764
      %866 = vmatpush2.msra.mxu0 %v763
      %867 = vmatprep.subr.mxu0 %v762
      %868 = vmatpush2.msra.mxu0 %v761
      %869 = vmatprep.mubr.f32.mxu0 %v728
      %870 = vmatmul.mubr.f32.gmra.mxu0 %v727
      %v871 = vpop.f32.mrf.mxu0
      %v872 = vadd.f32 %v798, %v871
      %v873 = vpop.f32.mrf.mxu0
      %v874 = vadd.f32 %v802, %v873
      %875 = vdwg.mxu0
      %v876 = vld [vmem:[%s705] sm:$0xff]
      %v877 = vld [vmem:[%s705 + $0x8] sm:$0xff]
      %v878 = vadd.f32 %v876, %v872
      %v879 = vadd.f32 %v877, %v874
      %v882 = vcombine.low %v878, %v879
      %v883 = vcombine.high %v878, %v879
      %v885 = vunpack.c.l.s4 1966171168
      %v886 = vunpack.c.0.s8 %v885
      %v887 = vlaneseq
      %v888 = vshrl.u32 %v887, 7
      %v889 = vsub.s32 %v886, %v888
      %v890 = vrot.slane %v882, %v889
      %v892 = vunpack.c.l.s4 1966171168
      %v893 = vunpack.c.0.s8 %v892
      %v894 = vlaneseq
      %v895 = vshrl.u32 %v894, 7
      %v896 = vsub.s32 %v893, %v895
      %v897 = vrot.slane %v883, %v896
      %v898 = vcombine.high %v890, %v890
      %v899 = vcombine.high %v897, %v897
      %v901 = vunpack.c.l.s4 1966171168
      %v902 = vunpack.c.0.s8 %v901
      %v903 = vlaneseq
      %v904 = vshrl.u32 %v903, 7
      %v905 = vsub.s32 %v902, %v904
      %v906 = vrot.slane %v890, %v905
      %v908 = vunpack.c.l.s4 1966171168
      %v909 = vunpack.c.0.s8 %v908
      %v910 = vlaneseq
      %v911 = vshrl.u32 %v910, 7
      %v912 = vsub.s32 %v909, %v911
      %v913 = vrot.slane %v897, %v912
      %v915 = vunpack.c.l.s4 1966171168
      %v916 = vunpack.c.0.s8 %v915
      %v917 = vlaneseq
      %v918 = vshrl.u32 %v917, 7
      %v919 = vsub.s32 %v916, %v918
      %v920 = vrot.slane %v898, %v919
      %v922 = vunpack.c.l.s4 1966171168
      %v923 = vunpack.c.0.s8 %v922
      %v924 = vlaneseq
      %v925 = vshrl.u32 %v924, 7
      %v926 = vsub.s32 %v923, %v925
      %v927 = vrot.slane %v899, %v926
      %v928 = vcombine.high %v906, %v906
      %v929 = vcombine.high %v913, %v913
      %v930 = vcombine.high %v920, %v920
      %v931 = vcombine.high %v927, %v927
      %v932 = vld [vmem:[%s4] sm:$0xff]
      %v933 = vld [vmem:[%s4 + $0x8] sm:$0xff]
      %v934 = vld [vmem:[%s4 + $0x10] sm:$0xff]
      %v935 = vld [vmem:[%s4 + $0x18] sm:$0xff]
      %v936 = vld [vmem:[%s4 + $0x20] sm:$0xff]
      %v937 = vld [vmem:[%s4 + $0x28] sm:$0xff]
      %v938 = vld [vmem:[%s4 + $0x30] sm:$0xff]
      %v939 = vld [vmem:[%s4 + $0x38] sm:$0xff]
      %v940 = vld [vmem:[%s4 + $0x40] sm:$0xff]
      %v941 = vld [vmem:[%s4 + $0x48] sm:$0xff]
      %v942 = vld [vmem:[%s4 + $0x50] sm:$0xff]
      %v943 = vld [vmem:[%s4 + $0x58] sm:$0xff]
      %v944 = vld [vmem:[%s4 + $0x60] sm:$0xff]
      %v945 = vld [vmem:[%s4 + $0x68] sm:$0xff]
      %v946 = vld [vmem:[%s4 + $0x70] sm:$0xff]
      %v947 = vld [vmem:[%s4 + $0x78] sm:$0xff]
      %v948 = vlaneseq
      %v949 = vshrl.u32 %v948, 7
      %v950 = vsub.s32 0, %v949
      %v951 = vrot.slane %v906, %v950
      %v952 = vlaneseq
      %v953 = vshrl.u32 %v952, 7
      %v954 = vsub.s32 1, %v953
      %v955 = vrot.slane %v906, %v954
      %v956 = vlaneseq
      %v957 = vshrl.u32 %v956, 7
      %v958 = vsub.s32 0, %v957
      %v959 = vrot.slane %v920, %v958
      %v960 = vlaneseq
      %v961 = vshrl.u32 %v960, 7
      %v962 = vsub.s32 1, %v961
      %v963 = vrot.slane %v920, %v962
      %v964 = vlaneseq
      %v965 = vshrl.u32 %v964, 7
      %v966 = vsub.s32 0, %v965
      %v967 = vrot.slane %v928, %v966
      %v968 = vlaneseq
      %v969 = vshrl.u32 %v968, 7
      %v970 = vsub.s32 1, %v969
      %v971 = vrot.slane %v928, %v970
      %v972 = vlaneseq
      %v973 = vshrl.u32 %v972, 7
      %v974 = vsub.s32 0, %v973
      %v975 = vrot.slane %v930, %v974
      %v976 = vlaneseq
      %v977 = vshrl.u32 %v976, 7
      %v978 = vsub.s32 1, %v977
      %v979 = vrot.slane %v930, %v978
      %v980 = vlaneseq
      %v981 = vshrl.u32 %v980, 7
      %v982 = vsub.s32 0, %v981
      %v983 = vrot.slane %v913, %v982
      %v984 = vlaneseq
      %v985 = vshrl.u32 %v984, 7
      %v986 = vsub.s32 1, %v985
      %v987 = vrot.slane %v913, %v986
      %v988 = vlaneseq
      %v989 = vshrl.u32 %v988, 7
      %v990 = vsub.s32 0, %v989
      %v991 = vrot.slane %v927, %v990
      %v992 = vlaneseq
      %v993 = vshrl.u32 %v992, 7
      %v994 = vsub.s32 1, %v993
      %v995 = vrot.slane %v927, %v994
      %v996 = vlaneseq
      %v997 = vshrl.u32 %v996, 7
      %v998 = vsub.s32 0, %v997
      %v999 = vrot.slane %v929, %v998
      %v1000 = vlaneseq
      %v1001 = vshrl.u32 %v1000, 7
      %v1002 = vsub.s32 1, %v1001
      %v1003 = vrot.slane %v929, %v1002
      %v1004 = vlaneseq
      %v1005 = vshrl.u32 %v1004, 7
      %v1006 = vsub.s32 0, %v1005
      %v1007 = vrot.slane %v931, %v1006
      %v1008 = vlaneseq
      %v1009 = vshrl.u32 %v1008, 7
      %v1010 = vsub.s32 1, %v1009
      %v1011 = vrot.slane %v931, %v1010
      %v1028 = vadd.f32 %v951, %v932
      %v1029 = vadd.f32 %v955, %v933
      %v1030 = vadd.f32 %v959, %v934
      %v1031 = vadd.f32 %v963, %v935
      %v1032 = vadd.f32 %v967, %v936
      %v1033 = vadd.f32 %v971, %v937
      %v1034 = vadd.f32 %v975, %v938
      %v1035 = vadd.f32 %v979, %v939
      %v1036 = vadd.f32 %v983, %v940
      %v1037 = vadd.f32 %v987, %v941
      %v1038 = vadd.f32 %v991, %v942
      %v1039 = vadd.f32 %v995, %v943
      %v1040 = vadd.f32 %v999, %v944
      %v1041 = vadd.f32 %v1003, %v945
      %v1042 = vadd.f32 %v1007, %v946
      %v1043 = vadd.f32 %v1011, %v947
      %v1044 = vtanh.pop %v1028
      %v1045 = vtanh.pop %v1029
      %v1046 = vtanh.pop %v1030
      %v1047 = vtanh.pop %v1031
      %v1048 = vtanh.pop %v1032
      %v1049 = vtanh.pop %v1033
      %v1050 = vtanh.pop %v1034
      %v1051 = vtanh.pop %v1035
      %v1052 = vtanh.pop %v1036
      %v1053 = vtanh.pop %v1037
      %v1054 = vtanh.pop %v1038
      %v1055 = vtanh.pop %v1039
      %v1056 = vtanh.pop %v1040
      %v1057 = vtanh.pop %v1041
      %v1058 = vtanh.pop %v1042
      %v1059 = vtanh.pop %v1043
      %v1060 = vld [vmem:[%s9] sm:$0x3]
      %v1062 = vlaneseq
      %v1063 = vshrl.u32 %v1062, 7
      %v1064 = vsub.s32 0, %v1063
      %v1065 = vrot.slane %v1060, %v1064
      %v1066 = vlaneseq
      %v1067 = vshrl.u32 %v1066, 7
      %v1068 = vsub.s32 1, %v1067
      %v1069 = vrot.slane %v1060, %v1068
      %v1072 = vmul.f32 %v1044, %v1065
      %v1073 = vmul.f32 %v1045, %v1069
      %v1074 = vmul.f32 %v1046, %v1065
      %v1075 = vmul.f32 %v1047, %v1069
      %v1076 = vmul.f32 %v1048, %v1065
      %v1077 = vmul.f32 %v1049, %v1069
      %v1078 = vmul.f32 %v1050, %v1065
      %v1079 = vmul.f32 %v1051, %v1069
      %v1080 = vmul.f32 %v1052, %v1065
      %v1081 = vmul.f32 %v1053, %v1069
      %v1082 = vmul.f32 %v1054, %v1065
      %v1083 = vmul.f32 %v1055, %v1069
      %v1084 = vmul.f32 %v1056, %v1065
      %v1085 = vmul.f32 %v1057, %v1069
      %v1086 = vmul.f32 %v1058, %v1065
      %v1087 = vmul.f32 %v1059, %v1069
      %v1088 = vadd.f32 %v1072, %v1073
      %1089 = vadd.xlane.f32.xlu0 %v1088
      %v1090 = vpop.xlane.xlu0 %1089
      %v1091 = vadd.f32 %v1074, %v1075
      %1092 = vadd.xlane.f32.xlu0 %v1091
      %v1093 = vpop.xlane.xlu0 %1092
      %v1094 = vadd.f32 %v1076, %v1077
      %1095 = vadd.xlane.f32.xlu0 %v1094
      %v1096 = vpop.xlane.xlu0 %1095
      %v1097 = vadd.f32 %v1078, %v1079
      %1098 = vadd.xlane.f32.xlu0 %v1097
      %v1099 = vpop.xlane.xlu0 %1098
      %v1100 = vadd.f32 %v1080, %v1081
      %1101 = vadd.xlane.f32.xlu0 %v1100
      %v1102 = vpop.xlane.xlu0 %1101
      %v1103 = vadd.f32 %v1082, %v1083
      %1104 = vadd.xlane.f32.xlu0 %v1103
      %v1105 = vpop.xlane.xlu0 %1104
      %v1106 = vadd.f32 %v1084, %v1085
      %1107 = vadd.xlane.f32.xlu0 %v1106
      %v1108 = vpop.xlane.xlu0 %1107
      %v1109 = vadd.f32 %v1086, %v1087
      %1110 = vadd.xlane.f32.xlu0 %v1109
      %v1111 = vpop.xlane.xlu0 %1110
      %v1112 = vld [vmem:[%s6] sm:$0xff]
      %vm1113 = vcmp.gt.f32.partialorder %v1112, 0.5
      %v1122 = vlaneseq
      %v1123 = vand.u32 %v1122, 127
      %v1124 = vlaneseq
      %v1125 = vshrl.u32 %v1124, 7
      %v1126 = vsub.s32 %v1123, %v1125
      %v1127 = vrot.slane %v1090, %v1126
      %v1128 = vlaneseq
      %v1129 = vshrl.u32 %v1128, 7
      %v1130 = vsub.s32 %v1123, %v1129
      %v1131 = vrot.slane %v1093, %v1130
      %v1132 = vlaneseq
      %v1133 = vshrl.u32 %v1132, 7
      %v1134 = vsub.s32 %v1123, %v1133
      %v1135 = vrot.slane %v1096, %v1134
      %v1136 = vlaneseq
      %v1137 = vshrl.u32 %v1136, 7
      %v1138 = vsub.s32 %v1123, %v1137
      %v1139 = vrot.slane %v1099, %v1138
      %v1140 = vlaneseq
      %v1141 = vshrl.u32 %v1140, 7
      %v1142 = vsub.s32 %v1123, %v1141
      %v1143 = vrot.slane %v1102, %v1142
      %v1144 = vlaneseq
      %v1145 = vshrl.u32 %v1144, 7
      %v1146 = vsub.s32 %v1123, %v1145
      %v1147 = vrot.slane %v1105, %v1146
      %v1148 = vlaneseq
      %v1149 = vshrl.u32 %v1148, 7
      %v1150 = vsub.s32 %v1123, %v1149
      %v1151 = vrot.slane %v1108, %v1150
      %v1152 = vlaneseq
      %v1153 = vshrl.u32 %v1152, 7
      %v1154 = vsub.s32 %v1123, %v1153
      %v1155 = vrot.slane %v1111, %v1154
      %vm1156 = vcmask 1041409
      %v1157 = vsel %vm1156, %v1131, %v1127
      %vm1158 = vcmask 1042434
      %v1159 = vsel %vm1158, %v1135, %v1157
      %vm1160 = vcmask 1043459
      %v1161 = vsel %vm1160, %v1139, %v1159
      %vm1162 = vcmask 1044484
      %v1163 = vsel %vm1162, %v1143, %v1161
      %vm1164 = vcmask 1045509
      %v1165 = vsel %vm1164, %v1147, %v1163
      %vm1166 = vcmask 1046534
      %v1167 = vsel %vm1166, %v1151, %v1165
      %vm1168 = vcmask 1047559
      %v1169 = vsel %vm1168, %v1155, %v1167
      %v1171 = vsel %vm1113, %v1169, -inf
      %vm1172 = vcmask 64512
      %v1173 = vsel %vm1172, %v1171, -inf
      %1174 = vmax.xlane.f32.xlu0 %v1173
      %v1175 = vpop.xlane.xlu0 %1174
      %v1176 = vsub.f32 %v1171, %v1175
      %v1177 = vmul.f32 %v1176, 1.442695
      %v1178 = vpow.pop %v1177
      %v1179 = vsel %vm1172, %v1178, 0.0
      %1180 = vadd.xlane.f32.xlu0 %v1179
      %v1181 = vpop.xlane.xlu0 %1180
      %v1182 = vrcp.pop %v1181
      %v1183 = vmul.f32 %v1178, %v1182
      %v1185 = vcombine.high %v1183, %v1183
      %v1187 = vunpack.c.l.s4 1966171168
      %v1188 = vunpack.c.0.s8 %v1187
      %v1189 = vlaneseq
      %v1190 = vshrl.u32 %v1189, 7
      %v1191 = vsub.s32 %v1188, %v1190
      %v1192 = vrot.slane %v1183, %v1191
      %v1194 = vunpack.c.l.s4 1966171168
      %v1195 = vunpack.c.0.s8 %v1194
      %v1196 = vlaneseq
      %v1197 = vshrl.u32 %v1196, 7
      %v1198 = vsub.s32 %v1195, %v1197
      %v1199 = vrot.slane %v1185, %v1198
      %v1200 = vcombine.high %v1192, %v1192
      %v1201 = vcombine.high %v1199, %v1199
      %v1203 = vunpack.c.l.s4 1966171168
      %v1204 = vunpack.c.0.s8 %v1203
      %v1205 = vlaneseq
      %v1206 = vshrl.u32 %v1205, 7
      %v1207 = vsub.s32 %v1204, %v1206
      %v1208 = vrot.slane %v1192, %v1207
      %v1210 = vunpack.c.l.s4 1966171168
      %v1211 = vunpack.c.0.s8 %v1210
      %v1212 = vlaneseq
      %v1213 = vshrl.u32 %v1212, 7
      %v1214 = vsub.s32 %v1211, %v1213
      %v1215 = vrot.slane %v1199, %v1214
      %v1217 = vunpack.c.l.s4 1966171168
      %v1218 = vunpack.c.0.s8 %v1217
      %v1219 = vlaneseq
      %v1220 = vshrl.u32 %v1219, 7
      %v1221 = vsub.s32 %v1218, %v1220
      %v1222 = vrot.slane %v1200, %v1221
      %v1224 = vunpack.c.l.s4 1966171168
      %v1225 = vunpack.c.0.s8 %v1224
      %v1226 = vlaneseq
      %v1227 = vshrl.u32 %v1226, 7
      %v1228 = vsub.s32 %v1225, %v1227
      %v1229 = vrot.slane %v1201, %v1228
      %v1230 = vcombine.high %v1208, %v1208
      %v1231 = vcombine.high %v1215, %v1215
      %v1232 = vcombine.high %v1222, %v1222
      %v1233 = vcombine.high %v1229, %v1229
      %v1234 = vld [vmem:[%s5] sm:$0xff]
      %v1235 = vld [vmem:[%s5 + $0x8] sm:$0xff]
      %v1236 = vld [vmem:[%s5 + $0x10] sm:$0xff]
      %v1237 = vld [vmem:[%s5 + $0x18] sm:$0xff]
      %v1238 = vld [vmem:[%s5 + $0x20] sm:$0xff]
      %v1239 = vld [vmem:[%s5 + $0x28] sm:$0xff]
      %v1240 = vld [vmem:[%s5 + $0x30] sm:$0xff]
      %v1241 = vld [vmem:[%s5 + $0x38] sm:$0xff]
      %v1242 = vld [vmem:[%s5 + $0x40] sm:$0xff]
      %v1243 = vld [vmem:[%s5 + $0x48] sm:$0xff]
      %v1244 = vld [vmem:[%s5 + $0x50] sm:$0xff]
      %v1245 = vld [vmem:[%s5 + $0x58] sm:$0xff]
      %v1246 = vld [vmem:[%s5 + $0x60] sm:$0xff]
      %v1247 = vld [vmem:[%s5 + $0x68] sm:$0xff]
      %v1248 = vld [vmem:[%s5 + $0x70] sm:$0xff]
      %v1249 = vld [vmem:[%s5 + $0x78] sm:$0xff]
      %v1250 = vsel %vm1172, %v1208, 0
      %1252 = vmatprep.subr.mxu0 0.0
      %1253 = vmatpush1.msra.mxu0 0.0
      %1254 = vmatprep.subr.mxu0 0.0
      %1255 = vmatpush1.msra.mxu0 0.0
      %1256 = vmatprep.subr.mxu0 0.0
      %1257 = vmatpush1.msra.mxu0 0.0
      %1258 = vmatprep.subr.mxu0 0.0
      %1259 = vmatpush1.msra.mxu0 0.0
      %1260 = vmatprep.subr.mxu0 0.0
      %1261 = vmatpush1.msra.mxu0 0.0
      %1262 = vmatprep.subr.mxu0 0.0
      %1263 = vmatpush1.msra.mxu0 0.0
      %1264 = vmatprep.subr.mxu0 0.0
      %1265 = vmatpush1.msra.mxu0 0.0
      %1266 = vmatprep.subr.mxu0 0.0
      %1267 = vmatpush1.msra.mxu0 0.0
      %1268 = vmatprep.subr.mxu0 0.0
      %1269 = vmatpush1.msra.mxu0 0.0
      %1270 = vmatprep.subr.mxu0 0.0
      %1271 = vmatpush1.msra.mxu0 0.0
      %1272 = vmatprep.subr.mxu0 0.0
      %1273 = vmatpush1.msra.mxu0 0.0
      %1274 = vmatprep.subr.mxu0 0.0
      %1275 = vmatpush1.msra.mxu0 0.0
      %1276 = vmatprep.subr.mxu0 0.0
      %1277 = vmatpush1.msra.mxu0 0.0
      %1278 = vmatprep.subr.mxu0 0.0
      %1279 = vmatpush1.msra.mxu0 0.0
      %1280 = vmatprep.subr.mxu0 0.0
      %1281 = vmatpush1.msra.mxu0 0.0
      %1282 = vmatprep.subr.mxu0 %v1235
      %1283 = vmatpush1.msra.mxu0 %v1234
      %1284 = vmatprep.subr.mxu0 0.0
      %1285 = vmatpush2.msra.mxu0 0.0
      %1286 = vmatprep.subr.mxu0 0.0
      %1287 = vmatpush2.msra.mxu0 0.0
      %1288 = vmatprep.subr.mxu0 0.0
      %1289 = vmatpush2.msra.mxu0 0.0
      %1290 = vmatprep.subr.mxu0 0.0
      %1291 = vmatpush2.msra.mxu0 0.0
      %1292 = vmatprep.subr.mxu0 0.0
      %1293 = vmatpush2.msra.mxu0 0.0
      %1294 = vmatprep.subr.mxu0 0.0
      %1295 = vmatpush2.msra.mxu0 0.0
      %1296 = vmatprep.subr.mxu0 0.0
      %1297 = vmatpush2.msra.mxu0 0.0
      %1298 = vmatprep.subr.mxu0 0.0
      %1299 = vmatpush2.msra.mxu0 0.0
      %1300 = vmatprep.subr.mxu0 0.0
      %1301 = vmatpush2.msra.mxu0 0.0
      %1302 = vmatprep.subr.mxu0 0.0
      %1303 = vmatpush2.msra.mxu0 0.0
      %1304 = vmatprep.subr.mxu0 0.0
      %1305 = vmatpush2.msra.mxu0 0.0
      %1306 = vmatprep.subr.mxu0 0.0
      %1307 = vmatpush2.msra.mxu0 0.0
      %1308 = vmatprep.subr.mxu0 0.0
      %1309 = vmatpush2.msra.mxu0 0.0
      %1310 = vmatprep.subr.mxu0 0.0
      %1311 = vmatpush2.msra.mxu0 0.0
      %1312 = vmatprep.subr.mxu0 0.0
      %1313 = vmatpush2.msra.mxu0 0.0
      %1314 = vmatprep.subr.mxu0 0.0
      %1315 = vmatpush2.msra.mxu0 0.0
      %1316 = vmatprep.mubr.f32.mxu0 0.0
      %1317 = vmatmul.mubr.f32.gmra.mxu0 %v1250
      %v1318 = vpop.f32.mrf.mxu0
      %v1319 = vadd.f32 0.0, %v1318
      %v1320 = vpop.f32.mrf.mxu0
      %v1321 = vadd.f32 0.0, %v1320
      %1322 = vdwg.mxu0
      %v1323 = vsel %vm1172, %v1222, 0
      %1325 = vmatprep.subr.mxu0 0.0
      %1326 = vmatpush1.msra.mxu0 0.0
      %1327 = vmatprep.subr.mxu0 0.0
      %1328 = vmatpush1.msra.mxu0 0.0
      %1329 = vmatprep.subr.mxu0 0.0
      %1330 = vmatpush1.msra.mxu0 0.0
      %1331 = vmatprep.subr.mxu0 0.0
      %1332 = vmatpush1.msra.mxu0 0.0
      %1333 = vmatprep.subr.mxu0 0.0
      %1334 = vmatpush1.msra.mxu0 0.0
      %1335 = vmatprep.subr.mxu0 0.0
      %1336 = vmatpush1.msra.mxu0 0.0
      %1337 = vmatprep.subr.mxu0 0.0
      %1338 = vmatpush1.msra.mxu0 0.0
      %1339 = vmatprep.subr.mxu0 0.0
      %1340 = vmatpush1.msra.mxu0 0.0
      %1341 = vmatprep.subr.mxu0 0.0
      %1342 = vmatpush1.msra.mxu0 0.0
      %1343 = vmatprep.subr.mxu0 0.0
      %1344 = vmatpush1.msra.mxu0 0.0
      %1345 = vmatprep.subr.mxu0 0.0
      %1346 = vmatpush1.msra.mxu0 0.0
      %1347 = vmatprep.subr.mxu0 0.0
      %1348 = vmatpush1.msra.mxu0 0.0
      %1349 = vmatprep.subr.mxu0 0.0
      %1350 = vmatpush1.msra.mxu0 0.0
      %1351 = vmatprep.subr.mxu0 0.0
      %1352 = vmatpush1.msra.mxu0 0.0
      %1353 = vmatprep.subr.mxu0 0.0
      %1354 = vmatpush1.msra.mxu0 0.0
      %1355 = vmatprep.subr.mxu0 %v1237
      %1356 = vmatpush1.msra.mxu0 %v1236
      %1357 = vmatprep.subr.mxu0 0.0
      %1358 = vmatpush2.msra.mxu0 0.0
      %1359 = vmatprep.subr.mxu0 0.0
      %1360 = vmatpush2.msra.mxu0 0.0
      %1361 = vmatprep.subr.mxu0 0.0
      %1362 = vmatpush2.msra.mxu0 0.0
      %1363 = vmatprep.subr.mxu0 0.0
      %1364 = vmatpush2.msra.mxu0 0.0
      %1365 = vmatprep.subr.mxu0 0.0
      %1366 = vmatpush2.msra.mxu0 0.0
      %1367 = vmatprep.subr.mxu0 0.0
      %1368 = vmatpush2.msra.mxu0 0.0
      %1369 = vmatprep.subr.mxu0 0.0
      %1370 = vmatpush2.msra.mxu0 0.0
      %1371 = vmatprep.subr.mxu0 0.0
      %1372 = vmatpush2.msra.mxu0 0.0
      %1373 = vmatprep.subr.mxu0 0.0
      %1374 = vmatpush2.msra.mxu0 0.0
      %1375 = vmatprep.subr.mxu0 0.0
      %1376 = vmatpush2.msra.mxu0 0.0
      %1377 = vmatprep.subr.mxu0 0.0
      %1378 = vmatpush2.msra.mxu0 0.0
      %1379 = vmatprep.subr.mxu0 0.0
      %1380 = vmatpush2.msra.mxu0 0.0
      %1381 = vmatprep.subr.mxu0 0.0
      %1382 = vmatpush2.msra.mxu0 0.0
      %1383 = vmatprep.subr.mxu0 0.0
      %1384 = vmatpush2.msra.mxu0 0.0
      %1385 = vmatprep.subr.mxu0 0.0
      %1386 = vmatpush2.msra.mxu0 0.0
      %1387 = vmatprep.subr.mxu0 0.0
      %1388 = vmatpush2.msra.mxu0 0.0
      %1389 = vmatprep.mubr.f32.mxu0 0.0
      %1390 = vmatmul.mubr.f32.gmra.mxu0 %v1323
      %v1391 = vpop.f32.mrf.mxu0
      %v1392 = vadd.f32 0.0, %v1391
      %v1393 = vpop.f32.mrf.mxu0
      %v1394 = vadd.f32 0.0, %v1393
      %1395 = vdwg.mxu0
      %v1396 = vsel %vm1172, %v1230, 0
      %1398 = vmatprep.subr.mxu0 0.0
      %1399 = vmatpush1.msra.mxu0 0.0
      %1400 = vmatprep.subr.mxu0 0.0
      %1401 = vmatpush1.msra.mxu0 0.0
      %1402 = vmatprep.subr.mxu0 0.0
      %1403 = vmatpush1.msra.mxu0 0.0
      %1404 = vmatprep.subr.mxu0 0.0
      %1405 = vmatpush1.msra.mxu0 0.0
      %1406 = vmatprep.subr.mxu0 0.0
      %1407 = vmatpush1.msra.mxu0 0.0
      %1408 = vmatprep.subr.mxu0 0.0
      %1409 = vmatpush1.msra.mxu0 0.0
      %1410 = vmatprep.subr.mxu0 0.0
      %1411 = vmatpush1.msra.mxu0 0.0
      %1412 = vmatprep.subr.mxu0 0.0
      %1413 = vmatpush1.msra.mxu0 0.0
      %1414 = vmatprep.subr.mxu0 0.0
      %1415 = vmatpush1.msra.mxu0 0.0
      %1416 = vmatprep.subr.mxu0 0.0
      %1417 = vmatpush1.msra.mxu0 0.0
      %1418 = vmatprep.subr.mxu0 0.0
      %1419 = vmatpush1.msra.mxu0 0.0
      %1420 = vmatprep.subr.mxu0 0.0
      %1421 = vmatpush1.msra.mxu0 0.0
      %1422 = vmatprep.subr.mxu0 0.0
      %1423 = vmatpush1.msra.mxu0 0.0
      %1424 = vmatprep.subr.mxu0 0.0
      %1425 = vmatpush1.msra.mxu0 0.0
      %1426 = vmatprep.subr.mxu0 0.0
      %1427 = vmatpush1.msra.mxu0 0.0
      %1428 = vmatprep.subr.mxu0 %v1239
      %1429 = vmatpush1.msra.mxu0 %v1238
      %1430 = vmatprep.subr.mxu0 0.0
      %1431 = vmatpush2.msra.mxu0 0.0
      %1432 = vmatprep.subr.mxu0 0.0
      %1433 = vmatpush2.msra.mxu0 0.0
      %1434 = vmatprep.subr.mxu0 0.0
      %1435 = vmatpush2.msra.mxu0 0.0
      %1436 = vmatprep.subr.mxu0 0.0
      %1437 = vmatpush2.msra.mxu0 0.0
      %1438 = vmatprep.subr.mxu0 0.0
      %1439 = vmatpush2.msra.mxu0 0.0
      %1440 = vmatprep.subr.mxu0 0.0
      %1441 = vmatpush2.msra.mxu0 0.0
      %1442 = vmatprep.subr.mxu0 0.0
      %1443 = vmatpush2.msra.mxu0 0.0
      %1444 = vmatprep.subr.mxu0 0.0
      %1445 = vmatpush2.msra.mxu0 0.0
      %1446 = vmatprep.subr.mxu0 0.0
      %1447 = vmatpush2.msra.mxu0 0.0
      %1448 = vmatprep.subr.mxu0 0.0
      %1449 = vmatpush2.msra.mxu0 0.0
      %1450 = vmatprep.subr.mxu0 0.0
      %1451 = vmatpush2.msra.mxu0 0.0
      %1452 = vmatprep.subr.mxu0 0.0
      %1453 = vmatpush2.msra.mxu0 0.0
      %1454 = vmatprep.subr.mxu0 0.0
      %1455 = vmatpush2.msra.mxu0 0.0
      %1456 = vmatprep.subr.mxu0 0.0
      %1457 = vmatpush2.msra.mxu0 0.0
      %1458 = vmatprep.subr.mxu0 0.0
      %1459 = vmatpush2.msra.mxu0 0.0
      %1460 = vmatprep.subr.mxu0 0.0
      %1461 = vmatpush2.msra.mxu0 0.0
      %1462 = vmatprep.mubr.f32.mxu0 0.0
      %1463 = vmatmul.mubr.f32.gmra.mxu0 %v1396
      %v1464 = vpop.f32.mrf.mxu0
      %v1465 = vadd.f32 0.0, %v1464
      %v1466 = vpop.f32.mrf.mxu0
      %v1467 = vadd.f32 0.0, %v1466
      %1468 = vdwg.mxu0
      %v1469 = vsel %vm1172, %v1232, 0
      %1471 = vmatprep.subr.mxu0 0.0
      %1472 = vmatpush1.msra.mxu0 0.0
      %1473 = vmatprep.subr.mxu0 0.0
      %1474 = vmatpush1.msra.mxu0 0.0
      %1475 = vmatprep.subr.mxu0 0.0
      %1476 = vmatpush1.msra.mxu0 0.0
      %1477 = vmatprep.subr.mxu0 0.0
      %1478 = vmatpush1.msra.mxu0 0.0
      %1479 = vmatprep.subr.mxu0 0.0
      %1480 = vmatpush1.msra.mxu0 0.0
      %1481 = vmatprep.subr.mxu0 0.0
      %1482 = vmatpush1.msra.mxu0 0.0
      %1483 = vmatprep.subr.mxu0 0.0
      %1484 = vmatpush1.msra.mxu0 0.0
      %1485 = vmatprep.subr.mxu0 0.0
      %1486 = vmatpush1.msra.mxu0 0.0
      %1487 = vmatprep.subr.mxu0 0.0
      %1488 = vmatpush1.msra.mxu0 0.0
      %1489 = vmatprep.subr.mxu0 0.0
      %1490 = vmatpush1.msra.mxu0 0.0
      %1491 = vmatprep.subr.mxu0 0.0
      %1492 = vmatpush1.msra.mxu0 0.0
      %1493 = vmatprep.subr.mxu0 0.0
      %1494 = vmatpush1.msra.mxu0 0.0
      %1495 = vmatprep.subr.mxu0 0.0
      %1496 = vmatpush1.msra.mxu0 0.0
      %1497 = vmatprep.subr.mxu0 0.0
      %1498 = vmatpush1.msra.mxu0 0.0
      %1499 = vmatprep.subr.mxu0 0.0
      %1500 = vmatpush1.msra.mxu0 0.0
      %1501 = vmatprep.subr.mxu0 %v1241
      %1502 = vmatpush1.msra.mxu0 %v1240
      %1503 = vmatprep.subr.mxu0 0.0
      %1504 = vmatpush2.msra.mxu0 0.0
      %1505 = vmatprep.subr.mxu0 0.0
      %1506 = vmatpush2.msra.mxu0 0.0
      %1507 = vmatprep.subr.mxu0 0.0
      %1508 = vmatpush2.msra.mxu0 0.0
      %1509 = vmatprep.subr.mxu0 0.0
      %1510 = vmatpush2.msra.mxu0 0.0
      %1511 = vmatprep.subr.mxu0 0.0
      %1512 = vmatpush2.msra.mxu0 0.0
      %1513 = vmatprep.subr.mxu0 0.0
      %1514 = vmatpush2.msra.mxu0 0.0
      %1515 = vmatprep.subr.mxu0 0.0
      %1516 = vmatpush2.msra.mxu0 0.0
      %1517 = vmatprep.subr.mxu0 0.0
      %1518 = vmatpush2.msra.mxu0 0.0
      %1519 = vmatprep.subr.mxu0 0.0
      %1520 = vmatpush2.msra.mxu0 0.0
      %1521 = vmatprep.subr.mxu0 0.0
      %1522 = vmatpush2.msra.mxu0 0.0
      %1523 = vmatprep.subr.mxu0 0.0
      %1524 = vmatpush2.msra.mxu0 0.0
      %1525 = vmatprep.subr.mxu0 0.0
      %1526 = vmatpush2.msra.mxu0 0.0
      %1527 = vmatprep.subr.mxu0 0.0
      %1528 = vmatpush2.msra.mxu0 0.0
      %1529 = vmatprep.subr.mxu0 0.0
      %1530 = vmatpush2.msra.mxu0 0.0
      %1531 = vmatprep.subr.mxu0 0.0
      %1532 = vmatpush2.msra.mxu0 0.0
      %1533 = vmatprep.subr.mxu0 0.0
      %1534 = vmatpush2.msra.mxu0 0.0
      %1535 = vmatprep.mubr.f32.mxu0 0.0
      %1536 = vmatmul.mubr.f32.gmra.mxu0 %v1469
      %v1537 = vpop.f32.mrf.mxu0
      %v1538 = vadd.f32 0.0, %v1537
      %v1539 = vpop.f32.mrf.mxu0
      %v1540 = vadd.f32 0.0, %v1539
      %1541 = vdwg.mxu0
      %v1542 = vsel %vm1172, %v1215, 0
      %1544 = vmatprep.subr.mxu0 0.0
      %1545 = vmatpush1.msra.mxu0 0.0
      %1546 = vmatprep.subr.mxu0 0.0
      %1547 = vmatpush1.msra.mxu0 0.0
      %1548 = vmatprep.subr.mxu0 0.0
      %1549 = vmatpush1.msra.mxu0 0.0
      %1550 = vmatprep.subr.mxu0 0.0
      %1551 = vmatpush1.msra.mxu0 0.0
      %1552 = vmatprep.subr.mxu0 0.0
      %1553 = vmatpush1.msra.mxu0 0.0
      %1554 = vmatprep.subr.mxu0 0.0
      %1555 = vmatpush1.msra.mxu0 0.0
      %1556 = vmatprep.subr.mxu0 0.0
      %1557 = vmatpush1.msra.mxu0 0.0
      %1558 = vmatprep.subr.mxu0 0.0
      %1559 = vmatpush1.msra.mxu0 0.0
      %1560 = vmatprep.subr.mxu0 0.0
      %1561 = vmatpush1.msra.mxu0 0.0
      %1562 = vmatprep.subr.mxu0 0.0
      %1563 = vmatpush1.msra.mxu0 0.0
      %1564 = vmatprep.subr.mxu0 0.0
      %1565 = vmatpush1.msra.mxu0 0.0
      %1566 = vmatprep.subr.mxu0 0.0
      %1567 = vmatpush1.msra.mxu0 0.0
      %1568 = vmatprep.subr.mxu0 0.0
      %1569 = vmatpush1.msra.mxu0 0.0
      %1570 = vmatprep.subr.mxu0 0.0
      %1571 = vmatpush1.msra.mxu0 0.0
      %1572 = vmatprep.subr.mxu0 0.0
      %1573 = vmatpush1.msra.mxu0 0.0
      %1574 = vmatprep.subr.mxu0 %v1243
      %1575 = vmatpush1.msra.mxu0 %v1242
      %1576 = vmatprep.subr.mxu0 0.0
      %1577 = vmatpush2.msra.mxu0 0.0
      %1578 = vmatprep.subr.mxu0 0.0
      %1579 = vmatpush2.msra.mxu0 0.0
      %1580 = vmatprep.subr.mxu0 0.0
      %1581 = vmatpush2.msra.mxu0 0.0
      %1582 = vmatprep.subr.mxu0 0.0
      %1583 = vmatpush2.msra.mxu0 0.0
      %1584 = vmatprep.subr.mxu0 0.0
      %1585 = vmatpush2.msra.mxu0 0.0
      %1586 = vmatprep.subr.mxu0 0.0
      %1587 = vmatpush2.msra.mxu0 0.0
      %1588 = vmatprep.subr.mxu0 0.0
      %1589 = vmatpush2.msra.mxu0 0.0
      %1590 = vmatprep.subr.mxu0 0.0
      %1591 = vmatpush2.msra.mxu0 0.0
      %1592 = vmatprep.subr.mxu0 0.0
      %1593 = vmatpush2.msra.mxu0 0.0
      %1594 = vmatprep.subr.mxu0 0.0
      %1595 = vmatpush2.msra.mxu0 0.0
      %1596 = vmatprep.subr.mxu0 0.0
      %1597 = vmatpush2.msra.mxu0 0.0
      %1598 = vmatprep.subr.mxu0 0.0
      %1599 = vmatpush2.msra.mxu0 0.0
      %1600 = vmatprep.subr.mxu0 0.0
      %1601 = vmatpush2.msra.mxu0 0.0
      %1602 = vmatprep.subr.mxu0 0.0
      %1603 = vmatpush2.msra.mxu0 0.0
      %1604 = vmatprep.subr.mxu0 0.0
      %1605 = vmatpush2.msra.mxu0 0.0
      %1606 = vmatprep.subr.mxu0 0.0
      %1607 = vmatpush2.msra.mxu0 0.0
      %1608 = vmatprep.mubr.f32.mxu0 0.0
      %1609 = vmatmul.mubr.f32.gmra.mxu0 %v1542
      %v1610 = vpop.f32.mrf.mxu0
      %v1611 = vadd.f32 0.0, %v1610
      %v1612 = vpop.f32.mrf.mxu0
      %v1613 = vadd.f32 0.0, %v1612
      %1614 = vdwg.mxu0
      %v1615 = vsel %vm1172, %v1229, 0
      %1617 = vmatprep.subr.mxu0 0.0
      %1618 = vmatpush1.msra.mxu0 0.0
      %1619 = vmatprep.subr.mxu0 0.0
      %1620 = vmatpush1.msra.mxu0 0.0
      %1621 = vmatprep.subr.mxu0 0.0
      %1622 = vmatpush1.msra.mxu0 0.0
      %1623 = vmatprep.subr.mxu0 0.0
      %1624 = vmatpush1.msra.mxu0 0.0
      %1625 = vmatprep.subr.mxu0 0.0
      %1626 = vmatpush1.msra.mxu0 0.0
      %1627 = vmatprep.subr.mxu0 0.0
      %1628 = vmatpush1.msra.mxu0 0.0
      %1629 = vmatprep.subr.mxu0 0.0
      %1630 = vmatpush1.msra.mxu0 0.0
      %1631 = vmatprep.subr.mxu0 0.0
      %1632 = vmatpush1.msra.mxu0 0.0
      %1633 = vmatprep.subr.mxu0 0.0
      %1634 = vmatpush1.msra.mxu0 0.0
      %1635 = vmatprep.subr.mxu0 0.0
      %1636 = vmatpush1.msra.mxu0 0.0
      %1637 = vmatprep.subr.mxu0 0.0
      %1638 = vmatpush1.msra.mxu0 0.0
      %1639 = vmatprep.subr.mxu0 0.0
      %1640 = vmatpush1.msra.mxu0 0.0
      %1641 = vmatprep.subr.mxu0 0.0
      %1642 = vmatpush1.msra.mxu0 0.0
      %1643 = vmatprep.subr.mxu0 0.0
      %1644 = vmatpush1.msra.mxu0 0.0
      %1645 = vmatprep.subr.mxu0 0.0
      %1646 = vmatpush1.msra.mxu0 0.0
      %1647 = vmatprep.subr.mxu0 %v1245
      %1648 = vmatpush1.msra.mxu0 %v1244
      %1649 = vmatprep.subr.mxu0 0.0
      %1650 = vmatpush2.msra.mxu0 0.0
      %1651 = vmatprep.subr.mxu0 0.0
      %1652 = vmatpush2.msra.mxu0 0.0
      %1653 = vmatprep.subr.mxu0 0.0
      %1654 = vmatpush2.msra.mxu0 0.0
      %1655 = vmatprep.subr.mxu0 0.0
      %1656 = vmatpush2.msra.mxu0 0.0
      %1657 = vmatprep.subr.mxu0 0.0
      %1658 = vmatpush2.msra.mxu0 0.0
      %1659 = vmatprep.subr.mxu0 0.0
      %1660 = vmatpush2.msra.mxu0 0.0
      %1661 = vmatprep.subr.mxu0 0.0
      %1662 = vmatpush2.msra.mxu0 0.0
      %1663 = vmatprep.subr.mxu0 0.0
      %1664 = vmatpush2.msra.mxu0 0.0
      %1665 = vmatprep.subr.mxu0 0.0
      %1666 = vmatpush2.msra.mxu0 0.0
      %1667 = vmatprep.subr.mxu0 0.0
      %1668 = vmatpush2.msra.mxu0 0.0
      %1669 = vmatprep.subr.mxu0 0.0
      %1670 = vmatpush2.msra.mxu0 0.0
      %1671 = vmatprep.subr.mxu0 0.0
      %1672 = vmatpush2.msra.mxu0 0.0
      %1673 = vmatprep.subr.mxu0 0.0
      %1674 = vmatpush2.msra.mxu0 0.0
      %1675 = vmatprep.subr.mxu0 0.0
      %1676 = vmatpush2.msra.mxu0 0.0
      %1677 = vmatprep.subr.mxu0 0.0
      %1678 = vmatpush2.msra.mxu0 0.0
      %1679 = vmatprep.subr.mxu0 0.0
      %1680 = vmatpush2.msra.mxu0 0.0
      %1681 = vmatprep.mubr.f32.mxu0 0.0
      %1682 = vmatmul.mubr.f32.gmra.mxu0 %v1615
      %v1683 = vpop.f32.mrf.mxu0
      %v1684 = vadd.f32 0.0, %v1683
      %v1685 = vpop.f32.mrf.mxu0
      %v1686 = vadd.f32 0.0, %v1685
      %1687 = vdwg.mxu0
      %v1688 = vsel %vm1172, %v1231, 0
      %1690 = vmatprep.subr.mxu0 0.0
      %1691 = vmatpush1.msra.mxu0 0.0
      %1692 = vmatprep.subr.mxu0 0.0
      %1693 = vmatpush1.msra.mxu0 0.0
      %1694 = vmatprep.subr.mxu0 0.0
      %1695 = vmatpush1.msra.mxu0 0.0
      %1696 = vmatprep.subr.mxu0 0.0
      %1697 = vmatpush1.msra.mxu0 0.0
      %1698 = vmatprep.subr.mxu0 0.0
      %1699 = vmatpush1.msra.mxu0 0.0
      %1700 = vmatprep.subr.mxu0 0.0
      %1701 = vmatpush1.msra.mxu0 0.0
      %1702 = vmatprep.subr.mxu0 0.0
      %1703 = vmatpush1.msra.mxu0 0.0
      %1704 = vmatprep.subr.mxu0 0.0
      %1705 = vmatpush1.msra.mxu0 0.0
      %1706 = vmatprep.subr.mxu0 0.0
      %1707 = vmatpush1.msra.mxu0 0.0
      %1708 = vmatprep.subr.mxu0 0.0
      %1709 = vmatpush1.msra.mxu0 0.0
      %1710 = vmatprep.subr.mxu0 0.0
      %1711 = vmatpush1.msra.mxu0 0.0
      %1712 = vmatprep.subr.mxu0 0.0
      %1713 = vmatpush1.msra.mxu0 0.0
      %1714 = vmatprep.subr.mxu0 0.0
      %1715 = vmatpush1.msra.mxu0 0.0
      %1716 = vmatprep.subr.mxu0 0.0
      %1717 = vmatpush1.msra.mxu0 0.0
      %1718 = vmatprep.subr.mxu0 0.0
      %1719 = vmatpush1.msra.mxu0 0.0
      %1720 = vmatprep.subr.mxu0 %v1247
      %1721 = vmatpush1.msra.mxu0 %v1246
      %1722 = vmatprep.subr.mxu0 0.0
      %1723 = vmatpush2.msra.mxu0 0.0
      %1724 = vmatprep.subr.mxu0 0.0
      %1725 = vmatpush2.msra.mxu0 0.0
      %1726 = vmatprep.subr.mxu0 0.0
      %1727 = vmatpush2.msra.mxu0 0.0
      %1728 = vmatprep.subr.mxu0 0.0
      %1729 = vmatpush2.msra.mxu0 0.0
      %1730 = vmatprep.subr.mxu0 0.0
      %1731 = vmatpush2.msra.mxu0 0.0
      %1732 = vmatprep.subr.mxu0 0.0
      %1733 = vmatpush2.msra.mxu0 0.0
      %1734 = vmatprep.subr.mxu0 0.0
      %1735 = vmatpush2.msra.mxu0 0.0
      %1736 = vmatprep.subr.mxu0 0.0
      %1737 = vmatpush2.msra.mxu0 0.0
      %1738 = vmatprep.subr.mxu0 0.0
      %1739 = vmatpush2.msra.mxu0 0.0
      %1740 = vmatprep.subr.mxu0 0.0
      %1741 = vmatpush2.msra.mxu0 0.0
      %1742 = vmatprep.subr.mxu0 0.0
      %1743 = vmatpush2.msra.mxu0 0.0
      %1744 = vmatprep.subr.mxu0 0.0
      %1745 = vmatpush2.msra.mxu0 0.0
      %1746 = vmatprep.subr.mxu0 0.0
      %1747 = vmatpush2.msra.mxu0 0.0
      %1748 = vmatprep.subr.mxu0 0.0
      %1749 = vmatpush2.msra.mxu0 0.0
      %1750 = vmatprep.subr.mxu0 0.0
      %1751 = vmatpush2.msra.mxu0 0.0
      %1752 = vmatprep.subr.mxu0 0.0
      %1753 = vmatpush2.msra.mxu0 0.0
      %1754 = vmatprep.mubr.f32.mxu0 0.0
      %1755 = vmatmul.mubr.f32.gmra.mxu0 %v1688
      %v1756 = vpop.f32.mrf.mxu0
      %v1757 = vadd.f32 0.0, %v1756
      %v1758 = vpop.f32.mrf.mxu0
      %v1759 = vadd.f32 0.0, %v1758
      %1760 = vdwg.mxu0
      %v1761 = vsel %vm1172, %v1233, 0
      %1763 = vmatprep.subr.mxu0 0.0
      %1764 = vmatpush1.msra.mxu0 0.0
      %1765 = vmatprep.subr.mxu0 0.0
      %1766 = vmatpush1.msra.mxu0 0.0
      %1767 = vmatprep.subr.mxu0 0.0
      %1768 = vmatpush1.msra.mxu0 0.0
      %1769 = vmatprep.subr.mxu0 0.0
      %1770 = vmatpush1.msra.mxu0 0.0
      %1771 = vmatprep.subr.mxu0 0.0
      %1772 = vmatpush1.msra.mxu0 0.0
      %1773 = vmatprep.subr.mxu0 0.0
      %1774 = vmatpush1.msra.mxu0 0.0
      %1775 = vmatprep.subr.mxu0 0.0
      %1776 = vmatpush1.msra.mxu0 0.0
      %1777 = vmatprep.subr.mxu0 0.0
      %1778 = vmatpush1.msra.mxu0 0.0
      %1779 = vmatprep.subr.mxu0 0.0
      %1780 = vmatpush1.msra.mxu0 0.0
      %1781 = vmatprep.subr.mxu0 0.0
      %1782 = vmatpush1.msra.mxu0 0.0
      %1783 = vmatprep.subr.mxu0 0.0
      %1784 = vmatpush1.msra.mxu0 0.0
      %1785 = vmatprep.subr.mxu0 0.0
      %1786 = vmatpush1.msra.mxu0 0.0
      %1787 = vmatprep.subr.mxu0 0.0
      %1788 = vmatpush1.msra.mxu0 0.0
      %1789 = vmatprep.subr.mxu0 0.0
      %1790 = vmatpush1.msra.mxu0 0.0
      %1791 = vmatprep.subr.mxu0 0.0
      %1792 = vmatpush1.msra.mxu0 0.0
      %1793 = vmatprep.subr.mxu0 %v1249
      %1794 = vmatpush1.msra.mxu0 %v1248
      %1795 = vmatprep.subr.mxu0 0.0
      %1796 = vmatpush2.msra.mxu0 0.0
      %1797 = vmatprep.subr.mxu0 0.0
      %1798 = vmatpush2.msra.mxu0 0.0
      %1799 = vmatprep.subr.mxu0 0.0
      %1800 = vmatpush2.msra.mxu0 0.0
      %1801 = vmatprep.subr.mxu0 0.0
      %1802 = vmatpush2.msra.mxu0 0.0
      %1803 = vmatprep.subr.mxu0 0.0
      %1804 = vmatpush2.msra.mxu0 0.0
      %1805 = vmatprep.subr.mxu0 0.0
      %1806 = vmatpush2.msra.mxu0 0.0
      %1807 = vmatprep.subr.mxu0 0.0
      %1808 = vmatpush2.msra.mxu0 0.0
      %1809 = vmatprep.subr.mxu0 0.0
      %1810 = vmatpush2.msra.mxu0 0.0
      %1811 = vmatprep.subr.mxu0 0.0
      %1812 = vmatpush2.msra.mxu0 0.0
      %1813 = vmatprep.subr.mxu0 0.0
      %1814 = vmatpush2.msra.mxu0 0.0
      %1815 = vmatprep.subr.mxu0 0.0
      %1816 = vmatpush2.msra.mxu0 0.0
      %1817 = vmatprep.subr.mxu0 0.0
      %1818 = vmatpush2.msra.mxu0 0.0
      %1819 = vmatprep.subr.mxu0 0.0
      %1820 = vmatpush2.msra.mxu0 0.0
      %1821 = vmatprep.subr.mxu0 0.0
      %1822 = vmatpush2.msra.mxu0 0.0
      %1823 = vmatprep.subr.mxu0 0.0
      %1824 = vmatpush2.msra.mxu0 0.0
      %1825 = vmatprep.subr.mxu0 0.0
      %1826 = vmatpush2.msra.mxu0 0.0
      %1827 = vmatprep.mubr.f32.mxu0 0.0
      %1828 = vmatmul.mubr.f32.gmra.mxu0 %v1761
      %v1829 = vpop.f32.mrf.mxu0
      %v1830 = vadd.f32 0.0, %v1829
      %v1831 = vpop.f32.mrf.mxu0
      %v1832 = vadd.f32 0.0, %v1831
      %1833 = vdwg.mxu0
      %v1834 = vld [vmem:[%s10] sm:$0xff]
      %v1835 = vld [vmem:[%s10 + $0x8] sm:$0xff]
      %v1836 = vld [vmem:[%s10 + $0x10] sm:$0xff]
      %v1837 = vld [vmem:[%s10 + $0x18] sm:$0xff]
      %v1838 = vld [vmem:[%s10 + $0x20] sm:$0xff]
      %v1839 = vld [vmem:[%s10 + $0x28] sm:$0xff]
      %v1840 = vld [vmem:[%s10 + $0x30] sm:$0xff]
      %v1841 = vld [vmem:[%s10 + $0x38] sm:$0xff]
      %v1842 = vld [vmem:[%s10 + $0x40] sm:$0xff]
      %v1843 = vld [vmem:[%s10 + $0x48] sm:$0xff]
      %v1844 = vld [vmem:[%s10 + $0x50] sm:$0xff]
      %v1845 = vld [vmem:[%s10 + $0x58] sm:$0xff]
      %v1846 = vld [vmem:[%s10 + $0x60] sm:$0xff]
      %v1847 = vld [vmem:[%s10 + $0x68] sm:$0xff]
      %v1848 = vld [vmem:[%s10 + $0x70] sm:$0xff]
      %v1849 = vld [vmem:[%s10 + $0x78] sm:$0xff]
      %v1850 = vld [vmem:[%s10 + $0x80] sm:$0xff]
      %v1851 = vld [vmem:[%s10 + $0x88] sm:$0xff]
      %v1852 = vld [vmem:[%s10 + $0x90] sm:$0xff]
      %v1853 = vld [vmem:[%s10 + $0x98] sm:$0xff]
      %v1854 = vld [vmem:[%s10 + $0xa0] sm:$0xff]
      %v1855 = vld [vmem:[%s10 + $0xa8] sm:$0xff]
      %v1856 = vld [vmem:[%s10 + $0xb0] sm:$0xff]
      %v1857 = vld [vmem:[%s10 + $0xb8] sm:$0xff]
      %v1858 = vld [vmem:[%s10 + $0xc0] sm:$0xff]
      %v1859 = vld [vmem:[%s10 + $0xc8] sm:$0xff]
      %v1860 = vld [vmem:[%s10 + $0xd0] sm:$0xff]
      %v1861 = vld [vmem:[%s10 + $0xd8] sm:$0xff]
      %v1862 = vld [vmem:[%s10 + $0xe0] sm:$0xff]
      %v1863 = vld [vmem:[%s10 + $0xe8] sm:$0xff]
      %v1864 = vld [vmem:[%s10 + $0xf0] sm:$0xff]
      %v1865 = vld [vmem:[%s10 + $0xf8] sm:$0xff]
      %v1866 = vld [vmem:[%s10 + $0x100] sm:$0xff]
      %v1867 = vld [vmem:[%s10 + $0x108] sm:$0xff]
      %v1868 = vld [vmem:[%s10 + $0x110] sm:$0xff]
      %v1869 = vld [vmem:[%s10 + $0x118] sm:$0xff]
      %v1870 = vld [vmem:[%s10 + $0x120] sm:$0xff]
      %v1871 = vld [vmem:[%s10 + $0x128] sm:$0xff]
      %v1872 = vld [vmem:[%s10 + $0x130] sm:$0xff]
      %v1873 = vld [vmem:[%s10 + $0x138] sm:$0xff]
      %v1874 = vld [vmem:[%s10 + $0x140] sm:$0xff]
      %v1875 = vld [vmem:[%s10 + $0x148] sm:$0xff]
      %v1876 = vld [vmem:[%s10 + $0x150] sm:$0xff]
      %v1877 = vld [vmem:[%s10 + $0x158] sm:$0xff]
      %v1878 = vld [vmem:[%s10 + $0x160] sm:$0xff]
      %v1879 = vld [vmem:[%s10 + $0x168] sm:$0xff]
      %v1880 = vld [vmem:[%s10 + $0x170] sm:$0xff]
      %v1881 = vld [vmem:[%s10 + $0x178] sm:$0xff]
      %v1882 = vld [vmem:[%s10 + $0x180] sm:$0xff]
      %v1883 = vld [vmem:[%s10 + $0x188] sm:$0xff]
      %v1884 = vld [vmem:[%s10 + $0x190] sm:$0xff]
      %v1885 = vld [vmem:[%s10 + $0x198] sm:$0xff]
      %v1886 = vld [vmem:[%s10 + $0x1a0] sm:$0xff]
      %v1887 = vld [vmem:[%s10 + $0x1a8] sm:$0xff]
      %v1888 = vld [vmem:[%s10 + $0x1b0] sm:$0xff]
      %v1889 = vld [vmem:[%s10 + $0x1b8] sm:$0xff]
      %v1890 = vld [vmem:[%s10 + $0x1c0] sm:$0xff]
      %v1891 = vld [vmem:[%s10 + $0x1c8] sm:$0xff]
      %v1892 = vld [vmem:[%s10 + $0x1d0] sm:$0xff]
      %v1893 = vld [vmem:[%s10 + $0x1d8] sm:$0xff]
      %v1894 = vld [vmem:[%s10 + $0x1e0] sm:$0xff]
      %v1895 = vld [vmem:[%s10 + $0x1e8] sm:$0xff]
      %v1896 = vld [vmem:[%s10 + $0x1f0] sm:$0xff]
      %v1897 = vld [vmem:[%s10 + $0x1f8] sm:$0xff]
      %v1898 = vld [vmem:[%s10 + $0x200] sm:$0xff]
      %v1899 = vld [vmem:[%s10 + $0x208] sm:$0xff]
      %v1900 = vld [vmem:[%s10 + $0x210] sm:$0xff]
      %v1901 = vld [vmem:[%s10 + $0x218] sm:$0xff]
      %v1902 = vld [vmem:[%s10 + $0x220] sm:$0xff]
      %v1903 = vld [vmem:[%s10 + $0x228] sm:$0xff]
      %v1904 = vld [vmem:[%s10 + $0x230] sm:$0xff]
      %v1905 = vld [vmem:[%s10 + $0x238] sm:$0xff]
      %v1906 = vld [vmem:[%s10 + $0x240] sm:$0xff]
      %v1907 = vld [vmem:[%s10 + $0x248] sm:$0xff]
      %v1908 = vld [vmem:[%s10 + $0x250] sm:$0xff]
      %v1909 = vld [vmem:[%s10 + $0x258] sm:$0xff]
      %v1910 = vld [vmem:[%s10 + $0x260] sm:$0xff]
      %v1911 = vld [vmem:[%s10 + $0x268] sm:$0xff]
      %v1912 = vld [vmem:[%s10 + $0x270] sm:$0xff]
      %v1913 = vld [vmem:[%s10 + $0x278] sm:$0xff]
      %v1914 = vld [vmem:[%s10 + $0x280] sm:$0xff]
      %v1915 = vld [vmem:[%s10 + $0x288] sm:$0xff]
      %v1916 = vld [vmem:[%s10 + $0x290] sm:$0xff]
      %v1917 = vld [vmem:[%s10 + $0x298] sm:$0xff]
      %v1918 = vld [vmem:[%s10 + $0x2a0] sm:$0xff]
      %v1919 = vld [vmem:[%s10 + $0x2a8] sm:$0xff]
      %v1920 = vld [vmem:[%s10 + $0x2b0] sm:$0xff]
      %v1921 = vld [vmem:[%s10 + $0x2b8] sm:$0xff]
      %v1922 = vld [vmem:[%s10 + $0x2c0] sm:$0xff]
      %v1923 = vld [vmem:[%s10 + $0x2c8] sm:$0xff]
      %v1924 = vld [vmem:[%s10 + $0x2d0] sm:$0xff]
      %v1925 = vld [vmem:[%s10 + $0x2d8] sm:$0xff]
      %v1926 = vld [vmem:[%s10 + $0x2e0] sm:$0xff]
      %v1927 = vld [vmem:[%s10 + $0x2e8] sm:$0xff]
      %v1928 = vld [vmem:[%s10 + $0x2f0] sm:$0xff]
      %v1929 = vld [vmem:[%s10 + $0x2f8] sm:$0xff]
      %v1930 = vld [vmem:[%s714] sm:$0xff]
      %v1931 = vld [vmem:[%s714 + $0x8] sm:$0xff]
      %v1932 = vld [vmem:[%s714 + $0x10] sm:$0xff]
      %v1949 = vrot.slane %v1392, 7
      %v1950 = vsel %vm1156, %v1949, %v1319
      %v1951 = vrot.slane %v1465, 6
      %v1952 = vsel %vm1158, %v1951, %v1950
      %v1953 = vrot.slane %v1538, 5
      %v1954 = vsel %vm1160, %v1953, %v1952
      %v1955 = vrot.slane %v1611, 4
      %v1956 = vsel %vm1162, %v1955, %v1954
      %v1957 = vrot.slane %v1684, 3
      %v1958 = vsel %vm1164, %v1957, %v1956
      %v1959 = vrot.slane %v1757, 2
      %v1960 = vsel %vm1166, %v1959, %v1958
      %v1961 = vrot.slane %v1830, 1
      %v1962 = vsel %vm1168, %v1961, %v1960
      %v1963 = vrot.slane %v1394, 7
      %v1964 = vsel %vm1156, %v1963, %v1321
      %v1965 = vrot.slane %v1467, 6
      %v1966 = vsel %vm1158, %v1965, %v1964
      %v1967 = vrot.slane %v1540, 5
      %v1968 = vsel %vm1160, %v1967, %v1966
      %v1969 = vrot.slane %v1613, 4
      %v1970 = vsel %vm1162, %v1969, %v1968
      %v1971 = vrot.slane %v1686, 3
      %v1972 = vsel %vm1164, %v1971, %v1970
      %v1973 = vrot.slane %v1759, 2
      %v1974 = vsel %vm1166, %v1973, %v1972
      %v1975 = vrot.slane %v1832, 1
      %v1976 = vsel %vm1168, %v1975, %v1974
      %1979 = vmatprep.subr.mxu0 %v1880
      %1980 = vmatpush1.msra.mxu0 %v1879
      %1981 = vmatprep.subr.mxu0 %v1877
      %1982 = vmatpush1.msra.mxu0 %v1876
      %1983 = vmatprep.subr.mxu0 %v1874
      %1984 = vmatpush1.msra.mxu0 %v1873
      %1985 = vmatprep.subr.mxu0 %v1871
      %1986 = vmatpush1.msra.mxu0 %v1870
      %1987 = vmatprep.subr.mxu0 %v1868
      %1988 = vmatpush1.msra.mxu0 %v1867
      %1989 = vmatprep.subr.mxu0 %v1865
      %1990 = vmatpush1.msra.mxu0 %v1864
      %1991 = vmatprep.subr.mxu0 %v1862
      %1992 = vmatpush1.msra.mxu0 %v1861
      %1993 = vmatprep.subr.mxu0 %v1859
      %1994 = vmatpush1.msra.mxu0 %v1858
      %1995 = vmatprep.subr.mxu0 %v1856
      %1996 = vmatpush1.msra.mxu0 %v1855
      %1997 = vmatprep.subr.mxu0 %v1853
      %1998 = vmatpush1.msra.mxu0 %v1852
      %1999 = vmatprep.subr.mxu0 %v1850
      %2000 = vmatpush1.msra.mxu0 %v1849
      %2001 = vmatprep.subr.mxu0 %v1847
      %2002 = vmatpush1.msra.mxu0 %v1846
      %2003 = vmatprep.subr.mxu0 %v1844
      %2004 = vmatpush1.msra.mxu0 %v1843
      %2005 = vmatprep.subr.mxu0 %v1841
      %2006 = vmatpush1.msra.mxu0 %v1840
      %2007 = vmatprep.subr.mxu0 %v1838
      %2008 = vmatpush1.msra.mxu0 %v1837
      %2009 = vmatprep.subr.mxu0 %v1835
      %2010 = vmatpush1.msra.mxu0 %v1834
      %2011 = vmatprep.subr.mxu0 %v1928
      %2012 = vmatpush2.msra.mxu0 %v1927
      %2013 = vmatprep.subr.mxu0 %v1925
      %2014 = vmatpush2.msra.mxu0 %v1924
      %2015 = vmatprep.subr.mxu0 %v1922
      %2016 = vmatpush2.msra.mxu0 %v1921
      %2017 = vmatprep.subr.mxu0 %v1919
      %2018 = vmatpush2.msra.mxu0 %v1918
      %2019 = vmatprep.subr.mxu0 %v1916
      %2020 = vmatpush2.msra.mxu0 %v1915
      %2021 = vmatprep.subr.mxu0 %v1913
      %2022 = vmatpush2.msra.mxu0 %v1912
      %2023 = vmatprep.subr.mxu0 %v1910
      %2024 = vmatpush2.msra.mxu0 %v1909
      %2025 = vmatprep.subr.mxu0 %v1907
      %2026 = vmatpush2.msra.mxu0 %v1906
      %2027 = vmatprep.subr.mxu0 %v1904
      %2028 = vmatpush2.msra.mxu0 %v1903
      %2029 = vmatprep.subr.mxu0 %v1901
      %2030 = vmatpush2.msra.mxu0 %v1900
      %2031 = vmatprep.subr.mxu0 %v1898
      %2032 = vmatpush2.msra.mxu0 %v1897
      %2033 = vmatprep.subr.mxu0 %v1895
      %2034 = vmatpush2.msra.mxu0 %v1894
      %2035 = vmatprep.subr.mxu0 %v1892
      %2036 = vmatpush2.msra.mxu0 %v1891
      %2037 = vmatprep.subr.mxu0 %v1889
      %2038 = vmatpush2.msra.mxu0 %v1888
      %2039 = vmatprep.subr.mxu0 %v1886
      %2040 = vmatpush2.msra.mxu0 %v1885
      %2041 = vmatprep.subr.mxu0 %v1883
      %2042 = vmatpush2.msra.mxu0 %v1882
      %2043 = vmatprep.mubr.f32.mxu0 %v1976
      %2044 = vmatmul.mubr.f32.gmra.mxu0 %v1962
      %v2045 = vpop.f32.mrf.mxu0
      %v2046 = vadd.f32 %v1930, %v2045
      %v2047 = vpop.f32.mrf.mxu0
      %v2048 = vadd.f32 %v1931, %v2047
      %2049 = vdwg.mxu0
      %2050 = vmatprep.subr.mxu0 0.0
      %2051 = vmatpush1.msra.mxu0 %v1881
      %2052 = vmatprep.subr.mxu0 0.0
      %2053 = vmatpush1.msra.mxu0 %v1878
      %2054 = vmatprep.subr.mxu0 0.0
      %2055 = vmatpush1.msra.mxu0 %v1875
      %2056 = vmatprep.subr.mxu0 0.0
      %2057 = vmatpush1.msra.mxu0 %v1872
      %2058 = vmatprep.subr.mxu0 0.0
      %2059 = vmatpush1.msra.mxu0 %v1869
      %2060 = vmatprep.subr.mxu0 0.0
      %2061 = vmatpush1.msra.mxu0 %v1866
      %2062 = vmatprep.subr.mxu0 0.0
      %2063 = vmatpush1.msra.mxu0 %v1863
      %2064 = vmatprep.subr.mxu0 0.0
      %2065 = vmatpush1.msra.mxu0 %v1860
      %2066 = vmatprep.subr.mxu0 0.0
      %2067 = vmatpush1.msra.mxu0 %v1857
      %2068 = vmatprep.subr.mxu0 0.0
      %2069 = vmatpush1.msra.mxu0 %v1854
      %2070 = vmatprep.subr.mxu0 0.0
      %2071 = vmatpush1.msra.mxu0 %v1851
      %2072 = vmatprep.subr.mxu0 0.0
      %2073 = vmatpush1.msra.mxu0 %v1848
      %2074 = vmatprep.subr.mxu0 0.0
      %2075 = vmatpush1.msra.mxu0 %v1845
      %2076 = vmatprep.subr.mxu0 0.0
      %2077 = vmatpush1.msra.mxu0 %v1842
      %2078 = vmatprep.subr.mxu0 0.0
      %2079 = vmatpush1.msra.mxu0 %v1839
      %2080 = vmatprep.subr.mxu0 0.0
      %2081 = vmatpush1.msra.mxu0 %v1836
      %2082 = vmatprep.subr.mxu0 0.0
      %2083 = vmatpush2.msra.mxu0 %v1929
      %2084 = vmatprep.subr.mxu0 0.0
      %2085 = vmatpush2.msra.mxu0 %v1926
      %2086 = vmatprep.subr.mxu0 0.0
      %2087 = vmatpush2.msra.mxu0 %v1923
      %2088 = vmatprep.subr.mxu0 0.0
      %2089 = vmatpush2.msra.mxu0 %v1920
      %2090 = vmatprep.subr.mxu0 0.0
      %2091 = vmatpush2.msra.mxu0 %v1917
      %2092 = vmatprep.subr.mxu0 0.0
      %2093 = vmatpush2.msra.mxu0 %v1914
      %2094 = vmatprep.subr.mxu0 0.0
      %2095 = vmatpush2.msra.mxu0 %v1911
      %2096 = vmatprep.subr.mxu0 0.0
      %2097 = vmatpush2.msra.mxu0 %v1908
      %2098 = vmatprep.subr.mxu0 0.0
      %2099 = vmatpush2.msra.mxu0 %v1905
      %2100 = vmatprep.subr.mxu0 0.0
      %2101 = vmatpush2.msra.mxu0 %v1902
      %2102 = vmatprep.subr.mxu0 0.0
      %2103 = vmatpush2.msra.mxu0 %v1899
      %2104 = vmatprep.subr.mxu0 0.0
      %2105 = vmatpush2.msra.mxu0 %v1896
      %2106 = vmatprep.subr.mxu0 0.0
      %2107 = vmatpush2.msra.mxu0 %v1893
      %2108 = vmatprep.subr.mxu0 0.0
      %2109 = vmatpush2.msra.mxu0 %v1890
      %2110 = vmatprep.subr.mxu0 0.0
      %2111 = vmatpush2.msra.mxu0 %v1887
      %2112 = vmatprep.subr.mxu0 0.0
      %2113 = vmatpush2.msra.mxu0 %v1884
      %2114 = vmatprep.mubr.f32.mxu0 %v1976
      %2115 = vmatmul.mubr.f32.gmra.mxu0 %v1962
      %v2116 = vpop.f32.mrf.mxu0
      %v2117 = vadd.f32 %v1932, %v2116
      %v2118 = vpop.f32.mrf.mxu0
      %2119 = vdwg.mxu0
      %v2120 = vld [vmem:[%s11] sm:$0x7]
      %v2122 = vlaneseq
      %v2123 = vshrl.u32 %v2122, 7
      %v2124 = vsub.s32 0, %v2123
      %v2125 = vrot.slane %v2120, %v2124
      %v2126 = vlaneseq
      %v2127 = vshrl.u32 %v2126, 7
      %v2128 = vsub.s32 1, %v2127
      %v2129 = vrot.slane %v2120, %v2128
      %v2130 = vlaneseq
      %v2131 = vshrl.u32 %v2130, 7
      %v2132 = vsub.s32 2, %v2131
      %v2133 = vrot.slane %v2120, %v2132
      %v2137 = vadd.f32 %v2046, %v2125
      %v2138 = vadd.f32 %v2048, %v2129
      %v2139 = vadd.f32 %v2117, %v2133
      %v2140 = vld [vmem:[%s12] sm:$0xff]
      %v2141 = vld [vmem:[%s12 + $0x8] sm:$0xff]
      %v2142 = vld [vmem:[%s12 + $0x10] sm:$0xff]
      %v2143 = vld [vmem:[%s12 + $0x18] sm:$0xff]
      %v2144 = vld [vmem:[%s12 + $0x20] sm:$0xff]
      %v2145 = vld [vmem:[%s12 + $0x28] sm:$0xff]
      %v2146 = vld [vmem:[%s12 + $0x30] sm:$0xff]
      %v2147 = vld [vmem:[%s12 + $0x38] sm:$0xff]
      %v2148 = vld [vmem:[%s12 + $0x40] sm:$0xff]
      %v2149 = vld [vmem:[%s12 + $0x48] sm:$0xff]
      %v2150 = vld [vmem:[%s12 + $0x50] sm:$0xff]
      %v2151 = vld [vmem:[%s12 + $0x58] sm:$0xff]
      %v2152 = vld [vmem:[%s12 + $0x60] sm:$0xff]
      %v2153 = vld [vmem:[%s12 + $0x68] sm:$0xff]
      %v2154 = vld [vmem:[%s12 + $0x70] sm:$0xff]
      %v2155 = vld [vmem:[%s12 + $0x78] sm:$0xff]
      %v2156 = vld [vmem:[%s12 + $0x80] sm:$0xff]
      %v2157 = vld [vmem:[%s12 + $0x88] sm:$0xff]
      %v2158 = vld [vmem:[%s12 + $0x90] sm:$0xff]
      %v2159 = vld [vmem:[%s12 + $0x98] sm:$0xff]
      %v2160 = vld [vmem:[%s12 + $0xa0] sm:$0xff]
      %v2161 = vld [vmem:[%s12 + $0xa8] sm:$0xff]
      %v2162 = vld [vmem:[%s12 + $0xb0] sm:$0xff]
      %v2163 = vld [vmem:[%s12 + $0xb8] sm:$0xff]
      %v2164 = vld [vmem:[%s12 + $0xc0] sm:$0xff]
      %v2165 = vld [vmem:[%s12 + $0xc8] sm:$0xff]
      %v2166 = vld [vmem:[%s12 + $0xd0] sm:$0xff]
      %v2167 = vld [vmem:[%s12 + $0xd8] sm:$0xff]
      %v2168 = vld [vmem:[%s12 + $0xe0] sm:$0xff]
      %v2169 = vld [vmem:[%s12 + $0xe8] sm:$0xff]
      %v2170 = vld [vmem:[%s12 + $0xf0] sm:$0xff]
      %v2171 = vld [vmem:[%s12 + $0xf8] sm:$0xff]
      %v2172 = vld [vmem:[%s12 + $0x100] sm:$0xff]
      %v2173 = vld [vmem:[%s12 + $0x108] sm:$0xff]
      %v2174 = vld [vmem:[%s12 + $0x110] sm:$0xff]
      %v2175 = vld [vmem:[%s12 + $0x118] sm:$0xff]
      %v2176 = vld [vmem:[%s12 + $0x120] sm:$0xff]
      %v2177 = vld [vmem:[%s12 + $0x128] sm:$0xff]
      %v2178 = vld [vmem:[%s12 + $0x130] sm:$0xff]
      %v2179 = vld [vmem:[%s12 + $0x138] sm:$0xff]
      %v2180 = vld [vmem:[%s12 + $0x140] sm:$0xff]
      %v2181 = vld [vmem:[%s12 + $0x148] sm:$0xff]
      %v2182 = vld [vmem:[%s12 + $0x150] sm:$0xff]
      %v2183 = vld [vmem:[%s12 + $0x158] sm:$0xff]
      %v2184 = vld [vmem:[%s12 + $0x160] sm:$0xff]
      %v2185 = vld [vmem:[%s12 + $0x168] sm:$0xff]
      %v2186 = vld [vmem:[%s12 + $0x170] sm:$0xff]
      %v2187 = vld [vmem:[%s12 + $0x178] sm:$0xff]
      %v2188 = vld [vmem:[%s13] sm:$0x7]
      %v2190 = vlaneseq
      %v2191 = vshrl.u32 %v2190, 7
      %v2192 = vsub.s32 0, %v2191
      %v2193 = vrot.slane %v2188, %v2192
      %v2194 = vlaneseq
      %v2195 = vshrl.u32 %v2194, 7
      %v2196 = vsub.s32 1, %v2195
      %v2197 = vrot.slane %v2188, %v2196
      %v2198 = vlaneseq
      %v2199 = vshrl.u32 %v2198, 7
      %v2200 = vsub.s32 2, %v2199
      %v2201 = vrot.slane %v2188, %v2200
      %2205 = vmatprep.subr.mxu0 %v2186
      %2206 = vmatpush1.msra.mxu0 %v2185
      %2207 = vmatprep.subr.mxu0 %v2183
      %2208 = vmatpush1.msra.mxu0 %v2182
      %2209 = vmatprep.subr.mxu0 %v2180
      %2210 = vmatpush1.msra.mxu0 %v2179
      %2211 = vmatprep.subr.mxu0 %v2177
      %2212 = vmatpush1.msra.mxu0 %v2176
      %2213 = vmatprep.subr.mxu0 %v2174
      %2214 = vmatpush1.msra.mxu0 %v2173
      %2215 = vmatprep.subr.mxu0 %v2171
      %2216 = vmatpush1.msra.mxu0 %v2170
      %2217 = vmatprep.subr.mxu0 %v2168
      %2218 = vmatpush1.msra.mxu0 %v2167
      %2219 = vmatprep.subr.mxu0 %v2165
      %2220 = vmatpush1.msra.mxu0 %v2164
      %2221 = vmatprep.subr.mxu0 %v2162
      %2222 = vmatpush1.msra.mxu0 %v2161
      %2223 = vmatprep.subr.mxu0 %v2159
      %2224 = vmatpush1.msra.mxu0 %v2158
      %2225 = vmatprep.subr.mxu0 %v2156
      %2226 = vmatpush1.msra.mxu0 %v2155
      %2227 = vmatprep.subr.mxu0 %v2153
      %2228 = vmatpush1.msra.mxu0 %v2152
      %2229 = vmatprep.subr.mxu0 %v2150
      %2230 = vmatpush1.msra.mxu0 %v2149
      %2231 = vmatprep.subr.mxu0 %v2147
      %2232 = vmatpush1.msra.mxu0 %v2146
      %2233 = vmatprep.subr.mxu0 %v2144
      %2234 = vmatpush1.msra.mxu0 %v2143
      %2235 = vmatprep.subr.mxu0 %v2141
      %2236 = vmatpush1.msra.mxu0 %v2140
      %2237 = vmatprep.subr.mxu0 0.0
      %2238 = vmatpush2.msra.mxu0 0.0
      %2239 = vmatprep.subr.mxu0 0.0
      %2240 = vmatpush2.msra.mxu0 0.0
      %2241 = vmatprep.subr.mxu0 0.0
      %2242 = vmatpush2.msra.mxu0 0.0
      %2243 = vmatprep.subr.mxu0 0.0
      %2244 = vmatpush2.msra.mxu0 0.0
      %2245 = vmatprep.subr.mxu0 0.0
      %2246 = vmatpush2.msra.mxu0 0.0
      %2247 = vmatprep.subr.mxu0 0.0
      %2248 = vmatpush2.msra.mxu0 0.0
      %2249 = vmatprep.subr.mxu0 0.0
      %2250 = vmatpush2.msra.mxu0 0.0
      %2251 = vmatprep.subr.mxu0 0.0
      %2252 = vmatpush2.msra.mxu0 0.0
      %2253 = vmatprep.subr.mxu0 0.0
      %2254 = vmatpush2.msra.mxu0 0.0
      %2255 = vmatprep.subr.mxu0 0.0
      %2256 = vmatpush2.msra.mxu0 0.0
      %2257 = vmatprep.subr.mxu0 0.0
      %2258 = vmatpush2.msra.mxu0 0.0
      %2259 = vmatprep.subr.mxu0 0.0
      %2260 = vmatpush2.msra.mxu0 0.0
      %2261 = vmatprep.subr.mxu0 0.0
      %2262 = vmatpush2.msra.mxu0 0.0
      %2263 = vmatprep.subr.mxu0 0.0
      %2264 = vmatpush2.msra.mxu0 0.0
      %2265 = vmatprep.subr.mxu0 0.0
      %2266 = vmatpush2.msra.mxu0 0.0
      %2267 = vmatprep.subr.mxu0 0.0
      %2268 = vmatpush2.msra.mxu0 0.0
      %2269 = vmatprep.mubr.f32.mxu0 0.0
      %2270 = vmatmul.mubr.f32.gmra.mxu0 %v727
      %v2271 = vpop.f32.mrf.mxu0
      %v2272 = vadd.f32 %v2193, %v2271
      %v2273 = vpop.f32.mrf.mxu0
      %v2274 = vadd.f32 %v2197, %v2273
      %2275 = vdwg.mxu0
      %2276 = vmatprep.subr.mxu0 0.0
      %2277 = vmatpush1.msra.mxu0 %v2187
      %2278 = vmatprep.subr.mxu0 0.0
      %2279 = vmatpush1.msra.mxu0 %v2184
      %2280 = vmatprep.subr.mxu0 0.0
      %2281 = vmatpush1.msra.mxu0 %v2181
      %2282 = vmatprep.subr.mxu0 0.0
      %2283 = vmatpush1.msra.mxu0 %v2178
      %2284 = vmatprep.subr.mxu0 0.0
      %2285 = vmatpush1.msra.mxu0 %v2175
      %2286 = vmatprep.subr.mxu0 0.0
      %2287 = vmatpush1.msra.mxu0 %v2172
      %2288 = vmatprep.subr.mxu0 0.0
      %2289 = vmatpush1.msra.mxu0 %v2169
      %2290 = vmatprep.subr.mxu0 0.0
      %2291 = vmatpush1.msra.mxu0 %v2166
      %2292 = vmatprep.subr.mxu0 0.0
      %2293 = vmatpush1.msra.mxu0 %v2163
      %2294 = vmatprep.subr.mxu0 0.0
      %2295 = vmatpush1.msra.mxu0 %v2160
      %2296 = vmatprep.subr.mxu0 0.0
      %2297 = vmatpush1.msra.mxu0 %v2157
      %2298 = vmatprep.subr.mxu0 0.0
      %2299 = vmatpush1.msra.mxu0 %v2154
      %2300 = vmatprep.subr.mxu0 0.0
      %2301 = vmatpush1.msra.mxu0 %v2151
      %2302 = vmatprep.subr.mxu0 0.0
      %2303 = vmatpush1.msra.mxu0 %v2148
      %2304 = vmatprep.subr.mxu0 0.0
      %2305 = vmatpush1.msra.mxu0 %v2145
      %2306 = vmatprep.subr.mxu0 0.0
      %2307 = vmatpush1.msra.mxu0 %v2142
      %2308 = vmatprep.subr.mxu0 0.0
      %2309 = vmatpush2.msra.mxu0 0.0
      %2310 = vmatprep.subr.mxu0 0.0
      %2311 = vmatpush2.msra.mxu0 0.0
      %2312 = vmatprep.subr.mxu0 0.0
      %2313 = vmatpush2.msra.mxu0 0.0
      %2314 = vmatprep.subr.mxu0 0.0
      %2315 = vmatpush2.msra.mxu0 0.0
      %2316 = vmatprep.subr.mxu0 0.0
      %2317 = vmatpush2.msra.mxu0 0.0
      %2318 = vmatprep.subr.mxu0 0.0
      %2319 = vmatpush2.msra.mxu0 0.0
      %2320 = vmatprep.subr.mxu0 0.0
      %2321 = vmatpush2.msra.mxu0 0.0
      %2322 = vmatprep.subr.mxu0 0.0
      %2323 = vmatpush2.msra.mxu0 0.0
      %2324 = vmatprep.subr.mxu0 0.0
      %2325 = vmatpush2.msra.mxu0 0.0
      %2326 = vmatprep.subr.mxu0 0.0
      %2327 = vmatpush2.msra.mxu0 0.0
      %2328 = vmatprep.subr.mxu0 0.0
      %2329 = vmatpush2.msra.mxu0 0.0
      %2330 = vmatprep.subr.mxu0 0.0
      %2331 = vmatpush2.msra.mxu0 0.0
      %2332 = vmatprep.subr.mxu0 0.0
      %2333 = vmatpush2.msra.mxu0 0.0
      %2334 = vmatprep.subr.mxu0 0.0
      %2335 = vmatpush2.msra.mxu0 0.0
      %2336 = vmatprep.subr.mxu0 0.0
      %2337 = vmatpush2.msra.mxu0 0.0
      %2338 = vmatprep.subr.mxu0 0.0
      %2339 = vmatpush2.msra.mxu0 0.0
      %2340 = vmatprep.mubr.f32.mxu0 0.0
      %2341 = vmatmul.mubr.f32.gmra.mxu0 %v727
      %v2342 = vpop.f32.mrf.mxu0
      %v2343 = vadd.f32 %v2201, %v2342
      %v2344 = vpop.f32.mrf.mxu0
      %2345 = vdwg.mxu0
      %v2346 = vadd.f32 %v2137, %v2272
      %v2347 = vxor.u32 %v2346, 2147483648
      %v2348 = vmul.f32 %v2347, 1.442695
      %v2349 = vpow.pop %v2348
      %v2350 = vadd.f32 %v2349, 1.0
      %v2351 = vrcp.pop %v2350
      %v2352 = vmul.f32 1.0, %v2351
      %v2353 = vadd.f32 %v2138, %v2274
      %v2354 = vxor.u32 %v2353, 2147483648
      %v2355 = vmul.f32 %v2354, 1.442695
      %v2356 = vpow.pop %v2355
      %v2357 = vadd.f32 %v2356, 1.0
      %v2358 = vrcp.pop %v2357
      %v2359 = vmul.f32 1.0, %v2358
      %v2360 = vmul.f32 %v2352, %v2343
      %v2361 = vadd.f32 %v2139, %v2360
      %v2362 = vtanh.pop %v2361
      %v2363 = vsub.f32 1.0, %v2359
      %v2364 = vmul.f32 %v2363, %v2362
      %v2365 = vmul.f32 %v2359, %v727
      %v2366 = vadd.f32 %v2364, %v2365
      %v2367 = vld [vmem:[%s14] sm:$0xff]
      %v2368 = vld [vmem:[%s14 + $0x8] sm:$0xff]
      %v2369 = vld [vmem:[%s14 + $0x10] sm:$0xff]
      %v2370 = vld [vmem:[%s14 + $0x18] sm:$0xff]
      %v2371 = vld [vmem:[%s14 + $0x20] sm:$0xff]
      %v2372 = vld [vmem:[%s14 + $0x28] sm:$0xff]
      %v2373 = vld [vmem:[%s14 + $0x30] sm:$0xff]
      %v2374 = vld [vmem:[%s14 + $0x38] sm:$0xff]
      %v2375 = vld [vmem:[%s14 + $0x40] sm:$0xff]
      %v2376 = vld [vmem:[%s14 + $0x48] sm:$0xff]
      %v2377 = vld [vmem:[%s14 + $0x50] sm:$0xff]
      %v2378 = vld [vmem:[%s14 + $0x58] sm:$0xff]
      %v2379 = vld [vmem:[%s14 + $0x60] sm:$0xff]
      %v2380 = vld [vmem:[%s14 + $0x68] sm:$0xff]
      %v2381 = vld [vmem:[%s14 + $0x70] sm:$0xff]
      %v2382 = vld [vmem:[%s14 + $0x78] sm:$0xff]
      %v2383 = vld [vmem:[%s14 + $0x80] sm:$0xff]
      %v2384 = vld [vmem:[%s14 + $0x88] sm:$0xff]
      %v2385 = vld [vmem:[%s14 + $0x90] sm:$0xff]
      %v2386 = vld [vmem:[%s14 + $0x98] sm:$0xff]
      %v2387 = vld [vmem:[%s14 + $0xa0] sm:$0xff]
      %v2388 = vld [vmem:[%s14 + $0xa8] sm:$0xff]
      %v2389 = vld [vmem:[%s14 + $0xb0] sm:$0xff]
      %v2390 = vld [vmem:[%s14 + $0xb8] sm:$0xff]
      %v2391 = vld [vmem:[%s14 + $0xc0] sm:$0xff]
      %v2392 = vld [vmem:[%s14 + $0xc8] sm:$0xff]
      %v2393 = vld [vmem:[%s14 + $0xd0] sm:$0xff]
      %v2394 = vld [vmem:[%s14 + $0xd8] sm:$0xff]
      %v2395 = vld [vmem:[%s14 + $0xe0] sm:$0xff]
      %v2396 = vld [vmem:[%s14 + $0xe8] sm:$0xff]
      %v2397 = vld [vmem:[%s14 + $0xf0] sm:$0xff]
      %v2398 = vld [vmem:[%s14 + $0xf8] sm:$0xff]
      %v2399 = vld [vmem:[%s14 + $0x100] sm:$0xff]
      %v2400 = vld [vmem:[%s14 + $0x108] sm:$0xff]
      %v2401 = vld [vmem:[%s14 + $0x110] sm:$0xff]
      %v2402 = vld [vmem:[%s14 + $0x118] sm:$0xff]
      %v2403 = vld [vmem:[%s14 + $0x120] sm:$0xff]
      %v2404 = vld [vmem:[%s14 + $0x128] sm:$0xff]
      %v2405 = vld [vmem:[%s14 + $0x130] sm:$0xff]
      %v2406 = vld [vmem:[%s14 + $0x138] sm:$0xff]
      %v2407 = vld [vmem:[%s14 + $0x140] sm:$0xff]
      %v2408 = vld [vmem:[%s14 + $0x148] sm:$0xff]
      %v2409 = vld [vmem:[%s14 + $0x150] sm:$0xff]
      %v2410 = vld [vmem:[%s14 + $0x158] sm:$0xff]
      %v2411 = vld [vmem:[%s14 + $0x160] sm:$0xff]
      %v2412 = vld [vmem:[%s14 + $0x168] sm:$0xff]
      %v2413 = vld [vmem:[%s14 + $0x170] sm:$0xff]
      %v2414 = vld [vmem:[%s14 + $0x178] sm:$0xff]
      %v2415 = vld [vmem:[%s15] sm:$0x7]
      %v2417 = vlaneseq
      %v2418 = vshrl.u32 %v2417, 7
      %v2419 = vsub.s32 0, %v2418
      %v2420 = vrot.slane %v2415, %v2419
      %v2421 = vlaneseq
      %v2422 = vshrl.u32 %v2421, 7
      %v2423 = vsub.s32 1, %v2422
      %v2424 = vrot.slane %v2415, %v2423
      %v2425 = vlaneseq
      %v2426 = vshrl.u32 %v2425, 7
      %v2427 = vsub.s32 2, %v2426
      %v2428 = vrot.slane %v2415, %v2427
      %2432 = vmatprep.subr.mxu0 %v2413
      %2433 = vmatpush1.msra.mxu0 %v2412
      %2434 = vmatprep.subr.mxu0 %v2410
      %2435 = vmatpush1.msra.mxu0 %v2409
      %2436 = vmatprep.subr.mxu0 %v2407
      %2437 = vmatpush1.msra.mxu0 %v2406
      %2438 = vmatprep.subr.mxu0 %v2404
      %2439 = vmatpush1.msra.mxu0 %v2403
      %2440 = vmatprep.subr.mxu0 %v2401
      %2441 = vmatpush1.msra.mxu0 %v2400
      %2442 = vmatprep.subr.mxu0 %v2398
      %2443 = vmatpush1.msra.mxu0 %v2397
      %2444 = vmatprep.subr.mxu0 %v2395
      %2445 = vmatpush1.msra.mxu0 %v2394
      %2446 = vmatprep.subr.mxu0 %v2392
      %2447 = vmatpush1.msra.mxu0 %v2391
      %2448 = vmatprep.subr.mxu0 %v2389
      %2449 = vmatpush1.msra.mxu0 %v2388
      %2450 = vmatprep.subr.mxu0 %v2386
      %2451 = vmatpush1.msra.mxu0 %v2385
      %2452 = vmatprep.subr.mxu0 %v2383
      %2453 = vmatpush1.msra.mxu0 %v2382
      %2454 = vmatprep.subr.mxu0 %v2380
      %2455 = vmatpush1.msra.mxu0 %v2379
      %2456 = vmatprep.subr.mxu0 %v2377
      %2457 = vmatpush1.msra.mxu0 %v2376
      %2458 = vmatprep.subr.mxu0 %v2374
      %2459 = vmatpush1.msra.mxu0 %v2373
      %2460 = vmatprep.subr.mxu0 %v2371
      %2461 = vmatpush1.msra.mxu0 %v2370
      %2462 = vmatprep.subr.mxu0 %v2368
      %2463 = vmatpush1.msra.mxu0 %v2367
      %2464 = vmatprep.subr.mxu0 0.0
      %2465 = vmatpush2.msra.mxu0 0.0
      %2466 = vmatprep.subr.mxu0 0.0
      %2467 = vmatpush2.msra.mxu0 0.0
      %2468 = vmatprep.subr.mxu0 0.0
      %2469 = vmatpush2.msra.mxu0 0.0
      %2470 = vmatprep.subr.mxu0 0.0
      %2471 = vmatpush2.msra.mxu0 0.0
      %2472 = vmatprep.subr.mxu0 0.0
      %2473 = vmatpush2.msra.mxu0 0.0
      %2474 = vmatprep.subr.mxu0 0.0
      %2475 = vmatpush2.msra.mxu0 0.0
      %2476 = vmatprep.subr.mxu0 0.0
      %2477 = vmatpush2.msra.mxu0 0.0
      %2478 = vmatprep.subr.mxu0 0.0
      %2479 = vmatpush2.msra.mxu0 0.0
      %2480 = vmatprep.subr.mxu0 0.0
      %2481 = vmatpush2.msra.mxu0 0.0
      %2482 = vmatprep.subr.mxu0 0.0
      %2483 = vmatpush2.msra.mxu0 0.0
      %2484 = vmatprep.subr.mxu0 0.0
      %2485 = vmatpush2.msra.mxu0 0.0
      %2486 = vmatprep.subr.mxu0 0.0
      %2487 = vmatpush2.msra.mxu0 0.0
      %2488 = vmatprep.subr.mxu0 0.0
      %2489 = vmatpush2.msra.mxu0 0.0
      %2490 = vmatprep.subr.mxu0 0.0
      %2491 = vmatpush2.msra.mxu0 0.0
      %2492 = vmatprep.subr.mxu0 0.0
      %2493 = vmatpush2.msra.mxu0 0.0
      %2494 = vmatprep.subr.mxu0 0.0
      %2495 = vmatpush2.msra.mxu0 0.0
      %2496 = vmatprep.mubr.f32.mxu0 0.0
      %2497 = vmatmul.mubr.f32.gmra.mxu0 %v2366
      %v2498 = vpop.f32.mrf.mxu0
      %v2499 = vadd.f32 %v2420, %v2498
      %v2500 = vpop.f32.mrf.mxu0
      %v2501 = vadd.f32 %v2424, %v2500
      %2502 = vdwg.mxu0
      %2503 = vmatprep.subr.mxu0 0.0
      %2504 = vmatpush1.msra.mxu0 %v2414
      %2505 = vmatprep.subr.mxu0 0.0
      %2506 = vmatpush1.msra.mxu0 %v2411
      %2507 = vmatprep.subr.mxu0 0.0
      %2508 = vmatpush1.msra.mxu0 %v2408
      %2509 = vmatprep.subr.mxu0 0.0
      %2510 = vmatpush1.msra.mxu0 %v2405
      %2511 = vmatprep.subr.mxu0 0.0
      %2512 = vmatpush1.msra.mxu0 %v2402
      %2513 = vmatprep.subr.mxu0 0.0
      %2514 = vmatpush1.msra.mxu0 %v2399
      %2515 = vmatprep.subr.mxu0 0.0
      %2516 = vmatpush1.msra.mxu0 %v2396
      %2517 = vmatprep.subr.mxu0 0.0
      %2518 = vmatpush1.msra.mxu0 %v2393
      %2519 = vmatprep.subr.mxu0 0.0
      %2520 = vmatpush1.msra.mxu0 %v2390
      %2521 = vmatprep.subr.mxu0 0.0
      %2522 = vmatpush1.msra.mxu0 %v2387
      %2523 = vmatprep.subr.mxu0 0.0
      %2524 = vmatpush1.msra.mxu0 %v2384
      %2525 = vmatprep.subr.mxu0 0.0
      %2526 = vmatpush1.msra.mxu0 %v2381
      %2527 = vmatprep.subr.mxu0 0.0
      %2528 = vmatpush1.msra.mxu0 %v2378
      %2529 = vmatprep.subr.mxu0 0.0
      %2530 = vmatpush1.msra.mxu0 %v2375
      %2531 = vmatprep.subr.mxu0 0.0
      %2532 = vmatpush1.msra.mxu0 %v2372
      %2533 = vmatprep.subr.mxu0 0.0
      %2534 = vmatpush1.msra.mxu0 %v2369
      %2535 = vmatprep.subr.mxu0 0.0
      %2536 = vmatpush2.msra.mxu0 0.0
      %2537 = vmatprep.subr.mxu0 0.0
      %2538 = vmatpush2.msra.mxu0 0.0
      %2539 = vmatprep.subr.mxu0 0.0
      %2540 = vmatpush2.msra.mxu0 0.0
      %2541 = vmatprep.subr.mxu0 0.0
      %2542 = vmatpush2.msra.mxu0 0.0
      %2543 = vmatprep.subr.mxu0 0.0
      %2544 = vmatpush2.msra.mxu0 0.0
      %2545 = vmatprep.subr.mxu0 0.0
      %2546 = vmatpush2.msra.mxu0 0.0
      %2547 = vmatprep.subr.mxu0 0.0
      %2548 = vmatpush2.msra.mxu0 0.0
      %2549 = vmatprep.subr.mxu0 0.0
      %2550 = vmatpush2.msra.mxu0 0.0
      %2551 = vmatprep.subr.mxu0 0.0
      %2552 = vmatpush2.msra.mxu0 0.0
      %2553 = vmatprep.subr.mxu0 0.0
      %2554 = vmatpush2.msra.mxu0 0.0
      %2555 = vmatprep.subr.mxu0 0.0
      %2556 = vmatpush2.msra.mxu0 0.0
      %2557 = vmatprep.subr.mxu0 0.0
      %2558 = vmatpush2.msra.mxu0 0.0
      %2559 = vmatprep.subr.mxu0 0.0
      %2560 = vmatpush2.msra.mxu0 0.0
      %2561 = vmatprep.subr.mxu0 0.0
      %2562 = vmatpush2.msra.mxu0 0.0
      %2563 = vmatprep.subr.mxu0 0.0
      %2564 = vmatpush2.msra.mxu0 0.0
      %2565 = vmatprep.subr.mxu0 0.0
      %2566 = vmatpush2.msra.mxu0 0.0
      %2567 = vmatprep.mubr.f32.mxu0 0.0
      %2568 = vmatmul.mubr.f32.gmra.mxu0 %v2366
      %v2569 = vpop.f32.mrf.mxu0
      %v2570 = vadd.f32 %v2428, %v2569
      %v2571 = vpop.f32.mrf.mxu0
      %2572 = vdwg.mxu0
      %v2573 = vld [vmem:[%s16] sm:$0xff]
      %v2574 = vld [vmem:[%s16 + $0x8] sm:$0xff]
      %v2575 = vld [vmem:[%s16 + $0x10] sm:$0xff]
      %v2576 = vld [vmem:[%s16 + $0x18] sm:$0xff]
      %v2577 = vld [vmem:[%s16 + $0x20] sm:$0xff]
      %v2578 = vld [vmem:[%s16 + $0x28] sm:$0xff]
      %v2579 = vld [vmem:[%s16 + $0x30] sm:$0xff]
      %v2580 = vld [vmem:[%s16 + $0x38] sm:$0xff]
      %v2581 = vld [vmem:[%s16 + $0x40] sm:$0xff]
      %v2582 = vld [vmem:[%s16 + $0x48] sm:$0xff]
      %v2583 = vld [vmem:[%s16 + $0x50] sm:$0xff]
      %v2584 = vld [vmem:[%s16 + $0x58] sm:$0xff]
      %v2585 = vld [vmem:[%s16 + $0x60] sm:$0xff]
      %v2586 = vld [vmem:[%s16 + $0x68] sm:$0xff]
      %v2587 = vld [vmem:[%s16 + $0x70] sm:$0xff]
      %v2588 = vld [vmem:[%s16 + $0x78] sm:$0xff]
      %v2589 = vld [vmem:[%s16 + $0x80] sm:$0xff]
      %v2590 = vld [vmem:[%s16 + $0x88] sm:$0xff]
      %v2591 = vld [vmem:[%s16 + $0x90] sm:$0xff]
      %v2592 = vld [vmem:[%s16 + $0x98] sm:$0xff]
      %v2593 = vld [vmem:[%s16 + $0xa0] sm:$0xff]
      %v2594 = vld [vmem:[%s16 + $0xa8] sm:$0xff]
      %v2595 = vld [vmem:[%s16 + $0xb0] sm:$0xff]
      %v2596 = vld [vmem:[%s16 + $0xb8] sm:$0xff]
      %v2597 = vld [vmem:[%s16 + $0xc0] sm:$0xff]
      %v2598 = vld [vmem:[%s16 + $0xc8] sm:$0xff]
      %v2599 = vld [vmem:[%s16 + $0xd0] sm:$0xff]
      %v2600 = vld [vmem:[%s16 + $0xd8] sm:$0xff]
      %v2601 = vld [vmem:[%s16 + $0xe0] sm:$0xff]
      %v2602 = vld [vmem:[%s16 + $0xe8] sm:$0xff]
      %v2603 = vld [vmem:[%s16 + $0xf0] sm:$0xff]
      %v2604 = vld [vmem:[%s16 + $0xf8] sm:$0xff]
      %v2605 = vld [vmem:[%s16 + $0x100] sm:$0xff]
      %v2606 = vld [vmem:[%s16 + $0x108] sm:$0xff]
      %v2607 = vld [vmem:[%s16 + $0x110] sm:$0xff]
      %v2608 = vld [vmem:[%s16 + $0x118] sm:$0xff]
      %v2609 = vld [vmem:[%s16 + $0x120] sm:$0xff]
      %v2610 = vld [vmem:[%s16 + $0x128] sm:$0xff]
      %v2611 = vld [vmem:[%s16 + $0x130] sm:$0xff]
      %v2612 = vld [vmem:[%s16 + $0x138] sm:$0xff]
      %v2613 = vld [vmem:[%s16 + $0x140] sm:$0xff]
      %v2614 = vld [vmem:[%s16 + $0x148] sm:$0xff]
      %v2615 = vld [vmem:[%s16 + $0x150] sm:$0xff]
      %v2616 = vld [vmem:[%s16 + $0x158] sm:$0xff]
      %v2617 = vld [vmem:[%s16 + $0x160] sm:$0xff]
      %v2618 = vld [vmem:[%s16 + $0x168] sm:$0xff]
      %v2619 = vld [vmem:[%s16 + $0x170] sm:$0xff]
      %v2620 = vld [vmem:[%s16 + $0x178] sm:$0xff]
      %v2621 = vld [vmem:[%s17] sm:$0x7]
      %v2623 = vlaneseq
      %v2624 = vshrl.u32 %v2623, 7
      %v2625 = vsub.s32 0, %v2624
      %v2626 = vrot.slane %v2621, %v2625
      %v2627 = vlaneseq
      %v2628 = vshrl.u32 %v2627, 7
      %v2629 = vsub.s32 1, %v2628
      %v2630 = vrot.slane %v2621, %v2629
      %v2631 = vlaneseq
      %v2632 = vshrl.u32 %v2631, 7
      %v2633 = vsub.s32 2, %v2632
      %v2634 = vrot.slane %v2621, %v2633
      %2638 = vmatprep.subr.mxu0 %v2619
      %2639 = vmatpush1.msra.mxu0 %v2618
      %2640 = vmatprep.subr.mxu0 %v2616
      %2641 = vmatpush1.msra.mxu0 %v2615
      %2642 = vmatprep.subr.mxu0 %v2613
      %2643 = vmatpush1.msra.mxu0 %v2612
      %2644 = vmatprep.subr.mxu0 %v2610
      %2645 = vmatpush1.msra.mxu0 %v2609
      %2646 = vmatprep.subr.mxu0 %v2607
      %2647 = vmatpush1.msra.mxu0 %v2606
      %2648 = vmatprep.subr.mxu0 %v2604
      %2649 = vmatpush1.msra.mxu0 %v2603
      %2650 = vmatprep.subr.mxu0 %v2601
      %2651 = vmatpush1.msra.mxu0 %v2600
      %2652 = vmatprep.subr.mxu0 %v2598
      %2653 = vmatpush1.msra.mxu0 %v2597
      %2654 = vmatprep.subr.mxu0 %v2595
      %2655 = vmatpush1.msra.mxu0 %v2594
      %2656 = vmatprep.subr.mxu0 %v2592
      %2657 = vmatpush1.msra.mxu0 %v2591
      %2658 = vmatprep.subr.mxu0 %v2589
      %2659 = vmatpush1.msra.mxu0 %v2588
      %2660 = vmatprep.subr.mxu0 %v2586
      %2661 = vmatpush1.msra.mxu0 %v2585
      %2662 = vmatprep.subr.mxu0 %v2583
      %2663 = vmatpush1.msra.mxu0 %v2582
      %2664 = vmatprep.subr.mxu0 %v2580
      %2665 = vmatpush1.msra.mxu0 %v2579
      %2666 = vmatprep.subr.mxu0 %v2577
      %2667 = vmatpush1.msra.mxu0 %v2576
      %2668 = vmatprep.subr.mxu0 %v2574
      %2669 = vmatpush1.msra.mxu0 %v2573
      %2670 = vmatprep.subr.mxu0 0.0
      %2671 = vmatpush2.msra.mxu0 0.0
      %2672 = vmatprep.subr.mxu0 0.0
      %2673 = vmatpush2.msra.mxu0 0.0
      %2674 = vmatprep.subr.mxu0 0.0
      %2675 = vmatpush2.msra.mxu0 0.0
      %2676 = vmatprep.subr.mxu0 0.0
      %2677 = vmatpush2.msra.mxu0 0.0
      %2678 = vmatprep.subr.mxu0 0.0
      %2679 = vmatpush2.msra.mxu0 0.0
      %2680 = vmatprep.subr.mxu0 0.0
      %2681 = vmatpush2.msra.mxu0 0.0
      %2682 = vmatprep.subr.mxu0 0.0
      %2683 = vmatpush2.msra.mxu0 0.0
      %2684 = vmatprep.subr.mxu0 0.0
      %2685 = vmatpush2.msra.mxu0 0.0
      %2686 = vmatprep.subr.mxu0 0.0
      %2687 = vmatpush2.msra.mxu0 0.0
      %2688 = vmatprep.subr.mxu0 0.0
      %2689 = vmatpush2.msra.mxu0 0.0
      %2690 = vmatprep.subr.mxu0 0.0
      %2691 = vmatpush2.msra.mxu0 0.0
      %2692 = vmatprep.subr.mxu0 0.0
      %2693 = vmatpush2.msra.mxu0 0.0
      %2694 = vmatprep.subr.mxu0 0.0
      %2695 = vmatpush2.msra.mxu0 0.0
      %2696 = vmatprep.subr.mxu0 0.0
      %2697 = vmatpush2.msra.mxu0 0.0
      %2698 = vmatprep.subr.mxu0 0.0
      %2699 = vmatpush2.msra.mxu0 0.0
      %2700 = vmatprep.subr.mxu0 0.0
      %2701 = vmatpush2.msra.mxu0 0.0
      %2702 = vmatprep.mubr.f32.mxu0 0.0
      %2703 = vmatmul.mubr.f32.gmra.mxu0 %v728
      %v2704 = vpop.f32.mrf.mxu0
      %v2705 = vadd.f32 %v2626, %v2704
      %v2706 = vpop.f32.mrf.mxu0
      %v2707 = vadd.f32 %v2630, %v2706
      %2708 = vdwg.mxu0
      %2709 = vmatprep.subr.mxu0 0.0
      %2710 = vmatpush1.msra.mxu0 %v2620
      %2711 = vmatprep.subr.mxu0 0.0
      %2712 = vmatpush1.msra.mxu0 %v2617
      %2713 = vmatprep.subr.mxu0 0.0
      %2714 = vmatpush1.msra.mxu0 %v2614
      %2715 = vmatprep.subr.mxu0 0.0
      %2716 = vmatpush1.msra.mxu0 %v2611
      %2717 = vmatprep.subr.mxu0 0.0
      %2718 = vmatpush1.msra.mxu0 %v2608
      %2719 = vmatprep.subr.mxu0 0.0
      %2720 = vmatpush1.msra.mxu0 %v2605
      %2721 = vmatprep.subr.mxu0 0.0
      %2722 = vmatpush1.msra.mxu0 %v2602
      %2723 = vmatprep.subr.mxu0 0.0
      %2724 = vmatpush1.msra.mxu0 %v2599
      %2725 = vmatprep.subr.mxu0 0.0
      %2726 = vmatpush1.msra.mxu0 %v2596
      %2727 = vmatprep.subr.mxu0 0.0
      %2728 = vmatpush1.msra.mxu0 %v2593
      %2729 = vmatprep.subr.mxu0 0.0
      %2730 = vmatpush1.msra.mxu0 %v2590
      %2731 = vmatprep.subr.mxu0 0.0
      %2732 = vmatpush1.msra.mxu0 %v2587
      %2733 = vmatprep.subr.mxu0 0.0
      %2734 = vmatpush1.msra.mxu0 %v2584
      %2735 = vmatprep.subr.mxu0 0.0
      %2736 = vmatpush1.msra.mxu0 %v2581
      %2737 = vmatprep.subr.mxu0 0.0
      %2738 = vmatpush1.msra.mxu0 %v2578
      %2739 = vmatprep.subr.mxu0 0.0
      %2740 = vmatpush1.msra.mxu0 %v2575
      %2741 = vmatprep.subr.mxu0 0.0
      %2742 = vmatpush2.msra.mxu0 0.0
      %2743 = vmatprep.subr.mxu0 0.0
      %2744 = vmatpush2.msra.mxu0 0.0
      %2745 = vmatprep.subr.mxu0 0.0
      %2746 = vmatpush2.msra.mxu0 0.0
      %2747 = vmatprep.subr.mxu0 0.0
      %2748 = vmatpush2.msra.mxu0 0.0
      %2749 = vmatprep.subr.mxu0 0.0
      %2750 = vmatpush2.msra.mxu0 0.0
      %2751 = vmatprep.subr.mxu0 0.0
      %2752 = vmatpush2.msra.mxu0 0.0
      %2753 = vmatprep.subr.mxu0 0.0
      %2754 = vmatpush2.msra.mxu0 0.0
      %2755 = vmatprep.subr.mxu0 0.0
      %2756 = vmatpush2.msra.mxu0 0.0
      %2757 = vmatprep.subr.mxu0 0.0
      %2758 = vmatpush2.msra.mxu0 0.0
      %2759 = vmatprep.subr.mxu0 0.0
      %2760 = vmatpush2.msra.mxu0 0.0
      %2761 = vmatprep.subr.mxu0 0.0
      %2762 = vmatpush2.msra.mxu0 0.0
      %2763 = vmatprep.subr.mxu0 0.0
      %2764 = vmatpush2.msra.mxu0 0.0
      %2765 = vmatprep.subr.mxu0 0.0
      %2766 = vmatpush2.msra.mxu0 0.0
      %2767 = vmatprep.subr.mxu0 0.0
      %2768 = vmatpush2.msra.mxu0 0.0
      %2769 = vmatprep.subr.mxu0 0.0
      %2770 = vmatpush2.msra.mxu0 0.0
      %2771 = vmatprep.subr.mxu0 0.0
      %2772 = vmatpush2.msra.mxu0 0.0
      %2773 = vmatprep.mubr.f32.mxu0 0.0
      %2774 = vmatmul.mubr.f32.gmra.mxu0 %v728
      %v2775 = vpop.f32.mrf.mxu0
      %v2776 = vadd.f32 %v2634, %v2775
      %v2777 = vpop.f32.mrf.mxu0
      %2778 = vdwg.mxu0
      %v2779 = vadd.f32 %v2499, %v2705
      %v2780 = vxor.u32 %v2779, 2147483648
      %v2781 = vmul.f32 %v2780, 1.442695
      %v2782 = vpow.pop %v2781
      %v2783 = vadd.f32 %v2782, 1.0
      %v2784 = vrcp.pop %v2783
      %v2785 = vmul.f32 1.0, %v2784
      %v2786 = vadd.f32 %v2501, %v2707
      %v2787 = vxor.u32 %v2786, 2147483648
      %v2788 = vmul.f32 %v2787, 1.442695
      %v2789 = vpow.pop %v2788
      %v2790 = vadd.f32 %v2789, 1.0
      %v2791 = vrcp.pop %v2790
      %v2792 = vmul.f32 1.0, %v2791
      %v2793 = vmul.f32 %v2785, %v2776
      %v2794 = vadd.f32 %v2570, %v2793
      %v2795 = vtanh.pop %v2794
      %v2796 = vsub.f32 1.0, %v2792
      %v2797 = vmul.f32 %v2796, %v2795
      %v2798 = vmul.f32 %v2792, %v728
      %v2799 = vadd.f32 %v2797, %v2798
      %v2800 = vld [vmem:[%s18] sm:$0xff]
      %v2801 = vld [vmem:[%s18 + $0x8] sm:$0xff]
      %v2802 = vld [vmem:[%s18 + $0x10] sm:$0xff]
      %v2803 = vld [vmem:[%s18 + $0x18] sm:$0xff]
      %v2804 = vld [vmem:[%s18 + $0x20] sm:$0xff]
      %v2805 = vld [vmem:[%s18 + $0x28] sm:$0xff]
      %v2806 = vld [vmem:[%s18 + $0x30] sm:$0xff]
      %v2807 = vld [vmem:[%s18 + $0x38] sm:$0xff]
      %v2808 = vld [vmem:[%s18 + $0x40] sm:$0xff]
      %v2809 = vld [vmem:[%s18 + $0x48] sm:$0xff]
      %v2810 = vld [vmem:[%s18 + $0x50] sm:$0xff]
      %v2811 = vld [vmem:[%s18 + $0x58] sm:$0xff]
      %v2812 = vld [vmem:[%s18 + $0x60] sm:$0xff]
      %v2813 = vld [vmem:[%s18 + $0x68] sm:$0xff]
      %v2814 = vld [vmem:[%s18 + $0x70] sm:$0xff]
      %v2815 = vld [vmem:[%s18 + $0x78] sm:$0xff]
      %v2816 = vld [vmem:[%s18 + $0x80] sm:$0xff]
      %v2817 = vld [vmem:[%s18 + $0x88] sm:$0xff]
      %v2818 = vld [vmem:[%s18 + $0x90] sm:$0xff]
      %v2819 = vld [vmem:[%s18 + $0x98] sm:$0xff]
      %v2820 = vld [vmem:[%s18 + $0xa0] sm:$0xff]
      %v2821 = vld [vmem:[%s18 + $0xa8] sm:$0xff]
      %v2822 = vld [vmem:[%s18 + $0xb0] sm:$0xff]
      %v2823 = vld [vmem:[%s18 + $0xb8] sm:$0xff]
      %v2824 = vld [vmem:[%s18 + $0xc0] sm:$0xff]
      %v2825 = vld [vmem:[%s18 + $0xc8] sm:$0xff]
      %v2826 = vld [vmem:[%s18 + $0xd0] sm:$0xff]
      %v2827 = vld [vmem:[%s18 + $0xd8] sm:$0xff]
      %v2828 = vld [vmem:[%s18 + $0xe0] sm:$0xff]
      %v2829 = vld [vmem:[%s18 + $0xe8] sm:$0xff]
      %v2830 = vld [vmem:[%s18 + $0xf0] sm:$0xff]
      %v2831 = vld [vmem:[%s18 + $0xf8] sm:$0xff]
      %v2832 = vld [vmem:[%s19] sm:$0x1]
      %v2834 = vlaneseq
      %v2835 = vshrl.u32 %v2834, 7
      %v2836 = vsub.s32 0, %v2835
      %v2837 = vrot.slane %v2832, %v2836
      %2839 = vmatprep.subr.mxu0 0.0
      %2840 = vmatpush1.msra.mxu0 %v2815
      %2841 = vmatprep.subr.mxu0 0.0
      %2842 = vmatpush1.msra.mxu0 %v2814
      %2843 = vmatprep.subr.mxu0 0.0
      %2844 = vmatpush1.msra.mxu0 %v2813
      %2845 = vmatprep.subr.mxu0 0.0
      %2846 = vmatpush1.msra.mxu0 %v2812
      %2847 = vmatprep.subr.mxu0 0.0
      %2848 = vmatpush1.msra.mxu0 %v2811
      %2849 = vmatprep.subr.mxu0 0.0
      %2850 = vmatpush1.msra.mxu0 %v2810
      %2851 = vmatprep.subr.mxu0 0.0
      %2852 = vmatpush1.msra.mxu0 %v2809
      %2853 = vmatprep.subr.mxu0 0.0
      %2854 = vmatpush1.msra.mxu0 %v2808
      %2855 = vmatprep.subr.mxu0 0.0
      %2856 = vmatpush1.msra.mxu0 %v2807
      %2857 = vmatprep.subr.mxu0 0.0
      %2858 = vmatpush1.msra.mxu0 %v2806
      %2859 = vmatprep.subr.mxu0 0.0
      %2860 = vmatpush1.msra.mxu0 %v2805
      %2861 = vmatprep.subr.mxu0 0.0
      %2862 = vmatpush1.msra.mxu0 %v2804
      %2863 = vmatprep.subr.mxu0 0.0
      %2864 = vmatpush1.msra.mxu0 %v2803
      %2865 = vmatprep.subr.mxu0 0.0
      %2866 = vmatpush1.msra.mxu0 %v2802
      %2867 = vmatprep.subr.mxu0 0.0
      %2868 = vmatpush1.msra.mxu0 %v2801
      %2869 = vmatprep.subr.mxu0 0.0
      %2870 = vmatpush1.msra.mxu0 %v2800
      %2871 = vmatprep.subr.mxu0 0.0
      %2872 = vmatpush2.msra.mxu0 %v2831
      %2873 = vmatprep.subr.mxu0 0.0
      %2874 = vmatpush2.msra.mxu0 %v2830
      %2875 = vmatprep.subr.mxu0 0.0
      %2876 = vmatpush2.msra.mxu0 %v2829
      %2877 = vmatprep.subr.mxu0 0.0
      %2878 = vmatpush2.msra.mxu0 %v2828
      %2879 = vmatprep.subr.mxu0 0.0
      %2880 = vmatpush2.msra.mxu0 %v2827
      %2881 = vmatprep.subr.mxu0 0.0
      %2882 = vmatpush2.msra.mxu0 %v2826
      %2883 = vmatprep.subr.mxu0 0.0
      %2884 = vmatpush2.msra.mxu0 %v2825
      %2885 = vmatprep.subr.mxu0 0.0
      %2886 = vmatpush2.msra.mxu0 %v2824
      %2887 = vmatprep.subr.mxu0 0.0
      %2888 = vmatpush2.msra.mxu0 %v2823
      %2889 = vmatprep.subr.mxu0 0.0
      %2890 = vmatpush2.msra.mxu0 %v2822
      %2891 = vmatprep.subr.mxu0 0.0
      %2892 = vmatpush2.msra.mxu0 %v2821
      %2893 = vmatprep.subr.mxu0 0.0
      %2894 = vmatpush2.msra.mxu0 %v2820
      %2895 = vmatprep.subr.mxu0 0.0
      %2896 = vmatpush2.msra.mxu0 %v2819
      %2897 = vmatprep.subr.mxu0 0.0
      %2898 = vmatpush2.msra.mxu0 %v2818
      %2899 = vmatprep.subr.mxu0 0.0
      %2900 = vmatpush2.msra.mxu0 %v2817
      %2901 = vmatprep.subr.mxu0 0.0
      %2902 = vmatpush2.msra.mxu0 %v2816
      %2903 = vmatprep.mubr.f32.mxu0 %v1976
      %2904 = vmatmul.mubr.f32.gmra.mxu0 %v1962
      %v2905 = vpop.f32.mrf.mxu0
      %v2906 = vadd.f32 %v2837, %v2905
      %v2907 = vpop.f32.mrf.mxu0
      %2908 = vdwg.mxu0
      %v2909 = vld [vmem:[%s20] sm:$0xff]
      %v2910 = vld [vmem:[%s20 + $0x8] sm:$0xff]
      %v2911 = vld [vmem:[%s20 + $0x10] sm:$0xff]
      %v2912 = vld [vmem:[%s20 + $0x18] sm:$0xff]
      %v2913 = vld [vmem:[%s20 + $0x20] sm:$0xff]
      %v2914 = vld [vmem:[%s20 + $0x28] sm:$0xff]
      %v2915 = vld [vmem:[%s20 + $0x30] sm:$0xff]
      %v2916 = vld [vmem:[%s20 + $0x38] sm:$0xff]
      %v2917 = vld [vmem:[%s20 + $0x40] sm:$0xff]
      %v2918 = vld [vmem:[%s20 + $0x48] sm:$0xff]
      %v2919 = vld [vmem:[%s20 + $0x50] sm:$0xff]
      %v2920 = vld [vmem:[%s20 + $0x58] sm:$0xff]
      %v2921 = vld [vmem:[%s20 + $0x60] sm:$0xff]
      %v2922 = vld [vmem:[%s20 + $0x68] sm:$0xff]
      %v2923 = vld [vmem:[%s20 + $0x70] sm:$0xff]
      %v2924 = vld [vmem:[%s20 + $0x78] sm:$0xff]
      %v2925 = vld [vmem:[%s21] sm:$0x1]
      %v2927 = vlaneseq
      %v2928 = vshrl.u32 %v2927, 7
      %v2929 = vsub.s32 0, %v2928
      %v2930 = vrot.slane %v2925, %v2929
      %2932 = vmatprep.subr.mxu0 0.0
      %2933 = vmatpush1.msra.mxu0 %v2924
      %2934 = vmatprep.subr.mxu0 0.0
      %2935 = vmatpush1.msra.mxu0 %v2923
      %2936 = vmatprep.subr.mxu0 0.0
      %2937 = vmatpush1.msra.mxu0 %v2922
      %2938 = vmatprep.subr.mxu0 0.0
      %2939 = vmatpush1.msra.mxu0 %v2921
      %2940 = vmatprep.subr.mxu0 0.0
      %2941 = vmatpush1.msra.mxu0 %v2920
      %2942 = vmatprep.subr.mxu0 0.0
      %2943 = vmatpush1.msra.mxu0 %v2919
      %2944 = vmatprep.subr.mxu0 0.0
      %2945 = vmatpush1.msra.mxu0 %v2918
      %2946 = vmatprep.subr.mxu0 0.0
      %2947 = vmatpush1.msra.mxu0 %v2917
      %2948 = vmatprep.subr.mxu0 0.0
      %2949 = vmatpush1.msra.mxu0 %v2916
      %2950 = vmatprep.subr.mxu0 0.0
      %2951 = vmatpush1.msra.mxu0 %v2915
      %2952 = vmatprep.subr.mxu0 0.0
      %2953 = vmatpush1.msra.mxu0 %v2914
      %2954 = vmatprep.subr.mxu0 0.0
      %2955 = vmatpush1.msra.mxu0 %v2913
      %2956 = vmatprep.subr.mxu0 0.0
      %2957 = vmatpush1.msra.mxu0 %v2912
      %2958 = vmatprep.subr.mxu0 0.0
      %2959 = vmatpush1.msra.mxu0 %v2911
      %2960 = vmatprep.subr.mxu0 0.0
      %2961 = vmatpush1.msra.mxu0 %v2910
      %2962 = vmatprep.subr.mxu0 0.0
      %2963 = vmatpush1.msra.mxu0 %v2909
      %2964 = vmatprep.subr.mxu0 0.0
      %2965 = vmatpush2.msra.mxu0 0.0
      %2966 = vmatprep.subr.mxu0 0.0
      %2967 = vmatpush2.msra.mxu0 0.0
      %2968 = vmatprep.subr.mxu0 0.0
      %2969 = vmatpush2.msra.mxu0 0.0
      %2970 = vmatprep.subr.mxu0 0.0
      %2971 = vmatpush2.msra.mxu0 0.0
      %2972 = vmatprep.subr.mxu0 0.0
      %2973 = vmatpush2.msra.mxu0 0.0
      %2974 = vmatprep.subr.mxu0 0.0
      %2975 = vmatpush2.msra.mxu0 0.0
      %2976 = vmatprep.subr.mxu0 0.0
      %2977 = vmatpush2.msra.mxu0 0.0
      %2978 = vmatprep.subr.mxu0 0.0
      %2979 = vmatpush2.msra.mxu0 0.0
      %2980 = vmatprep.subr.mxu0 0.0
      %2981 = vmatpush2.msra.mxu0 0.0
      %2982 = vmatprep.subr.mxu0 0.0
      %2983 = vmatpush2.msra.mxu0 0.0
      %2984 = vmatprep.subr.mxu0 0.0
      %2985 = vmatpush2.msra.mxu0 0.0
      %2986 = vmatprep.subr.mxu0 0.0
      %2987 = vmatpush2.msra.mxu0 0.0
      %2988 = vmatprep.subr.mxu0 0.0
      %2989 = vmatpush2.msra.mxu0 0.0
      %2990 = vmatprep.subr.mxu0 0.0
      %2991 = vmatpush2.msra.mxu0 0.0
      %2992 = vmatprep.subr.mxu0 0.0
      %2993 = vmatpush2.msra.mxu0 0.0
      %2994 = vmatprep.subr.mxu0 0.0
      %2995 = vmatpush2.msra.mxu0 0.0
      %2996 = vmatprep.mubr.f32.mxu0 0.0
      %2997 = vmatmul.mubr.f32.gmra.mxu0 %v2799
      %v2998 = vpop.f32.mrf.mxu0
      %v2999 = vadd.f32 %v2930, %v2998
      %v3000 = vpop.f32.mrf.mxu0
      %3001 = vdwg.mxu0
      %v3002 = vld [vmem:[%s709] sm:$0xff]
      %v3003 = vadd.f32 %v3002, %v2906
      %v3004 = vadd.f32 %v3003, %v2999
      %v3005 = vtanh.pop %v3004
      %3006 = vst [vmem:[%s718] sm:$0xff] %v3005
      %3007 = vst [vmem:[#allocation2] sm:$0xff] %v2366
      %3008 = vst [vmem:[#allocation2 + $0x8] sm:$0xff] %v2799
      %p3009 = scmp.lt.s32.totalorder %s33, 4
      %s3010 = scalar_select %p3009, %s33, 4
      %s3011 = smul.addr %s3010, 8
      %s3012 = scalar_lea.vmem %s22, %s3011
      // Predicated region
      $region113: #{nmt_forward.24} parent=107 // pred_check
        %p3013 = pneg %p528
      $region114: #{nmt_forward.24} parent=107 // pred_check_branch
        %3015 = sbr.rel (%p3013) target = $region116
      $region115: #{nmt_forward.24} parent=107 // pred_region
        _
      $region116: #{nmt_forward.24} parent=107 // pred_fallthru
        _
    $region108: #{nmt_forward.24} parent=5 // pred_fallthru
      _
    %p3016 = scmp.le.s32.totalorder 2, %s28
    // Predicated region
    $region117: #{nmt_forward.24} parent=5 // pred_check
      %p3017 = pneg %p3016
    $region118: #{nmt_forward.24} parent=5 // pred_check_branch
      %3019 = sbr.rel (%p3017) target = $region120
    $region119: #{nmt_forward.24} parent=5 // pred_region
      %s3020 = ssub.s32 %s28, 2
      // Predicated region
      $region121: #{nmt_forward.24} parent=119 // pred_check
        %p3021 = pneg %p534
      $region122: #{nmt_forward.24} parent=119 // pred_check_branch
        %3023 = sbr.rel (%p3021) target = $region124
      $region123: #{nmt_forward.24} parent=119 // pred_region
        %p3024 = scmp.lt.s32.totalorder %s34, 4
        %s3025 = scalar_select %p3024, %s34, 4
        %s3026 = smul.addr %s3025, 8
        %s3027 = scalar_lea.vmem %s22, %s3026
      $region124: #{nmt_forward.24} parent=119 // pred_fallthru
        _
    $region120: #{nmt_forward.24} parent=5 // pred_fallthru
      _
  $region6: #{nmt_forward.24} parent=0 // loop_footer
    %s32 = sadd.s32 1, %s28
  $region7: #{nmt_forward.24} parent=0 // loop_footer_branch
    %27 = sbr.rel target = $region3
  $region8: #{nmt_forward.24} parent=0 // loop_exit
    _

</llo_original>
